<compile_context>
chip_gen: v7x
topology: tpu7x:2x2x1
jax: 0.10.0
libtpu: 0.0.40
codegen_flags: <defaults>
</compile_context>

<pallas_src>
import functools

import jax
import jax.numpy as jnp
from jax import lax
from jax.experimental import pallas as pl
from jax.experimental.pallas import tpu as pltpu


# ----------------------------------------------------------------------------
# Pallas kernel: deformable conv + BatchNorm(batch stats) + ReLU, fully fused
# ----------------------------------------------------------------------------
def _fused_dconv_bn_relu_kernel(gy_ref, axt_ref, x_ref, bias_ref, gamma_ref,
                                beta_ref, out_ref, *, B, O, N, H, W, eps,
                                compute_dtype):
    """Single grid step; every operand is VMEM resident.

    gy_ref   : (O*N*H, C*H) folded (channel-mix x y-gather) matrices
    axt_ref  : (O*N, W, W)  pre-transposed x-gather matrices
    x_ref    : (B, C*H, W)  input, rows = (c, h'), lanes = w'
    bias_ref : (O, 1, 1)    conv bias           (f32)
    gamma_ref: (O, 1, 1)    BatchNorm2d weight  (f32)
    beta_ref : (O, 1, 1)    BatchNorm2d bias    (f32)
    out_ref  : (B, O, H, W) relu(bn(conv(x)))   (f32)
    """
    gy = gy_ref[...]
    axt = axt_ref[...]
    bias = bias_ref[...]

    ys = []
    s1 = jnp.zeros((O, 1, 1), jnp.float32)      # per-channel sum
    s2 = jnp.zeros((O, 1, 1), jnp.float32)      # per-channel sum of squares
    for b in range(B):                          # B is small & static: unrolled
        # Channel mix + y-gather for ALL (o, n) in ONE MXU matmul, K = C*H.
        t = jnp.dot(gy, x_ref[b],
                    preferred_element_type=jnp.float32)        # (O*N*H, W)
        t3 = t.reshape(O * N, H, W)             # lane dim unchanged -> cheap
        if compute_dtype != jnp.float32:
            t3 = t3.astype(compute_dtype)
        # x-gather for all (o, n): one batched MXU matmul, f32 accumulation.
        s = jnp.einsum('mhk,mkw->mhw', t3, axt,
                       preferred_element_type=jnp.float32)     # (O*N, H, W)
        yb = jnp.sum(s.reshape(O, N, H, W), axis=1) + bias     # (O, H, W)
        ys.append(yb)
        # Fused BatchNorm statistics (finalised below, no extra HBM pass).
        s1 = s1 + jnp.sum(jnp.sum(yb, axis=2, keepdims=True),
                          axis=1, keepdims=True)
        s2 = s2 + jnp.sum(jnp.sum(yb * yb, axis=2, keepdims=True),
                          axis=1, keepdims=True)

    inv_cnt = 1.0 / float(B * H * W)
    mean = s1 * inv_cnt                                        # (O, 1, 1)
    var = jnp.maximum(s2 * inv_cnt - mean * mean, 0.0)
    scale = gamma_ref[...] * lax.rsqrt(var + eps)              # (O, 1, 1)
    shift = beta_ref[...] - mean * scale

    for b in range(B):
        out_ref[b] = jnp.maximum(ys[b] * scale + shift, 0.0)


# ----------------------------------------------------------------------------
# Glue: separable bilinear-gather matrices from the frame parameters
# ----------------------------------------------------------------------------
def _build_axis_matrices(offsets, L):
    """offsets: (O, N) constant offsets along one axis of length L.
    Returns A: (O, N, L, L), A[o,n,l,l'] = bilinear gather weight, reproducing
    the clamp/floor semantics of the PyTorch module exactly."""
    pos = jnp.arange(L, dtype=jnp.float32)
    p = offsets[:, :, None] + pos[None, None, :]               # (O, N, L)
    q_lt = jnp.floor(p)
    q_rb = q_lt + 1.0
    q_lt_c = jnp.clip(q_lt, 0.0, L - 1.0)
    q_rb_c = jnp.clip(q_rb, 0.0, L - 1.0)
    p_c = jnp.clip(p, 0.0, L - 1.0)
    g_lt = 1.0 + (q_lt_c - p_c)
    g_rb = 1.0 - (q_rb_c - p_c)
    oh_lt = jax.nn.one_hot(q_lt_c.astype(jnp.int32), L, dtype=jnp.float32)
    oh_rb = jax.nn.one_hot(q_rb_c.astype(jnp.int32), L, dtype=jnp.float32)
    return g_lt[..., None] * oh_lt + g_rb[..., None] * oh_rb   # (O, N, L, L)


# ----------------------------------------------------------------------------
# Forward wrapper
# ----------------------------------------------------------------------------
def perpendicular_deformable_conv2d(x, frames, wc, bias, gamma, beta,
                                    kernel_size, eps=1e-5,
                                    matmul_dtype=jnp.float32):
    B, C, H, W = x.shape
    O, two_n = frames.shape
    N = two_n // 2
    assert N == kernel_size * kernel_size

    # frame[:N] are x-offsets, frame[N:] are y-offsets (PyTorch convention).
    Ay = _build_axis_matrices(frames[:, N:], H)                # (O, N, H, H)
    Ax = _build_axis_matrices(frames[:, :N], W)                # (O, N, W, W)

    # Fold conv weights into the y-gather (parameter-only precompute):
    #   Gy[(o*N + n)*H + h, c*H + h'] = wc[o, c, n] * Ay[o, n, h, h']
    gy = jnp.einsum('ocn,onhg->onhcg', wc, Ay).reshape(O * N * H, C * H)
    axt = jnp.swapaxes(Ax, -1, -2).reshape(O * N, W, W)

    # Optional bf16 MXU operands (v6e / v7x); accumulation stays f32.
    gy = gy.astype(matmul_dtype)
    axt = axt.astype(matmul_dtype)
    xr = x.reshape(B, C * H, W).astype(matmul_dtype)

    out = pl.pallas_call(
        functools.partial(_fused_dconv_bn_relu_kernel, B=B, O=O, N=N, H=H,
                          W=W, eps=eps, compute_dtype=matmul_dtype),
        out_shape=jax.ShapeDtypeStruct((B, O, H, W), jnp.float32),
        compiler_params=pltpu.CompilerParams(
            vmem_limit_bytes=64 * 1024 * 1024),
    )(gy, axt, xr,
      bias.astype(jnp.float32).reshape(O, 1, 1),
      gamma.astype(jnp.float32).reshape(O, 1, 1),
      beta.astype(jnp.float32).reshape(O, 1, 1))
    return out


# ----------------------------------------------------------------------------
# Pure-JAX reference (direct gather, mirrors the PyTorch code) for validation
# ----------------------------------------------------------------------------
def _reference(x, frames, wc, bias, gamma, beta, kernel_size, eps=1e-5):
    B, C, H, W = x.shape
    O, two_n = frames.shape
    N = two_n // 2
    yi = jnp.arange(H, dtype=jnp.float32)[:, None, None]
    xi = jnp.arange(W, dtype=jnp.float32)[None, :, None]
    outs = []
    for o in range(O):
        fx = frames[o, :N][None, None, :]
        fy = frames[o, N:][None, None, :]
        px = jnp.broadcast_to(fx + xi, (H, W, N))
        py = jnp.broadcast_to(fy + yi, (H, W, N))
        qltx = jnp.clip(jnp.floor(px), 0, W - 1)
        qlty = jnp.clip(jnp.floor(py), 0, H - 1)
        qrbx = jnp.clip(jnp.floor(px) + 1, 0, W - 1)
        qrby = jnp.clip(jnp.floor(py) + 1, 0, H - 1)
        pxc = jnp.clip(px, 0, W - 1)
        pyc = jnp.clip(py, 0, H - 1)
        glt = (1 + (qltx - pxc)) * (1 + (qlty - pyc))
        grb = (1 - (qrbx - pxc)) * (1 - (qrby - pyc))
        glb = (1 + (qltx - pxc)) * (1 - (qrby - pyc))
        grt = (1 - (qrbx - pxc)) * (1 + (qlty - pyc))
        ilx, ily = qltx.astype(jnp.int32), qlty.astype(jnp.int32)
        irx, iry = qrbx.astype(jnp.int32), qrby.astype(jnp.int32)
        xlt = x[:, :, ily, ilx]
        xrb = x[:, :, iry, irx]
        xlb = x[:, :, iry, ilx]
        xrt = x[:, :, ily, irx]
        xoff = glt * xlt + grb * xrb + glb * xlb + grt * xrt     # (B,C,H,W,N)
        outs.append(jnp.einsum('bchwn,cn->bhw', xoff, wc[o]) + bias[o])
    y = jnp.stack(outs, axis=1)
    mean = jnp.mean(y, axis=(0, 2, 3), keepdims=True)
    var = jnp.var(y, axis=(0, 2, 3), keepdims=True)
    yn = (y - mean) / jnp.sqrt(var + eps)
    yn = yn * gamma[None, :, None, None] + beta[None, :, None, None]
    return jnp.maximum(yn, 0.0)


# ----------------------------------------------------------------------------
if __name__ == "__main__":
    B, C, H, W = 2, 4, 16, 16
    out_dim, ks = 4, 3
    N = ks * ks

    key = jax.random.PRNGKey(0)
    k_x, k_f, k_w, k_b, k_g, k_bt = jax.random.split(key, 6)

    x = jax.random.normal(k_x, (B, C, H, W), dtype=jnp.float32)

    # Deterministic "parameters" (shapes match the PyTorch module __init__):
    frames = jax.random.normal(k_f, (out_dim, 2 * N), dtype=jnp.float32)
    conv_w = 0.1 * jax.random.normal(k_w, (out_dim, C, ks, ks), dtype=jnp.float32)
    wc = conv_w.reshape(out_dim, C, N)
    bias = 0.1 * jax.random.normal(k_b, (out_dim,), dtype=jnp.float32)
    gamma = 1.0 + 0.1 * jax.random.normal(k_g, (out_dim,), dtype=jnp.float32)
    beta = 0.1 * jax.random.normal(k_bt, (out_dim,), dtype=jnp.float32)

    ref = jax.block_until_ready(_reference(x, frames, wc, bias, gamma, beta, ks))

    # f32 MXU path (default).
    out = perpendicular_deformable_conv2d(x, frames, wc, bias, gamma, beta, ks)
    out = jax.block_until_ready(out)
    assert out.shape == (B, out_dim, H, W)
    assert jnp.allclose(out, ref, rtol=1e-3, atol=1e-3), (
        float(jnp.max(jnp.abs(out - ref))))

    # bf16 MXU-operand path (v6e/v7x optimization; f32 accumulation).  Looser
    # tolerance: ~2^-8 operand rounding amplified by the BN 1/sigma scaling.
    out_bf16 = perpendicular_deformable_conv2d(
        x, frames, wc, bias, gamma, beta, ks, matmul_dtype=jnp.bfloat16)
    out_bf16 = jax.block_until_ready(out_bf16)
    assert jnp.allclose(out_bf16, ref, rtol=1e-1, atol=1e-1), (
        float(jnp.max(jnp.abs(out_bf16 - ref))))

    print("KERNEL_OK")
</pallas_src>

<mosaic_0001>
module attributes {stable_mosaic.version = 11 : i64} {
  func.func @_fused_dconv_bn_relu_kernel(%arg0: memref<576x64xf32, #tpu.memory_space<vmem>>, %arg1: memref<36x16x16xf32, #tpu.memory_space<vmem>>, %arg2: memref<2x64x16xf32, #tpu.memory_space<vmem>>, %arg3: memref<4x1x1xf32, #tpu.memory_space<vmem>>, %arg4: memref<4x1x1xf32, #tpu.memory_space<vmem>>, %arg5: memref<4x1x1xf32, #tpu.memory_space<vmem>>, %arg6: memref<2x4x16x16xf32, #tpu.memory_space<vmem>>) attributes {dimension_semantics = [], scalar_prefetch = 0 : i64, scratch_operands = 0 : i64, tpu.core_type = #tpu.core_type<tc>} {
    %c0 = arith.constant 0 : index
    %c0_0 = arith.constant 0 : index
    %0 = vector.load %arg0[%c0, %c0_0] : memref<576x64xf32, #tpu.memory_space<vmem>>, vector<576x64xf32>
    %c0_1 = arith.constant 0 : index
    %c0_2 = arith.constant 0 : index
    %c0_3 = arith.constant 0 : index
    %1 = vector.load %arg1[%c0_1, %c0_2, %c0_3] : memref<36x16x16xf32, #tpu.memory_space<vmem>>, vector<36x16x16xf32>
    %c0_4 = arith.constant 0 : index
    %c0_5 = arith.constant 0 : index
    %c0_6 = arith.constant 0 : index
    %2 = vector.load %arg3[%c0_4, %c0_5, %c0_6] : memref<4x1x1xf32, #tpu.memory_space<vmem>>, vector<4x1x1xf32>
    %cst = arith.constant 0.000000e+00 : f32
    %3 = vector.broadcast %cst : f32 to vector<4x1x1xf32>
    %cst_7 = arith.constant 0.000000e+00 : f32
    %4 = vector.broadcast %cst_7 : f32 to vector<4x1x1xf32>
    %c0_8 = arith.constant 0 : index
    %c0_9 = arith.constant 0 : index
    %c0_10 = arith.constant 0 : index
    %5 = vector.load %arg2[%c0_8, %c0_9, %c0_10] : memref<2x64x16xf32, #tpu.memory_space<vmem>>, vector<1x64x16xf32>
    %6 = vector.shape_cast %5 : vector<1x64x16xf32> to vector<64x16xf32>
    %cst_11 = arith.constant dense<0.000000e+00> : vector<576x16xf32>
    %7 = tpu.matmul %0, %6, %cst_11 {dimension_numbers = #tpu.dot_dimension_numbers<[1], [0], [0], [1], [0, 0, 1, 1], [], []>} : vector<576x64xf32>, vector<64x16xf32>, vector<576x16xf32> -> vector<576x16xf32>
    %8 = vector.shape_cast %7 : vector<576x16xf32> to vector<36x16x16xf32>
    "tpu.trace_start"() <{level = 10 : i32, message = "mhk,mkw->mhw"}> : () -> ()
    %cst_12 = arith.constant dense<0.000000e+00> : vector<36x16x16xf32>
    %9 = tpu.matmul %8, %1, %cst_12 {dimension_numbers = #tpu.dot_dimension_numbers<[2], [1], [1], [2], [0, 0, 0, 1, 1, 2], [0], [0]>} : vector<36x16x16xf32>, vector<36x16x16xf32>, vector<36x16x16xf32> -> vector<36x16x16xf32>
    "tpu.trace_stop"() : () -> ()
    %10 = vector.shape_cast %9 : vector<36x16x16xf32> to vector<4x9x16x16xf32>
    %cst_13 = arith.constant dense<0.000000e+00> : vector<4x16x16xf32>
    %11 = vector.multi_reduction <add>, %10, %cst_13 [1] : vector<4x9x16x16xf32> to vector<4x16x16xf32>
    %12 = vector.broadcast %2 : vector<4x1x1xf32> to vector<4x16x16xf32>
    %13 = arith.addf %11, %12 : vector<4x16x16xf32>
    %cst_14 = arith.constant dense<0.000000e+00> : vector<4x16xf32>
    %14 = vector.multi_reduction <add>, %13, %cst_14 [2] : vector<4x16x16xf32> to vector<4x16xf32>
    %15 = vector.shape_cast %14 : vector<4x16xf32> to vector<4x16x1xf32>
    %cst_15 = arith.constant dense<0.000000e+00> : vector<4x1xf32>
    %16 = vector.multi_reduction <add>, %15, %cst_15 [1] : vector<4x16x1xf32> to vector<4x1xf32>
    %17 = vector.shape_cast %16 : vector<4x1xf32> to vector<4x1x1xf32>
    %18 = arith.addf %3, %17 : vector<4x1x1xf32>
    %19 = arith.mulf %13, %13 : vector<4x16x16xf32>
    %cst_16 = arith.constant dense<0.000000e+00> : vector<4x16xf32>
    %20 = vector.multi_reduction <add>, %19, %cst_16 [2] : vector<4x16x16xf32> to vector<4x16xf32>
    %21 = vector.shape_cast %20 : vector<4x16xf32> to vector<4x16x1xf32>
    %cst_17 = arith.constant dense<0.000000e+00> : vector<4x1xf32>
    %22 = vector.multi_reduction <add>, %21, %cst_17 [1] : vector<4x16x1xf32> to vector<4x1xf32>
    %23 = vector.shape_cast %22 : vector<4x1xf32> to vector<4x1x1xf32>
    %24 = arith.addf %4, %23 : vector<4x1x1xf32>
    %c1 = arith.constant 1 : index
    %c0_18 = arith.constant 0 : index
    %c0_19 = arith.constant 0 : index
    %25 = vector.load %arg2[%c1, %c0_18, %c0_19] : memref<2x64x16xf32, #tpu.memory_space<vmem>>, vector<1x64x16xf32>
    %26 = vector.shape_cast %25 : vector<1x64x16xf32> to vector<64x16xf32>
    %cst_20 = arith.constant dense<0.000000e+00> : vector<576x16xf32>
    %27 = tpu.matmul %0, %26, %cst_20 {dimension_numbers = #tpu.dot_dimension_numbers<[1], [0], [0], [1], [0, 0, 1, 1], [], []>} : vector<576x64xf32>, vector<64x16xf32>, vector<576x16xf32> -> vector<576x16xf32>
    %28 = vector.shape_cast %27 : vector<576x16xf32> to vector<36x16x16xf32>
    "tpu.trace_start"() <{level = 10 : i32, message = "mhk,mkw->mhw"}> : () -> ()
    %cst_21 = arith.constant dense<0.000000e+00> : vector<36x16x16xf32>
    %29 = tpu.matmul %28, %1, %cst_21 {dimension_numbers = #tpu.dot_dimension_numbers<[2], [1], [1], [2], [0, 0, 0, 1, 1, 2], [0], [0]>} : vector<36x16x16xf32>, vector<36x16x16xf32>, vector<36x16x16xf32> -> vector<36x16x16xf32>
    "tpu.trace_stop"() : () -> ()
    %30 = vector.shape_cast %29 : vector<36x16x16xf32> to vector<4x9x16x16xf32>
    %cst_22 = arith.constant dense<0.000000e+00> : vector<4x16x16xf32>
    %31 = vector.multi_reduction <add>, %30, %cst_22 [1] : vector<4x9x16x16xf32> to vector<4x16x16xf32>
    %32 = vector.broadcast %2 : vector<4x1x1xf32> to vector<4x16x16xf32>
    %33 = arith.addf %31, %32 : vector<4x16x16xf32>
    %cst_23 = arith.constant dense<0.000000e+00> : vector<4x16xf32>
    %34 = vector.multi_reduction <add>, %33, %cst_23 [2] : vector<4x16x16xf32> to vector<4x16xf32>
    %35 = vector.shape_cast %34 : vector<4x16xf32> to vector<4x16x1xf32>
    %cst_24 = arith.constant dense<0.000000e+00> : vector<4x1xf32>
    %36 = vector.multi_reduction <add>, %35, %cst_24 [1] : vector<4x16x1xf32> to vector<4x1xf32>
    %37 = vector.shape_cast %36 : vector<4x1xf32> to vector<4x1x1xf32>
    %38 = arith.addf %18, %37 : vector<4x1x1xf32>
    %39 = arith.mulf %33, %33 : vector<4x16x16xf32>
    %cst_25 = arith.constant dense<0.000000e+00> : vector<4x16xf32>
    %40 = vector.multi_reduction <add>, %39, %cst_25 [2] : vector<4x16x16xf32> to vector<4x16xf32>
    %41 = vector.shape_cast %40 : vector<4x16xf32> to vector<4x16x1xf32>
    %cst_26 = arith.constant dense<0.000000e+00> : vector<4x1xf32>
    %42 = vector.multi_reduction <add>, %41, %cst_26 [1] : vector<4x16x1xf32> to vector<4x1xf32>
    %43 = vector.shape_cast %42 : vector<4x1xf32> to vector<4x1x1xf32>
    %44 = arith.addf %24, %43 : vector<4x1x1xf32>
    %cst_27 = arith.constant 0.001953125 : f32
    %45 = vector.broadcast %cst_27 : f32 to vector<4x1x1xf32>
    %46 = arith.mulf %38, %45 : vector<4x1x1xf32>
    %cst_28 = arith.constant 0.001953125 : f32
    %47 = vector.broadcast %cst_28 : f32 to vector<4x1x1xf32>
    %48 = arith.mulf %44, %47 : vector<4x1x1xf32>
    %49 = arith.mulf %46, %46 : vector<4x1x1xf32>
    %50 = arith.subf %48, %49 : vector<4x1x1xf32>
    %cst_29 = arith.constant 0.000000e+00 : f32
    %51 = vector.broadcast %cst_29 : f32 to vector<4x1x1xf32>
    %52 = arith.maximumf %50, %51 : vector<4x1x1xf32>
    %c0_30 = arith.constant 0 : index
    %c0_31 = arith.constant 0 : index
    %c0_32 = arith.constant 0 : index
    %53 = vector.load %arg4[%c0_30, %c0_31, %c0_32] : memref<4x1x1xf32, #tpu.memory_space<vmem>>, vector<4x1x1xf32>
    %cst_33 = arith.constant 9.99999974E-6 : f32
    %54 = vector.broadcast %cst_33 : f32 to vector<4x1x1xf32>
    %55 = arith.addf %52, %54 : vector<4x1x1xf32>
    %56 = math.rsqrt %55 : vector<4x1x1xf32>
    %57 = arith.mulf %53, %56 : vector<4x1x1xf32>
    %c0_34 = arith.constant 0 : index
    %c0_35 = arith.constant 0 : index
    %c0_36 = arith.constant 0 : index
    %58 = vector.load %arg5[%c0_34, %c0_35, %c0_36] : memref<4x1x1xf32, #tpu.memory_space<vmem>>, vector<4x1x1xf32>
    %59 = arith.mulf %46, %57 : vector<4x1x1xf32>
    %60 = arith.subf %58, %59 : vector<4x1x1xf32>
    %61 = vector.broadcast %57 : vector<4x1x1xf32> to vector<4x16x16xf32>
    %62 = arith.mulf %13, %61 : vector<4x16x16xf32>
    %63 = vector.broadcast %60 : vector<4x1x1xf32> to vector<4x16x16xf32>
    %64 = arith.addf %62, %63 : vector<4x16x16xf32>
    %cst_37 = arith.constant 0.000000e+00 : f32
    %65 = vector.broadcast %cst_37 : f32 to vector<4x16x16xf32>
    %66 = arith.maximumf %64, %65 : vector<4x16x16xf32>
    %c0_38 = arith.constant 0 : index
    %c0_39 = arith.constant 0 : index
    %c0_40 = arith.constant 0 : index
    %c0_41 = arith.constant 0 : index
    %67 = vector.load %arg6[%c0_38, %c0_39, %c0_40, %c0_41] : memref<2x4x16x16xf32, #tpu.memory_space<vmem>>, vector<1x4x16x16xf32>
    %68 = vector.shape_cast %67 : vector<1x4x16x16xf32> to vector<4x16x16xf32>
    %69 = vector.shape_cast %66 : vector<4x16x16xf32> to vector<1x4x16x16xf32>
    tpu.vector_store %arg6[%c0_38, %c0_39, %c0_40, %c0_41], %69 {strides = array<i32>} : memref<2x4x16x16xf32, #tpu.memory_space<vmem>>, vector<1x4x16x16xf32>,
    %70 = vector.broadcast %57 : vector<4x1x1xf32> to vector<4x16x16xf32>
    %71 = arith.mulf %33, %70 : vector<4x16x16xf32>
    %72 = vector.broadcast %60 : vector<4x1x1xf32> to vector<4x16x16xf32>
    %73 = arith.addf %71, %72 : vector<4x16x16xf32>
    %cst_42 = arith.constant 0.000000e+00 : f32
    %74 = vector.broadcast %cst_42 : f32 to vector<4x16x16xf32>
    %75 = arith.maximumf %73, %74 : vector<4x16x16xf32>
    %c1_43 = arith.constant 1 : index
    %c0_44 = arith.constant 0 : index
    %c0_45 = arith.constant 0 : index
    %c0_46 = arith.constant 0 : index
    %76 = vector.load %arg6[%c1_43, %c0_44, %c0_45, %c0_46] : memref<2x4x16x16xf32, #tpu.memory_space<vmem>>, vector<1x4x16x16xf32>
    %77 = vector.shape_cast %76 : vector<1x4x16x16xf32> to vector<4x16x16xf32>
    %78 = vector.shape_cast %75 : vector<4x16x16xf32> to vector<1x4x16x16xf32>
    tpu.vector_store %arg6[%c1_43, %c0_44, %c0_45, %c0_46], %78 {strides = array<i32>} : memref<2x4x16x16xf32, #tpu.memory_space<vmem>>, vector<1x4x16x16xf32>,
    return
  }
}

</mosaic_0001>

<llo_original>
// kernel: tpu_custom_call.1
$region0: #{tpu_custom_call.1}
  #allocation0 [shape = 'u32[]', space=smem, size = 0x4, offset = 0x4, fixed_abs, tag = 'smem constant byte address 0x4 - core index']
  #allocation1 [shape = 'u32[144,128]{1,0:T(1,128)}', space=vmem, size = 0x12000, scoped, tag = 'internal scratch']
  %s0 = inlined_call_operand.hbm [shape: f32[576,64], index: 0, kind: input, shape index: {}]
  %s1 = inlined_call_operand.hbm [shape: f32[36,16,16], index: 1, kind: input, shape index: {}]
  %s2 = inlined_call_operand.hbm [shape: f32[2,64,16], index: 2, kind: input, shape index: {}]
  %s3 = inlined_call_operand.hbm [shape: f32[4,1,1], index: 3, kind: input, shape index: {}]
  %s4 = inlined_call_operand.hbm [shape: f32[4,1,1], index: 4, kind: input, shape index: {}]
  %s5 = inlined_call_operand.hbm [shape: f32[4,1,1], index: 5, kind: input, shape index: {}]
  %s6 = inlined_call_operand.hbm [shape: f32[2,4,16,16], index: 6, kind: output, shape index: {}]
  %s7 = sld [smem:[#allocation0]]
  $region58: #{tpu_custom_call.1} parent=0
    _
  %s9 = ssub.s32 1, %s7
  %s10 = scalar_select 0, %s9, %s7
  $region1: #{tpu_custom_call.1} parent=0
    #allocation2 [shape = 'u8[294912]{0}', space=vmem, size = 0x48000, scoped, tag = 'input window, operand 0, single buffered']
    #allocation3 [shape = 's32[1]{0}', space=sflag, size = 0x4, scoped, tag = 'scoped memory for tpu_custom_call.1']
    #allocation4 [shape = 's32[1]{0}', space=sflag, size = 0x4, scoped, tag = 'scoped memory for tpu_custom_call.1']
    #allocation5 [shape = 'u8[294912]{0}', space=vmem, size = 0x48000, scoped, tag = 'input window, operand 1, single buffered']
    #allocation6 [shape = 's32[1]{0}', space=sflag, size = 0x4, scoped, tag = 'scoped memory for tpu_custom_call.1']
    #allocation7 [shape = 'u8[65536]{0}', space=vmem, size = 0x10000, scoped, tag = 'input window, operand 2, single buffered']
    #allocation8 [shape = 'u8[2048]{0}', space=vmem, size = 0x800, scoped, tag = 'input window, operand 3, single buffered']
    #allocation9 [shape = 's32[1]{0}', space=sflag, size = 0x4, scoped, tag = 'scoped memory for tpu_custom_call.1']
    #allocation10 [shape = 'u8[2048]{0}', space=vmem, size = 0x800, scoped, tag = 'input window, operand 4, single buffered']
    #allocation11 [shape = 'u8[2048]{0}', space=vmem, size = 0x800, scoped, tag = 'input window, operand 5, single buffered']
    #allocation12 [shape = 's32[1]{0}', space=sflag, size = 0x4, scoped, tag = 'scoped memory for tpu_custom_call.1']
    #allocation13 [shape = 'u8[65536]{0}', space=vmem, size = 0x10000, scoped, tag = 'output window, operand 0, single buffered']
    %11 = vsyncpa [#allocation3], 0
    %12 = vsyncpa [#allocation6], 0
    %13 = vsyncpa [#allocation9], 0
    %14 = vsyncpa [#allocation12], 0
    %15 = vsyncpa [#allocation4], 0
    // Predicated region
    $region2: #{tpu_custom_call.1} parent=1 // pred_check
      _
    $region3: #{tpu_custom_call.1} parent=1 // pred_check_branch
      %17 = sbr.rel (0) target = $region5
    $region4: #{tpu_custom_call.1} parent=1 // pred_region
      %s19 = ssub.s32 9216, 9216
      %20 = vsyncadd [#allocation3], %s19
      %s21 = sshll.u32 [#allocation2], 4
      %s22 = int_to_ptr.vmem [resolvable:$true] %s21
      %27 = dma.hbm_to_vmem [thread:$0]  %s0, 9216, %s22, [#allocation3], 128, 128, 8
    $region5: #{tpu_custom_call.1} parent=1 // pred_fallthru
      _
    // Predicated region
    $region6: #{tpu_custom_call.1} parent=1 // pred_check
      _
    $region7: #{tpu_custom_call.1} parent=1 // pred_check_branch
      %29 = sbr.rel (0) target = $region9
    $region8: #{tpu_custom_call.1} parent=1 // pred_region
      %s31 = ssub.s32 9216, 9216
      %32 = vsyncadd [#allocation6], %s31
      %s33 = sshll.u32 [#allocation5], 4
      %s34 = int_to_ptr.vmem [resolvable:$true] %s33
      %39 = dma.hbm_to_vmem [thread:$0]  %s1, 9216, %s34, [#allocation6], 128, 128, 8
    $region9: #{tpu_custom_call.1} parent=1 // pred_fallthru
      _
    // Predicated region
    $region10: #{tpu_custom_call.1} parent=1 // pred_check
      _
    $region11: #{tpu_custom_call.1} parent=1 // pred_check_branch
      %41 = sbr.rel (0) target = $region13
    $region12: #{tpu_custom_call.1} parent=1 // pred_region
      %s43 = ssub.s32 2048, 2048
      %44 = vsyncadd [#allocation6], %s43
      %s45 = sshll.u32 [#allocation7], 4
      %s46 = int_to_ptr.vmem [resolvable:$true] %s45
      %51 = dma.hbm_to_vmem [thread:$0]  %s2, 2048, %s46, [#allocation6], 128, 128, 8
    $region13: #{tpu_custom_call.1} parent=1 // pred_fallthru
      _
    // Predicated region
    $region14: #{tpu_custom_call.1} parent=1 // pred_check
      _
    $region15: #{tpu_custom_call.1} parent=1 // pred_check_branch
      %53 = sbr.rel (0) target = $region17
    $region16: #{tpu_custom_call.1} parent=1 // pred_region
      %s55 = ssub.s32 64, 64
      %56 = vsyncadd [#allocation9], %s55
      %s57 = sshll.u32 [#allocation8], 4
      %s58 = int_to_ptr.vmem [resolvable:$true] %s57
      %63 = dma.hbm_to_vmem [thread:$0]  %s3, 64, %s58, [#allocation9], 16, 16, 1
    $region17: #{tpu_custom_call.1} parent=1 // pred_fallthru
      _
    // Predicated region
    $region18: #{tpu_custom_call.1} parent=1 // pred_check
      _
    $region19: #{tpu_custom_call.1} parent=1 // pred_check_branch
      %65 = sbr.rel (0) target = $region21
    $region20: #{tpu_custom_call.1} parent=1 // pred_region
      %s67 = ssub.s32 64, 64
      %68 = vsyncadd [#allocation9], %s67
      %s69 = sshll.u32 [#allocation10], 4
      %s70 = int_to_ptr.vmem [resolvable:$true] %s69
      %75 = dma.hbm_to_vmem [thread:$0]  %s4, 64, %s70, [#allocation9], 16, 16, 1
    $region21: #{tpu_custom_call.1} parent=1 // pred_fallthru
      _
    // Predicated region
    $region22: #{tpu_custom_call.1} parent=1 // pred_check
      _
    $region23: #{tpu_custom_call.1} parent=1 // pred_check_branch
      %77 = sbr.rel (0) target = $region25
    $region24: #{tpu_custom_call.1} parent=1 // pred_region
      %s79 = ssub.s32 64, 64
      %80 = vsyncadd [#allocation12], %s79
      %s81 = sshll.u32 [#allocation11], 4
      %s82 = int_to_ptr.vmem [resolvable:$true] %s81
      %87 = dma.hbm_to_vmem [thread:$0]  %s5, 64, %s82, [#allocation12], 16, 16, 1
    $region25: #{tpu_custom_call.1} parent=1 // pred_fallthru
      _
    // Predicated region
    $region26: #{tpu_custom_call.1} parent=1 // pred_check
      _
    $region27: #{tpu_custom_call.1} parent=1 // pred_check_branch
      %89 = sbr.rel (0) target = $region29
    $region28: #{tpu_custom_call.1} parent=1 // pred_region
      %90 = dma.done [#allocation3], 9216
    $region29: #{tpu_custom_call.1} parent=1 // pred_fallthru
      _
    // Predicated region
    $region30: #{tpu_custom_call.1} parent=1 // pred_check
      _
    $region31: #{tpu_custom_call.1} parent=1 // pred_check_branch
      %92 = sbr.rel (0) target = $region33
    $region32: #{tpu_custom_call.1} parent=1 // pred_region
      %93 = dma.done [#allocation6], 9216
    $region33: #{tpu_custom_call.1} parent=1 // pred_fallthru
      _
    // Predicated region
    $region34: #{tpu_custom_call.1} parent=1 // pred_check
      _
    $region35: #{tpu_custom_call.1} parent=1 // pred_check_branch
      %95 = sbr.rel (0) target = $region37
    $region36: #{tpu_custom_call.1} parent=1 // pred_region
      %96 = dma.done [#allocation6], 2048
    $region37: #{tpu_custom_call.1} parent=1 // pred_fallthru
      _
    // Predicated region
    $region38: #{tpu_custom_call.1} parent=1 // pred_check
      _
    $region39: #{tpu_custom_call.1} parent=1 // pred_check_branch
      %98 = sbr.rel (0) target = $region41
    $region40: #{tpu_custom_call.1} parent=1 // pred_region
      %99 = dma.done [#allocation9], 64
    $region41: #{tpu_custom_call.1} parent=1 // pred_fallthru
      _
    // Predicated region
    $region42: #{tpu_custom_call.1} parent=1 // pred_check
      _
    $region43: #{tpu_custom_call.1} parent=1 // pred_check_branch
      %101 = sbr.rel (0) target = $region45
    $region44: #{tpu_custom_call.1} parent=1 // pred_region
      %102 = dma.done [#allocation9], 64
    $region45: #{tpu_custom_call.1} parent=1 // pred_fallthru
      _
    // Predicated region
    $region46: #{tpu_custom_call.1} parent=1 // pred_check
      _
    $region47: #{tpu_custom_call.1} parent=1 // pred_check_branch
      %104 = sbr.rel (0) target = $region49
    $region48: #{tpu_custom_call.1} parent=1 // pred_region
      %105 = dma.done [#allocation12], 64
    $region49: #{tpu_custom_call.1} parent=1 // pred_fallthru
      _
    %v106 = vld [vmem:[#allocation2] sm:$0xff]
    %v107 = vld [vmem:[#allocation2 + $0x8] sm:$0xff]
    %v108 = vld [vmem:[#allocation2 + $0x10] sm:$0xff]
    %v109 = vld [vmem:[#allocation2 + $0x18] sm:$0xff]
    %v110 = vld [vmem:[#allocation2 + $0x20] sm:$0xff]
    %v111 = vld [vmem:[#allocation2 + $0x28] sm:$0xff]
    %v112 = vld [vmem:[#allocation2 + $0x30] sm:$0xff]
    %v113 = vld [vmem:[#allocation2 + $0x38] sm:$0xff]
    %v114 = vld [vmem:[#allocation2 + $0x40] sm:$0xff]
    %v115 = vld [vmem:[#allocation2 + $0x48] sm:$0xff]
    %v116 = vld [vmem:[#allocation2 + $0x50] sm:$0xff]
    %v117 = vld [vmem:[#allocation2 + $0x58] sm:$0xff]
    %v118 = vld [vmem:[#allocation2 + $0x60] sm:$0xff]
    %v119 = vld [vmem:[#allocation2 + $0x68] sm:$0xff]
    %v120 = vld [vmem:[#allocation2 + $0x70] sm:$0xff]
    %v121 = vld [vmem:[#allocation2 + $0x78] sm:$0xff]
    %v122 = vld [vmem:[#allocation2 + $0x80] sm:$0xff]
    %v123 = vld [vmem:[#allocation2 + $0x88] sm:$0xff]
    %v124 = vld [vmem:[#allocation2 + $0x90] sm:$0xff]
    %v125 = vld [vmem:[#allocation2 + $0x98] sm:$0xff]
    %v126 = vld [vmem:[#allocation2 + $0xa0] sm:$0xff]
    %v127 = vld [vmem:[#allocation2 + $0xa8] sm:$0xff]
    %v128 = vld [vmem:[#allocation2 + $0xb0] sm:$0xff]
    %v129 = vld [vmem:[#allocation2 + $0xb8] sm:$0xff]
    %v130 = vld [vmem:[#allocation2 + $0xc0] sm:$0xff]
    %v131 = vld [vmem:[#allocation2 + $0xc8] sm:$0xff]
    %v132 = vld [vmem:[#allocation2 + $0xd0] sm:$0xff]
    %v133 = vld [vmem:[#allocation2 + $0xd8] sm:$0xff]
    %v134 = vld [vmem:[#allocation2 + $0xe0] sm:$0xff]
    %v135 = vld [vmem:[#allocation2 + $0xe8] sm:$0xff]
    %v136 = vld [vmem:[#allocation2 + $0xf0] sm:$0xff]
    %v137 = vld [vmem:[#allocation2 + $0xf8] sm:$0xff]
    %v138 = vld [vmem:[#allocation2 + $0x100] sm:$0xff]
    %v139 = vld [vmem:[#allocation2 + $0x108] sm:$0xff]
    %v140 = vld [vmem:[#allocation2 + $0x110] sm:$0xff]
    %v141 = vld [vmem:[#allocation2 + $0x118] sm:$0xff]
    %v142 = vld [vmem:[#allocation2 + $0x120] sm:$0xff]
    %v143 = vld [vmem:[#allocation2 + $0x128] sm:$0xff]
    %v144 = vld [vmem:[#allocation2 + $0x130] sm:$0xff]
    %v145 = vld [vmem:[#allocation2 + $0x138] sm:$0xff]
    %v146 = vld [vmem:[#allocation2 + $0x140] sm:$0xff]
    %v147 = vld [vmem:[#allocation2 + $0x148] sm:$0xff]
    %v148 = vld [vmem:[#allocation2 + $0x150] sm:$0xff]
    %v149 = vld [vmem:[#allocation2 + $0x158] sm:$0xff]
    %v150 = vld [vmem:[#allocation2 + $0x160] sm:$0xff]
    %v151 = vld [vmem:[#allocation2 + $0x168] sm:$0xff]
    %v152 = vld [vmem:[#allocation2 + $0x170] sm:$0xff]
    %v153 = vld [vmem:[#allocation2 + $0x178] sm:$0xff]
    %v154 = vld [vmem:[#allocation2 + $0x180] sm:$0xff]
    %v155 = vld [vmem:[#allocation2 + $0x188] sm:$0xff]
    %v156 = vld [vmem:[#allocation2 + $0x190] sm:$0xff]
    %v157 = vld [vmem:[#allocation2 + $0x198] sm:$0xff]
    %v158 = vld [vmem:[#allocation2 + $0x1a0] sm:$0xff]
    %v159 = vld [vmem:[#allocation2 + $0x1a8] sm:$0xff]
    %v160 = vld [vmem:[#allocation2 + $0x1b0] sm:$0xff]
    %v161 = vld [vmem:[#allocation2 + $0x1b8] sm:$0xff]
    %v162 = vld [vmem:[#allocation2 + $0x1c0] sm:$0xff]
    %v163 = vld [vmem:[#allocation2 + $0x1c8] sm:$0xff]
    %v164 = vld [vmem:[#allocation2 + $0x1d0] sm:$0xff]
    %v165 = vld [vmem:[#allocation2 + $0x1d8] sm:$0xff]
    %v166 = vld [vmem:[#allocation2 + $0x1e0] sm:$0xff]
    %v167 = vld [vmem:[#allocation2 + $0x1e8] sm:$0xff]
    %v168 = vld [vmem:[#allocation2 + $0x1f0] sm:$0xff]
    %v169 = vld [vmem:[#allocation2 + $0x1f8] sm:$0xff]
    %v170 = vld [vmem:[#allocation2 + $0x200] sm:$0xff]
    %v171 = vld [vmem:[#allocation2 + $0x208] sm:$0xff]
    %v172 = vld [vmem:[#allocation2 + $0x210] sm:$0xff]
    %v173 = vld [vmem:[#allocation2 + $0x218] sm:$0xff]
    %v174 = vld [vmem:[#allocation2 + $0x220] sm:$0xff]
    %v175 = vld [vmem:[#allocation2 + $0x228] sm:$0xff]
    %v176 = vld [vmem:[#allocation2 + $0x230] sm:$0xff]
    %v177 = vld [vmem:[#allocation2 + $0x238] sm:$0xff]
    %v178 = vld [vmem:[#allocation5] sm:$0xff]
    %v179 = vld [vmem:[#allocation5 + $0x8] sm:$0xff]
    %v180 = vld [vmem:[#allocation5 + $0x10] sm:$0xff]
    %v181 = vld [vmem:[#allocation5 + $0x18] sm:$0xff]
    %v182 = vld [vmem:[#allocation5 + $0x20] sm:$0xff]
    %v183 = vld [vmem:[#allocation5 + $0x28] sm:$0xff]
    %v184 = vld [vmem:[#allocation5 + $0x30] sm:$0xff]
    %v185 = vld [vmem:[#allocation5 + $0x38] sm:$0xff]
    %v186 = vld [vmem:[#allocation5 + $0x40] sm:$0xff]
    %v187 = vld [vmem:[#allocation5 + $0x48] sm:$0xff]
    %v188 = vld [vmem:[#allocation5 + $0x50] sm:$0xff]
    %v189 = vld [vmem:[#allocation5 + $0x58] sm:$0xff]
    %v190 = vld [vmem:[#allocation5 + $0x60] sm:$0xff]
    %v191 = vld [vmem:[#allocation5 + $0x68] sm:$0xff]
    %v192 = vld [vmem:[#allocation5 + $0x70] sm:$0xff]
    %v193 = vld [vmem:[#allocation5 + $0x78] sm:$0xff]
    %v194 = vld [vmem:[#allocation5 + $0x80] sm:$0xff]
    %v195 = vld [vmem:[#allocation5 + $0x88] sm:$0xff]
    %v196 = vld [vmem:[#allocation5 + $0x90] sm:$0xff]
    %v197 = vld [vmem:[#allocation5 + $0x98] sm:$0xff]
    %v198 = vld [vmem:[#allocation5 + $0xa0] sm:$0xff]
    %v199 = vld [vmem:[#allocation5 + $0xa8] sm:$0xff]
    %v200 = vld [vmem:[#allocation5 + $0xb0] sm:$0xff]
    %v201 = vld [vmem:[#allocation5 + $0xb8] sm:$0xff]
    %v202 = vld [vmem:[#allocation5 + $0xc0] sm:$0xff]
    %v203 = vld [vmem:[#allocation5 + $0xc8] sm:$0xff]
    %v204 = vld [vmem:[#allocation5 + $0xd0] sm:$0xff]
    %v205 = vld [vmem:[#allocation5 + $0xd8] sm:$0xff]
    %v206 = vld [vmem:[#allocation5 + $0xe0] sm:$0xff]
    %v207 = vld [vmem:[#allocation5 + $0xe8] sm:$0xff]
    %v208 = vld [vmem:[#allocation5 + $0xf0] sm:$0xff]
    %v209 = vld [vmem:[#allocation5 + $0xf8] sm:$0xff]
    %v210 = vld [vmem:[#allocation5 + $0x100] sm:$0xff]
    %v211 = vld [vmem:[#allocation5 + $0x108] sm:$0xff]
    %v212 = vld [vmem:[#allocation5 + $0x110] sm:$0xff]
    %v213 = vld [vmem:[#allocation5 + $0x118] sm:$0xff]
    %v214 = vld [vmem:[#allocation5 + $0x120] sm:$0xff]
    %v215 = vld [vmem:[#allocation5 + $0x128] sm:$0xff]
    %v216 = vld [vmem:[#allocation5 + $0x130] sm:$0xff]
    %v217 = vld [vmem:[#allocation5 + $0x138] sm:$0xff]
    %v218 = vld [vmem:[#allocation5 + $0x140] sm:$0xff]
    %v219 = vld [vmem:[#allocation5 + $0x148] sm:$0xff]
    %v220 = vld [vmem:[#allocation5 + $0x150] sm:$0xff]
    %v221 = vld [vmem:[#allocation5 + $0x158] sm:$0xff]
    %v222 = vld [vmem:[#allocation5 + $0x160] sm:$0xff]
    %v223 = vld [vmem:[#allocation5 + $0x168] sm:$0xff]
    %v224 = vld [vmem:[#allocation5 + $0x170] sm:$0xff]
    %v225 = vld [vmem:[#allocation5 + $0x178] sm:$0xff]
    %v226 = vld [vmem:[#allocation5 + $0x180] sm:$0xff]
    %v227 = vld [vmem:[#allocation5 + $0x188] sm:$0xff]
    %v228 = vld [vmem:[#allocation5 + $0x190] sm:$0xff]
    %v229 = vld [vmem:[#allocation5 + $0x198] sm:$0xff]
    %v230 = vld [vmem:[#allocation5 + $0x1a0] sm:$0xff]
    %v231 = vld [vmem:[#allocation5 + $0x1a8] sm:$0xff]
    %v232 = vld [vmem:[#allocation5 + $0x1b0] sm:$0xff]
    %v233 = vld [vmem:[#allocation5 + $0x1b8] sm:$0xff]
    %v234 = vld [vmem:[#allocation5 + $0x1c0] sm:$0xff]
    %v235 = vld [vmem:[#allocation5 + $0x1c8] sm:$0xff]
    %v236 = vld [vmem:[#allocation5 + $0x1d0] sm:$0xff]
    %v237 = vld [vmem:[#allocation5 + $0x1d8] sm:$0xff]
    %v238 = vld [vmem:[#allocation5 + $0x1e0] sm:$0xff]
    %v239 = vld [vmem:[#allocation5 + $0x1e8] sm:$0xff]
    %v240 = vld [vmem:[#allocation5 + $0x1f0] sm:$0xff]
    %v241 = vld [vmem:[#allocation5 + $0x1f8] sm:$0xff]
    %v242 = vld [vmem:[#allocation5 + $0x200] sm:$0xff]
    %v243 = vld [vmem:[#allocation5 + $0x208] sm:$0xff]
    %v244 = vld [vmem:[#allocation5 + $0x210] sm:$0xff]
    %v245 = vld [vmem:[#allocation5 + $0x218] sm:$0xff]
    %v246 = vld [vmem:[#allocation5 + $0x220] sm:$0xff]
    %v247 = vld [vmem:[#allocation5 + $0x228] sm:$0xff]
    %v248 = vld [vmem:[#allocation5 + $0x230] sm:$0xff]
    %v249 = vld [vmem:[#allocation5 + $0x238] sm:$0xff]
    %v250 = vld [vmem:[#allocation8] sm:$0x1]
    %v251 = vld [vmem:[#allocation8 + $0x1] sm:$0x1]
    %v252 = vld [vmem:[#allocation8 + $0x2] sm:$0x1]
    %v253 = vld [vmem:[#allocation8 + $0x3] sm:$0x1]
    %v254 = vld [vmem:[#allocation7] sm:$0xff]
    %v255 = vld [vmem:[#allocation7 + $0x8] sm:$0xff]
    %v256 = vld [vmem:[#allocation7 + $0x10] sm:$0xff]
    %v257 = vld [vmem:[#allocation7 + $0x18] sm:$0xff]
    %v258 = vld [vmem:[#allocation7 + $0x20] sm:$0xff]
    %v259 = vld [vmem:[#allocation7 + $0x28] sm:$0xff]
    %v260 = vld [vmem:[#allocation7 + $0x30] sm:$0xff]
    %v261 = vld [vmem:[#allocation7 + $0x38] sm:$0xff]
    %vm262 = vcmask 523264
    %v264 = vsel %vm262, %v106, 0
    %v267 = vsel %vm262, %v107, 0
    %v270 = vsel %vm262, %v108, 0
    %v273 = vsel %vm262, %v109, 0
    %v276 = vsel %vm262, %v110, 0
    %v279 = vsel %vm262, %v111, 0
    %v282 = vsel %vm262, %v112, 0
    %v285 = vsel %vm262, %v113, 0
    %v288 = vsel %vm262, %v114, 0
    %v291 = vsel %vm262, %v115, 0
    %v294 = vsel %vm262, %v116, 0
    %v297 = vsel %vm262, %v117, 0
    %v300 = vsel %vm262, %v118, 0
    %v303 = vsel %vm262, %v119, 0
    %v306 = vsel %vm262, %v120, 0
    %v309 = vsel %vm262, %v121, 0
    %v312 = vsel %vm262, %v122, 0
    %v315 = vsel %vm262, %v123, 0
    %v318 = vsel %vm262, %v124, 0
    %v321 = vsel %vm262, %v125, 0
    %v324 = vsel %vm262, %v126, 0
    %v327 = vsel %vm262, %v127, 0
    %v330 = vsel %vm262, %v128, 0
    %v333 = vsel %vm262, %v129, 0
    %v336 = vsel %vm262, %v130, 0
    %v339 = vsel %vm262, %v131, 0
    %v342 = vsel %vm262, %v132, 0
    %v345 = vsel %vm262, %v133, 0
    %v348 = vsel %vm262, %v134, 0
    %v351 = vsel %vm262, %v135, 0
    %v354 = vsel %vm262, %v136, 0
    %v357 = vsel %vm262, %v137, 0
    %v360 = vsel %vm262, %v138, 0
    %v363 = vsel %vm262, %v139, 0
    %v366 = vsel %vm262, %v140, 0
    %v369 = vsel %vm262, %v141, 0
    %v372 = vsel %vm262, %v142, 0
    %v375 = vsel %vm262, %v143, 0
    %v378 = vsel %vm262, %v144, 0
    %v381 = vsel %vm262, %v145, 0
    %v384 = vsel %vm262, %v146, 0
    %v387 = vsel %vm262, %v147, 0
    %v390 = vsel %vm262, %v148, 0
    %v393 = vsel %vm262, %v149, 0
    %v396 = vsel %vm262, %v150, 0
    %v399 = vsel %vm262, %v151, 0
    %v402 = vsel %vm262, %v152, 0
    %v405 = vsel %vm262, %v153, 0
    %v408 = vsel %vm262, %v154, 0
    %v411 = vsel %vm262, %v155, 0
    %v414 = vsel %vm262, %v156, 0
    %v417 = vsel %vm262, %v157, 0
    %v420 = vsel %vm262, %v158, 0
    %v423 = vsel %vm262, %v159, 0
    %v426 = vsel %vm262, %v160, 0
    %v429 = vsel %vm262, %v161, 0
    %v432 = vsel %vm262, %v162, 0
    %v435 = vsel %vm262, %v163, 0
    %v438 = vsel %vm262, %v164, 0
    %v441 = vsel %vm262, %v165, 0
    %v444 = vsel %vm262, %v166, 0
    %v447 = vsel %vm262, %v167, 0
    %v450 = vsel %vm262, %v168, 0
    %v453 = vsel %vm262, %v169, 0
    %v456 = vsel %vm262, %v170, 0
    %v459 = vsel %vm262, %v171, 0
    %v462 = vsel %vm262, %v172, 0
    %v465 = vsel %vm262, %v173, 0
    %v468 = vsel %vm262, %v174, 0
    %v471 = vsel %vm262, %v175, 0
    %v474 = vsel %vm262, %v176, 0
    %v477 = vsel %vm262, %v177, 0
    %479 = vmatprep.subr.mxu0 0.0
    %480 = vmatpush1.msra.mxu0 %v254
    %481 = vmatprep.subr.mxu0 0.0
    %482 = vmatpush1.msra.mxu0 %v255
    %483 = vmatprep.subr.mxu0 0.0
    %484 = vmatpush1.msra.mxu0 %v256
    %485 = vmatprep.subr.mxu0 0.0
    %486 = vmatpush1.msra.mxu0 %v257
    %487 = vmatprep.subr.mxu0 0.0
    %488 = vmatpush1.msra.mxu0 %v258
    %489 = vmatprep.subr.mxu0 0.0
    %490 = vmatpush1.msra.mxu0 %v259
    %491 = vmatprep.subr.mxu0 0.0
    %492 = vmatpush1.msra.mxu0 %v260
    %493 = vmatprep.subr.mxu0 0.0
    %494 = vmatpush1.msra.mxu0 %v261
    %495 = vmatprep.subr.mxu0 0.0
    %496 = vmatpush1.msra.mxu0 0.0
    %497 = vmatprep.subr.mxu0 0.0
    %498 = vmatpush1.msra.mxu0 0.0
    %499 = vmatprep.subr.mxu0 0.0
    %500 = vmatpush1.msra.mxu0 0.0
    %501 = vmatprep.subr.mxu0 0.0
    %502 = vmatpush1.msra.mxu0 0.0
    %503 = vmatprep.subr.mxu0 0.0
    %504 = vmatpush1.msra.mxu0 0.0
    %505 = vmatprep.subr.mxu0 0.0
    %506 = vmatpush1.msra.mxu0 0.0
    %507 = vmatprep.subr.mxu0 0.0
    %508 = vmatpush1.msra.mxu0 0.0
    %509 = vmatprep.subr.mxu0 0.0
    %510 = vmatpush1.msra.mxu0 0.0
    %511 = vmatprep.subr.mxu0 0.0
    %512 = vmatpush1.msra.mxu0 0.0
    %513 = vmatprep.subr.mxu0 0.0
    %514 = vmatpush1.msra.mxu0 0.0
    %515 = vmatprep.subr.mxu0 0.0
    %516 = vmatpush1.msra.mxu0 0.0
    %517 = vmatprep.subr.mxu0 0.0
    %518 = vmatpush1.msra.mxu0 0.0
    %519 = vmatprep.subr.mxu0 0.0
    %520 = vmatpush1.msra.mxu0 0.0
    %521 = vmatprep.subr.mxu0 0.0
    %522 = vmatpush1.msra.mxu0 0.0
    %523 = vmatprep.subr.mxu0 0.0
    %524 = vmatpush1.msra.mxu0 0.0
    %525 = vmatprep.subr.mxu0 0.0
    %526 = vmatpush1.msra.mxu0 0.0
    %527 = vmatprep.subr.mxu0 0.0
    %528 = vmatpush1.msra.mxu0 0.0
    %529 = vmatprep.subr.mxu0 0.0
    %530 = vmatpush1.msra.mxu0 0.0
    %531 = vmatprep.subr.mxu0 0.0
    %532 = vmatpush1.msra.mxu0 0.0
    %533 = vmatprep.subr.mxu0 0.0
    %534 = vmatpush1.msra.mxu0 0.0
    %535 = vmatprep.subr.mxu0 0.0
    %536 = vmatpush1.msra.mxu0 0.0
    %537 = vmatprep.subr.mxu0 0.0
    %538 = vmatpush1.msra.mxu0 0.0
    %539 = vmatprep.subr.mxu0 0.0
    %540 = vmatpush1.msra.mxu0 0.0
    %541 = vmatprep.subr.mxu0 0.0
    %542 = vmatpush1.msra.mxu0 0.0
    %543 = vmatprep.mubr.f32.mxu0 0.0
    %544 = vmatmul.mubr.f32.gmra.mrb[0].mxu0 %v264
    %v545 = vpop.f32.mrb[0].mxu0
    %v546 = vadd.f32 0.0, %v545
    %v547 = vpop.f32.mrb[0].mxu0
    %548 = vmatprep.mubr.f32.mxu0 0.0
    %549 = vmatmul.mubr.f32.gmra.mrb[0].mxu0 %v267
    %v550 = vpop.f32.mrb[0].mxu0
    %v551 = vadd.f32 0.0, %v550
    %v552 = vpop.f32.mrb[0].mxu0
    %553 = vmatprep.mubr.f32.mxu0 0.0
    %554 = vmatmul.mubr.f32.gmra.mrb[0].mxu0 %v270
    %v555 = vpop.f32.mrb[0].mxu0
    %v556 = vadd.f32 0.0, %v555
    %v557 = vpop.f32.mrb[0].mxu0
    %558 = vmatprep.mubr.f32.mxu0 0.0
    %559 = vmatmul.mubr.f32.gmra.mrb[0].mxu0 %v273
    %v560 = vpop.f32.mrb[0].mxu0
    %v561 = vadd.f32 0.0, %v560
    %v562 = vpop.f32.mrb[0].mxu0
    %563 = vmatprep.mubr.f32.mxu0 0.0
    %564 = vmatmul.mubr.f32.gmra.mrb[0].mxu0 %v276
    %v565 = vpop.f32.mrb[0].mxu0
    %v566 = vadd.f32 0.0, %v565
    %v567 = vpop.f32.mrb[0].mxu0
    %568 = vmatprep.mubr.f32.mxu0 0.0
    %569 = vmatmul.mubr.f32.gmra.mrb[0].mxu0 %v279
    %v570 = vpop.f32.mrb[0].mxu0
    %v571 = vadd.f32 0.0, %v570
    %v572 = vpop.f32.mrb[0].mxu0
    %573 = vmatprep.mubr.f32.mxu0 0.0
    %574 = vmatmul.mubr.f32.gmra.mrb[0].mxu0 %v282
    %v575 = vpop.f32.mrb[0].mxu0
    %v576 = vadd.f32 0.0, %v575
    %v577 = vpop.f32.mrb[0].mxu0
    %578 = vmatprep.mubr.f32.mxu0 0.0
    %579 = vmatmul.mubr.f32.gmra.mrb[0].mxu0 %v285
    %v580 = vpop.f32.mrb[0].mxu0
    %v581 = vadd.f32 0.0, %v580
    %v582 = vpop.f32.mrb[0].mxu0
    %583 = vmatprep.mubr.f32.mxu0 0.0
    %584 = vmatmul.mubr.f32.gmra.mrb[0].mxu0 %v288
    %v585 = vpop.f32.mrb[0].mxu0
    %v586 = vadd.f32 0.0, %v585
    %v587 = vpop.f32.mrb[0].mxu0
    %588 = vmatprep.mubr.f32.mxu0 0.0
    %589 = vmatmul.mubr.f32.gmra.mrb[0].mxu0 %v291
    %v590 = vpop.f32.mrb[0].mxu0
    %v591 = vadd.f32 0.0, %v590
    %v592 = vpop.f32.mrb[0].mxu0
    %593 = vmatprep.mubr.f32.mxu0 0.0
    %594 = vmatmul.mubr.f32.gmra.mrb[0].mxu0 %v294
    %v595 = vpop.f32.mrb[0].mxu0
    %v596 = vadd.f32 0.0, %v595
    %v597 = vpop.f32.mrb[0].mxu0
    %598 = vmatprep.mubr.f32.mxu0 0.0
    %599 = vmatmul.mubr.f32.gmra.mrb[0].mxu0 %v297
    %v600 = vpop.f32.mrb[0].mxu0
    %v601 = vadd.f32 0.0, %v600
    %v602 = vpop.f32.mrb[0].mxu0
    %603 = vmatprep.mubr.f32.mxu0 0.0
    %604 = vmatmul.mubr.f32.gmra.mrb[0].mxu0 %v300
    %v605 = vpop.f32.mrb[0].mxu0
    %v606 = vadd.f32 0.0, %v605
    %v607 = vpop.f32.mrb[0].mxu0
    %608 = vmatprep.mubr.f32.mxu0 0.0
    %609 = vmatmul.mubr.f32.gmra.mrb[0].mxu0 %v303
    %v610 = vpop.f32.mrb[0].mxu0
    %v611 = vadd.f32 0.0, %v610
    %v612 = vpop.f32.mrb[0].mxu0
    %613 = vmatprep.mubr.f32.mxu0 0.0
    %614 = vmatmul.mubr.f32.gmra.mrb[0].mxu0 %v306
    %v615 = vpop.f32.mrb[0].mxu0
    %v616 = vadd.f32 0.0, %v615
    %v617 = vpop.f32.mrb[0].mxu0
    %618 = vmatprep.mubr.f32.mxu0 0.0
    %619 = vmatmul.mubr.f32.gmra.mrb[0].mxu0 %v309
    %v620 = vpop.f32.mrb[0].mxu0
    %v621 = vadd.f32 0.0, %v620
    %v622 = vpop.f32.mrb[0].mxu0
    %623 = vmatprep.mubr.f32.mxu0 0.0
    %624 = vmatmul.mubr.f32.gmra.mrb[0].mxu0 %v312
    %v625 = vpop.f32.mrb[0].mxu0
    %v626 = vadd.f32 0.0, %v625
    %v627 = vpop.f32.mrb[0].mxu0
    %628 = vmatprep.mubr.f32.mxu0 0.0
    %629 = vmatmul.mubr.f32.gmra.mrb[0].mxu0 %v315
    %v630 = vpop.f32.mrb[0].mxu0
    %v631 = vadd.f32 0.0, %v630
    %v632 = vpop.f32.mrb[0].mxu0
    %633 = vmatprep.mubr.f32.mxu0 0.0
    %634 = vmatmul.mubr.f32.gmra.mrb[0].mxu0 %v318
    %v635 = vpop.f32.mrb[0].mxu0
    %v636 = vadd.f32 0.0, %v635
    %v637 = vpop.f32.mrb[0].mxu0
    %638 = vmatprep.mubr.f32.mxu0 0.0
    %639 = vmatmul.mubr.f32.gmra.mrb[0].mxu0 %v321
    %v640 = vpop.f32.mrb[0].mxu0
    %v641 = vadd.f32 0.0, %v640
    %v642 = vpop.f32.mrb[0].mxu0
    %643 = vmatprep.mubr.f32.mxu0 0.0
    %644 = vmatmul.mubr.f32.gmra.mrb[0].mxu0 %v324
    %v645 = vpop.f32.mrb[0].mxu0
    %v646 = vadd.f32 0.0, %v645
    %v647 = vpop.f32.mrb[0].mxu0
    %648 = vmatprep.mubr.f32.mxu0 0.0
    %649 = vmatmul.mubr.f32.gmra.mrb[0].mxu0 %v327
    %v650 = vpop.f32.mrb[0].mxu0
    %v651 = vadd.f32 0.0, %v650
    %v652 = vpop.f32.mrb[0].mxu0
    %653 = vmatprep.mubr.f32.mxu0 0.0
    %654 = vmatmul.mubr.f32.gmra.mrb[0].mxu0 %v330
    %v655 = vpop.f32.mrb[0].mxu0
    %v656 = vadd.f32 0.0, %v655
    %v657 = vpop.f32.mrb[0].mxu0
    %658 = vmatprep.mubr.f32.mxu0 0.0
    %659 = vmatmul.mubr.f32.gmra.mrb[0].mxu0 %v333
    %v660 = vpop.f32.mrb[0].mxu0
    %v661 = vadd.f32 0.0, %v660
    %v662 = vpop.f32.mrb[0].mxu0
    %663 = vmatprep.mubr.f32.mxu0 0.0
    %664 = vmatmul.mubr.f32.gmra.mrb[0].mxu0 %v336
    %v665 = vpop.f32.mrb[0].mxu0
    %v666 = vadd.f32 0.0, %v665
    %v667 = vpop.f32.mrb[0].mxu0
    %668 = vmatprep.mubr.f32.mxu0 0.0
    %669 = vmatmul.mubr.f32.gmra.mrb[0].mxu0 %v339
    %v670 = vpop.f32.mrb[0].mxu0
    %v671 = vadd.f32 0.0, %v670
    %v672 = vpop.f32.mrb[0].mxu0
    %673 = vmatprep.mubr.f32.mxu0 0.0
    %674 = vmatmul.mubr.f32.gmra.mrb[0].mxu0 %v342
    %v675 = vpop.f32.mrb[0].mxu0
    %v676 = vadd.f32 0.0, %v675
    %v677 = vpop.f32.mrb[0].mxu0
    %678 = vmatprep.mubr.f32.mxu0 0.0
    %679 = vmatmul.mubr.f32.gmra.mrb[0].mxu0 %v345
    %v680 = vpop.f32.mrb[0].mxu0
    %v681 = vadd.f32 0.0, %v680
    %v682 = vpop.f32.mrb[0].mxu0
    %683 = vmatprep.mubr.f32.mxu0 0.0
    %684 = vmatmul.mubr.f32.gmra.mrb[0].mxu0 %v348
    %v685 = vpop.f32.mrb[0].mxu0
    %v686 = vadd.f32 0.0, %v685
    %v687 = vpop.f32.mrb[0].mxu0
    %688 = vmatprep.mubr.f32.mxu0 0.0
    %689 = vmatmul.mubr.f32.gmra.mrb[0].mxu0 %v351
    %v690 = vpop.f32.mrb[0].mxu0
    %v691 = vadd.f32 0.0, %v690
    %v692 = vpop.f32.mrb[0].mxu0
    %693 = vmatprep.mubr.f32.mxu0 0.0
    %694 = vmatmul.mubr.f32.gmra.mrb[0].mxu0 %v354
    %v695 = vpop.f32.mrb[0].mxu0
    %v696 = vadd.f32 0.0, %v695
    %v697 = vpop.f32.mrb[0].mxu0
    %698 = vmatprep.mubr.f32.mxu0 0.0
    %699 = vmatmul.mubr.f32.gmra.mrb[0].mxu0 %v357
    %v700 = vpop.f32.mrb[0].mxu0
    %v701 = vadd.f32 0.0, %v700
    %v702 = vpop.f32.mrb[0].mxu0
    %703 = vmatprep.mubr.f32.mxu0 0.0
    %704 = vmatmul.mubr.f32.gmra.mrb[0].mxu0 %v360
    %v705 = vpop.f32.mrb[0].mxu0
    %v706 = vadd.f32 0.0, %v705
    %v707 = vpop.f32.mrb[0].mxu0
    %708 = vmatprep.mubr.f32.mxu0 0.0
    %709 = vmatmul.mubr.f32.gmra.mrb[0].mxu0 %v363
    %v710 = vpop.f32.mrb[0].mxu0
    %v711 = vadd.f32 0.0, %v710
    %v712 = vpop.f32.mrb[0].mxu0
    %713 = vmatprep.mubr.f32.mxu0 0.0
    %714 = vmatmul.mubr.f32.gmra.mrb[0].mxu0 %v366
    %v715 = vpop.f32.mrb[0].mxu0
    %v716 = vadd.f32 0.0, %v715
    %v717 = vpop.f32.mrb[0].mxu0
    %718 = vmatprep.mubr.f32.mxu0 0.0
    %719 = vmatmul.mubr.f32.gmra.mrb[0].mxu0 %v369
    %v720 = vpop.f32.mrb[0].mxu0
    %v721 = vadd.f32 0.0, %v720
    %v722 = vpop.f32.mrb[0].mxu0
    %723 = vmatprep.mubr.f32.mxu0 0.0
    %724 = vmatmul.mubr.f32.gmra.mrb[0].mxu0 %v372
    %v725 = vpop.f32.mrb[0].mxu0
    %v726 = vadd.f32 0.0, %v725
    %v727 = vpop.f32.mrb[0].mxu0
    %728 = vmatprep.mubr.f32.mxu0 0.0
    %729 = vmatmul.mubr.f32.gmra.mrb[0].mxu0 %v375
    %v730 = vpop.f32.mrb[0].mxu0
    %v731 = vadd.f32 0.0, %v730
    %v732 = vpop.f32.mrb[0].mxu0
    %733 = vmatprep.mubr.f32.mxu0 0.0
    %734 = vmatmul.mubr.f32.gmra.mrb[0].mxu0 %v378
    %v735 = vpop.f32.mrb[0].mxu0
    %v736 = vadd.f32 0.0, %v735
    %v737 = vpop.f32.mrb[0].mxu0
    %738 = vmatprep.mubr.f32.mxu0 0.0
    %739 = vmatmul.mubr.f32.gmra.mrb[0].mxu0 %v381
    %v740 = vpop.f32.mrb[0].mxu0
    %v741 = vadd.f32 0.0, %v740
    %v742 = vpop.f32.mrb[0].mxu0
    %743 = vmatprep.mubr.f32.mxu0 0.0
    %744 = vmatmul.mubr.f32.gmra.mrb[0].mxu0 %v384
    %v745 = vpop.f32.mrb[0].mxu0
    %v746 = vadd.f32 0.0, %v745
    %v747 = vpop.f32.mrb[0].mxu0
    %748 = vmatprep.mubr.f32.mxu0 0.0
    %749 = vmatmul.mubr.f32.gmra.mrb[0].mxu0 %v387
    %v750 = vpop.f32.mrb[0].mxu0
    %v751 = vadd.f32 0.0, %v750
    %v752 = vpop.f32.mrb[0].mxu0
    %753 = vmatprep.mubr.f32.mxu0 0.0
    %754 = vmatmul.mubr.f32.gmra.mrb[0].mxu0 %v390
    %v755 = vpop.f32.mrb[0].mxu0
    %v756 = vadd.f32 0.0, %v755
    %v757 = vpop.f32.mrb[0].mxu0
    %758 = vmatprep.mubr.f32.mxu0 0.0
    %759 = vmatmul.mubr.f32.gmra.mrb[0].mxu0 %v393
    %v760 = vpop.f32.mrb[0].mxu0
    %v761 = vadd.f32 0.0, %v760
    %v762 = vpop.f32.mrb[0].mxu0
    %763 = vmatprep.mubr.f32.mxu0 0.0
    %764 = vmatmul.mubr.f32.gmra.mrb[0].mxu0 %v396
    %v765 = vpop.f32.mrb[0].mxu0
    %v766 = vadd.f32 0.0, %v765
    %v767 = vpop.f32.mrb[0].mxu0
    %768 = vmatprep.mubr.f32.mxu0 0.0
    %769 = vmatmul.mubr.f32.gmra.mrb[0].mxu0 %v399
    %v770 = vpop.f32.mrb[0].mxu0
    %v771 = vadd.f32 0.0, %v770
    %v772 = vpop.f32.mrb[0].mxu0
    %773 = vmatprep.mubr.f32.mxu0 0.0
    %774 = vmatmul.mubr.f32.gmra.mrb[0].mxu0 %v402
    %v775 = vpop.f32.mrb[0].mxu0
    %v776 = vadd.f32 0.0, %v775
    %v777 = vpop.f32.mrb[0].mxu0
    %778 = vmatprep.mubr.f32.mxu0 0.0
    %779 = vmatmul.mubr.f32.gmra.mrb[0].mxu0 %v405
    %v780 = vpop.f32.mrb[0].mxu0
    %v781 = vadd.f32 0.0, %v780
    %v782 = vpop.f32.mrb[0].mxu0
    %783 = vmatprep.mubr.f32.mxu0 0.0
    %784 = vmatmul.mubr.f32.gmra.mrb[0].mxu0 %v408
    %v785 = vpop.f32.mrb[0].mxu0
    %v786 = vadd.f32 0.0, %v785
    %v787 = vpop.f32.mrb[0].mxu0
    %788 = vmatprep.mubr.f32.mxu0 0.0
    %789 = vmatmul.mubr.f32.gmra.mrb[0].mxu0 %v411
    %v790 = vpop.f32.mrb[0].mxu0
    %v791 = vadd.f32 0.0, %v790
    %v792 = vpop.f32.mrb[0].mxu0
    %793 = vmatprep.mubr.f32.mxu0 0.0
    %794 = vmatmul.mubr.f32.gmra.mrb[0].mxu0 %v414
    %v795 = vpop.f32.mrb[0].mxu0
    %v796 = vadd.f32 0.0, %v795
    %v797 = vpop.f32.mrb[0].mxu0
    %798 = vmatprep.mubr.f32.mxu0 0.0
    %799 = vmatmul.mubr.f32.gmra.mrb[0].mxu0 %v417
    %v800 = vpop.f32.mrb[0].mxu0
    %v801 = vadd.f32 0.0, %v800
    %v802 = vpop.f32.mrb[0].mxu0
    %803 = vmatprep.mubr.f32.mxu0 0.0
    %804 = vmatmul.mubr.f32.gmra.mrb[0].mxu0 %v420
    %v805 = vpop.f32.mrb[0].mxu0
    %v806 = vadd.f32 0.0, %v805
    %v807 = vpop.f32.mrb[0].mxu0
    %808 = vmatprep.mubr.f32.mxu0 0.0
    %809 = vmatmul.mubr.f32.gmra.mrb[0].mxu0 %v423
    %v810 = vpop.f32.mrb[0].mxu0
    %v811 = vadd.f32 0.0, %v810
    %v812 = vpop.f32.mrb[0].mxu0
    %813 = vmatprep.mubr.f32.mxu0 0.0
    %814 = vmatmul.mubr.f32.gmra.mrb[0].mxu0 %v426
    %v815 = vpop.f32.mrb[0].mxu0
    %v816 = vadd.f32 0.0, %v815
    %v817 = vpop.f32.mrb[0].mxu0
    %818 = vmatprep.mubr.f32.mxu0 0.0
    %819 = vmatmul.mubr.f32.gmra.mrb[0].mxu0 %v429
    %v820 = vpop.f32.mrb[0].mxu0
    %v821 = vadd.f32 0.0, %v820
    %v822 = vpop.f32.mrb[0].mxu0
    %823 = vmatprep.mubr.f32.mxu0 0.0
    %824 = vmatmul.mubr.f32.gmra.mrb[0].mxu0 %v432
    %v825 = vpop.f32.mrb[0].mxu0
    %v826 = vadd.f32 0.0, %v825
    %v827 = vpop.f32.mrb[0].mxu0
    %828 = vmatprep.mubr.f32.mxu0 0.0
    %829 = vmatmul.mubr.f32.gmra.mrb[0].mxu0 %v435
    %v830 = vpop.f32.mrb[0].mxu0
    %v831 = vadd.f32 0.0, %v830
    %v832 = vpop.f32.mrb[0].mxu0
    %833 = vmatprep.mubr.f32.mxu0 0.0
    %834 = vmatmul.mubr.f32.gmra.mrb[0].mxu0 %v438
    %v835 = vpop.f32.mrb[0].mxu0
    %v836 = vadd.f32 0.0, %v835
    %v837 = vpop.f32.mrb[0].mxu0
    %838 = vmatprep.mubr.f32.mxu0 0.0
    %839 = vmatmul.mubr.f32.gmra.mrb[0].mxu0 %v441
    %v840 = vpop.f32.mrb[0].mxu0
    %v841 = vadd.f32 0.0, %v840
    %v842 = vpop.f32.mrb[0].mxu0
    %843 = vmatprep.mubr.f32.mxu0 0.0
    %844 = vmatmul.mubr.f32.gmra.mrb[0].mxu0 %v444
    %v845 = vpop.f32.mrb[0].mxu0
    %v846 = vadd.f32 0.0, %v845
    %v847 = vpop.f32.mrb[0].mxu0
    %848 = vmatprep.mubr.f32.mxu0 0.0
    %849 = vmatmul.mubr.f32.gmra.mrb[0].mxu0 %v447
    %v850 = vpop.f32.mrb[0].mxu0
    %v851 = vadd.f32 0.0, %v850
    %v852 = vpop.f32.mrb[0].mxu0
    %853 = vmatprep.mubr.f32.mxu0 0.0
    %854 = vmatmul.mubr.f32.gmra.mrb[0].mxu0 %v450
    %v855 = vpop.f32.mrb[0].mxu0
    %v856 = vadd.f32 0.0, %v855
    %v857 = vpop.f32.mrb[0].mxu0
    %858 = vmatprep.mubr.f32.mxu0 0.0
    %859 = vmatmul.mubr.f32.gmra.mrb[0].mxu0 %v453
    %v860 = vpop.f32.mrb[0].mxu0
    %v861 = vadd.f32 0.0, %v860
    %v862 = vpop.f32.mrb[0].mxu0
    %863 = vmatprep.mubr.f32.mxu0 0.0
    %864 = vmatmul.mubr.f32.gmra.mrb[0].mxu0 %v456
    %v865 = vpop.f32.mrb[0].mxu0
    %v866 = vadd.f32 0.0, %v865
    %v867 = vpop.f32.mrb[0].mxu0
    %868 = vmatprep.mubr.f32.mxu0 0.0
    %869 = vmatmul.mubr.f32.gmra.mrb[0].mxu0 %v459
    %v870 = vpop.f32.mrb[0].mxu0
    %v871 = vadd.f32 0.0, %v870
    %v872 = vpop.f32.mrb[0].mxu0
    %873 = vmatprep.mubr.f32.mxu0 0.0
    %874 = vmatmul.mubr.f32.gmra.mrb[0].mxu0 %v462
    %v875 = vpop.f32.mrb[0].mxu0
    %v876 = vadd.f32 0.0, %v875
    %v877 = vpop.f32.mrb[0].mxu0
    %878 = vmatprep.mubr.f32.mxu0 0.0
    %879 = vmatmul.mubr.f32.gmra.mrb[0].mxu0 %v465
    %v880 = vpop.f32.mrb[0].mxu0
    %v881 = vadd.f32 0.0, %v880
    %v882 = vpop.f32.mrb[0].mxu0
    %883 = vmatprep.mubr.f32.mxu0 0.0
    %884 = vmatmul.mubr.f32.gmra.mrb[0].mxu0 %v468
    %v885 = vpop.f32.mrb[0].mxu0
    %v886 = vadd.f32 0.0, %v885
    %v887 = vpop.f32.mrb[0].mxu0
    %888 = vmatprep.mubr.f32.mxu0 0.0
    %889 = vmatmul.mubr.f32.gmra.mrb[0].mxu0 %v471
    %v890 = vpop.f32.mrb[0].mxu0
    %v891 = vadd.f32 0.0, %v890
    %v892 = vpop.f32.mrb[0].mxu0
    %893 = vmatprep.mubr.f32.mxu0 0.0
    %894 = vmatmul.mubr.f32.gmra.mrb[0].mxu0 %v474
    %v895 = vpop.f32.mrb[0].mxu0
    %v896 = vadd.f32 0.0, %v895
    %v897 = vpop.f32.mrb[0].mxu0
    %898 = vmatprep.mubr.f32.mxu0 0.0
    %899 = vmatmul.mubr.f32.gmra.mrb[0].mxu0 %v477
    %v900 = vpop.f32.mrb[0].mxu0
    %v901 = vadd.f32 0.0, %v900
    %v902 = vpop.f32.mrb[0].mxu0
    %903 = vdwg.mxu0
    %vm904 = vcmask 130048
    %v906 = vsel %vm904, %v546, 0
    %v909 = vsel %vm904, %v551, 0
    %911 = vmatprep.subr.mxu0 0.0
    %912 = vmatpush1.msra.mxu0 %v178
    %913 = vmatprep.subr.mxu0 0.0
    %914 = vmatpush1.msra.mxu0 %v179
    %915 = vmatprep.subr.mxu0 0.0
    %916 = vmatpush1.msra.mxu0 0.0
    %917 = vmatprep.subr.mxu0 0.0
    %918 = vmatpush1.msra.mxu0 0.0
    %919 = vmatprep.subr.mxu0 0.0
    %920 = vmatpush1.msra.mxu0 0.0
    %921 = vmatprep.subr.mxu0 0.0
    %922 = vmatpush1.msra.mxu0 0.0
    %923 = vmatprep.subr.mxu0 0.0
    %924 = vmatpush1.msra.mxu0 0.0
    %925 = vmatprep.subr.mxu0 0.0
    %926 = vmatpush1.msra.mxu0 0.0
    %927 = vmatprep.subr.mxu0 0.0
    %928 = vmatpush1.msra.mxu0 0.0
    %929 = vmatprep.subr.mxu0 0.0
    %930 = vmatpush1.msra.mxu0 0.0
    %931 = vmatprep.subr.mxu0 0.0
    %932 = vmatpush1.msra.mxu0 0.0
    %933 = vmatprep.subr.mxu0 0.0
    %934 = vmatpush1.msra.mxu0 0.0
    %935 = vmatprep.subr.mxu0 0.0
    %936 = vmatpush1.msra.mxu0 0.0
    %937 = vmatprep.subr.mxu0 0.0
    %938 = vmatpush1.msra.mxu0 0.0
    %939 = vmatprep.subr.mxu0 0.0
    %940 = vmatpush1.msra.mxu0 0.0
    %941 = vmatprep.subr.mxu0 0.0
    %942 = vmatpush1.msra.mxu0 0.0
    %943 = vmatprep.subr.mxu0 0.0
    %944 = vmatpush1.msra.mxu0 0.0
    %945 = vmatprep.subr.mxu0 0.0
    %946 = vmatpush1.msra.mxu0 0.0
    %947 = vmatprep.subr.mxu0 0.0
    %948 = vmatpush1.msra.mxu0 0.0
    %949 = vmatprep.subr.mxu0 0.0
    %950 = vmatpush1.msra.mxu0 0.0
    %951 = vmatprep.subr.mxu0 0.0
    %952 = vmatpush1.msra.mxu0 0.0
    %953 = vmatprep.subr.mxu0 0.0
    %954 = vmatpush1.msra.mxu0 0.0
    %955 = vmatprep.subr.mxu0 0.0
    %956 = vmatpush1.msra.mxu0 0.0
    %957 = vmatprep.subr.mxu0 0.0
    %958 = vmatpush1.msra.mxu0 0.0
    %959 = vmatprep.subr.mxu0 0.0
    %960 = vmatpush1.msra.mxu0 0.0
    %961 = vmatprep.subr.mxu0 0.0
    %962 = vmatpush1.msra.mxu0 0.0
    %963 = vmatprep.subr.mxu0 0.0
    %964 = vmatpush1.msra.mxu0 0.0
    %965 = vmatprep.subr.mxu0 0.0
    %966 = vmatpush1.msra.mxu0 0.0
    %967 = vmatprep.subr.mxu0 0.0
    %968 = vmatpush1.msra.mxu0 0.0
    %969 = vmatprep.subr.mxu0 0.0
    %970 = vmatpush1.msra.mxu0 0.0
    %971 = vmatprep.subr.mxu0 0.0
    %972 = vmatpush1.msra.mxu0 0.0
    %973 = vmatprep.subr.mxu0 0.0
    %974 = vmatpush1.msra.mxu0 0.0
    %975 = vmatprep.mubr.f32.mxu0 0.0
    %976 = vmatmul.mubr.f32.gmra.mrb[0].mxu0 %v906
    %v977 = vpop.f32.mrb[0].mxu0
    %v978 = vadd.f32 0.0, %v977
    %v979 = vpop.f32.mrb[0].mxu0
    %980 = vmatprep.mubr.f32.mxu0 0.0
    %981 = vmatmul.mubr.f32.gmra.mrb[0].mxu0 %v909
    %v982 = vpop.f32.mrb[0].mxu0
    %v983 = vadd.f32 0.0, %v982
    %v984 = vpop.f32.mrb[0].mxu0
    %985 = vdwg.mxu0
    %v987 = vsel %vm904, %v556, 0
    %v990 = vsel %vm904, %v561, 0
    %992 = vmatprep.subr.mxu0 0.0
    %993 = vmatpush1.msra.mxu0 %v180
    %994 = vmatprep.subr.mxu0 0.0
    %995 = vmatpush1.msra.mxu0 %v181
    %996 = vmatprep.subr.mxu0 0.0
    %997 = vmatpush1.msra.mxu0 0.0
    %998 = vmatprep.subr.mxu0 0.0
    %999 = vmatpush1.msra.mxu0 0.0
    %1000 = vmatprep.subr.mxu0 0.0
    %1001 = vmatpush1.msra.mxu0 0.0
    %1002 = vmatprep.subr.mxu0 0.0
    %1003 = vmatpush1.msra.mxu0 0.0
    %1004 = vmatprep.subr.mxu0 0.0
    %1005 = vmatpush1.msra.mxu0 0.0
    %1006 = vmatprep.subr.mxu0 0.0
    %1007 = vmatpush1.msra.mxu0 0.0
    %1008 = vmatprep.subr.mxu0 0.0
    %1009 = vmatpush1.msra.mxu0 0.0
    %1010 = vmatprep.subr.mxu0 0.0
    %1011 = vmatpush1.msra.mxu0 0.0
    %1012 = vmatprep.subr.mxu0 0.0
    %1013 = vmatpush1.msra.mxu0 0.0
    %1014 = vmatprep.subr.mxu0 0.0
    %1015 = vmatpush1.msra.mxu0 0.0
    %1016 = vmatprep.subr.mxu0 0.0
    %1017 = vmatpush1.msra.mxu0 0.0
    %1018 = vmatprep.subr.mxu0 0.0
    %1019 = vmatpush1.msra.mxu0 0.0
    %1020 = vmatprep.subr.mxu0 0.0
    %1021 = vmatpush1.msra.mxu0 0.0
    %1022 = vmatprep.subr.mxu0 0.0
    %1023 = vmatpush1.msra.mxu0 0.0
    %1024 = vmatprep.subr.mxu0 0.0
    %1025 = vmatpush1.msra.mxu0 0.0
    %1026 = vmatprep.subr.mxu0 0.0
    %1027 = vmatpush1.msra.mxu0 0.0
    %1028 = vmatprep.subr.mxu0 0.0
    %1029 = vmatpush1.msra.mxu0 0.0
    %1030 = vmatprep.subr.mxu0 0.0
    %1031 = vmatpush1.msra.mxu0 0.0
    %1032 = vmatprep.subr.mxu0 0.0
    %1033 = vmatpush1.msra.mxu0 0.0
    %1034 = vmatprep.subr.mxu0 0.0
    %1035 = vmatpush1.msra.mxu0 0.0
    %1036 = vmatprep.subr.mxu0 0.0
    %1037 = vmatpush1.msra.mxu0 0.0
    %1038 = vmatprep.subr.mxu0 0.0
    %1039 = vmatpush1.msra.mxu0 0.0
    %1040 = vmatprep.subr.mxu0 0.0
    %1041 = vmatpush1.msra.mxu0 0.0
    %1042 = vmatprep.subr.mxu0 0.0
    %1043 = vmatpush1.msra.mxu0 0.0
    %1044 = vmatprep.subr.mxu0 0.0
    %1045 = vmatpush1.msra.mxu0 0.0
    %1046 = vmatprep.subr.mxu0 0.0
    %1047 = vmatpush1.msra.mxu0 0.0
    %1048 = vmatprep.subr.mxu0 0.0
    %1049 = vmatpush1.msra.mxu0 0.0
    %1050 = vmatprep.subr.mxu0 0.0
    %1051 = vmatpush1.msra.mxu0 0.0
    %1052 = vmatprep.subr.mxu0 0.0
    %1053 = vmatpush1.msra.mxu0 0.0
    %1054 = vmatprep.subr.mxu0 0.0
    %1055 = vmatpush1.msra.mxu0 0.0
    %1056 = vmatprep.mubr.f32.mxu0 0.0
    %1057 = vmatmul.mubr.f32.gmra.mrb[0].mxu0 %v987
    %v1058 = vpop.f32.mrb[0].mxu0
    %v1059 = vadd.f32 0.0, %v1058
    %v1060 = vpop.f32.mrb[0].mxu0
    %1061 = vmatprep.mubr.f32.mxu0 0.0
    %1062 = vmatmul.mubr.f32.gmra.mrb[0].mxu0 %v990
    %v1063 = vpop.f32.mrb[0].mxu0
    %v1064 = vadd.f32 0.0, %v1063
    %v1065 = vpop.f32.mrb[0].mxu0
    %1066 = vdwg.mxu0
    %v1068 = vsel %vm904, %v566, 0
    %v1071 = vsel %vm904, %v571, 0
    %1073 = vmatprep.subr.mxu0 0.0
    %1074 = vmatpush1.msra.mxu0 %v182
    %1075 = vmatprep.subr.mxu0 0.0
    %1076 = vmatpush1.msra.mxu0 %v183
    %1077 = vmatprep.subr.mxu0 0.0
    %1078 = vmatpush1.msra.mxu0 0.0
    %1079 = vmatprep.subr.mxu0 0.0
    %1080 = vmatpush1.msra.mxu0 0.0
    %1081 = vmatprep.subr.mxu0 0.0
    %1082 = vmatpush1.msra.mxu0 0.0
    %1083 = vmatprep.subr.mxu0 0.0
    %1084 = vmatpush1.msra.mxu0 0.0
    %1085 = vmatprep.subr.mxu0 0.0
    %1086 = vmatpush1.msra.mxu0 0.0
    %1087 = vmatprep.subr.mxu0 0.0
    %1088 = vmatpush1.msra.mxu0 0.0
    %1089 = vmatprep.subr.mxu0 0.0
    %1090 = vmatpush1.msra.mxu0 0.0
    %1091 = vmatprep.subr.mxu0 0.0
    %1092 = vmatpush1.msra.mxu0 0.0
    %1093 = vmatprep.subr.mxu0 0.0
    %1094 = vmatpush1.msra.mxu0 0.0
    %1095 = vmatprep.subr.mxu0 0.0
    %1096 = vmatpush1.msra.mxu0 0.0
    %1097 = vmatprep.subr.mxu0 0.0
    %1098 = vmatpush1.msra.mxu0 0.0
    %1099 = vmatprep.subr.mxu0 0.0
    %1100 = vmatpush1.msra.mxu0 0.0
    %1101 = vmatprep.subr.mxu0 0.0
    %1102 = vmatpush1.msra.mxu0 0.0
    %1103 = vmatprep.subr.mxu0 0.0
    %1104 = vmatpush1.msra.mxu0 0.0
    %1105 = vmatprep.subr.mxu0 0.0
    %1106 = vmatpush1.msra.mxu0 0.0
    %1107 = vmatprep.subr.mxu0 0.0
    %1108 = vmatpush1.msra.mxu0 0.0
    %1109 = vmatprep.subr.mxu0 0.0
    %1110 = vmatpush1.msra.mxu0 0.0
    %1111 = vmatprep.subr.mxu0 0.0
    %1112 = vmatpush1.msra.mxu0 0.0
    %1113 = vmatprep.subr.mxu0 0.0
    %1114 = vmatpush1.msra.mxu0 0.0
    %1115 = vmatprep.subr.mxu0 0.0
    %1116 = vmatpush1.msra.mxu0 0.0
    %1117 = vmatprep.subr.mxu0 0.0
    %1118 = vmatpush1.msra.mxu0 0.0
    %1119 = vmatprep.subr.mxu0 0.0
    %1120 = vmatpush1.msra.mxu0 0.0
    %1121 = vmatprep.subr.mxu0 0.0
    %1122 = vmatpush1.msra.mxu0 0.0
    %1123 = vmatprep.subr.mxu0 0.0
    %1124 = vmatpush1.msra.mxu0 0.0
    %1125 = vmatprep.subr.mxu0 0.0
    %1126 = vmatpush1.msra.mxu0 0.0
    %1127 = vmatprep.subr.mxu0 0.0
    %1128 = vmatpush1.msra.mxu0 0.0
    %1129 = vmatprep.subr.mxu0 0.0
    %1130 = vmatpush1.msra.mxu0 0.0
    %1131 = vmatprep.subr.mxu0 0.0
    %1132 = vmatpush1.msra.mxu0 0.0
    %1133 = vmatprep.subr.mxu0 0.0
    %1134 = vmatpush1.msra.mxu0 0.0
    %1135 = vmatprep.subr.mxu0 0.0
    %1136 = vmatpush1.msra.mxu0 0.0
    %1137 = vmatprep.mubr.f32.mxu0 0.0
    %1138 = vmatmul.mubr.f32.gmra.mrb[0].mxu0 %v1068
    %v1139 = vpop.f32.mrb[0].mxu0
    %v1140 = vadd.f32 0.0, %v1139
    %v1141 = vpop.f32.mrb[0].mxu0
    %1142 = vmatprep.mubr.f32.mxu0 0.0
    %1143 = vmatmul.mubr.f32.gmra.mrb[0].mxu0 %v1071
    %v1144 = vpop.f32.mrb[0].mxu0
    %v1145 = vadd.f32 0.0, %v1144
    %v1146 = vpop.f32.mrb[0].mxu0
    %1147 = vdwg.mxu0
    %v1149 = vsel %vm904, %v576, 0
    %v1152 = vsel %vm904, %v581, 0
    %1154 = vmatprep.subr.mxu0 0.0
    %1155 = vmatpush1.msra.mxu0 %v184
    %1156 = vmatprep.subr.mxu0 0.0
    %1157 = vmatpush1.msra.mxu0 %v185
    %1158 = vmatprep.subr.mxu0 0.0
    %1159 = vmatpush1.msra.mxu0 0.0
    %1160 = vmatprep.subr.mxu0 0.0
    %1161 = vmatpush1.msra.mxu0 0.0
    %1162 = vmatprep.subr.mxu0 0.0
    %1163 = vmatpush1.msra.mxu0 0.0
    %1164 = vmatprep.subr.mxu0 0.0
    %1165 = vmatpush1.msra.mxu0 0.0
    %1166 = vmatprep.subr.mxu0 0.0
    %1167 = vmatpush1.msra.mxu0 0.0
    %1168 = vmatprep.subr.mxu0 0.0
    %1169 = vmatpush1.msra.mxu0 0.0
    %1170 = vmatprep.subr.mxu0 0.0
    %1171 = vmatpush1.msra.mxu0 0.0
    %1172 = vmatprep.subr.mxu0 0.0
    %1173 = vmatpush1.msra.mxu0 0.0
    %1174 = vmatprep.subr.mxu0 0.0
    %1175 = vmatpush1.msra.mxu0 0.0
    %1176 = vmatprep.subr.mxu0 0.0
    %1177 = vmatpush1.msra.mxu0 0.0
    %1178 = vmatprep.subr.mxu0 0.0
    %1179 = vmatpush1.msra.mxu0 0.0
    %1180 = vmatprep.subr.mxu0 0.0
    %1181 = vmatpush1.msra.mxu0 0.0
    %1182 = vmatprep.subr.mxu0 0.0
    %1183 = vmatpush1.msra.mxu0 0.0
    %1184 = vmatprep.subr.mxu0 0.0
    %1185 = vmatpush1.msra.mxu0 0.0
    %1186 = vmatprep.subr.mxu0 0.0
    %1187 = vmatpush1.msra.mxu0 0.0
    %1188 = vmatprep.subr.mxu0 0.0
    %1189 = vmatpush1.msra.mxu0 0.0
    %1190 = vmatprep.subr.mxu0 0.0
    %1191 = vmatpush1.msra.mxu0 0.0
    %1192 = vmatprep.subr.mxu0 0.0
    %1193 = vmatpush1.msra.mxu0 0.0
    %1194 = vmatprep.subr.mxu0 0.0
    %1195 = vmatpush1.msra.mxu0 0.0
    %1196 = vmatprep.subr.mxu0 0.0
    %1197 = vmatpush1.msra.mxu0 0.0
    %1198 = vmatprep.subr.mxu0 0.0
    %1199 = vmatpush1.msra.mxu0 0.0
    %1200 = vmatprep.subr.mxu0 0.0
    %1201 = vmatpush1.msra.mxu0 0.0
    %1202 = vmatprep.subr.mxu0 0.0
    %1203 = vmatpush1.msra.mxu0 0.0
    %1204 = vmatprep.subr.mxu0 0.0
    %1205 = vmatpush1.msra.mxu0 0.0
    %1206 = vmatprep.subr.mxu0 0.0
    %1207 = vmatpush1.msra.mxu0 0.0
    %1208 = vmatprep.subr.mxu0 0.0
    %1209 = vmatpush1.msra.mxu0 0.0
    %1210 = vmatprep.subr.mxu0 0.0
    %1211 = vmatpush1.msra.mxu0 0.0
    %1212 = vmatprep.subr.mxu0 0.0
    %1213 = vmatpush1.msra.mxu0 0.0
    %1214 = vmatprep.subr.mxu0 0.0
    %1215 = vmatpush1.msra.mxu0 0.0
    %1216 = vmatprep.subr.mxu0 0.0
    %1217 = vmatpush1.msra.mxu0 0.0
    %1218 = vmatprep.mubr.f32.mxu0 0.0
    %1219 = vmatmul.mubr.f32.gmra.mrb[0].mxu0 %v1149
    %v1220 = vpop.f32.mrb[0].mxu0
    %v1221 = vadd.f32 0.0, %v1220
    %v1222 = vpop.f32.mrb[0].mxu0
    %1223 = vmatprep.mubr.f32.mxu0 0.0
    %1224 = vmatmul.mubr.f32.gmra.mrb[0].mxu0 %v1152
    %v1225 = vpop.f32.mrb[0].mxu0
    %v1226 = vadd.f32 0.0, %v1225
    %v1227 = vpop.f32.mrb[0].mxu0
    %1228 = vdwg.mxu0
    %v1230 = vsel %vm904, %v586, 0
    %v1233 = vsel %vm904, %v591, 0
    %1235 = vmatprep.subr.mxu0 0.0
    %1236 = vmatpush1.msra.mxu0 %v186
    %1237 = vmatprep.subr.mxu0 0.0
    %1238 = vmatpush1.msra.mxu0 %v187
    %1239 = vmatprep.subr.mxu0 0.0
    %1240 = vmatpush1.msra.mxu0 0.0
    %1241 = vmatprep.subr.mxu0 0.0
    %1242 = vmatpush1.msra.mxu0 0.0
    %1243 = vmatprep.subr.mxu0 0.0
    %1244 = vmatpush1.msra.mxu0 0.0
    %1245 = vmatprep.subr.mxu0 0.0
    %1246 = vmatpush1.msra.mxu0 0.0
    %1247 = vmatprep.subr.mxu0 0.0
    %1248 = vmatpush1.msra.mxu0 0.0
    %1249 = vmatprep.subr.mxu0 0.0
    %1250 = vmatpush1.msra.mxu0 0.0
    %1251 = vmatprep.subr.mxu0 0.0
    %1252 = vmatpush1.msra.mxu0 0.0
    %1253 = vmatprep.subr.mxu0 0.0
    %1254 = vmatpush1.msra.mxu0 0.0
    %1255 = vmatprep.subr.mxu0 0.0
    %1256 = vmatpush1.msra.mxu0 0.0
    %1257 = vmatprep.subr.mxu0 0.0
    %1258 = vmatpush1.msra.mxu0 0.0
    %1259 = vmatprep.subr.mxu0 0.0
    %1260 = vmatpush1.msra.mxu0 0.0
    %1261 = vmatprep.subr.mxu0 0.0
    %1262 = vmatpush1.msra.mxu0 0.0
    %1263 = vmatprep.subr.mxu0 0.0
    %1264 = vmatpush1.msra.mxu0 0.0
    %1265 = vmatprep.subr.mxu0 0.0
    %1266 = vmatpush1.msra.mxu0 0.0
    %1267 = vmatprep.subr.mxu0 0.0
    %1268 = vmatpush1.msra.mxu0 0.0
    %1269 = vmatprep.subr.mxu0 0.0
    %1270 = vmatpush1.msra.mxu0 0.0
    %1271 = vmatprep.subr.mxu0 0.0
    %1272 = vmatpush1.msra.mxu0 0.0
    %1273 = vmatprep.subr.mxu0 0.0
    %1274 = vmatpush1.msra.mxu0 0.0
    %1275 = vmatprep.subr.mxu0 0.0
    %1276 = vmatpush1.msra.mxu0 0.0
    %1277 = vmatprep.subr.mxu0 0.0
    %1278 = vmatpush1.msra.mxu0 0.0
    %1279 = vmatprep.subr.mxu0 0.0
    %1280 = vmatpush1.msra.mxu0 0.0
    %1281 = vmatprep.subr.mxu0 0.0
    %1282 = vmatpush1.msra.mxu0 0.0
    %1283 = vmatprep.subr.mxu0 0.0
    %1284 = vmatpush1.msra.mxu0 0.0
    %1285 = vmatprep.subr.mxu0 0.0
    %1286 = vmatpush1.msra.mxu0 0.0
    %1287 = vmatprep.subr.mxu0 0.0
    %1288 = vmatpush1.msra.mxu0 0.0
    %1289 = vmatprep.subr.mxu0 0.0
    %1290 = vmatpush1.msra.mxu0 0.0
    %1291 = vmatprep.subr.mxu0 0.0
    %1292 = vmatpush1.msra.mxu0 0.0
    %1293 = vmatprep.subr.mxu0 0.0
    %1294 = vmatpush1.msra.mxu0 0.0
    %1295 = vmatprep.subr.mxu0 0.0
    %1296 = vmatpush1.msra.mxu0 0.0
    %1297 = vmatprep.subr.mxu0 0.0
    %1298 = vmatpush1.msra.mxu0 0.0
    %1299 = vmatprep.mubr.f32.mxu0 0.0
    %1300 = vmatmul.mubr.f32.gmra.mrb[0].mxu0 %v1230
    %v1301 = vpop.f32.mrb[0].mxu0
    %v1302 = vadd.f32 0.0, %v1301
    %v1303 = vpop.f32.mrb[0].mxu0
    %1304 = vmatprep.mubr.f32.mxu0 0.0
    %1305 = vmatmul.mubr.f32.gmra.mrb[0].mxu0 %v1233
    %v1306 = vpop.f32.mrb[0].mxu0
    %v1307 = vadd.f32 0.0, %v1306
    %v1308 = vpop.f32.mrb[0].mxu0
    %1309 = vdwg.mxu0
    %v1311 = vsel %vm904, %v596, 0
    %v1314 = vsel %vm904, %v601, 0
    %1316 = vmatprep.subr.mxu0 0.0
    %1317 = vmatpush1.msra.mxu0 %v188
    %1318 = vmatprep.subr.mxu0 0.0
    %1319 = vmatpush1.msra.mxu0 %v189
    %1320 = vmatprep.subr.mxu0 0.0
    %1321 = vmatpush1.msra.mxu0 0.0
    %1322 = vmatprep.subr.mxu0 0.0
    %1323 = vmatpush1.msra.mxu0 0.0
    %1324 = vmatprep.subr.mxu0 0.0
    %1325 = vmatpush1.msra.mxu0 0.0
    %1326 = vmatprep.subr.mxu0 0.0
    %1327 = vmatpush1.msra.mxu0 0.0
    %1328 = vmatprep.subr.mxu0 0.0
    %1329 = vmatpush1.msra.mxu0 0.0
    %1330 = vmatprep.subr.mxu0 0.0
    %1331 = vmatpush1.msra.mxu0 0.0
    %1332 = vmatprep.subr.mxu0 0.0
    %1333 = vmatpush1.msra.mxu0 0.0
    %1334 = vmatprep.subr.mxu0 0.0
    %1335 = vmatpush1.msra.mxu0 0.0
    %1336 = vmatprep.subr.mxu0 0.0
    %1337 = vmatpush1.msra.mxu0 0.0
    %1338 = vmatprep.subr.mxu0 0.0
    %1339 = vmatpush1.msra.mxu0 0.0
    %1340 = vmatprep.subr.mxu0 0.0
    %1341 = vmatpush1.msra.mxu0 0.0
    %1342 = vmatprep.subr.mxu0 0.0
    %1343 = vmatpush1.msra.mxu0 0.0
    %1344 = vmatprep.subr.mxu0 0.0
    %1345 = vmatpush1.msra.mxu0 0.0
    %1346 = vmatprep.subr.mxu0 0.0
    %1347 = vmatpush1.msra.mxu0 0.0
    %1348 = vmatprep.subr.mxu0 0.0
    %1349 = vmatpush1.msra.mxu0 0.0
    %1350 = vmatprep.subr.mxu0 0.0
    %1351 = vmatpush1.msra.mxu0 0.0
    %1352 = vmatprep.subr.mxu0 0.0
    %1353 = vmatpush1.msra.mxu0 0.0
    %1354 = vmatprep.subr.mxu0 0.0
    %1355 = vmatpush1.msra.mxu0 0.0
    %1356 = vmatprep.subr.mxu0 0.0
    %1357 = vmatpush1.msra.mxu0 0.0
    %1358 = vmatprep.subr.mxu0 0.0
    %1359 = vmatpush1.msra.mxu0 0.0
    %1360 = vmatprep.subr.mxu0 0.0
    %1361 = vmatpush1.msra.mxu0 0.0
    %1362 = vmatprep.subr.mxu0 0.0
    %1363 = vmatpush1.msra.mxu0 0.0
    %1364 = vmatprep.subr.mxu0 0.0
    %1365 = vmatpush1.msra.mxu0 0.0
    %1366 = vmatprep.subr.mxu0 0.0
    %1367 = vmatpush1.msra.mxu0 0.0
    %1368 = vmatprep.subr.mxu0 0.0
    %1369 = vmatpush1.msra.mxu0 0.0
    %1370 = vmatprep.subr.mxu0 0.0
    %1371 = vmatpush1.msra.mxu0 0.0
    %1372 = vmatprep.subr.mxu0 0.0
    %1373 = vmatpush1.msra.mxu0 0.0
    %1374 = vmatprep.subr.mxu0 0.0
    %1375 = vmatpush1.msra.mxu0 0.0
    %1376 = vmatprep.subr.mxu0 0.0
    %1377 = vmatpush1.msra.mxu0 0.0
    %1378 = vmatprep.subr.mxu0 0.0
    %1379 = vmatpush1.msra.mxu0 0.0
    %1380 = vmatprep.mubr.f32.mxu0 0.0
    %1381 = vmatmul.mubr.f32.gmra.mrb[0].mxu0 %v1311
    %v1382 = vpop.f32.mrb[0].mxu0
    %v1383 = vadd.f32 0.0, %v1382
    %v1384 = vpop.f32.mrb[0].mxu0
    %1385 = vmatprep.mubr.f32.mxu0 0.0
    %1386 = vmatmul.mubr.f32.gmra.mrb[0].mxu0 %v1314
    %v1387 = vpop.f32.mrb[0].mxu0
    %v1388 = vadd.f32 0.0, %v1387
    %v1389 = vpop.f32.mrb[0].mxu0
    %1390 = vdwg.mxu0
    %v1392 = vsel %vm904, %v606, 0
    %v1395 = vsel %vm904, %v611, 0
    %1397 = vmatprep.subr.mxu0 0.0
    %1398 = vmatpush1.msra.mxu0 %v190
    %1399 = vmatprep.subr.mxu0 0.0
    %1400 = vmatpush1.msra.mxu0 %v191
    %1401 = vmatprep.subr.mxu0 0.0
    %1402 = vmatpush1.msra.mxu0 0.0
    %1403 = vmatprep.subr.mxu0 0.0
    %1404 = vmatpush1.msra.mxu0 0.0
    %1405 = vmatprep.subr.mxu0 0.0
    %1406 = vmatpush1.msra.mxu0 0.0
    %1407 = vmatprep.subr.mxu0 0.0
    %1408 = vmatpush1.msra.mxu0 0.0
    %1409 = vmatprep.subr.mxu0 0.0
    %1410 = vmatpush1.msra.mxu0 0.0
    %1411 = vmatprep.subr.mxu0 0.0
    %1412 = vmatpush1.msra.mxu0 0.0
    %1413 = vmatprep.subr.mxu0 0.0
    %1414 = vmatpush1.msra.mxu0 0.0
    %1415 = vmatprep.subr.mxu0 0.0
    %1416 = vmatpush1.msra.mxu0 0.0
    %1417 = vmatprep.subr.mxu0 0.0
    %1418 = vmatpush1.msra.mxu0 0.0
    %1419 = vmatprep.subr.mxu0 0.0
    %1420 = vmatpush1.msra.mxu0 0.0
    %1421 = vmatprep.subr.mxu0 0.0
    %1422 = vmatpush1.msra.mxu0 0.0
    %1423 = vmatprep.subr.mxu0 0.0
    %1424 = vmatpush1.msra.mxu0 0.0
    %1425 = vmatprep.subr.mxu0 0.0
    %1426 = vmatpush1.msra.mxu0 0.0
    %1427 = vmatprep.subr.mxu0 0.0
    %1428 = vmatpush1.msra.mxu0 0.0
    %1429 = vmatprep.subr.mxu0 0.0
    %1430 = vmatpush1.msra.mxu0 0.0
    %1431 = vmatprep.subr.mxu0 0.0
    %1432 = vmatpush1.msra.mxu0 0.0
    %1433 = vmatprep.subr.mxu0 0.0
    %1434 = vmatpush1.msra.mxu0 0.0
    %1435 = vmatprep.subr.mxu0 0.0
    %1436 = vmatpush1.msra.mxu0 0.0
    %1437 = vmatprep.subr.mxu0 0.0
    %1438 = vmatpush1.msra.mxu0 0.0
    %1439 = vmatprep.subr.mxu0 0.0
    %1440 = vmatpush1.msra.mxu0 0.0
    %1441 = vmatprep.subr.mxu0 0.0
    %1442 = vmatpush1.msra.mxu0 0.0
    %1443 = vmatprep.subr.mxu0 0.0
    %1444 = vmatpush1.msra.mxu0 0.0
    %1445 = vmatprep.subr.mxu0 0.0
    %1446 = vmatpush1.msra.mxu0 0.0
    %1447 = vmatprep.subr.mxu0 0.0
    %1448 = vmatpush1.msra.mxu0 0.0
    %1449 = vmatprep.subr.mxu0 0.0
    %1450 = vmatpush1.msra.mxu0 0.0
    %1451 = vmatprep.subr.mxu0 0.0
    %1452 = vmatpush1.msra.mxu0 0.0
    %1453 = vmatprep.subr.mxu0 0.0
    %1454 = vmatpush1.msra.mxu0 0.0
    %1455 = vmatprep.subr.mxu0 0.0
    %1456 = vmatpush1.msra.mxu0 0.0
    %1457 = vmatprep.subr.mxu0 0.0
    %1458 = vmatpush1.msra.mxu0 0.0
    %1459 = vmatprep.subr.mxu0 0.0
    %1460 = vmatpush1.msra.mxu0 0.0
    %1461 = vmatprep.mubr.f32.mxu0 0.0
    %1462 = vmatmul.mubr.f32.gmra.mrb[0].mxu0 %v1392
    %v1463 = vpop.f32.mrb[0].mxu0
    %v1464 = vadd.f32 0.0, %v1463
    %v1465 = vpop.f32.mrb[0].mxu0
    %1466 = vmatprep.mubr.f32.mxu0 0.0
    %1467 = vmatmul.mubr.f32.gmra.mrb[0].mxu0 %v1395
    %v1468 = vpop.f32.mrb[0].mxu0
    %v1469 = vadd.f32 0.0, %v1468
    %v1470 = vpop.f32.mrb[0].mxu0
    %1471 = vdwg.mxu0
    %v1473 = vsel %vm904, %v616, 0
    %v1476 = vsel %vm904, %v621, 0
    %1478 = vmatprep.subr.mxu0 0.0
    %1479 = vmatpush1.msra.mxu0 %v192
    %1480 = vmatprep.subr.mxu0 0.0
    %1481 = vmatpush1.msra.mxu0 %v193
    %1482 = vmatprep.subr.mxu0 0.0
    %1483 = vmatpush1.msra.mxu0 0.0
    %1484 = vmatprep.subr.mxu0 0.0
    %1485 = vmatpush1.msra.mxu0 0.0
    %1486 = vmatprep.subr.mxu0 0.0
    %1487 = vmatpush1.msra.mxu0 0.0
    %1488 = vmatprep.subr.mxu0 0.0
    %1489 = vmatpush1.msra.mxu0 0.0
    %1490 = vmatprep.subr.mxu0 0.0
    %1491 = vmatpush1.msra.mxu0 0.0
    %1492 = vmatprep.subr.mxu0 0.0
    %1493 = vmatpush1.msra.mxu0 0.0
    %1494 = vmatprep.subr.mxu0 0.0
    %1495 = vmatpush1.msra.mxu0 0.0
    %1496 = vmatprep.subr.mxu0 0.0
    %1497 = vmatpush1.msra.mxu0 0.0
    %1498 = vmatprep.subr.mxu0 0.0
    %1499 = vmatpush1.msra.mxu0 0.0
    %1500 = vmatprep.subr.mxu0 0.0
    %1501 = vmatpush1.msra.mxu0 0.0
    %1502 = vmatprep.subr.mxu0 0.0
    %1503 = vmatpush1.msra.mxu0 0.0
    %1504 = vmatprep.subr.mxu0 0.0
    %1505 = vmatpush1.msra.mxu0 0.0
    %1506 = vmatprep.subr.mxu0 0.0
    %1507 = vmatpush1.msra.mxu0 0.0
    %1508 = vmatprep.subr.mxu0 0.0
    %1509 = vmatpush1.msra.mxu0 0.0
    %1510 = vmatprep.subr.mxu0 0.0
    %1511 = vmatpush1.msra.mxu0 0.0
    %1512 = vmatprep.subr.mxu0 0.0
    %1513 = vmatpush1.msra.mxu0 0.0
    %1514 = vmatprep.subr.mxu0 0.0
    %1515 = vmatpush1.msra.mxu0 0.0
    %1516 = vmatprep.subr.mxu0 0.0
    %1517 = vmatpush1.msra.mxu0 0.0
    %1518 = vmatprep.subr.mxu0 0.0
    %1519 = vmatpush1.msra.mxu0 0.0
    %1520 = vmatprep.subr.mxu0 0.0
    %1521 = vmatpush1.msra.mxu0 0.0
    %1522 = vmatprep.subr.mxu0 0.0
    %1523 = vmatpush1.msra.mxu0 0.0
    %1524 = vmatprep.subr.mxu0 0.0
    %1525 = vmatpush1.msra.mxu0 0.0
    %1526 = vmatprep.subr.mxu0 0.0
    %1527 = vmatpush1.msra.mxu0 0.0
    %1528 = vmatprep.subr.mxu0 0.0
    %1529 = vmatpush1.msra.mxu0 0.0
    %1530 = vmatprep.subr.mxu0 0.0
    %1531 = vmatpush1.msra.mxu0 0.0
    %1532 = vmatprep.subr.mxu0 0.0
    %1533 = vmatpush1.msra.mxu0 0.0
    %1534 = vmatprep.subr.mxu0 0.0
    %1535 = vmatpush1.msra.mxu0 0.0
    %1536 = vmatprep.subr.mxu0 0.0
    %1537 = vmatpush1.msra.mxu0 0.0
    %1538 = vmatprep.subr.mxu0 0.0
    %1539 = vmatpush1.msra.mxu0 0.0
    %1540 = vmatprep.subr.mxu0 0.0
    %1541 = vmatpush1.msra.mxu0 0.0
    %1542 = vmatprep.mubr.f32.mxu0 0.0
    %1543 = vmatmul.mubr.f32.gmra.mrb[0].mxu0 %v1473
    %v1544 = vpop.f32.mrb[0].mxu0
    %v1545 = vadd.f32 0.0, %v1544
    %v1546 = vpop.f32.mrb[0].mxu0
    %1547 = vmatprep.mubr.f32.mxu0 0.0
    %1548 = vmatmul.mubr.f32.gmra.mrb[0].mxu0 %v1476
    %v1549 = vpop.f32.mrb[0].mxu0
    %v1550 = vadd.f32 0.0, %v1549
    %v1551 = vpop.f32.mrb[0].mxu0
    %1552 = vdwg.mxu0
    %v1554 = vsel %vm904, %v626, 0
    %v1557 = vsel %vm904, %v631, 0
    %1559 = vmatprep.subr.mxu0 0.0
    %1560 = vmatpush1.msra.mxu0 %v194
    %1561 = vmatprep.subr.mxu0 0.0
    %1562 = vmatpush1.msra.mxu0 %v195
    %1563 = vmatprep.subr.mxu0 0.0
    %1564 = vmatpush1.msra.mxu0 0.0
    %1565 = vmatprep.subr.mxu0 0.0
    %1566 = vmatpush1.msra.mxu0 0.0
    %1567 = vmatprep.subr.mxu0 0.0
    %1568 = vmatpush1.msra.mxu0 0.0
    %1569 = vmatprep.subr.mxu0 0.0
    %1570 = vmatpush1.msra.mxu0 0.0
    %1571 = vmatprep.subr.mxu0 0.0
    %1572 = vmatpush1.msra.mxu0 0.0
    %1573 = vmatprep.subr.mxu0 0.0
    %1574 = vmatpush1.msra.mxu0 0.0
    %1575 = vmatprep.subr.mxu0 0.0
    %1576 = vmatpush1.msra.mxu0 0.0
    %1577 = vmatprep.subr.mxu0 0.0
    %1578 = vmatpush1.msra.mxu0 0.0
    %1579 = vmatprep.subr.mxu0 0.0
    %1580 = vmatpush1.msra.mxu0 0.0
    %1581 = vmatprep.subr.mxu0 0.0
    %1582 = vmatpush1.msra.mxu0 0.0
    %1583 = vmatprep.subr.mxu0 0.0
    %1584 = vmatpush1.msra.mxu0 0.0
    %1585 = vmatprep.subr.mxu0 0.0
    %1586 = vmatpush1.msra.mxu0 0.0
    %1587 = vmatprep.subr.mxu0 0.0
    %1588 = vmatpush1.msra.mxu0 0.0
    %1589 = vmatprep.subr.mxu0 0.0
    %1590 = vmatpush1.msra.mxu0 0.0
    %1591 = vmatprep.subr.mxu0 0.0
    %1592 = vmatpush1.msra.mxu0 0.0
    %1593 = vmatprep.subr.mxu0 0.0
    %1594 = vmatpush1.msra.mxu0 0.0
    %1595 = vmatprep.subr.mxu0 0.0
    %1596 = vmatpush1.msra.mxu0 0.0
    %1597 = vmatprep.subr.mxu0 0.0
    %1598 = vmatpush1.msra.mxu0 0.0
    %1599 = vmatprep.subr.mxu0 0.0
    %1600 = vmatpush1.msra.mxu0 0.0
    %1601 = vmatprep.subr.mxu0 0.0
    %1602 = vmatpush1.msra.mxu0 0.0
    %1603 = vmatprep.subr.mxu0 0.0
    %1604 = vmatpush1.msra.mxu0 0.0
    %1605 = vmatprep.subr.mxu0 0.0
    %1606 = vmatpush1.msra.mxu0 0.0
    %1607 = vmatprep.subr.mxu0 0.0
    %1608 = vmatpush1.msra.mxu0 0.0
    %1609 = vmatprep.subr.mxu0 0.0
    %1610 = vmatpush1.msra.mxu0 0.0
    %1611 = vmatprep.subr.mxu0 0.0
    %1612 = vmatpush1.msra.mxu0 0.0
    %1613 = vmatprep.subr.mxu0 0.0
    %1614 = vmatpush1.msra.mxu0 0.0
    %1615 = vmatprep.subr.mxu0 0.0
    %1616 = vmatpush1.msra.mxu0 0.0
    %1617 = vmatprep.subr.mxu0 0.0
    %1618 = vmatpush1.msra.mxu0 0.0
    %1619 = vmatprep.subr.mxu0 0.0
    %1620 = vmatpush1.msra.mxu0 0.0
    %1621 = vmatprep.subr.mxu0 0.0
    %1622 = vmatpush1.msra.mxu0 0.0
    %1623 = vmatprep.mubr.f32.mxu0 0.0
    %1624 = vmatmul.mubr.f32.gmra.mrb[0].mxu0 %v1554
    %v1625 = vpop.f32.mrb[0].mxu0
    %v1626 = vadd.f32 0.0, %v1625
    %v1627 = vpop.f32.mrb[0].mxu0
    %1628 = vmatprep.mubr.f32.mxu0 0.0
    %1629 = vmatmul.mubr.f32.gmra.mrb[0].mxu0 %v1557
    %v1630 = vpop.f32.mrb[0].mxu0
    %v1631 = vadd.f32 0.0, %v1630
    %v1632 = vpop.f32.mrb[0].mxu0
    %1633 = vdwg.mxu0
    %v1635 = vsel %vm904, %v636, 0
    %v1638 = vsel %vm904, %v641, 0
    %1640 = vmatprep.subr.mxu0 0.0
    %1641 = vmatpush1.msra.mxu0 %v196
    %1642 = vmatprep.subr.mxu0 0.0
    %1643 = vmatpush1.msra.mxu0 %v197
    %1644 = vmatprep.subr.mxu0 0.0
    %1645 = vmatpush1.msra.mxu0 0.0
    %1646 = vmatprep.subr.mxu0 0.0
    %1647 = vmatpush1.msra.mxu0 0.0
    %1648 = vmatprep.subr.mxu0 0.0
    %1649 = vmatpush1.msra.mxu0 0.0
    %1650 = vmatprep.subr.mxu0 0.0
    %1651 = vmatpush1.msra.mxu0 0.0
    %1652 = vmatprep.subr.mxu0 0.0
    %1653 = vmatpush1.msra.mxu0 0.0
    %1654 = vmatprep.subr.mxu0 0.0
    %1655 = vmatpush1.msra.mxu0 0.0
    %1656 = vmatprep.subr.mxu0 0.0
    %1657 = vmatpush1.msra.mxu0 0.0
    %1658 = vmatprep.subr.mxu0 0.0
    %1659 = vmatpush1.msra.mxu0 0.0
    %1660 = vmatprep.subr.mxu0 0.0
    %1661 = vmatpush1.msra.mxu0 0.0
    %1662 = vmatprep.subr.mxu0 0.0
    %1663 = vmatpush1.msra.mxu0 0.0
    %1664 = vmatprep.subr.mxu0 0.0
    %1665 = vmatpush1.msra.mxu0 0.0
    %1666 = vmatprep.subr.mxu0 0.0
    %1667 = vmatpush1.msra.mxu0 0.0
    %1668 = vmatprep.subr.mxu0 0.0
    %1669 = vmatpush1.msra.mxu0 0.0
    %1670 = vmatprep.subr.mxu0 0.0
    %1671 = vmatpush1.msra.mxu0 0.0
    %1672 = vmatprep.subr.mxu0 0.0
    %1673 = vmatpush1.msra.mxu0 0.0
    %1674 = vmatprep.subr.mxu0 0.0
    %1675 = vmatpush1.msra.mxu0 0.0
    %1676 = vmatprep.subr.mxu0 0.0
    %1677 = vmatpush1.msra.mxu0 0.0
    %1678 = vmatprep.subr.mxu0 0.0
    %1679 = vmatpush1.msra.mxu0 0.0
    %1680 = vmatprep.subr.mxu0 0.0
    %1681 = vmatpush1.msra.mxu0 0.0
    %1682 = vmatprep.subr.mxu0 0.0
    %1683 = vmatpush1.msra.mxu0 0.0
    %1684 = vmatprep.subr.mxu0 0.0
    %1685 = vmatpush1.msra.mxu0 0.0
    %1686 = vmatprep.subr.mxu0 0.0
    %1687 = vmatpush1.msra.mxu0 0.0
    %1688 = vmatprep.subr.mxu0 0.0
    %1689 = vmatpush1.msra.mxu0 0.0
    %1690 = vmatprep.subr.mxu0 0.0
    %1691 = vmatpush1.msra.mxu0 0.0
    %1692 = vmatprep.subr.mxu0 0.0
    %1693 = vmatpush1.msra.mxu0 0.0
    %1694 = vmatprep.subr.mxu0 0.0
    %1695 = vmatpush1.msra.mxu0 0.0
    %1696 = vmatprep.subr.mxu0 0.0
    %1697 = vmatpush1.msra.mxu0 0.0
    %1698 = vmatprep.subr.mxu0 0.0
    %1699 = vmatpush1.msra.mxu0 0.0
    %1700 = vmatprep.subr.mxu0 0.0
    %1701 = vmatpush1.msra.mxu0 0.0
    %1702 = vmatprep.subr.mxu0 0.0
    %1703 = vmatpush1.msra.mxu0 0.0
    %1704 = vmatprep.mubr.f32.mxu0 0.0
    %1705 = vmatmul.mubr.f32.gmra.mrb[0].mxu0 %v1635
    %v1706 = vpop.f32.mrb[0].mxu0
    %v1707 = vadd.f32 0.0, %v1706
    %v1708 = vpop.f32.mrb[0].mxu0
    %1709 = vmatprep.mubr.f32.mxu0 0.0
    %1710 = vmatmul.mubr.f32.gmra.mrb[0].mxu0 %v1638
    %v1711 = vpop.f32.mrb[0].mxu0
    %v1712 = vadd.f32 0.0, %v1711
    %v1713 = vpop.f32.mrb[0].mxu0
    %1714 = vdwg.mxu0
    %v1716 = vsel %vm904, %v646, 0
    %v1719 = vsel %vm904, %v651, 0
    %1721 = vmatprep.subr.mxu0 0.0
    %1722 = vmatpush1.msra.mxu0 %v198
    %1723 = vmatprep.subr.mxu0 0.0
    %1724 = vmatpush1.msra.mxu0 %v199
    %1725 = vmatprep.subr.mxu0 0.0
    %1726 = vmatpush1.msra.mxu0 0.0
    %1727 = vmatprep.subr.mxu0 0.0
    %1728 = vmatpush1.msra.mxu0 0.0
    %1729 = vmatprep.subr.mxu0 0.0
    %1730 = vmatpush1.msra.mxu0 0.0
    %1731 = vmatprep.subr.mxu0 0.0
    %1732 = vmatpush1.msra.mxu0 0.0
    %1733 = vmatprep.subr.mxu0 0.0
    %1734 = vmatpush1.msra.mxu0 0.0
    %1735 = vmatprep.subr.mxu0 0.0
    %1736 = vmatpush1.msra.mxu0 0.0
    %1737 = vmatprep.subr.mxu0 0.0
    %1738 = vmatpush1.msra.mxu0 0.0
    %1739 = vmatprep.subr.mxu0 0.0
    %1740 = vmatpush1.msra.mxu0 0.0
    %1741 = vmatprep.subr.mxu0 0.0
    %1742 = vmatpush1.msra.mxu0 0.0
    %1743 = vmatprep.subr.mxu0 0.0
    %1744 = vmatpush1.msra.mxu0 0.0
    %1745 = vmatprep.subr.mxu0 0.0
    %1746 = vmatpush1.msra.mxu0 0.0
    %1747 = vmatprep.subr.mxu0 0.0
    %1748 = vmatpush1.msra.mxu0 0.0
    %1749 = vmatprep.subr.mxu0 0.0
    %1750 = vmatpush1.msra.mxu0 0.0
    %1751 = vmatprep.subr.mxu0 0.0
    %1752 = vmatpush1.msra.mxu0 0.0
    %1753 = vmatprep.subr.mxu0 0.0
    %1754 = vmatpush1.msra.mxu0 0.0
    %1755 = vmatprep.subr.mxu0 0.0
    %1756 = vmatpush1.msra.mxu0 0.0
    %1757 = vmatprep.subr.mxu0 0.0
    %1758 = vmatpush1.msra.mxu0 0.0
    %1759 = vmatprep.subr.mxu0 0.0
    %1760 = vmatpush1.msra.mxu0 0.0
    %1761 = vmatprep.subr.mxu0 0.0
    %1762 = vmatpush1.msra.mxu0 0.0
    %1763 = vmatprep.subr.mxu0 0.0
    %1764 = vmatpush1.msra.mxu0 0.0
    %1765 = vmatprep.subr.mxu0 0.0
    %1766 = vmatpush1.msra.mxu0 0.0
    %1767 = vmatprep.subr.mxu0 0.0
    %1768 = vmatpush1.msra.mxu0 0.0
    %1769 = vmatprep.subr.mxu0 0.0
    %1770 = vmatpush1.msra.mxu0 0.0
    %1771 = vmatprep.subr.mxu0 0.0
    %1772 = vmatpush1.msra.mxu0 0.0
    %1773 = vmatprep.subr.mxu0 0.0
    %1774 = vmatpush1.msra.mxu0 0.0
    %1775 = vmatprep.subr.mxu0 0.0
    %1776 = vmatpush1.msra.mxu0 0.0
    %1777 = vmatprep.subr.mxu0 0.0
    %1778 = vmatpush1.msra.mxu0 0.0
    %1779 = vmatprep.subr.mxu0 0.0
    %1780 = vmatpush1.msra.mxu0 0.0
    %1781 = vmatprep.subr.mxu0 0.0
    %1782 = vmatpush1.msra.mxu0 0.0
    %1783 = vmatprep.subr.mxu0 0.0
    %1784 = vmatpush1.msra.mxu0 0.0
    %1785 = vmatprep.mubr.f32.mxu0 0.0
    %1786 = vmatmul.mubr.f32.gmra.mrb[0].mxu0 %v1716
    %v1787 = vpop.f32.mrb[0].mxu0
    %v1788 = vadd.f32 0.0, %v1787
    %v1789 = vpop.f32.mrb[0].mxu0
    %1790 = vmatprep.mubr.f32.mxu0 0.0
    %1791 = vmatmul.mubr.f32.gmra.mrb[0].mxu0 %v1719
    %v1792 = vpop.f32.mrb[0].mxu0
    %v1793 = vadd.f32 0.0, %v1792
    %v1794 = vpop.f32.mrb[0].mxu0
    %1795 = vdwg.mxu0
    %v1797 = vsel %vm904, %v656, 0
    %v1800 = vsel %vm904, %v661, 0
    %1802 = vmatprep.subr.mxu0 0.0
    %1803 = vmatpush1.msra.mxu0 %v200
    %1804 = vmatprep.subr.mxu0 0.0
    %1805 = vmatpush1.msra.mxu0 %v201
    %1806 = vmatprep.subr.mxu0 0.0
    %1807 = vmatpush1.msra.mxu0 0.0
    %1808 = vmatprep.subr.mxu0 0.0
    %1809 = vmatpush1.msra.mxu0 0.0
    %1810 = vmatprep.subr.mxu0 0.0
    %1811 = vmatpush1.msra.mxu0 0.0
    %1812 = vmatprep.subr.mxu0 0.0
    %1813 = vmatpush1.msra.mxu0 0.0
    %1814 = vmatprep.subr.mxu0 0.0
    %1815 = vmatpush1.msra.mxu0 0.0
    %1816 = vmatprep.subr.mxu0 0.0
    %1817 = vmatpush1.msra.mxu0 0.0
    %1818 = vmatprep.subr.mxu0 0.0
    %1819 = vmatpush1.msra.mxu0 0.0
    %1820 = vmatprep.subr.mxu0 0.0
    %1821 = vmatpush1.msra.mxu0 0.0
    %1822 = vmatprep.subr.mxu0 0.0
    %1823 = vmatpush1.msra.mxu0 0.0
    %1824 = vmatprep.subr.mxu0 0.0
    %1825 = vmatpush1.msra.mxu0 0.0
    %1826 = vmatprep.subr.mxu0 0.0
    %1827 = vmatpush1.msra.mxu0 0.0
    %1828 = vmatprep.subr.mxu0 0.0
    %1829 = vmatpush1.msra.mxu0 0.0
    %1830 = vmatprep.subr.mxu0 0.0
    %1831 = vmatpush1.msra.mxu0 0.0
    %1832 = vmatprep.subr.mxu0 0.0
    %1833 = vmatpush1.msra.mxu0 0.0
    %1834 = vmatprep.subr.mxu0 0.0
    %1835 = vmatpush1.msra.mxu0 0.0
    %1836 = vmatprep.subr.mxu0 0.0
    %1837 = vmatpush1.msra.mxu0 0.0
    %1838 = vmatprep.subr.mxu0 0.0
    %1839 = vmatpush1.msra.mxu0 0.0
    %1840 = vmatprep.subr.mxu0 0.0
    %1841 = vmatpush1.msra.mxu0 0.0
    %1842 = vmatprep.subr.mxu0 0.0
    %1843 = vmatpush1.msra.mxu0 0.0
    %1844 = vmatprep.subr.mxu0 0.0
    %1845 = vmatpush1.msra.mxu0 0.0
    %1846 = vmatprep.subr.mxu0 0.0
    %1847 = vmatpush1.msra.mxu0 0.0
    %1848 = vmatprep.subr.mxu0 0.0
    %1849 = vmatpush1.msra.mxu0 0.0
    %1850 = vmatprep.subr.mxu0 0.0
    %1851 = vmatpush1.msra.mxu0 0.0
    %1852 = vmatprep.subr.mxu0 0.0
    %1853 = vmatpush1.msra.mxu0 0.0
    %1854 = vmatprep.subr.mxu0 0.0
    %1855 = vmatpush1.msra.mxu0 0.0
    %1856 = vmatprep.subr.mxu0 0.0
    %1857 = vmatpush1.msra.mxu0 0.0
    %1858 = vmatprep.subr.mxu0 0.0
    %1859 = vmatpush1.msra.mxu0 0.0
    %1860 = vmatprep.subr.mxu0 0.0
    %1861 = vmatpush1.msra.mxu0 0.0
    %1862 = vmatprep.subr.mxu0 0.0
    %1863 = vmatpush1.msra.mxu0 0.0
    %1864 = vmatprep.subr.mxu0 0.0
    %1865 = vmatpush1.msra.mxu0 0.0
    %1866 = vmatprep.mubr.f32.mxu0 0.0
    %1867 = vmatmul.mubr.f32.gmra.mrb[0].mxu0 %v1797
    %v1868 = vpop.f32.mrb[0].mxu0
    %v1869 = vadd.f32 0.0, %v1868
    %v1870 = vpop.f32.mrb[0].mxu0
    %1871 = vmatprep.mubr.f32.mxu0 0.0
    %1872 = vmatmul.mubr.f32.gmra.mrb[0].mxu0 %v1800
    %v1873 = vpop.f32.mrb[0].mxu0
    %v1874 = vadd.f32 0.0, %v1873
    %v1875 = vpop.f32.mrb[0].mxu0
    %1876 = vdwg.mxu0
    %v1878 = vsel %vm904, %v666, 0
    %v1881 = vsel %vm904, %v671, 0
    %1883 = vmatprep.subr.mxu0 0.0
    %1884 = vmatpush1.msra.mxu0 %v202
    %1885 = vmatprep.subr.mxu0 0.0
    %1886 = vmatpush1.msra.mxu0 %v203
    %1887 = vmatprep.subr.mxu0 0.0
    %1888 = vmatpush1.msra.mxu0 0.0
    %1889 = vmatprep.subr.mxu0 0.0
    %1890 = vmatpush1.msra.mxu0 0.0
    %1891 = vmatprep.subr.mxu0 0.0
    %1892 = vmatpush1.msra.mxu0 0.0
    %1893 = vmatprep.subr.mxu0 0.0
    %1894 = vmatpush1.msra.mxu0 0.0
    %1895 = vmatprep.subr.mxu0 0.0
    %1896 = vmatpush1.msra.mxu0 0.0
    %1897 = vmatprep.subr.mxu0 0.0
    %1898 = vmatpush1.msra.mxu0 0.0
    %1899 = vmatprep.subr.mxu0 0.0
    %1900 = vmatpush1.msra.mxu0 0.0
    %1901 = vmatprep.subr.mxu0 0.0
    %1902 = vmatpush1.msra.mxu0 0.0
    %1903 = vmatprep.subr.mxu0 0.0
    %1904 = vmatpush1.msra.mxu0 0.0
    %1905 = vmatprep.subr.mxu0 0.0
    %1906 = vmatpush1.msra.mxu0 0.0
    %1907 = vmatprep.subr.mxu0 0.0
    %1908 = vmatpush1.msra.mxu0 0.0
    %1909 = vmatprep.subr.mxu0 0.0
    %1910 = vmatpush1.msra.mxu0 0.0
    %1911 = vmatprep.subr.mxu0 0.0
    %1912 = vmatpush1.msra.mxu0 0.0
    %1913 = vmatprep.subr.mxu0 0.0
    %1914 = vmatpush1.msra.mxu0 0.0
    %1915 = vmatprep.subr.mxu0 0.0
    %1916 = vmatpush1.msra.mxu0 0.0
    %1917 = vmatprep.subr.mxu0 0.0
    %1918 = vmatpush1.msra.mxu0 0.0
    %1919 = vmatprep.subr.mxu0 0.0
    %1920 = vmatpush1.msra.mxu0 0.0
    %1921 = vmatprep.subr.mxu0 0.0
    %1922 = vmatpush1.msra.mxu0 0.0
    %1923 = vmatprep.subr.mxu0 0.0
    %1924 = vmatpush1.msra.mxu0 0.0
    %1925 = vmatprep.subr.mxu0 0.0
    %1926 = vmatpush1.msra.mxu0 0.0
    %1927 = vmatprep.subr.mxu0 0.0
    %1928 = vmatpush1.msra.mxu0 0.0
    %1929 = vmatprep.subr.mxu0 0.0
    %1930 = vmatpush1.msra.mxu0 0.0
    %1931 = vmatprep.subr.mxu0 0.0
    %1932 = vmatpush1.msra.mxu0 0.0
    %1933 = vmatprep.subr.mxu0 0.0
    %1934 = vmatpush1.msra.mxu0 0.0
    %1935 = vmatprep.subr.mxu0 0.0
    %1936 = vmatpush1.msra.mxu0 0.0
    %1937 = vmatprep.subr.mxu0 0.0
    %1938 = vmatpush1.msra.mxu0 0.0
    %1939 = vmatprep.subr.mxu0 0.0
    %1940 = vmatpush1.msra.mxu0 0.0
    %1941 = vmatprep.subr.mxu0 0.0
    %1942 = vmatpush1.msra.mxu0 0.0
    %1943 = vmatprep.subr.mxu0 0.0
    %1944 = vmatpush1.msra.mxu0 0.0
    %1945 = vmatprep.subr.mxu0 0.0
    %1946 = vmatpush1.msra.mxu0 0.0
    %1947 = vmatprep.mubr.f32.mxu0 0.0
    %1948 = vmatmul.mubr.f32.gmra.mrb[0].mxu0 %v1878
    %v1949 = vpop.f32.mrb[0].mxu0
    %v1950 = vadd.f32 0.0, %v1949
    %v1951 = vpop.f32.mrb[0].mxu0
    %1952 = vmatprep.mubr.f32.mxu0 0.0
    %1953 = vmatmul.mubr.f32.gmra.mrb[0].mxu0 %v1881
    %v1954 = vpop.f32.mrb[0].mxu0
    %v1955 = vadd.f32 0.0, %v1954
    %v1956 = vpop.f32.mrb[0].mxu0
    %1957 = vdwg.mxu0
    %v1959 = vsel %vm904, %v676, 0
    %v1962 = vsel %vm904, %v681, 0
    %1964 = vmatprep.subr.mxu0 0.0
    %1965 = vmatpush1.msra.mxu0 %v204
    %1966 = vmatprep.subr.mxu0 0.0
    %1967 = vmatpush1.msra.mxu0 %v205
    %1968 = vmatprep.subr.mxu0 0.0
    %1969 = vmatpush1.msra.mxu0 0.0
    %1970 = vmatprep.subr.mxu0 0.0
    %1971 = vmatpush1.msra.mxu0 0.0
    %1972 = vmatprep.subr.mxu0 0.0
    %1973 = vmatpush1.msra.mxu0 0.0
    %1974 = vmatprep.subr.mxu0 0.0
    %1975 = vmatpush1.msra.mxu0 0.0
    %1976 = vmatprep.subr.mxu0 0.0
    %1977 = vmatpush1.msra.mxu0 0.0
    %1978 = vmatprep.subr.mxu0 0.0
    %1979 = vmatpush1.msra.mxu0 0.0
    %1980 = vmatprep.subr.mxu0 0.0
    %1981 = vmatpush1.msra.mxu0 0.0
    %1982 = vmatprep.subr.mxu0 0.0
    %1983 = vmatpush1.msra.mxu0 0.0
    %1984 = vmatprep.subr.mxu0 0.0
    %1985 = vmatpush1.msra.mxu0 0.0
    %1986 = vmatprep.subr.mxu0 0.0
    %1987 = vmatpush1.msra.mxu0 0.0
    %1988 = vmatprep.subr.mxu0 0.0
    %1989 = vmatpush1.msra.mxu0 0.0
    %1990 = vmatprep.subr.mxu0 0.0
    %1991 = vmatpush1.msra.mxu0 0.0
    %1992 = vmatprep.subr.mxu0 0.0
    %1993 = vmatpush1.msra.mxu0 0.0
    %1994 = vmatprep.subr.mxu0 0.0
    %1995 = vmatpush1.msra.mxu0 0.0
    %1996 = vmatprep.subr.mxu0 0.0
    %1997 = vmatpush1.msra.mxu0 0.0
    %1998 = vmatprep.subr.mxu0 0.0
    %1999 = vmatpush1.msra.mxu0 0.0
    %2000 = vmatprep.subr.mxu0 0.0
    %2001 = vmatpush1.msra.mxu0 0.0
    %2002 = vmatprep.subr.mxu0 0.0
    %2003 = vmatpush1.msra.mxu0 0.0
    %2004 = vmatprep.subr.mxu0 0.0
    %2005 = vmatpush1.msra.mxu0 0.0
    %2006 = vmatprep.subr.mxu0 0.0
    %2007 = vmatpush1.msra.mxu0 0.0
    %2008 = vmatprep.subr.mxu0 0.0
    %2009 = vmatpush1.msra.mxu0 0.0
    %2010 = vmatprep.subr.mxu0 0.0
    %2011 = vmatpush1.msra.mxu0 0.0
    %2012 = vmatprep.subr.mxu0 0.0
    %2013 = vmatpush1.msra.mxu0 0.0
    %2014 = vmatprep.subr.mxu0 0.0
    %2015 = vmatpush1.msra.mxu0 0.0
    %2016 = vmatprep.subr.mxu0 0.0
    %2017 = vmatpush1.msra.mxu0 0.0
    %2018 = vmatprep.subr.mxu0 0.0
    %2019 = vmatpush1.msra.mxu0 0.0
    %2020 = vmatprep.subr.mxu0 0.0
    %2021 = vmatpush1.msra.mxu0 0.0
    %2022 = vmatprep.subr.mxu0 0.0
    %2023 = vmatpush1.msra.mxu0 0.0
    %2024 = vmatprep.subr.mxu0 0.0
    %2025 = vmatpush1.msra.mxu0 0.0
    %2026 = vmatprep.subr.mxu0 0.0
    %2027 = vmatpush1.msra.mxu0 0.0
    %2028 = vmatprep.mubr.f32.mxu0 0.0
    %2029 = vmatmul.mubr.f32.gmra.mrb[0].mxu0 %v1959
    %v2030 = vpop.f32.mrb[0].mxu0
    %v2031 = vadd.f32 0.0, %v2030
    %v2032 = vpop.f32.mrb[0].mxu0
    %2033 = vmatprep.mubr.f32.mxu0 0.0
    %2034 = vmatmul.mubr.f32.gmra.mrb[0].mxu0 %v1962
    %v2035 = vpop.f32.mrb[0].mxu0
    %v2036 = vadd.f32 0.0, %v2035
    %v2037 = vpop.f32.mrb[0].mxu0
    %2038 = vdwg.mxu0
    %v2040 = vsel %vm904, %v686, 0
    %v2043 = vsel %vm904, %v691, 0
    %2045 = vmatprep.subr.mxu0 0.0
    %2046 = vmatpush1.msra.mxu0 %v206
    %2047 = vmatprep.subr.mxu0 0.0
    %2048 = vmatpush1.msra.mxu0 %v207
    %2049 = vmatprep.subr.mxu0 0.0
    %2050 = vmatpush1.msra.mxu0 0.0
    %2051 = vmatprep.subr.mxu0 0.0
    %2052 = vmatpush1.msra.mxu0 0.0
    %2053 = vmatprep.subr.mxu0 0.0
    %2054 = vmatpush1.msra.mxu0 0.0
    %2055 = vmatprep.subr.mxu0 0.0
    %2056 = vmatpush1.msra.mxu0 0.0
    %2057 = vmatprep.subr.mxu0 0.0
    %2058 = vmatpush1.msra.mxu0 0.0
    %2059 = vmatprep.subr.mxu0 0.0
    %2060 = vmatpush1.msra.mxu0 0.0
    %2061 = vmatprep.subr.mxu0 0.0
    %2062 = vmatpush1.msra.mxu0 0.0
    %2063 = vmatprep.subr.mxu0 0.0
    %2064 = vmatpush1.msra.mxu0 0.0
    %2065 = vmatprep.subr.mxu0 0.0
    %2066 = vmatpush1.msra.mxu0 0.0
    %2067 = vmatprep.subr.mxu0 0.0
    %2068 = vmatpush1.msra.mxu0 0.0
    %2069 = vmatprep.subr.mxu0 0.0
    %2070 = vmatpush1.msra.mxu0 0.0
    %2071 = vmatprep.subr.mxu0 0.0
    %2072 = vmatpush1.msra.mxu0 0.0
    %2073 = vmatprep.subr.mxu0 0.0
    %2074 = vmatpush1.msra.mxu0 0.0
    %2075 = vmatprep.subr.mxu0 0.0
    %2076 = vmatpush1.msra.mxu0 0.0
    %2077 = vmatprep.subr.mxu0 0.0
    %2078 = vmatpush1.msra.mxu0 0.0
    %2079 = vmatprep.subr.mxu0 0.0
    %2080 = vmatpush1.msra.mxu0 0.0
    %2081 = vmatprep.subr.mxu0 0.0
    %2082 = vmatpush1.msra.mxu0 0.0
    %2083 = vmatprep.subr.mxu0 0.0
    %2084 = vmatpush1.msra.mxu0 0.0
    %2085 = vmatprep.subr.mxu0 0.0
    %2086 = vmatpush1.msra.mxu0 0.0
    %2087 = vmatprep.subr.mxu0 0.0
    %2088 = vmatpush1.msra.mxu0 0.0
    %2089 = vmatprep.subr.mxu0 0.0
    %2090 = vmatpush1.msra.mxu0 0.0
    %2091 = vmatprep.subr.mxu0 0.0
    %2092 = vmatpush1.msra.mxu0 0.0
    %2093 = vmatprep.subr.mxu0 0.0
    %2094 = vmatpush1.msra.mxu0 0.0
    %2095 = vmatprep.subr.mxu0 0.0
    %2096 = vmatpush1.msra.mxu0 0.0
    %2097 = vmatprep.subr.mxu0 0.0
    %2098 = vmatpush1.msra.mxu0 0.0
    %2099 = vmatprep.subr.mxu0 0.0
    %2100 = vmatpush1.msra.mxu0 0.0
    %2101 = vmatprep.subr.mxu0 0.0
    %2102 = vmatpush1.msra.mxu0 0.0
    %2103 = vmatprep.subr.mxu0 0.0
    %2104 = vmatpush1.msra.mxu0 0.0
    %2105 = vmatprep.subr.mxu0 0.0
    %2106 = vmatpush1.msra.mxu0 0.0
    %2107 = vmatprep.subr.mxu0 0.0
    %2108 = vmatpush1.msra.mxu0 0.0
    %2109 = vmatprep.mubr.f32.mxu0 0.0
    %2110 = vmatmul.mubr.f32.gmra.mrb[0].mxu0 %v2040
    %v2111 = vpop.f32.mrb[0].mxu0
    %v2112 = vadd.f32 0.0, %v2111
    %v2113 = vpop.f32.mrb[0].mxu0
    %2114 = vmatprep.mubr.f32.mxu0 0.0
    %2115 = vmatmul.mubr.f32.gmra.mrb[0].mxu0 %v2043
    %v2116 = vpop.f32.mrb[0].mxu0
    %v2117 = vadd.f32 0.0, %v2116
    %v2118 = vpop.f32.mrb[0].mxu0
    %2119 = vdwg.mxu0
    %v2121 = vsel %vm904, %v696, 0
    %v2124 = vsel %vm904, %v701, 0
    %2126 = vmatprep.subr.mxu0 0.0
    %2127 = vmatpush1.msra.mxu0 %v208
    %2128 = vmatprep.subr.mxu0 0.0
    %2129 = vmatpush1.msra.mxu0 %v209
    %2130 = vmatprep.subr.mxu0 0.0
    %2131 = vmatpush1.msra.mxu0 0.0
    %2132 = vmatprep.subr.mxu0 0.0
    %2133 = vmatpush1.msra.mxu0 0.0
    %2134 = vmatprep.subr.mxu0 0.0
    %2135 = vmatpush1.msra.mxu0 0.0
    %2136 = vmatprep.subr.mxu0 0.0
    %2137 = vmatpush1.msra.mxu0 0.0
    %2138 = vmatprep.subr.mxu0 0.0
    %2139 = vmatpush1.msra.mxu0 0.0
    %2140 = vmatprep.subr.mxu0 0.0
    %2141 = vmatpush1.msra.mxu0 0.0
    %2142 = vmatprep.subr.mxu0 0.0
    %2143 = vmatpush1.msra.mxu0 0.0
    %2144 = vmatprep.subr.mxu0 0.0
    %2145 = vmatpush1.msra.mxu0 0.0
    %2146 = vmatprep.subr.mxu0 0.0
    %2147 = vmatpush1.msra.mxu0 0.0
    %2148 = vmatprep.subr.mxu0 0.0
    %2149 = vmatpush1.msra.mxu0 0.0
    %2150 = vmatprep.subr.mxu0 0.0
    %2151 = vmatpush1.msra.mxu0 0.0
    %2152 = vmatprep.subr.mxu0 0.0
    %2153 = vmatpush1.msra.mxu0 0.0
    %2154 = vmatprep.subr.mxu0 0.0
    %2155 = vmatpush1.msra.mxu0 0.0
    %2156 = vmatprep.subr.mxu0 0.0
    %2157 = vmatpush1.msra.mxu0 0.0
    %2158 = vmatprep.subr.mxu0 0.0
    %2159 = vmatpush1.msra.mxu0 0.0
    %2160 = vmatprep.subr.mxu0 0.0
    %2161 = vmatpush1.msra.mxu0 0.0
    %2162 = vmatprep.subr.mxu0 0.0
    %2163 = vmatpush1.msra.mxu0 0.0
    %2164 = vmatprep.subr.mxu0 0.0
    %2165 = vmatpush1.msra.mxu0 0.0
    %2166 = vmatprep.subr.mxu0 0.0
    %2167 = vmatpush1.msra.mxu0 0.0
    %2168 = vmatprep.subr.mxu0 0.0
    %2169 = vmatpush1.msra.mxu0 0.0
    %2170 = vmatprep.subr.mxu0 0.0
    %2171 = vmatpush1.msra.mxu0 0.0
    %2172 = vmatprep.subr.mxu0 0.0
    %2173 = vmatpush1.msra.mxu0 0.0
    %2174 = vmatprep.subr.mxu0 0.0
    %2175 = vmatpush1.msra.mxu0 0.0
    %2176 = vmatprep.subr.mxu0 0.0
    %2177 = vmatpush1.msra.mxu0 0.0
    %2178 = vmatprep.subr.mxu0 0.0
    %2179 = vmatpush1.msra.mxu0 0.0
    %2180 = vmatprep.subr.mxu0 0.0
    %2181 = vmatpush1.msra.mxu0 0.0
    %2182 = vmatprep.subr.mxu0 0.0
    %2183 = vmatpush1.msra.mxu0 0.0
    %2184 = vmatprep.subr.mxu0 0.0
    %2185 = vmatpush1.msra.mxu0 0.0
    %2186 = vmatprep.subr.mxu0 0.0
    %2187 = vmatpush1.msra.mxu0 0.0
    %2188 = vmatprep.subr.mxu0 0.0
    %2189 = vmatpush1.msra.mxu0 0.0
    %2190 = vmatprep.mubr.f32.mxu0 0.0
    %2191 = vmatmul.mubr.f32.gmra.mrb[0].mxu0 %v2121
    %v2192 = vpop.f32.mrb[0].mxu0
    %v2193 = vadd.f32 0.0, %v2192
    %v2194 = vpop.f32.mrb[0].mxu0
    %2195 = vmatprep.mubr.f32.mxu0 0.0
    %2196 = vmatmul.mubr.f32.gmra.mrb[0].mxu0 %v2124
    %v2197 = vpop.f32.mrb[0].mxu0
    %v2198 = vadd.f32 0.0, %v2197
    %v2199 = vpop.f32.mrb[0].mxu0
    %2200 = vdwg.mxu0
    %v2202 = vsel %vm904, %v706, 0
    %v2205 = vsel %vm904, %v711, 0
    %2207 = vmatprep.subr.mxu0 0.0
    %2208 = vmatpush1.msra.mxu0 %v210
    %2209 = vmatprep.subr.mxu0 0.0
    %2210 = vmatpush1.msra.mxu0 %v211
    %2211 = vmatprep.subr.mxu0 0.0
    %2212 = vmatpush1.msra.mxu0 0.0
    %2213 = vmatprep.subr.mxu0 0.0
    %2214 = vmatpush1.msra.mxu0 0.0
    %2215 = vmatprep.subr.mxu0 0.0
    %2216 = vmatpush1.msra.mxu0 0.0
    %2217 = vmatprep.subr.mxu0 0.0
    %2218 = vmatpush1.msra.mxu0 0.0
    %2219 = vmatprep.subr.mxu0 0.0
    %2220 = vmatpush1.msra.mxu0 0.0
    %2221 = vmatprep.subr.mxu0 0.0
    %2222 = vmatpush1.msra.mxu0 0.0
    %2223 = vmatprep.subr.mxu0 0.0
    %2224 = vmatpush1.msra.mxu0 0.0
    %2225 = vmatprep.subr.mxu0 0.0
    %2226 = vmatpush1.msra.mxu0 0.0
    %2227 = vmatprep.subr.mxu0 0.0
    %2228 = vmatpush1.msra.mxu0 0.0
    %2229 = vmatprep.subr.mxu0 0.0
    %2230 = vmatpush1.msra.mxu0 0.0
    %2231 = vmatprep.subr.mxu0 0.0
    %2232 = vmatpush1.msra.mxu0 0.0
    %2233 = vmatprep.subr.mxu0 0.0
    %2234 = vmatpush1.msra.mxu0 0.0
    %2235 = vmatprep.subr.mxu0 0.0
    %2236 = vmatpush1.msra.mxu0 0.0
    %2237 = vmatprep.subr.mxu0 0.0
    %2238 = vmatpush1.msra.mxu0 0.0
    %2239 = vmatprep.subr.mxu0 0.0
    %2240 = vmatpush1.msra.mxu0 0.0
    %2241 = vmatprep.subr.mxu0 0.0
    %2242 = vmatpush1.msra.mxu0 0.0
    %2243 = vmatprep.subr.mxu0 0.0
    %2244 = vmatpush1.msra.mxu0 0.0
    %2245 = vmatprep.subr.mxu0 0.0
    %2246 = vmatpush1.msra.mxu0 0.0
    %2247 = vmatprep.subr.mxu0 0.0
    %2248 = vmatpush1.msra.mxu0 0.0
    %2249 = vmatprep.subr.mxu0 0.0
    %2250 = vmatpush1.msra.mxu0 0.0
    %2251 = vmatprep.subr.mxu0 0.0
    %2252 = vmatpush1.msra.mxu0 0.0
    %2253 = vmatprep.subr.mxu0 0.0
    %2254 = vmatpush1.msra.mxu0 0.0
    %2255 = vmatprep.subr.mxu0 0.0
    %2256 = vmatpush1.msra.mxu0 0.0
    %2257 = vmatprep.subr.mxu0 0.0
    %2258 = vmatpush1.msra.mxu0 0.0
    %2259 = vmatprep.subr.mxu0 0.0
    %2260 = vmatpush1.msra.mxu0 0.0
    %2261 = vmatprep.subr.mxu0 0.0
    %2262 = vmatpush1.msra.mxu0 0.0
    %2263 = vmatprep.subr.mxu0 0.0
    %2264 = vmatpush1.msra.mxu0 0.0
    %2265 = vmatprep.subr.mxu0 0.0
    %2266 = vmatpush1.msra.mxu0 0.0
    %2267 = vmatprep.subr.mxu0 0.0
    %2268 = vmatpush1.msra.mxu0 0.0
    %2269 = vmatprep.subr.mxu0 0.0
    %2270 = vmatpush1.msra.mxu0 0.0
    %2271 = vmatprep.mubr.f32.mxu0 0.0
    %2272 = vmatmul.mubr.f32.gmra.mrb[0].mxu0 %v2202
    %v2273 = vpop.f32.mrb[0].mxu0
    %v2274 = vadd.f32 0.0, %v2273
    %v2275 = vpop.f32.mrb[0].mxu0
    %2276 = vmatprep.mubr.f32.mxu0 0.0
    %2277 = vmatmul.mubr.f32.gmra.mrb[0].mxu0 %v2205
    %v2278 = vpop.f32.mrb[0].mxu0
    %v2279 = vadd.f32 0.0, %v2278
    %v2280 = vpop.f32.mrb[0].mxu0
    %2281 = vdwg.mxu0
    %v2283 = vsel %vm904, %v716, 0
    %v2286 = vsel %vm904, %v721, 0
    %2288 = vmatprep.subr.mxu0 0.0
    %2289 = vmatpush1.msra.mxu0 %v212
    %2290 = vmatprep.subr.mxu0 0.0
    %2291 = vmatpush1.msra.mxu0 %v213
    %2292 = vmatprep.subr.mxu0 0.0
    %2293 = vmatpush1.msra.mxu0 0.0
    %2294 = vmatprep.subr.mxu0 0.0
    %2295 = vmatpush1.msra.mxu0 0.0
    %2296 = vmatprep.subr.mxu0 0.0
    %2297 = vmatpush1.msra.mxu0 0.0
    %2298 = vmatprep.subr.mxu0 0.0
    %2299 = vmatpush1.msra.mxu0 0.0
    %2300 = vmatprep.subr.mxu0 0.0
    %2301 = vmatpush1.msra.mxu0 0.0
    %2302 = vmatprep.subr.mxu0 0.0
    %2303 = vmatpush1.msra.mxu0 0.0
    %2304 = vmatprep.subr.mxu0 0.0
    %2305 = vmatpush1.msra.mxu0 0.0
    %2306 = vmatprep.subr.mxu0 0.0
    %2307 = vmatpush1.msra.mxu0 0.0
    %2308 = vmatprep.subr.mxu0 0.0
    %2309 = vmatpush1.msra.mxu0 0.0
    %2310 = vmatprep.subr.mxu0 0.0
    %2311 = vmatpush1.msra.mxu0 0.0
    %2312 = vmatprep.subr.mxu0 0.0
    %2313 = vmatpush1.msra.mxu0 0.0
    %2314 = vmatprep.subr.mxu0 0.0
    %2315 = vmatpush1.msra.mxu0 0.0
    %2316 = vmatprep.subr.mxu0 0.0
    %2317 = vmatpush1.msra.mxu0 0.0
    %2318 = vmatprep.subr.mxu0 0.0
    %2319 = vmatpush1.msra.mxu0 0.0
    %2320 = vmatprep.subr.mxu0 0.0
    %2321 = vmatpush1.msra.mxu0 0.0
    %2322 = vmatprep.subr.mxu0 0.0
    %2323 = vmatpush1.msra.mxu0 0.0
    %2324 = vmatprep.subr.mxu0 0.0
    %2325 = vmatpush1.msra.mxu0 0.0
    %2326 = vmatprep.subr.mxu0 0.0
    %2327 = vmatpush1.msra.mxu0 0.0
    %2328 = vmatprep.subr.mxu0 0.0
    %2329 = vmatpush1.msra.mxu0 0.0
    %2330 = vmatprep.subr.mxu0 0.0
    %2331 = vmatpush1.msra.mxu0 0.0
    %2332 = vmatprep.subr.mxu0 0.0
    %2333 = vmatpush1.msra.mxu0 0.0
    %2334 = vmatprep.subr.mxu0 0.0
    %2335 = vmatpush1.msra.mxu0 0.0
    %2336 = vmatprep.subr.mxu0 0.0
    %2337 = vmatpush1.msra.mxu0 0.0
    %2338 = vmatprep.subr.mxu0 0.0
    %2339 = vmatpush1.msra.mxu0 0.0
    %2340 = vmatprep.subr.mxu0 0.0
    %2341 = vmatpush1.msra.mxu0 0.0
    %2342 = vmatprep.subr.mxu0 0.0
    %2343 = vmatpush1.msra.mxu0 0.0
    %2344 = vmatprep.subr.mxu0 0.0
    %2345 = vmatpush1.msra.mxu0 0.0
    %2346 = vmatprep.subr.mxu0 0.0
    %2347 = vmatpush1.msra.mxu0 0.0
    %2348 = vmatprep.subr.mxu0 0.0
    %2349 = vmatpush1.msra.mxu0 0.0
    %2350 = vmatprep.subr.mxu0 0.0
    %2351 = vmatpush1.msra.mxu0 0.0
    %2352 = vmatprep.mubr.f32.mxu0 0.0
    %2353 = vmatmul.mubr.f32.gmra.mrb[0].mxu0 %v2283
    %v2354 = vpop.f32.mrb[0].mxu0
    %v2355 = vadd.f32 0.0, %v2354
    %v2356 = vpop.f32.mrb[0].mxu0
    %2357 = vmatprep.mubr.f32.mxu0 0.0
    %2358 = vmatmul.mubr.f32.gmra.mrb[0].mxu0 %v2286
    %v2359 = vpop.f32.mrb[0].mxu0
    %v2360 = vadd.f32 0.0, %v2359
    %v2361 = vpop.f32.mrb[0].mxu0
    %2362 = vdwg.mxu0
    %v2364 = vsel %vm904, %v726, 0
    %v2367 = vsel %vm904, %v731, 0
    %2369 = vmatprep.subr.mxu0 0.0
    %2370 = vmatpush1.msra.mxu0 %v214
    %2371 = vmatprep.subr.mxu0 0.0
    %2372 = vmatpush1.msra.mxu0 %v215
    %2373 = vmatprep.subr.mxu0 0.0
    %2374 = vmatpush1.msra.mxu0 0.0
    %2375 = vmatprep.subr.mxu0 0.0
    %2376 = vmatpush1.msra.mxu0 0.0
    %2377 = vmatprep.subr.mxu0 0.0
    %2378 = vmatpush1.msra.mxu0 0.0
    %2379 = vmatprep.subr.mxu0 0.0
    %2380 = vmatpush1.msra.mxu0 0.0
    %2381 = vmatprep.subr.mxu0 0.0
    %2382 = vmatpush1.msra.mxu0 0.0
    %2383 = vmatprep.subr.mxu0 0.0
    %2384 = vmatpush1.msra.mxu0 0.0
    %2385 = vmatprep.subr.mxu0 0.0
    %2386 = vmatpush1.msra.mxu0 0.0
    %2387 = vmatprep.subr.mxu0 0.0
    %2388 = vmatpush1.msra.mxu0 0.0
    %2389 = vmatprep.subr.mxu0 0.0
    %2390 = vmatpush1.msra.mxu0 0.0
    %2391 = vmatprep.subr.mxu0 0.0
    %2392 = vmatpush1.msra.mxu0 0.0
    %2393 = vmatprep.subr.mxu0 0.0
    %2394 = vmatpush1.msra.mxu0 0.0
    %2395 = vmatprep.subr.mxu0 0.0
    %2396 = vmatpush1.msra.mxu0 0.0
    %2397 = vmatprep.subr.mxu0 0.0
    %2398 = vmatpush1.msra.mxu0 0.0
    %2399 = vmatprep.subr.mxu0 0.0
    %2400 = vmatpush1.msra.mxu0 0.0
    %2401 = vmatprep.subr.mxu0 0.0
    %2402 = vmatpush1.msra.mxu0 0.0
    %2403 = vmatprep.subr.mxu0 0.0
    %2404 = vmatpush1.msra.mxu0 0.0
    %2405 = vmatprep.subr.mxu0 0.0
    %2406 = vmatpush1.msra.mxu0 0.0
    %2407 = vmatprep.subr.mxu0 0.0
    %2408 = vmatpush1.msra.mxu0 0.0
    %2409 = vmatprep.subr.mxu0 0.0
    %2410 = vmatpush1.msra.mxu0 0.0
    %2411 = vmatprep.subr.mxu0 0.0
    %2412 = vmatpush1.msra.mxu0 0.0
    %2413 = vmatprep.subr.mxu0 0.0
    %2414 = vmatpush1.msra.mxu0 0.0
    %2415 = vmatprep.subr.mxu0 0.0
    %2416 = vmatpush1.msra.mxu0 0.0
    %2417 = vmatprep.subr.mxu0 0.0
    %2418 = vmatpush1.msra.mxu0 0.0
    %2419 = vmatprep.subr.mxu0 0.0
    %2420 = vmatpush1.msra.mxu0 0.0
    %2421 = vmatprep.subr.mxu0 0.0
    %2422 = vmatpush1.msra.mxu0 0.0
    %2423 = vmatprep.subr.mxu0 0.0
    %2424 = vmatpush1.msra.mxu0 0.0
    %2425 = vmatprep.subr.mxu0 0.0
    %2426 = vmatpush1.msra.mxu0 0.0
    %2427 = vmatprep.subr.mxu0 0.0
    %2428 = vmatpush1.msra.mxu0 0.0
    %2429 = vmatprep.subr.mxu0 0.0
    %2430 = vmatpush1.msra.mxu0 0.0
    %2431 = vmatprep.subr.mxu0 0.0
    %2432 = vmatpush1.msra.mxu0 0.0
    %2433 = vmatprep.mubr.f32.mxu0 0.0
    %2434 = vmatmul.mubr.f32.gmra.mrb[0].mxu0 %v2364
    %v2435 = vpop.f32.mrb[0].mxu0
    %v2436 = vadd.f32 0.0, %v2435
    %v2437 = vpop.f32.mrb[0].mxu0
    %2438 = vmatprep.mubr.f32.mxu0 0.0
    %2439 = vmatmul.mubr.f32.gmra.mrb[0].mxu0 %v2367
    %v2440 = vpop.f32.mrb[0].mxu0
    %v2441 = vadd.f32 0.0, %v2440
    %v2442 = vpop.f32.mrb[0].mxu0
    %2443 = vdwg.mxu0
    %v2445 = vsel %vm904, %v736, 0
    %v2448 = vsel %vm904, %v741, 0
    %2450 = vmatprep.subr.mxu0 0.0
    %2451 = vmatpush1.msra.mxu0 %v216
    %2452 = vmatprep.subr.mxu0 0.0
    %2453 = vmatpush1.msra.mxu0 %v217
    %2454 = vmatprep.subr.mxu0 0.0
    %2455 = vmatpush1.msra.mxu0 0.0
    %2456 = vmatprep.subr.mxu0 0.0
    %2457 = vmatpush1.msra.mxu0 0.0
    %2458 = vmatprep.subr.mxu0 0.0
    %2459 = vmatpush1.msra.mxu0 0.0
    %2460 = vmatprep.subr.mxu0 0.0
    %2461 = vmatpush1.msra.mxu0 0.0
    %2462 = vmatprep.subr.mxu0 0.0
    %2463 = vmatpush1.msra.mxu0 0.0
    %2464 = vmatprep.subr.mxu0 0.0
    %2465 = vmatpush1.msra.mxu0 0.0
    %2466 = vmatprep.subr.mxu0 0.0
    %2467 = vmatpush1.msra.mxu0 0.0
    %2468 = vmatprep.subr.mxu0 0.0
    %2469 = vmatpush1.msra.mxu0 0.0
    %2470 = vmatprep.subr.mxu0 0.0
    %2471 = vmatpush1.msra.mxu0 0.0
    %2472 = vmatprep.subr.mxu0 0.0
    %2473 = vmatpush1.msra.mxu0 0.0
    %2474 = vmatprep.subr.mxu0 0.0
    %2475 = vmatpush1.msra.mxu0 0.0
    %2476 = vmatprep.subr.mxu0 0.0
    %2477 = vmatpush1.msra.mxu0 0.0
    %2478 = vmatprep.subr.mxu0 0.0
    %2479 = vmatpush1.msra.mxu0 0.0
    %2480 = vmatprep.subr.mxu0 0.0
    %2481 = vmatpush1.msra.mxu0 0.0
    %2482 = vmatprep.subr.mxu0 0.0
    %2483 = vmatpush1.msra.mxu0 0.0
    %2484 = vmatprep.subr.mxu0 0.0
    %2485 = vmatpush1.msra.mxu0 0.0
    %2486 = vmatprep.subr.mxu0 0.0
    %2487 = vmatpush1.msra.mxu0 0.0
    %2488 = vmatprep.subr.mxu0 0.0
    %2489 = vmatpush1.msra.mxu0 0.0
    %2490 = vmatprep.subr.mxu0 0.0
    %2491 = vmatpush1.msra.mxu0 0.0
    %2492 = vmatprep.subr.mxu0 0.0
    %2493 = vmatpush1.msra.mxu0 0.0
    %2494 = vmatprep.subr.mxu0 0.0
    %2495 = vmatpush1.msra.mxu0 0.0
    %2496 = vmatprep.subr.mxu0 0.0
    %2497 = vmatpush1.msra.mxu0 0.0
    %2498 = vmatprep.subr.mxu0 0.0
    %2499 = vmatpush1.msra.mxu0 0.0
    %2500 = vmatprep.subr.mxu0 0.0
    %2501 = vmatpush1.msra.mxu0 0.0
    %2502 = vmatprep.subr.mxu0 0.0
    %2503 = vmatpush1.msra.mxu0 0.0
    %2504 = vmatprep.subr.mxu0 0.0
    %2505 = vmatpush1.msra.mxu0 0.0
    %2506 = vmatprep.subr.mxu0 0.0
    %2507 = vmatpush1.msra.mxu0 0.0
    %2508 = vmatprep.subr.mxu0 0.0
    %2509 = vmatpush1.msra.mxu0 0.0
    %2510 = vmatprep.subr.mxu0 0.0
    %2511 = vmatpush1.msra.mxu0 0.0
    %2512 = vmatprep.subr.mxu0 0.0
    %2513 = vmatpush1.msra.mxu0 0.0
    %2514 = vmatprep.mubr.f32.mxu0 0.0
    %2515 = vmatmul.mubr.f32.gmra.mrb[0].mxu0 %v2445
    %v2516 = vpop.f32.mrb[0].mxu0
    %v2517 = vadd.f32 0.0, %v2516
    %v2518 = vpop.f32.mrb[0].mxu0
    %2519 = vmatprep.mubr.f32.mxu0 0.0
    %2520 = vmatmul.mubr.f32.gmra.mrb[0].mxu0 %v2448
    %v2521 = vpop.f32.mrb[0].mxu0
    %v2522 = vadd.f32 0.0, %v2521
    %v2523 = vpop.f32.mrb[0].mxu0
    %2524 = vdwg.mxu0
    %v2526 = vsel %vm904, %v746, 0
    %v2529 = vsel %vm904, %v751, 0
    %2531 = vmatprep.subr.mxu0 0.0
    %2532 = vmatpush1.msra.mxu0 %v218
    %2533 = vmatprep.subr.mxu0 0.0
    %2534 = vmatpush1.msra.mxu0 %v219
    %2535 = vmatprep.subr.mxu0 0.0
    %2536 = vmatpush1.msra.mxu0 0.0
    %2537 = vmatprep.subr.mxu0 0.0
    %2538 = vmatpush1.msra.mxu0 0.0
    %2539 = vmatprep.subr.mxu0 0.0
    %2540 = vmatpush1.msra.mxu0 0.0
    %2541 = vmatprep.subr.mxu0 0.0
    %2542 = vmatpush1.msra.mxu0 0.0
    %2543 = vmatprep.subr.mxu0 0.0
    %2544 = vmatpush1.msra.mxu0 0.0
    %2545 = vmatprep.subr.mxu0 0.0
    %2546 = vmatpush1.msra.mxu0 0.0
    %2547 = vmatprep.subr.mxu0 0.0
    %2548 = vmatpush1.msra.mxu0 0.0
    %2549 = vmatprep.subr.mxu0 0.0
    %2550 = vmatpush1.msra.mxu0 0.0
    %2551 = vmatprep.subr.mxu0 0.0
    %2552 = vmatpush1.msra.mxu0 0.0
    %2553 = vmatprep.subr.mxu0 0.0
    %2554 = vmatpush1.msra.mxu0 0.0
    %2555 = vmatprep.subr.mxu0 0.0
    %2556 = vmatpush1.msra.mxu0 0.0
    %2557 = vmatprep.subr.mxu0 0.0
    %2558 = vmatpush1.msra.mxu0 0.0
    %2559 = vmatprep.subr.mxu0 0.0
    %2560 = vmatpush1.msra.mxu0 0.0
    %2561 = vmatprep.subr.mxu0 0.0
    %2562 = vmatpush1.msra.mxu0 0.0
    %2563 = vmatprep.subr.mxu0 0.0
    %2564 = vmatpush1.msra.mxu0 0.0
    %2565 = vmatprep.subr.mxu0 0.0
    %2566 = vmatpush1.msra.mxu0 0.0
    %2567 = vmatprep.subr.mxu0 0.0
    %2568 = vmatpush1.msra.mxu0 0.0
    %2569 = vmatprep.subr.mxu0 0.0
    %2570 = vmatpush1.msra.mxu0 0.0
    %2571 = vmatprep.subr.mxu0 0.0
    %2572 = vmatpush1.msra.mxu0 0.0
    %2573 = vmatprep.subr.mxu0 0.0
    %2574 = vmatpush1.msra.mxu0 0.0
    %2575 = vmatprep.subr.mxu0 0.0
    %2576 = vmatpush1.msra.mxu0 0.0
    %2577 = vmatprep.subr.mxu0 0.0
    %2578 = vmatpush1.msra.mxu0 0.0
    %2579 = vmatprep.subr.mxu0 0.0
    %2580 = vmatpush1.msra.mxu0 0.0
    %2581 = vmatprep.subr.mxu0 0.0
    %2582 = vmatpush1.msra.mxu0 0.0
    %2583 = vmatprep.subr.mxu0 0.0
    %2584 = vmatpush1.msra.mxu0 0.0
    %2585 = vmatprep.subr.mxu0 0.0
    %2586 = vmatpush1.msra.mxu0 0.0
    %2587 = vmatprep.subr.mxu0 0.0
    %2588 = vmatpush1.msra.mxu0 0.0
    %2589 = vmatprep.subr.mxu0 0.0
    %2590 = vmatpush1.msra.mxu0 0.0
    %2591 = vmatprep.subr.mxu0 0.0
    %2592 = vmatpush1.msra.mxu0 0.0
    %2593 = vmatprep.subr.mxu0 0.0
    %2594 = vmatpush1.msra.mxu0 0.0
    %2595 = vmatprep.mubr.f32.mxu0 0.0
    %2596 = vmatmul.mubr.f32.gmra.mrb[0].mxu0 %v2526
    %v2597 = vpop.f32.mrb[0].mxu0
    %v2598 = vadd.f32 0.0, %v2597
    %v2599 = vpop.f32.mrb[0].mxu0
    %2600 = vmatprep.mubr.f32.mxu0 0.0
    %2601 = vmatmul.mubr.f32.gmra.mrb[0].mxu0 %v2529
    %v2602 = vpop.f32.mrb[0].mxu0
    %v2603 = vadd.f32 0.0, %v2602
    %v2604 = vpop.f32.mrb[0].mxu0
    %2605 = vdwg.mxu0
    %v2607 = vsel %vm904, %v756, 0
    %v2610 = vsel %vm904, %v761, 0
    %2612 = vmatprep.subr.mxu0 0.0
    %2613 = vmatpush1.msra.mxu0 %v220
    %2614 = vmatprep.subr.mxu0 0.0
    %2615 = vmatpush1.msra.mxu0 %v221
    %2616 = vmatprep.subr.mxu0 0.0
    %2617 = vmatpush1.msra.mxu0 0.0
    %2618 = vmatprep.subr.mxu0 0.0
    %2619 = vmatpush1.msra.mxu0 0.0
    %2620 = vmatprep.subr.mxu0 0.0
    %2621 = vmatpush1.msra.mxu0 0.0
    %2622 = vmatprep.subr.mxu0 0.0
    %2623 = vmatpush1.msra.mxu0 0.0
    %2624 = vmatprep.subr.mxu0 0.0
    %2625 = vmatpush1.msra.mxu0 0.0
    %2626 = vmatprep.subr.mxu0 0.0
    %2627 = vmatpush1.msra.mxu0 0.0
    %2628 = vmatprep.subr.mxu0 0.0
    %2629 = vmatpush1.msra.mxu0 0.0
    %2630 = vmatprep.subr.mxu0 0.0
    %2631 = vmatpush1.msra.mxu0 0.0
    %2632 = vmatprep.subr.mxu0 0.0
    %2633 = vmatpush1.msra.mxu0 0.0
    %2634 = vmatprep.subr.mxu0 0.0
    %2635 = vmatpush1.msra.mxu0 0.0
    %2636 = vmatprep.subr.mxu0 0.0
    %2637 = vmatpush1.msra.mxu0 0.0
    %2638 = vmatprep.subr.mxu0 0.0
    %2639 = vmatpush1.msra.mxu0 0.0
    %2640 = vmatprep.subr.mxu0 0.0
    %2641 = vmatpush1.msra.mxu0 0.0
    %2642 = vmatprep.subr.mxu0 0.0
    %2643 = vmatpush1.msra.mxu0 0.0
    %2644 = vmatprep.subr.mxu0 0.0
    %2645 = vmatpush1.msra.mxu0 0.0
    %2646 = vmatprep.subr.mxu0 0.0
    %2647 = vmatpush1.msra.mxu0 0.0
    %2648 = vmatprep.subr.mxu0 0.0
    %2649 = vmatpush1.msra.mxu0 0.0
    %2650 = vmatprep.subr.mxu0 0.0
    %2651 = vmatpush1.msra.mxu0 0.0
    %2652 = vmatprep.subr.mxu0 0.0
    %2653 = vmatpush1.msra.mxu0 0.0
    %2654 = vmatprep.subr.mxu0 0.0
    %2655 = vmatpush1.msra.mxu0 0.0
    %2656 = vmatprep.subr.mxu0 0.0
    %2657 = vmatpush1.msra.mxu0 0.0
    %2658 = vmatprep.subr.mxu0 0.0
    %2659 = vmatpush1.msra.mxu0 0.0
    %2660 = vmatprep.subr.mxu0 0.0
    %2661 = vmatpush1.msra.mxu0 0.0
    %2662 = vmatprep.subr.mxu0 0.0
    %2663 = vmatpush1.msra.mxu0 0.0
    %2664 = vmatprep.subr.mxu0 0.0
    %2665 = vmatpush1.msra.mxu0 0.0
    %2666 = vmatprep.subr.mxu0 0.0
    %2667 = vmatpush1.msra.mxu0 0.0
    %2668 = vmatprep.subr.mxu0 0.0
    %2669 = vmatpush1.msra.mxu0 0.0
    %2670 = vmatprep.subr.mxu0 0.0
    %2671 = vmatpush1.msra.mxu0 0.0
    %2672 = vmatprep.subr.mxu0 0.0
    %2673 = vmatpush1.msra.mxu0 0.0
    %2674 = vmatprep.subr.mxu0 0.0
    %2675 = vmatpush1.msra.mxu0 0.0
    %2676 = vmatprep.mubr.f32.mxu0 0.0
    %2677 = vmatmul.mubr.f32.gmra.mrb[0].mxu0 %v2607
    %v2678 = vpop.f32.mrb[0].mxu0
    %v2679 = vadd.f32 0.0, %v2678
    %v2680 = vpop.f32.mrb[0].mxu0
    %2681 = vmatprep.mubr.f32.mxu0 0.0
    %2682 = vmatmul.mubr.f32.gmra.mrb[0].mxu0 %v2610
    %v2683 = vpop.f32.mrb[0].mxu0
    %v2684 = vadd.f32 0.0, %v2683
    %v2685 = vpop.f32.mrb[0].mxu0
    %2686 = vdwg.mxu0
    %v2688 = vsel %vm904, %v766, 0
    %v2691 = vsel %vm904, %v771, 0
    %2693 = vmatprep.subr.mxu0 0.0
    %2694 = vmatpush1.msra.mxu0 %v222
    %2695 = vmatprep.subr.mxu0 0.0
    %2696 = vmatpush1.msra.mxu0 %v223
    %2697 = vmatprep.subr.mxu0 0.0
    %2698 = vmatpush1.msra.mxu0 0.0
    %2699 = vmatprep.subr.mxu0 0.0
    %2700 = vmatpush1.msra.mxu0 0.0
    %2701 = vmatprep.subr.mxu0 0.0
    %2702 = vmatpush1.msra.mxu0 0.0
    %2703 = vmatprep.subr.mxu0 0.0
    %2704 = vmatpush1.msra.mxu0 0.0
    %2705 = vmatprep.subr.mxu0 0.0
    %2706 = vmatpush1.msra.mxu0 0.0
    %2707 = vmatprep.subr.mxu0 0.0
    %2708 = vmatpush1.msra.mxu0 0.0
    %2709 = vmatprep.subr.mxu0 0.0
    %2710 = vmatpush1.msra.mxu0 0.0
    %2711 = vmatprep.subr.mxu0 0.0
    %2712 = vmatpush1.msra.mxu0 0.0
    %2713 = vmatprep.subr.mxu0 0.0
    %2714 = vmatpush1.msra.mxu0 0.0
    %2715 = vmatprep.subr.mxu0 0.0
    %2716 = vmatpush1.msra.mxu0 0.0
    %2717 = vmatprep.subr.mxu0 0.0
    %2718 = vmatpush1.msra.mxu0 0.0
    %2719 = vmatprep.subr.mxu0 0.0
    %2720 = vmatpush1.msra.mxu0 0.0
    %2721 = vmatprep.subr.mxu0 0.0
    %2722 = vmatpush1.msra.mxu0 0.0
    %2723 = vmatprep.subr.mxu0 0.0
    %2724 = vmatpush1.msra.mxu0 0.0
    %2725 = vmatprep.subr.mxu0 0.0
    %2726 = vmatpush1.msra.mxu0 0.0
    %2727 = vmatprep.subr.mxu0 0.0
    %2728 = vmatpush1.msra.mxu0 0.0
    %2729 = vmatprep.subr.mxu0 0.0
    %2730 = vmatpush1.msra.mxu0 0.0
    %2731 = vmatprep.subr.mxu0 0.0
    %2732 = vmatpush1.msra.mxu0 0.0
    %2733 = vmatprep.subr.mxu0 0.0
    %2734 = vmatpush1.msra.mxu0 0.0
    %2735 = vmatprep.subr.mxu0 0.0
    %2736 = vmatpush1.msra.mxu0 0.0
    %2737 = vmatprep.subr.mxu0 0.0
    %2738 = vmatpush1.msra.mxu0 0.0
    %2739 = vmatprep.subr.mxu0 0.0
    %2740 = vmatpush1.msra.mxu0 0.0
    %2741 = vmatprep.subr.mxu0 0.0
    %2742 = vmatpush1.msra.mxu0 0.0
    %2743 = vmatprep.subr.mxu0 0.0
    %2744 = vmatpush1.msra.mxu0 0.0
    %2745 = vmatprep.subr.mxu0 0.0
    %2746 = vmatpush1.msra.mxu0 0.0
    %2747 = vmatprep.subr.mxu0 0.0
    %2748 = vmatpush1.msra.mxu0 0.0
    %2749 = vmatprep.subr.mxu0 0.0
    %2750 = vmatpush1.msra.mxu0 0.0
    %2751 = vmatprep.subr.mxu0 0.0
    %2752 = vmatpush1.msra.mxu0 0.0
    %2753 = vmatprep.subr.mxu0 0.0
    %2754 = vmatpush1.msra.mxu0 0.0
    %2755 = vmatprep.subr.mxu0 0.0
    %2756 = vmatpush1.msra.mxu0 0.0
    %2757 = vmatprep.mubr.f32.mxu0 0.0
    %2758 = vmatmul.mubr.f32.gmra.mrb[0].mxu0 %v2688
    %v2759 = vpop.f32.mrb[0].mxu0
    %v2760 = vadd.f32 0.0, %v2759
    %v2761 = vpop.f32.mrb[0].mxu0
    %2762 = vmatprep.mubr.f32.mxu0 0.0
    %2763 = vmatmul.mubr.f32.gmra.mrb[0].mxu0 %v2691
    %v2764 = vpop.f32.mrb[0].mxu0
    %v2765 = vadd.f32 0.0, %v2764
    %v2766 = vpop.f32.mrb[0].mxu0
    %2767 = vdwg.mxu0
    %v2769 = vsel %vm904, %v776, 0
    %v2772 = vsel %vm904, %v781, 0
    %2774 = vmatprep.subr.mxu0 0.0
    %2775 = vmatpush1.msra.mxu0 %v224
    %2776 = vmatprep.subr.mxu0 0.0
    %2777 = vmatpush1.msra.mxu0 %v225
    %2778 = vmatprep.subr.mxu0 0.0
    %2779 = vmatpush1.msra.mxu0 0.0
    %2780 = vmatprep.subr.mxu0 0.0
    %2781 = vmatpush1.msra.mxu0 0.0
    %2782 = vmatprep.subr.mxu0 0.0
    %2783 = vmatpush1.msra.mxu0 0.0
    %2784 = vmatprep.subr.mxu0 0.0
    %2785 = vmatpush1.msra.mxu0 0.0
    %2786 = vmatprep.subr.mxu0 0.0
    %2787 = vmatpush1.msra.mxu0 0.0
    %2788 = vmatprep.subr.mxu0 0.0
    %2789 = vmatpush1.msra.mxu0 0.0
    %2790 = vmatprep.subr.mxu0 0.0
    %2791 = vmatpush1.msra.mxu0 0.0
    %2792 = vmatprep.subr.mxu0 0.0
    %2793 = vmatpush1.msra.mxu0 0.0
    %2794 = vmatprep.subr.mxu0 0.0
    %2795 = vmatpush1.msra.mxu0 0.0
    %2796 = vmatprep.subr.mxu0 0.0
    %2797 = vmatpush1.msra.mxu0 0.0
    %2798 = vmatprep.subr.mxu0 0.0
    %2799 = vmatpush1.msra.mxu0 0.0
    %2800 = vmatprep.subr.mxu0 0.0
    %2801 = vmatpush1.msra.mxu0 0.0
    %2802 = vmatprep.subr.mxu0 0.0
    %2803 = vmatpush1.msra.mxu0 0.0
    %2804 = vmatprep.subr.mxu0 0.0
    %2805 = vmatpush1.msra.mxu0 0.0
    %2806 = vmatprep.subr.mxu0 0.0
    %2807 = vmatpush1.msra.mxu0 0.0
    %2808 = vmatprep.subr.mxu0 0.0
    %2809 = vmatpush1.msra.mxu0 0.0
    %2810 = vmatprep.subr.mxu0 0.0
    %2811 = vmatpush1.msra.mxu0 0.0
    %2812 = vmatprep.subr.mxu0 0.0
    %2813 = vmatpush1.msra.mxu0 0.0
    %2814 = vmatprep.subr.mxu0 0.0
    %2815 = vmatpush1.msra.mxu0 0.0
    %2816 = vmatprep.subr.mxu0 0.0
    %2817 = vmatpush1.msra.mxu0 0.0
    %2818 = vmatprep.subr.mxu0 0.0
    %2819 = vmatpush1.msra.mxu0 0.0
    %2820 = vmatprep.subr.mxu0 0.0
    %2821 = vmatpush1.msra.mxu0 0.0
    %2822 = vmatprep.subr.mxu0 0.0
    %2823 = vmatpush1.msra.mxu0 0.0
    %2824 = vmatprep.subr.mxu0 0.0
    %2825 = vmatpush1.msra.mxu0 0.0
    %2826 = vmatprep.subr.mxu0 0.0
    %2827 = vmatpush1.msra.mxu0 0.0
    %2828 = vmatprep.subr.mxu0 0.0
    %2829 = vmatpush1.msra.mxu0 0.0
    %2830 = vmatprep.subr.mxu0 0.0
    %2831 = vmatpush1.msra.mxu0 0.0
    %2832 = vmatprep.subr.mxu0 0.0
    %2833 = vmatpush1.msra.mxu0 0.0
    %2834 = vmatprep.subr.mxu0 0.0
    %2835 = vmatpush1.msra.mxu0 0.0
    %2836 = vmatprep.subr.mxu0 0.0
    %2837 = vmatpush1.msra.mxu0 0.0
    %2838 = vmatprep.mubr.f32.mxu0 0.0
    %2839 = vmatmul.mubr.f32.gmra.mrb[0].mxu0 %v2769
    %v2840 = vpop.f32.mrb[0].mxu0
    %v2841 = vadd.f32 0.0, %v2840
    %v2842 = vpop.f32.mrb[0].mxu0
    %2843 = vmatprep.mubr.f32.mxu0 0.0
    %2844 = vmatmul.mubr.f32.gmra.mrb[0].mxu0 %v2772
    %v2845 = vpop.f32.mrb[0].mxu0
    %v2846 = vadd.f32 0.0, %v2845
    %v2847 = vpop.f32.mrb[0].mxu0
    %2848 = vdwg.mxu0
    %v2850 = vsel %vm904, %v786, 0
    %v2853 = vsel %vm904, %v791, 0
    %2855 = vmatprep.subr.mxu0 0.0
    %2856 = vmatpush1.msra.mxu0 %v226
    %2857 = vmatprep.subr.mxu0 0.0
    %2858 = vmatpush1.msra.mxu0 %v227
    %2859 = vmatprep.subr.mxu0 0.0
    %2860 = vmatpush1.msra.mxu0 0.0
    %2861 = vmatprep.subr.mxu0 0.0
    %2862 = vmatpush1.msra.mxu0 0.0
    %2863 = vmatprep.subr.mxu0 0.0
    %2864 = vmatpush1.msra.mxu0 0.0
    %2865 = vmatprep.subr.mxu0 0.0
    %2866 = vmatpush1.msra.mxu0 0.0
    %2867 = vmatprep.subr.mxu0 0.0
    %2868 = vmatpush1.msra.mxu0 0.0
    %2869 = vmatprep.subr.mxu0 0.0
    %2870 = vmatpush1.msra.mxu0 0.0
    %2871 = vmatprep.subr.mxu0 0.0
    %2872 = vmatpush1.msra.mxu0 0.0
    %2873 = vmatprep.subr.mxu0 0.0
    %2874 = vmatpush1.msra.mxu0 0.0
    %2875 = vmatprep.subr.mxu0 0.0
    %2876 = vmatpush1.msra.mxu0 0.0
    %2877 = vmatprep.subr.mxu0 0.0
    %2878 = vmatpush1.msra.mxu0 0.0
    %2879 = vmatprep.subr.mxu0 0.0
    %2880 = vmatpush1.msra.mxu0 0.0
    %2881 = vmatprep.subr.mxu0 0.0
    %2882 = vmatpush1.msra.mxu0 0.0
    %2883 = vmatprep.subr.mxu0 0.0
    %2884 = vmatpush1.msra.mxu0 0.0
    %2885 = vmatprep.subr.mxu0 0.0
    %2886 = vmatpush1.msra.mxu0 0.0
    %2887 = vmatprep.subr.mxu0 0.0
    %2888 = vmatpush1.msra.mxu0 0.0
    %2889 = vmatprep.subr.mxu0 0.0
    %2890 = vmatpush1.msra.mxu0 0.0
    %2891 = vmatprep.subr.mxu0 0.0
    %2892 = vmatpush1.msra.mxu0 0.0
    %2893 = vmatprep.subr.mxu0 0.0
    %2894 = vmatpush1.msra.mxu0 0.0
    %2895 = vmatprep.subr.mxu0 0.0
    %2896 = vmatpush1.msra.mxu0 0.0
    %2897 = vmatprep.subr.mxu0 0.0
    %2898 = vmatpush1.msra.mxu0 0.0
    %2899 = vmatprep.subr.mxu0 0.0
    %2900 = vmatpush1.msra.mxu0 0.0
    %2901 = vmatprep.subr.mxu0 0.0
    %2902 = vmatpush1.msra.mxu0 0.0
    %2903 = vmatprep.subr.mxu0 0.0
    %2904 = vmatpush1.msra.mxu0 0.0
    %2905 = vmatprep.subr.mxu0 0.0
    %2906 = vmatpush1.msra.mxu0 0.0
    %2907 = vmatprep.subr.mxu0 0.0
    %2908 = vmatpush1.msra.mxu0 0.0
    %2909 = vmatprep.subr.mxu0 0.0
    %2910 = vmatpush1.msra.mxu0 0.0
    %2911 = vmatprep.subr.mxu0 0.0
    %2912 = vmatpush1.msra.mxu0 0.0
    %2913 = vmatprep.subr.mxu0 0.0
    %2914 = vmatpush1.msra.mxu0 0.0
    %2915 = vmatprep.subr.mxu0 0.0
    %2916 = vmatpush1.msra.mxu0 0.0
    %2917 = vmatprep.subr.mxu0 0.0
    %2918 = vmatpush1.msra.mxu0 0.0
    %2919 = vmatprep.mubr.f32.mxu0 0.0
    %2920 = vmatmul.mubr.f32.gmra.mrb[0].mxu0 %v2850
    %v2921 = vpop.f32.mrb[0].mxu0
    %v2922 = vadd.f32 0.0, %v2921
    %v2923 = vpop.f32.mrb[0].mxu0
    %2924 = vmatprep.mubr.f32.mxu0 0.0
    %2925 = vmatmul.mubr.f32.gmra.mrb[0].mxu0 %v2853
    %v2926 = vpop.f32.mrb[0].mxu0
    %v2927 = vadd.f32 0.0, %v2926
    %v2928 = vpop.f32.mrb[0].mxu0
    %2929 = vdwg.mxu0
    %v2931 = vsel %vm904, %v796, 0
    %v2934 = vsel %vm904, %v801, 0
    %2936 = vmatprep.subr.mxu0 0.0
    %2937 = vmatpush1.msra.mxu0 %v228
    %2938 = vmatprep.subr.mxu0 0.0
    %2939 = vmatpush1.msra.mxu0 %v229
    %2940 = vmatprep.subr.mxu0 0.0
    %2941 = vmatpush1.msra.mxu0 0.0
    %2942 = vmatprep.subr.mxu0 0.0
    %2943 = vmatpush1.msra.mxu0 0.0
    %2944 = vmatprep.subr.mxu0 0.0
    %2945 = vmatpush1.msra.mxu0 0.0
    %2946 = vmatprep.subr.mxu0 0.0
    %2947 = vmatpush1.msra.mxu0 0.0
    %2948 = vmatprep.subr.mxu0 0.0
    %2949 = vmatpush1.msra.mxu0 0.0
    %2950 = vmatprep.subr.mxu0 0.0
    %2951 = vmatpush1.msra.mxu0 0.0
    %2952 = vmatprep.subr.mxu0 0.0
    %2953 = vmatpush1.msra.mxu0 0.0
    %2954 = vmatprep.subr.mxu0 0.0
    %2955 = vmatpush1.msra.mxu0 0.0
    %2956 = vmatprep.subr.mxu0 0.0
    %2957 = vmatpush1.msra.mxu0 0.0
    %2958 = vmatprep.subr.mxu0 0.0
    %2959 = vmatpush1.msra.mxu0 0.0
    %2960 = vmatprep.subr.mxu0 0.0
    %2961 = vmatpush1.msra.mxu0 0.0
    %2962 = vmatprep.subr.mxu0 0.0
    %2963 = vmatpush1.msra.mxu0 0.0
    %2964 = vmatprep.subr.mxu0 0.0
    %2965 = vmatpush1.msra.mxu0 0.0
    %2966 = vmatprep.subr.mxu0 0.0
    %2967 = vmatpush1.msra.mxu0 0.0
    %2968 = vmatprep.subr.mxu0 0.0
    %2969 = vmatpush1.msra.mxu0 0.0
    %2970 = vmatprep.subr.mxu0 0.0
    %2971 = vmatpush1.msra.mxu0 0.0
    %2972 = vmatprep.subr.mxu0 0.0
    %2973 = vmatpush1.msra.mxu0 0.0
    %2974 = vmatprep.subr.mxu0 0.0
    %2975 = vmatpush1.msra.mxu0 0.0
    %2976 = vmatprep.subr.mxu0 0.0
    %2977 = vmatpush1.msra.mxu0 0.0
    %2978 = vmatprep.subr.mxu0 0.0
    %2979 = vmatpush1.msra.mxu0 0.0
    %2980 = vmatprep.subr.mxu0 0.0
    %2981 = vmatpush1.msra.mxu0 0.0
    %2982 = vmatprep.subr.mxu0 0.0
    %2983 = vmatpush1.msra.mxu0 0.0
    %2984 = vmatprep.subr.mxu0 0.0
    %2985 = vmatpush1.msra.mxu0 0.0
    %2986 = vmatprep.subr.mxu0 0.0
    %2987 = vmatpush1.msra.mxu0 0.0
    %2988 = vmatprep.subr.mxu0 0.0
    %2989 = vmatpush1.msra.mxu0 0.0
    %2990 = vmatprep.subr.mxu0 0.0
    %2991 = vmatpush1.msra.mxu0 0.0
    %2992 = vmatprep.subr.mxu0 0.0
    %2993 = vmatpush1.msra.mxu0 0.0
    %2994 = vmatprep.subr.mxu0 0.0
    %2995 = vmatpush1.msra.mxu0 0.0
    %2996 = vmatprep.subr.mxu0 0.0
    %2997 = vmatpush1.msra.mxu0 0.0
    %2998 = vmatprep.subr.mxu0 0.0
    %2999 = vmatpush1.msra.mxu0 0.0
    %3000 = vmatprep.mubr.f32.mxu0 0.0
    %3001 = vmatmul.mubr.f32.gmra.mrb[0].mxu0 %v2931
    %v3002 = vpop.f32.mrb[0].mxu0
    %v3003 = vadd.f32 0.0, %v3002
    %v3004 = vpop.f32.mrb[0].mxu0
    %3005 = vmatprep.mubr.f32.mxu0 0.0
    %3006 = vmatmul.mubr.f32.gmra.mrb[0].mxu0 %v2934
    %v3007 = vpop.f32.mrb[0].mxu0
    %v3008 = vadd.f32 0.0, %v3007
    %v3009 = vpop.f32.mrb[0].mxu0
    %3010 = vdwg.mxu0
    %v3012 = vsel %vm904, %v806, 0
    %v3015 = vsel %vm904, %v811, 0
    %3017 = vmatprep.subr.mxu0 0.0
    %3018 = vmatpush1.msra.mxu0 %v230
    %3019 = vmatprep.subr.mxu0 0.0
    %3020 = vmatpush1.msra.mxu0 %v231
    %3021 = vmatprep.subr.mxu0 0.0
    %3022 = vmatpush1.msra.mxu0 0.0
    %3023 = vmatprep.subr.mxu0 0.0
    %3024 = vmatpush1.msra.mxu0 0.0
    %3025 = vmatprep.subr.mxu0 0.0
    %3026 = vmatpush1.msra.mxu0 0.0
    %3027 = vmatprep.subr.mxu0 0.0
    %3028 = vmatpush1.msra.mxu0 0.0
    %3029 = vmatprep.subr.mxu0 0.0
    %3030 = vmatpush1.msra.mxu0 0.0
    %3031 = vmatprep.subr.mxu0 0.0
    %3032 = vmatpush1.msra.mxu0 0.0
    %3033 = vmatprep.subr.mxu0 0.0
    %3034 = vmatpush1.msra.mxu0 0.0
    %3035 = vmatprep.subr.mxu0 0.0
    %3036 = vmatpush1.msra.mxu0 0.0
    %3037 = vmatprep.subr.mxu0 0.0
    %3038 = vmatpush1.msra.mxu0 0.0
    %3039 = vmatprep.subr.mxu0 0.0
    %3040 = vmatpush1.msra.mxu0 0.0
    %3041 = vmatprep.subr.mxu0 0.0
    %3042 = vmatpush1.msra.mxu0 0.0
    %3043 = vmatprep.subr.mxu0 0.0
    %3044 = vmatpush1.msra.mxu0 0.0
    %3045 = vmatprep.subr.mxu0 0.0
    %3046 = vmatpush1.msra.mxu0 0.0
    %3047 = vmatprep.subr.mxu0 0.0
    %3048 = vmatpush1.msra.mxu0 0.0
    %3049 = vmatprep.subr.mxu0 0.0
    %3050 = vmatpush1.msra.mxu0 0.0
    %3051 = vmatprep.subr.mxu0 0.0
    %3052 = vmatpush1.msra.mxu0 0.0
    %3053 = vmatprep.subr.mxu0 0.0
    %3054 = vmatpush1.msra.mxu0 0.0
    %3055 = vmatprep.subr.mxu0 0.0
    %3056 = vmatpush1.msra.mxu0 0.0
    %3057 = vmatprep.subr.mxu0 0.0
    %3058 = vmatpush1.msra.mxu0 0.0
    %3059 = vmatprep.subr.mxu0 0.0
    %3060 = vmatpush1.msra.mxu0 0.0
    %3061 = vmatprep.subr.mxu0 0.0
    %3062 = vmatpush1.msra.mxu0 0.0
    %3063 = vmatprep.subr.mxu0 0.0
    %3064 = vmatpush1.msra.mxu0 0.0
    %3065 = vmatprep.subr.mxu0 0.0
    %3066 = vmatpush1.msra.mxu0 0.0
    %3067 = vmatprep.subr.mxu0 0.0
    %3068 = vmatpush1.msra.mxu0 0.0
    %3069 = vmatprep.subr.mxu0 0.0
    %3070 = vmatpush1.msra.mxu0 0.0
    %3071 = vmatprep.subr.mxu0 0.0
    %3072 = vmatpush1.msra.mxu0 0.0
    %3073 = vmatprep.subr.mxu0 0.0
    %3074 = vmatpush1.msra.mxu0 0.0
    %3075 = vmatprep.subr.mxu0 0.0
    %3076 = vmatpush1.msra.mxu0 0.0
    %3077 = vmatprep.subr.mxu0 0.0
    %3078 = vmatpush1.msra.mxu0 0.0
    %3079 = vmatprep.subr.mxu0 0.0
    %3080 = vmatpush1.msra.mxu0 0.0
    %3081 = vmatprep.mubr.f32.mxu0 0.0
    %3082 = vmatmul.mubr.f32.gmra.mrb[0].mxu0 %v3012
    %v3083 = vpop.f32.mrb[0].mxu0
    %v3084 = vadd.f32 0.0, %v3083
    %v3085 = vpop.f32.mrb[0].mxu0
    %3086 = vmatprep.mubr.f32.mxu0 0.0
    %3087 = vmatmul.mubr.f32.gmra.mrb[0].mxu0 %v3015
    %v3088 = vpop.f32.mrb[0].mxu0
    %v3089 = vadd.f32 0.0, %v3088
    %v3090 = vpop.f32.mrb[0].mxu0
    %3091 = vdwg.mxu0
    %v3093 = vsel %vm904, %v816, 0
    %v3096 = vsel %vm904, %v821, 0
    %3098 = vmatprep.subr.mxu0 0.0
    %3099 = vmatpush1.msra.mxu0 %v232
    %3100 = vmatprep.subr.mxu0 0.0
    %3101 = vmatpush1.msra.mxu0 %v233
    %3102 = vmatprep.subr.mxu0 0.0
    %3103 = vmatpush1.msra.mxu0 0.0
    %3104 = vmatprep.subr.mxu0 0.0
    %3105 = vmatpush1.msra.mxu0 0.0
    %3106 = vmatprep.subr.mxu0 0.0
    %3107 = vmatpush1.msra.mxu0 0.0
    %3108 = vmatprep.subr.mxu0 0.0
    %3109 = vmatpush1.msra.mxu0 0.0
    %3110 = vmatprep.subr.mxu0 0.0
    %3111 = vmatpush1.msra.mxu0 0.0
    %3112 = vmatprep.subr.mxu0 0.0
    %3113 = vmatpush1.msra.mxu0 0.0
    %3114 = vmatprep.subr.mxu0 0.0
    %3115 = vmatpush1.msra.mxu0 0.0
    %3116 = vmatprep.subr.mxu0 0.0
    %3117 = vmatpush1.msra.mxu0 0.0
    %3118 = vmatprep.subr.mxu0 0.0
    %3119 = vmatpush1.msra.mxu0 0.0
    %3120 = vmatprep.subr.mxu0 0.0
    %3121 = vmatpush1.msra.mxu0 0.0
    %3122 = vmatprep.subr.mxu0 0.0
    %3123 = vmatpush1.msra.mxu0 0.0
    %3124 = vmatprep.subr.mxu0 0.0
    %3125 = vmatpush1.msra.mxu0 0.0
    %3126 = vmatprep.subr.mxu0 0.0
    %3127 = vmatpush1.msra.mxu0 0.0
    %3128 = vmatprep.subr.mxu0 0.0
    %3129 = vmatpush1.msra.mxu0 0.0
    %3130 = vmatprep.subr.mxu0 0.0
    %3131 = vmatpush1.msra.mxu0 0.0
    %3132 = vmatprep.subr.mxu0 0.0
    %3133 = vmatpush1.msra.mxu0 0.0
    %3134 = vmatprep.subr.mxu0 0.0
    %3135 = vmatpush1.msra.mxu0 0.0
    %3136 = vmatprep.subr.mxu0 0.0
    %3137 = vmatpush1.msra.mxu0 0.0
    %3138 = vmatprep.subr.mxu0 0.0
    %3139 = vmatpush1.msra.mxu0 0.0
    %3140 = vmatprep.subr.mxu0 0.0
    %3141 = vmatpush1.msra.mxu0 0.0
    %3142 = vmatprep.subr.mxu0 0.0
    %3143 = vmatpush1.msra.mxu0 0.0
    %3144 = vmatprep.subr.mxu0 0.0
    %3145 = vmatpush1.msra.mxu0 0.0
    %3146 = vmatprep.subr.mxu0 0.0
    %3147 = vmatpush1.msra.mxu0 0.0
    %3148 = vmatprep.subr.mxu0 0.0
    %3149 = vmatpush1.msra.mxu0 0.0
    %3150 = vmatprep.subr.mxu0 0.0
    %3151 = vmatpush1.msra.mxu0 0.0
    %3152 = vmatprep.subr.mxu0 0.0
    %3153 = vmatpush1.msra.mxu0 0.0
    %3154 = vmatprep.subr.mxu0 0.0
    %3155 = vmatpush1.msra.mxu0 0.0
    %3156 = vmatprep.subr.mxu0 0.0
    %3157 = vmatpush1.msra.mxu0 0.0
    %3158 = vmatprep.subr.mxu0 0.0
    %3159 = vmatpush1.msra.mxu0 0.0
    %3160 = vmatprep.subr.mxu0 0.0
    %3161 = vmatpush1.msra.mxu0 0.0
    %3162 = vmatprep.mubr.f32.mxu0 0.0
    %3163 = vmatmul.mubr.f32.gmra.mrb[0].mxu0 %v3093
    %v3164 = vpop.f32.mrb[0].mxu0
    %v3165 = vadd.f32 0.0, %v3164
    %v3166 = vpop.f32.mrb[0].mxu0
    %3167 = vmatprep.mubr.f32.mxu0 0.0
    %3168 = vmatmul.mubr.f32.gmra.mrb[0].mxu0 %v3096
    %v3169 = vpop.f32.mrb[0].mxu0
    %v3170 = vadd.f32 0.0, %v3169
    %v3171 = vpop.f32.mrb[0].mxu0
    %3172 = vdwg.mxu0
    %v3174 = vsel %vm904, %v826, 0
    %v3177 = vsel %vm904, %v831, 0
    %3179 = vmatprep.subr.mxu0 0.0
    %3180 = vmatpush1.msra.mxu0 %v234
    %3181 = vmatprep.subr.mxu0 0.0
    %3182 = vmatpush1.msra.mxu0 %v235
    %3183 = vmatprep.subr.mxu0 0.0
    %3184 = vmatpush1.msra.mxu0 0.0
    %3185 = vmatprep.subr.mxu0 0.0
    %3186 = vmatpush1.msra.mxu0 0.0
    %3187 = vmatprep.subr.mxu0 0.0
    %3188 = vmatpush1.msra.mxu0 0.0
    %3189 = vmatprep.subr.mxu0 0.0
    %3190 = vmatpush1.msra.mxu0 0.0
    %3191 = vmatprep.subr.mxu0 0.0
    %3192 = vmatpush1.msra.mxu0 0.0
    %3193 = vmatprep.subr.mxu0 0.0
    %3194 = vmatpush1.msra.mxu0 0.0
    %3195 = vmatprep.subr.mxu0 0.0
    %3196 = vmatpush1.msra.mxu0 0.0
    %3197 = vmatprep.subr.mxu0 0.0
    %3198 = vmatpush1.msra.mxu0 0.0
    %3199 = vmatprep.subr.mxu0 0.0
    %3200 = vmatpush1.msra.mxu0 0.0
    %3201 = vmatprep.subr.mxu0 0.0
    %3202 = vmatpush1.msra.mxu0 0.0
    %3203 = vmatprep.subr.mxu0 0.0
    %3204 = vmatpush1.msra.mxu0 0.0
    %3205 = vmatprep.subr.mxu0 0.0
    %3206 = vmatpush1.msra.mxu0 0.0
    %3207 = vmatprep.subr.mxu0 0.0
    %3208 = vmatpush1.msra.mxu0 0.0
    %3209 = vmatprep.subr.mxu0 0.0
    %3210 = vmatpush1.msra.mxu0 0.0
    %3211 = vmatprep.subr.mxu0 0.0
    %3212 = vmatpush1.msra.mxu0 0.0
    %3213 = vmatprep.subr.mxu0 0.0
    %3214 = vmatpush1.msra.mxu0 0.0
    %3215 = vmatprep.subr.mxu0 0.0
    %3216 = vmatpush1.msra.mxu0 0.0
    %3217 = vmatprep.subr.mxu0 0.0
    %3218 = vmatpush1.msra.mxu0 0.0
    %3219 = vmatprep.subr.mxu0 0.0
    %3220 = vmatpush1.msra.mxu0 0.0
    %3221 = vmatprep.subr.mxu0 0.0
    %3222 = vmatpush1.msra.mxu0 0.0
    %3223 = vmatprep.subr.mxu0 0.0
    %3224 = vmatpush1.msra.mxu0 0.0
    %3225 = vmatprep.subr.mxu0 0.0
    %3226 = vmatpush1.msra.mxu0 0.0
    %3227 = vmatprep.subr.mxu0 0.0
    %3228 = vmatpush1.msra.mxu0 0.0
    %3229 = vmatprep.subr.mxu0 0.0
    %3230 = vmatpush1.msra.mxu0 0.0
    %3231 = vmatprep.subr.mxu0 0.0
    %3232 = vmatpush1.msra.mxu0 0.0
    %3233 = vmatprep.subr.mxu0 0.0
    %3234 = vmatpush1.msra.mxu0 0.0
    %3235 = vmatprep.subr.mxu0 0.0
    %3236 = vmatpush1.msra.mxu0 0.0
    %3237 = vmatprep.subr.mxu0 0.0
    %3238 = vmatpush1.msra.mxu0 0.0
    %3239 = vmatprep.subr.mxu0 0.0
    %3240 = vmatpush1.msra.mxu0 0.0
    %3241 = vmatprep.subr.mxu0 0.0
    %3242 = vmatpush1.msra.mxu0 0.0
    %3243 = vmatprep.mubr.f32.mxu0 0.0
    %3244 = vmatmul.mubr.f32.gmra.mrb[0].mxu0 %v3174
    %v3245 = vpop.f32.mrb[0].mxu0
    %v3246 = vadd.f32 0.0, %v3245
    %v3247 = vpop.f32.mrb[0].mxu0
    %3248 = vmatprep.mubr.f32.mxu0 0.0
    %3249 = vmatmul.mubr.f32.gmra.mrb[0].mxu0 %v3177
    %v3250 = vpop.f32.mrb[0].mxu0
    %v3251 = vadd.f32 0.0, %v3250
    %v3252 = vpop.f32.mrb[0].mxu0
    %3253 = vdwg.mxu0
    %v3255 = vsel %vm904, %v836, 0
    %v3258 = vsel %vm904, %v841, 0
    %3260 = vmatprep.subr.mxu0 0.0
    %3261 = vmatpush1.msra.mxu0 %v236
    %3262 = vmatprep.subr.mxu0 0.0
    %3263 = vmatpush1.msra.mxu0 %v237
    %3264 = vmatprep.subr.mxu0 0.0
    %3265 = vmatpush1.msra.mxu0 0.0
    %3266 = vmatprep.subr.mxu0 0.0
    %3267 = vmatpush1.msra.mxu0 0.0
    %3268 = vmatprep.subr.mxu0 0.0
    %3269 = vmatpush1.msra.mxu0 0.0
    %3270 = vmatprep.subr.mxu0 0.0
    %3271 = vmatpush1.msra.mxu0 0.0
    %3272 = vmatprep.subr.mxu0 0.0
    %3273 = vmatpush1.msra.mxu0 0.0
    %3274 = vmatprep.subr.mxu0 0.0
    %3275 = vmatpush1.msra.mxu0 0.0
    %3276 = vmatprep.subr.mxu0 0.0
    %3277 = vmatpush1.msra.mxu0 0.0
    %3278 = vmatprep.subr.mxu0 0.0
    %3279 = vmatpush1.msra.mxu0 0.0
    %3280 = vmatprep.subr.mxu0 0.0
    %3281 = vmatpush1.msra.mxu0 0.0
    %3282 = vmatprep.subr.mxu0 0.0
    %3283 = vmatpush1.msra.mxu0 0.0
    %3284 = vmatprep.subr.mxu0 0.0
    %3285 = vmatpush1.msra.mxu0 0.0
    %3286 = vmatprep.subr.mxu0 0.0
    %3287 = vmatpush1.msra.mxu0 0.0
    %3288 = vmatprep.subr.mxu0 0.0
    %3289 = vmatpush1.msra.mxu0 0.0
    %3290 = vmatprep.subr.mxu0 0.0
    %3291 = vmatpush1.msra.mxu0 0.0
    %3292 = vmatprep.subr.mxu0 0.0
    %3293 = vmatpush1.msra.mxu0 0.0
    %3294 = vmatprep.subr.mxu0 0.0
    %3295 = vmatpush1.msra.mxu0 0.0
    %3296 = vmatprep.subr.mxu0 0.0
    %3297 = vmatpush1.msra.mxu0 0.0
    %3298 = vmatprep.subr.mxu0 0.0
    %3299 = vmatpush1.msra.mxu0 0.0
    %3300 = vmatprep.subr.mxu0 0.0
    %3301 = vmatpush1.msra.mxu0 0.0
    %3302 = vmatprep.subr.mxu0 0.0
    %3303 = vmatpush1.msra.mxu0 0.0
    %3304 = vmatprep.subr.mxu0 0.0
    %3305 = vmatpush1.msra.mxu0 0.0
    %3306 = vmatprep.subr.mxu0 0.0
    %3307 = vmatpush1.msra.mxu0 0.0
    %3308 = vmatprep.subr.mxu0 0.0
    %3309 = vmatpush1.msra.mxu0 0.0
    %3310 = vmatprep.subr.mxu0 0.0
    %3311 = vmatpush1.msra.mxu0 0.0
    %3312 = vmatprep.subr.mxu0 0.0
    %3313 = vmatpush1.msra.mxu0 0.0
    %3314 = vmatprep.subr.mxu0 0.0
    %3315 = vmatpush1.msra.mxu0 0.0
    %3316 = vmatprep.subr.mxu0 0.0
    %3317 = vmatpush1.msra.mxu0 0.0
    %3318 = vmatprep.subr.mxu0 0.0
    %3319 = vmatpush1.msra.mxu0 0.0
    %3320 = vmatprep.subr.mxu0 0.0
    %3321 = vmatpush1.msra.mxu0 0.0
    %3322 = vmatprep.subr.mxu0 0.0
    %3323 = vmatpush1.msra.mxu0 0.0
    %3324 = vmatprep.mubr.f32.mxu0 0.0
    %3325 = vmatmul.mubr.f32.gmra.mrb[0].mxu0 %v3255
    %v3326 = vpop.f32.mrb[0].mxu0
    %v3327 = vadd.f32 0.0, %v3326
    %v3328 = vpop.f32.mrb[0].mxu0
    %3329 = vmatprep.mubr.f32.mxu0 0.0
    %3330 = vmatmul.mubr.f32.gmra.mrb[0].mxu0 %v3258
    %v3331 = vpop.f32.mrb[0].mxu0
    %v3332 = vadd.f32 0.0, %v3331
    %v3333 = vpop.f32.mrb[0].mxu0
    %3334 = vdwg.mxu0
    %v3336 = vsel %vm904, %v846, 0
    %v3339 = vsel %vm904, %v851, 0
    %3341 = vmatprep.subr.mxu0 0.0
    %3342 = vmatpush1.msra.mxu0 %v238
    %3343 = vmatprep.subr.mxu0 0.0
    %3344 = vmatpush1.msra.mxu0 %v239
    %3345 = vmatprep.subr.mxu0 0.0
    %3346 = vmatpush1.msra.mxu0 0.0
    %3347 = vmatprep.subr.mxu0 0.0
    %3348 = vmatpush1.msra.mxu0 0.0
    %3349 = vmatprep.subr.mxu0 0.0
    %3350 = vmatpush1.msra.mxu0 0.0
    %3351 = vmatprep.subr.mxu0 0.0
    %3352 = vmatpush1.msra.mxu0 0.0
    %3353 = vmatprep.subr.mxu0 0.0
    %3354 = vmatpush1.msra.mxu0 0.0
    %3355 = vmatprep.subr.mxu0 0.0
    %3356 = vmatpush1.msra.mxu0 0.0
    %3357 = vmatprep.subr.mxu0 0.0
    %3358 = vmatpush1.msra.mxu0 0.0
    %3359 = vmatprep.subr.mxu0 0.0
    %3360 = vmatpush1.msra.mxu0 0.0
    %3361 = vmatprep.subr.mxu0 0.0
    %3362 = vmatpush1.msra.mxu0 0.0
    %3363 = vmatprep.subr.mxu0 0.0
    %3364 = vmatpush1.msra.mxu0 0.0
    %3365 = vmatprep.subr.mxu0 0.0
    %3366 = vmatpush1.msra.mxu0 0.0
    %3367 = vmatprep.subr.mxu0 0.0
    %3368 = vmatpush1.msra.mxu0 0.0
    %3369 = vmatprep.subr.mxu0 0.0
    %3370 = vmatpush1.msra.mxu0 0.0
    %3371 = vmatprep.subr.mxu0 0.0
    %3372 = vmatpush1.msra.mxu0 0.0
    %3373 = vmatprep.subr.mxu0 0.0
    %3374 = vmatpush1.msra.mxu0 0.0
    %3375 = vmatprep.subr.mxu0 0.0
    %3376 = vmatpush1.msra.mxu0 0.0
    %3377 = vmatprep.subr.mxu0 0.0
    %3378 = vmatpush1.msra.mxu0 0.0
    %3379 = vmatprep.subr.mxu0 0.0
    %3380 = vmatpush1.msra.mxu0 0.0
    %3381 = vmatprep.subr.mxu0 0.0
    %3382 = vmatpush1.msra.mxu0 0.0
    %3383 = vmatprep.subr.mxu0 0.0
    %3384 = vmatpush1.msra.mxu0 0.0
    %3385 = vmatprep.subr.mxu0 0.0
    %3386 = vmatpush1.msra.mxu0 0.0
    %3387 = vmatprep.subr.mxu0 0.0
    %3388 = vmatpush1.msra.mxu0 0.0
    %3389 = vmatprep.subr.mxu0 0.0
    %3390 = vmatpush1.msra.mxu0 0.0
    %3391 = vmatprep.subr.mxu0 0.0
    %3392 = vmatpush1.msra.mxu0 0.0
    %3393 = vmatprep.subr.mxu0 0.0
    %3394 = vmatpush1.msra.mxu0 0.0
    %3395 = vmatprep.subr.mxu0 0.0
    %3396 = vmatpush1.msra.mxu0 0.0
    %3397 = vmatprep.subr.mxu0 0.0
    %3398 = vmatpush1.msra.mxu0 0.0
    %3399 = vmatprep.subr.mxu0 0.0
    %3400 = vmatpush1.msra.mxu0 0.0
    %3401 = vmatprep.subr.mxu0 0.0
    %3402 = vmatpush1.msra.mxu0 0.0
    %3403 = vmatprep.subr.mxu0 0.0
    %3404 = vmatpush1.msra.mxu0 0.0
    %3405 = vmatprep.mubr.f32.mxu0 0.0
    %3406 = vmatmul.mubr.f32.gmra.mrb[0].mxu0 %v3336
    %v3407 = vpop.f32.mrb[0].mxu0
    %v3408 = vadd.f32 0.0, %v3407
    %v3409 = vpop.f32.mrb[0].mxu0
    %3410 = vmatprep.mubr.f32.mxu0 0.0
    %3411 = vmatmul.mubr.f32.gmra.mrb[0].mxu0 %v3339
    %v3412 = vpop.f32.mrb[0].mxu0
    %v3413 = vadd.f32 0.0, %v3412
    %v3414 = vpop.f32.mrb[0].mxu0
    %3415 = vdwg.mxu0
    %v3417 = vsel %vm904, %v856, 0
    %v3420 = vsel %vm904, %v861, 0
    %3422 = vmatprep.subr.mxu0 0.0
    %3423 = vmatpush1.msra.mxu0 %v240
    %3424 = vmatprep.subr.mxu0 0.0
    %3425 = vmatpush1.msra.mxu0 %v241
    %3426 = vmatprep.subr.mxu0 0.0
    %3427 = vmatpush1.msra.mxu0 0.0
    %3428 = vmatprep.subr.mxu0 0.0
    %3429 = vmatpush1.msra.mxu0 0.0
    %3430 = vmatprep.subr.mxu0 0.0
    %3431 = vmatpush1.msra.mxu0 0.0
    %3432 = vmatprep.subr.mxu0 0.0
    %3433 = vmatpush1.msra.mxu0 0.0
    %3434 = vmatprep.subr.mxu0 0.0
    %3435 = vmatpush1.msra.mxu0 0.0
    %3436 = vmatprep.subr.mxu0 0.0
    %3437 = vmatpush1.msra.mxu0 0.0
    %3438 = vmatprep.subr.mxu0 0.0
    %3439 = vmatpush1.msra.mxu0 0.0
    %3440 = vmatprep.subr.mxu0 0.0
    %3441 = vmatpush1.msra.mxu0 0.0
    %3442 = vmatprep.subr.mxu0 0.0
    %3443 = vmatpush1.msra.mxu0 0.0
    %3444 = vmatprep.subr.mxu0 0.0
    %3445 = vmatpush1.msra.mxu0 0.0
    %3446 = vmatprep.subr.mxu0 0.0
    %3447 = vmatpush1.msra.mxu0 0.0
    %3448 = vmatprep.subr.mxu0 0.0
    %3449 = vmatpush1.msra.mxu0 0.0
    %3450 = vmatprep.subr.mxu0 0.0
    %3451 = vmatpush1.msra.mxu0 0.0
    %3452 = vmatprep.subr.mxu0 0.0
    %3453 = vmatpush1.msra.mxu0 0.0
    %3454 = vmatprep.subr.mxu0 0.0
    %3455 = vmatpush1.msra.mxu0 0.0
    %3456 = vmatprep.subr.mxu0 0.0
    %3457 = vmatpush1.msra.mxu0 0.0
    %3458 = vmatprep.subr.mxu0 0.0
    %3459 = vmatpush1.msra.mxu0 0.0
    %3460 = vmatprep.subr.mxu0 0.0
    %3461 = vmatpush1.msra.mxu0 0.0
    %3462 = vmatprep.subr.mxu0 0.0
    %3463 = vmatpush1.msra.mxu0 0.0
    %3464 = vmatprep.subr.mxu0 0.0
    %3465 = vmatpush1.msra.mxu0 0.0
    %3466 = vmatprep.subr.mxu0 0.0
    %3467 = vmatpush1.msra.mxu0 0.0
    %3468 = vmatprep.subr.mxu0 0.0
    %3469 = vmatpush1.msra.mxu0 0.0
    %3470 = vmatprep.subr.mxu0 0.0
    %3471 = vmatpush1.msra.mxu0 0.0
    %3472 = vmatprep.subr.mxu0 0.0
    %3473 = vmatpush1.msra.mxu0 0.0
    %3474 = vmatprep.subr.mxu0 0.0
    %3475 = vmatpush1.msra.mxu0 0.0
    %3476 = vmatprep.subr.mxu0 0.0
    %3477 = vmatpush1.msra.mxu0 0.0
    %3478 = vmatprep.subr.mxu0 0.0
    %3479 = vmatpush1.msra.mxu0 0.0
    %3480 = vmatprep.subr.mxu0 0.0
    %3481 = vmatpush1.msra.mxu0 0.0
    %3482 = vmatprep.subr.mxu0 0.0
    %3483 = vmatpush1.msra.mxu0 0.0
    %3484 = vmatprep.subr.mxu0 0.0
    %3485 = vmatpush1.msra.mxu0 0.0
    %3486 = vmatprep.mubr.f32.mxu0 0.0
    %3487 = vmatmul.mubr.f32.gmra.mrb[0].mxu0 %v3417
    %v3488 = vpop.f32.mrb[0].mxu0
    %v3489 = vadd.f32 0.0, %v3488
    %v3490 = vpop.f32.mrb[0].mxu0
    %3491 = vmatprep.mubr.f32.mxu0 0.0
    %3492 = vmatmul.mubr.f32.gmra.mrb[0].mxu0 %v3420
    %v3493 = vpop.f32.mrb[0].mxu0
    %v3494 = vadd.f32 0.0, %v3493
    %v3495 = vpop.f32.mrb[0].mxu0
    %3496 = vdwg.mxu0
    %v3498 = vsel %vm904, %v866, 0
    %v3501 = vsel %vm904, %v871, 0
    %3503 = vmatprep.subr.mxu0 0.0
    %3504 = vmatpush1.msra.mxu0 %v242
    %3505 = vmatprep.subr.mxu0 0.0
    %3506 = vmatpush1.msra.mxu0 %v243
    %3507 = vmatprep.subr.mxu0 0.0
    %3508 = vmatpush1.msra.mxu0 0.0
    %3509 = vmatprep.subr.mxu0 0.0
    %3510 = vmatpush1.msra.mxu0 0.0
    %3511 = vmatprep.subr.mxu0 0.0
    %3512 = vmatpush1.msra.mxu0 0.0
    %3513 = vmatprep.subr.mxu0 0.0
    %3514 = vmatpush1.msra.mxu0 0.0
    %3515 = vmatprep.subr.mxu0 0.0
    %3516 = vmatpush1.msra.mxu0 0.0
    %3517 = vmatprep.subr.mxu0 0.0
    %3518 = vmatpush1.msra.mxu0 0.0
    %3519 = vmatprep.subr.mxu0 0.0
    %3520 = vmatpush1.msra.mxu0 0.0
    %3521 = vmatprep.subr.mxu0 0.0
    %3522 = vmatpush1.msra.mxu0 0.0
    %3523 = vmatprep.subr.mxu0 0.0
    %3524 = vmatpush1.msra.mxu0 0.0
    %3525 = vmatprep.subr.mxu0 0.0
    %3526 = vmatpush1.msra.mxu0 0.0
    %3527 = vmatprep.subr.mxu0 0.0
    %3528 = vmatpush1.msra.mxu0 0.0
    %3529 = vmatprep.subr.mxu0 0.0
    %3530 = vmatpush1.msra.mxu0 0.0
    %3531 = vmatprep.subr.mxu0 0.0
    %3532 = vmatpush1.msra.mxu0 0.0
    %3533 = vmatprep.subr.mxu0 0.0
    %3534 = vmatpush1.msra.mxu0 0.0
    %3535 = vmatprep.subr.mxu0 0.0
    %3536 = vmatpush1.msra.mxu0 0.0
    %3537 = vmatprep.subr.mxu0 0.0
    %3538 = vmatpush1.msra.mxu0 0.0
    %3539 = vmatprep.subr.mxu0 0.0
    %3540 = vmatpush1.msra.mxu0 0.0
    %3541 = vmatprep.subr.mxu0 0.0
    %3542 = vmatpush1.msra.mxu0 0.0
    %3543 = vmatprep.subr.mxu0 0.0
    %3544 = vmatpush1.msra.mxu0 0.0
    %3545 = vmatprep.subr.mxu0 0.0
    %3546 = vmatpush1.msra.mxu0 0.0
    %3547 = vmatprep.subr.mxu0 0.0
    %3548 = vmatpush1.msra.mxu0 0.0
    %3549 = vmatprep.subr.mxu0 0.0
    %3550 = vmatpush1.msra.mxu0 0.0
    %3551 = vmatprep.subr.mxu0 0.0
    %3552 = vmatpush1.msra.mxu0 0.0
    %3553 = vmatprep.subr.mxu0 0.0
    %3554 = vmatpush1.msra.mxu0 0.0
    %3555 = vmatprep.subr.mxu0 0.0
    %3556 = vmatpush1.msra.mxu0 0.0
    %3557 = vmatprep.subr.mxu0 0.0
    %3558 = vmatpush1.msra.mxu0 0.0
    %3559 = vmatprep.subr.mxu0 0.0
    %3560 = vmatpush1.msra.mxu0 0.0
    %3561 = vmatprep.subr.mxu0 0.0
    %3562 = vmatpush1.msra.mxu0 0.0
    %3563 = vmatprep.subr.mxu0 0.0
    %3564 = vmatpush1.msra.mxu0 0.0
    %3565 = vmatprep.subr.mxu0 0.0
    %3566 = vmatpush1.msra.mxu0 0.0
    %3567 = vmatprep.mubr.f32.mxu0 0.0
    %3568 = vmatmul.mubr.f32.gmra.mrb[0].mxu0 %v3498
    %v3569 = vpop.f32.mrb[0].mxu0
    %v3570 = vadd.f32 0.0, %v3569
    %v3571 = vpop.f32.mrb[0].mxu0
    %3572 = vmatprep.mubr.f32.mxu0 0.0
    %3573 = vmatmul.mubr.f32.gmra.mrb[0].mxu0 %v3501
    %v3574 = vpop.f32.mrb[0].mxu0
    %v3575 = vadd.f32 0.0, %v3574
    %v3576 = vpop.f32.mrb[0].mxu0
    %3577 = vdwg.mxu0
    %v3579 = vsel %vm904, %v876, 0
    %v3582 = vsel %vm904, %v881, 0
    %3584 = vmatprep.subr.mxu0 0.0
    %3585 = vmatpush1.msra.mxu0 %v244
    %3586 = vmatprep.subr.mxu0 0.0
    %3587 = vmatpush1.msra.mxu0 %v245
    %3588 = vmatprep.subr.mxu0 0.0
    %3589 = vmatpush1.msra.mxu0 0.0
    %3590 = vmatprep.subr.mxu0 0.0
    %3591 = vmatpush1.msra.mxu0 0.0
    %3592 = vmatprep.subr.mxu0 0.0
    %3593 = vmatpush1.msra.mxu0 0.0
    %3594 = vmatprep.subr.mxu0 0.0
    %3595 = vmatpush1.msra.mxu0 0.0
    %3596 = vmatprep.subr.mxu0 0.0
    %3597 = vmatpush1.msra.mxu0 0.0
    %3598 = vmatprep.subr.mxu0 0.0
    %3599 = vmatpush1.msra.mxu0 0.0
    %3600 = vmatprep.subr.mxu0 0.0
    %3601 = vmatpush1.msra.mxu0 0.0
    %3602 = vmatprep.subr.mxu0 0.0
    %3603 = vmatpush1.msra.mxu0 0.0
    %3604 = vmatprep.subr.mxu0 0.0
    %3605 = vmatpush1.msra.mxu0 0.0
    %3606 = vmatprep.subr.mxu0 0.0
    %3607 = vmatpush1.msra.mxu0 0.0
    %3608 = vmatprep.subr.mxu0 0.0
    %3609 = vmatpush1.msra.mxu0 0.0
    %3610 = vmatprep.subr.mxu0 0.0
    %3611 = vmatpush1.msra.mxu0 0.0
    %3612 = vmatprep.subr.mxu0 0.0
    %3613 = vmatpush1.msra.mxu0 0.0
    %3614 = vmatprep.subr.mxu0 0.0
    %3615 = vmatpush1.msra.mxu0 0.0
    %3616 = vmatprep.subr.mxu0 0.0
    %3617 = vmatpush1.msra.mxu0 0.0
    %3618 = vmatprep.subr.mxu0 0.0
    %3619 = vmatpush1.msra.mxu0 0.0
    %3620 = vmatprep.subr.mxu0 0.0
    %3621 = vmatpush1.msra.mxu0 0.0
    %3622 = vmatprep.subr.mxu0 0.0
    %3623 = vmatpush1.msra.mxu0 0.0
    %3624 = vmatprep.subr.mxu0 0.0
    %3625 = vmatpush1.msra.mxu0 0.0
    %3626 = vmatprep.subr.mxu0 0.0
    %3627 = vmatpush1.msra.mxu0 0.0
    %3628 = vmatprep.subr.mxu0 0.0
    %3629 = vmatpush1.msra.mxu0 0.0
    %3630 = vmatprep.subr.mxu0 0.0
    %3631 = vmatpush1.msra.mxu0 0.0
    %3632 = vmatprep.subr.mxu0 0.0
    %3633 = vmatpush1.msra.mxu0 0.0
    %3634 = vmatprep.subr.mxu0 0.0
    %3635 = vmatpush1.msra.mxu0 0.0
    %3636 = vmatprep.subr.mxu0 0.0
    %3637 = vmatpush1.msra.mxu0 0.0
    %3638 = vmatprep.subr.mxu0 0.0
    %3639 = vmatpush1.msra.mxu0 0.0
    %3640 = vmatprep.subr.mxu0 0.0
    %3641 = vmatpush1.msra.mxu0 0.0
    %3642 = vmatprep.subr.mxu0 0.0
    %3643 = vmatpush1.msra.mxu0 0.0
    %3644 = vmatprep.subr.mxu0 0.0
    %3645 = vmatpush1.msra.mxu0 0.0
    %3646 = vmatprep.subr.mxu0 0.0
    %3647 = vmatpush1.msra.mxu0 0.0
    %3648 = vmatprep.mubr.f32.mxu0 0.0
    %3649 = vmatmul.mubr.f32.gmra.mrb[0].mxu0 %v3579
    %v3650 = vpop.f32.mrb[0].mxu0
    %v3651 = vadd.f32 0.0, %v3650
    %v3652 = vpop.f32.mrb[0].mxu0
    %3653 = vmatprep.mubr.f32.mxu0 0.0
    %3654 = vmatmul.mubr.f32.gmra.mrb[0].mxu0 %v3582
    %v3655 = vpop.f32.mrb[0].mxu0
    %v3656 = vadd.f32 0.0, %v3655
    %v3657 = vpop.f32.mrb[0].mxu0
    %3658 = vdwg.mxu0
    %v3660 = vsel %vm904, %v886, 0
    %v3663 = vsel %vm904, %v891, 0
    %3665 = vmatprep.subr.mxu0 0.0
    %3666 = vmatpush1.msra.mxu0 %v246
    %3667 = vmatprep.subr.mxu0 0.0
    %3668 = vmatpush1.msra.mxu0 %v247
    %3669 = vmatprep.subr.mxu0 0.0
    %3670 = vmatpush1.msra.mxu0 0.0
    %3671 = vmatprep.subr.mxu0 0.0
    %3672 = vmatpush1.msra.mxu0 0.0
    %3673 = vmatprep.subr.mxu0 0.0
    %3674 = vmatpush1.msra.mxu0 0.0
    %3675 = vmatprep.subr.mxu0 0.0
    %3676 = vmatpush1.msra.mxu0 0.0
    %3677 = vmatprep.subr.mxu0 0.0
    %3678 = vmatpush1.msra.mxu0 0.0
    %3679 = vmatprep.subr.mxu0 0.0
    %3680 = vmatpush1.msra.mxu0 0.0
    %3681 = vmatprep.subr.mxu0 0.0
    %3682 = vmatpush1.msra.mxu0 0.0
    %3683 = vmatprep.subr.mxu0 0.0
    %3684 = vmatpush1.msra.mxu0 0.0
    %3685 = vmatprep.subr.mxu0 0.0
    %3686 = vmatpush1.msra.mxu0 0.0
    %3687 = vmatprep.subr.mxu0 0.0
    %3688 = vmatpush1.msra.mxu0 0.0
    %3689 = vmatprep.subr.mxu0 0.0
    %3690 = vmatpush1.msra.mxu0 0.0
    %3691 = vmatprep.subr.mxu0 0.0
    %3692 = vmatpush1.msra.mxu0 0.0
    %3693 = vmatprep.subr.mxu0 0.0
    %3694 = vmatpush1.msra.mxu0 0.0
    %3695 = vmatprep.subr.mxu0 0.0
    %3696 = vmatpush1.msra.mxu0 0.0
    %3697 = vmatprep.subr.mxu0 0.0
    %3698 = vmatpush1.msra.mxu0 0.0
    %3699 = vmatprep.subr.mxu0 0.0
    %3700 = vmatpush1.msra.mxu0 0.0
    %3701 = vmatprep.subr.mxu0 0.0
    %3702 = vmatpush1.msra.mxu0 0.0
    %3703 = vmatprep.subr.mxu0 0.0
    %3704 = vmatpush1.msra.mxu0 0.0
    %3705 = vmatprep.subr.mxu0 0.0
    %3706 = vmatpush1.msra.mxu0 0.0
    %3707 = vmatprep.subr.mxu0 0.0
    %3708 = vmatpush1.msra.mxu0 0.0
    %3709 = vmatprep.subr.mxu0 0.0
    %3710 = vmatpush1.msra.mxu0 0.0
    %3711 = vmatprep.subr.mxu0 0.0
    %3712 = vmatpush1.msra.mxu0 0.0
    %3713 = vmatprep.subr.mxu0 0.0
    %3714 = vmatpush1.msra.mxu0 0.0
    %3715 = vmatprep.subr.mxu0 0.0
    %3716 = vmatpush1.msra.mxu0 0.0
    %3717 = vmatprep.subr.mxu0 0.0
    %3718 = vmatpush1.msra.mxu0 0.0
    %3719 = vmatprep.subr.mxu0 0.0
    %3720 = vmatpush1.msra.mxu0 0.0
    %3721 = vmatprep.subr.mxu0 0.0
    %3722 = vmatpush1.msra.mxu0 0.0
    %3723 = vmatprep.subr.mxu0 0.0
    %3724 = vmatpush1.msra.mxu0 0.0
    %3725 = vmatprep.subr.mxu0 0.0
    %3726 = vmatpush1.msra.mxu0 0.0
    %3727 = vmatprep.subr.mxu0 0.0
    %3728 = vmatpush1.msra.mxu0 0.0
    %3729 = vmatprep.mubr.f32.mxu0 0.0
    %3730 = vmatmul.mubr.f32.gmra.mrb[0].mxu0 %v3660
    %v3731 = vpop.f32.mrb[0].mxu0
    %v3732 = vadd.f32 0.0, %v3731
    %v3733 = vpop.f32.mrb[0].mxu0
    %3734 = vmatprep.mubr.f32.mxu0 0.0
    %3735 = vmatmul.mubr.f32.gmra.mrb[0].mxu0 %v3663
    %v3736 = vpop.f32.mrb[0].mxu0
    %v3737 = vadd.f32 0.0, %v3736
    %v3738 = vpop.f32.mrb[0].mxu0
    %3739 = vdwg.mxu0
    %v3741 = vsel %vm904, %v896, 0
    %v3744 = vsel %vm904, %v901, 0
    %3746 = vmatprep.subr.mxu0 0.0
    %3747 = vmatpush1.msra.mxu0 %v248
    %3748 = vmatprep.subr.mxu0 0.0
    %3749 = vmatpush1.msra.mxu0 %v249
    %3750 = vmatprep.subr.mxu0 0.0
    %3751 = vmatpush1.msra.mxu0 0.0
    %3752 = vmatprep.subr.mxu0 0.0
    %3753 = vmatpush1.msra.mxu0 0.0
    %3754 = vmatprep.subr.mxu0 0.0
    %3755 = vmatpush1.msra.mxu0 0.0
    %3756 = vmatprep.subr.mxu0 0.0
    %3757 = vmatpush1.msra.mxu0 0.0
    %3758 = vmatprep.subr.mxu0 0.0
    %3759 = vmatpush1.msra.mxu0 0.0
    %3760 = vmatprep.subr.mxu0 0.0
    %3761 = vmatpush1.msra.mxu0 0.0
    %3762 = vmatprep.subr.mxu0 0.0
    %3763 = vmatpush1.msra.mxu0 0.0
    %3764 = vmatprep.subr.mxu0 0.0
    %3765 = vmatpush1.msra.mxu0 0.0
    %3766 = vmatprep.subr.mxu0 0.0
    %3767 = vmatpush1.msra.mxu0 0.0
    %3768 = vmatprep.subr.mxu0 0.0
    %3769 = vmatpush1.msra.mxu0 0.0
    %3770 = vmatprep.subr.mxu0 0.0
    %3771 = vmatpush1.msra.mxu0 0.0
    %3772 = vmatprep.subr.mxu0 0.0
    %3773 = vmatpush1.msra.mxu0 0.0
    %3774 = vmatprep.subr.mxu0 0.0
    %3775 = vmatpush1.msra.mxu0 0.0
    %3776 = vmatprep.subr.mxu0 0.0
    %3777 = vmatpush1.msra.mxu0 0.0
    %3778 = vmatprep.subr.mxu0 0.0
    %3779 = vmatpush1.msra.mxu0 0.0
    %3780 = vmatprep.subr.mxu0 0.0
    %3781 = vmatpush1.msra.mxu0 0.0
    %3782 = vmatprep.subr.mxu0 0.0
    %3783 = vmatpush1.msra.mxu0 0.0
    %3784 = vmatprep.subr.mxu0 0.0
    %3785 = vmatpush1.msra.mxu0 0.0
    %3786 = vmatprep.subr.mxu0 0.0
    %3787 = vmatpush1.msra.mxu0 0.0
    %3788 = vmatprep.subr.mxu0 0.0
    %3789 = vmatpush1.msra.mxu0 0.0
    %3790 = vmatprep.subr.mxu0 0.0
    %3791 = vmatpush1.msra.mxu0 0.0
    %3792 = vmatprep.subr.mxu0 0.0
    %3793 = vmatpush1.msra.mxu0 0.0
    %3794 = vmatprep.subr.mxu0 0.0
    %3795 = vmatpush1.msra.mxu0 0.0
    %3796 = vmatprep.subr.mxu0 0.0
    %3797 = vmatpush1.msra.mxu0 0.0
    %3798 = vmatprep.subr.mxu0 0.0
    %3799 = vmatpush1.msra.mxu0 0.0
    %3800 = vmatprep.subr.mxu0 0.0
    %3801 = vmatpush1.msra.mxu0 0.0
    %3802 = vmatprep.subr.mxu0 0.0
    %3803 = vmatpush1.msra.mxu0 0.0
    %3804 = vmatprep.subr.mxu0 0.0
    %3805 = vmatpush1.msra.mxu0 0.0
    %3806 = vmatprep.subr.mxu0 0.0
    %3807 = vmatpush1.msra.mxu0 0.0
    %3808 = vmatprep.subr.mxu0 0.0
    %3809 = vmatpush1.msra.mxu0 0.0
    %3810 = vmatprep.mubr.f32.mxu0 0.0
    %3811 = vmatmul.mubr.f32.gmra.mrb[0].mxu0 %v3741
    %v3812 = vpop.f32.mrb[0].mxu0
    %v3813 = vadd.f32 0.0, %v3812
    %v3814 = vpop.f32.mrb[0].mxu0
    %3815 = vmatprep.mubr.f32.mxu0 0.0
    %3816 = vmatmul.mubr.f32.gmra.mrb[0].mxu0 %v3744
    %v3817 = vpop.f32.mrb[0].mxu0
    %v3818 = vadd.f32 0.0, %v3817
    %v3819 = vpop.f32.mrb[0].mxu0
    %3820 = vdwg.mxu0
    %v3821 = vsel %vm904, %v978, 0.0
    %v3822 = vsel %vm904, %v1059, 0.0
    %v3823 = vadd.f32 %v3821, %v3822
    %v3824 = vsel %vm904, %v1140, 0.0
    %v3825 = vadd.f32 %v3823, %v3824
    %v3826 = vsel %vm904, %v1221, 0.0
    %v3827 = vadd.f32 %v3825, %v3826
    %v3828 = vsel %vm904, %v1302, 0.0
    %v3829 = vadd.f32 %v3827, %v3828
    %v3830 = vsel %vm904, %v1383, 0.0
    %v3831 = vadd.f32 %v3829, %v3830
    %v3832 = vsel %vm904, %v1464, 0.0
    %v3833 = vadd.f32 %v3831, %v3832
    %v3834 = vsel %vm904, %v1545, 0.0
    %v3835 = vadd.f32 %v3833, %v3834
    %v3836 = vsel %vm904, %v1626, 0.0
    %v3837 = vadd.f32 %v3835, %v3836
    %v3838 = vsel %vm904, %v983, 0.0
    %v3839 = vsel %vm904, %v1064, 0.0
    %v3840 = vadd.f32 %v3838, %v3839
    %v3841 = vsel %vm904, %v1145, 0.0
    %v3842 = vadd.f32 %v3840, %v3841
    %v3843 = vsel %vm904, %v1226, 0.0
    %v3844 = vadd.f32 %v3842, %v3843
    %v3845 = vsel %vm904, %v1307, 0.0
    %v3846 = vadd.f32 %v3844, %v3845
    %v3847 = vsel %vm904, %v1388, 0.0
    %v3848 = vadd.f32 %v3846, %v3847
    %v3849 = vsel %vm904, %v1469, 0.0
    %v3850 = vadd.f32 %v3848, %v3849
    %v3851 = vsel %vm904, %v1550, 0.0
    %v3852 = vadd.f32 %v3850, %v3851
    %v3853 = vsel %vm904, %v1631, 0.0
    %v3854 = vadd.f32 %v3852, %v3853
    %v3855 = vsel %vm904, %v1707, 0.0
    %v3856 = vsel %vm904, %v1788, 0.0
    %v3857 = vadd.f32 %v3855, %v3856
    %v3858 = vsel %vm904, %v1869, 0.0
    %v3859 = vadd.f32 %v3857, %v3858
    %v3860 = vsel %vm904, %v1950, 0.0
    %v3861 = vadd.f32 %v3859, %v3860
    %v3862 = vsel %vm904, %v2031, 0.0
    %v3863 = vadd.f32 %v3861, %v3862
    %v3864 = vsel %vm904, %v2112, 0.0
    %v3865 = vadd.f32 %v3863, %v3864
    %v3866 = vsel %vm904, %v2193, 0.0
    %v3867 = vadd.f32 %v3865, %v3866
    %v3868 = vsel %vm904, %v2274, 0.0
    %v3869 = vadd.f32 %v3867, %v3868
    %v3870 = vsel %vm904, %v2355, 0.0
    %v3871 = vadd.f32 %v3869, %v3870
    %v3872 = vsel %vm904, %v1712, 0.0
    %v3873 = vsel %vm904, %v1793, 0.0
    %v3874 = vadd.f32 %v3872, %v3873
    %v3875 = vsel %vm904, %v1874, 0.0
    %v3876 = vadd.f32 %v3874, %v3875
    %v3877 = vsel %vm904, %v1955, 0.0
    %v3878 = vadd.f32 %v3876, %v3877
    %v3879 = vsel %vm904, %v2036, 0.0
    %v3880 = vadd.f32 %v3878, %v3879
    %v3881 = vsel %vm904, %v2117, 0.0
    %v3882 = vadd.f32 %v3880, %v3881
    %v3883 = vsel %vm904, %v2198, 0.0
    %v3884 = vadd.f32 %v3882, %v3883
    %v3885 = vsel %vm904, %v2279, 0.0
    %v3886 = vadd.f32 %v3884, %v3885
    %v3887 = vsel %vm904, %v2360, 0.0
    %v3888 = vadd.f32 %v3886, %v3887
    %v3889 = vsel %vm904, %v2436, 0.0
    %v3890 = vsel %vm904, %v2517, 0.0
    %v3891 = vadd.f32 %v3889, %v3890
    %v3892 = vsel %vm904, %v2598, 0.0
    %v3893 = vadd.f32 %v3891, %v3892
    %v3894 = vsel %vm904, %v2679, 0.0
    %v3895 = vadd.f32 %v3893, %v3894
    %v3896 = vsel %vm904, %v2760, 0.0
    %v3897 = vadd.f32 %v3895, %v3896
    %v3898 = vsel %vm904, %v2841, 0.0
    %v3899 = vadd.f32 %v3897, %v3898
    %v3900 = vsel %vm904, %v2922, 0.0
    %v3901 = vadd.f32 %v3899, %v3900
    %v3902 = vsel %vm904, %v3003, 0.0
    %v3903 = vadd.f32 %v3901, %v3902
    %v3904 = vsel %vm904, %v3084, 0.0
    %v3905 = vadd.f32 %v3903, %v3904
    %v3906 = vsel %vm904, %v2441, 0.0
    %v3907 = vsel %vm904, %v2522, 0.0
    %v3908 = vadd.f32 %v3906, %v3907
    %v3909 = vsel %vm904, %v2603, 0.0
    %v3910 = vadd.f32 %v3908, %v3909
    %v3911 = vsel %vm904, %v2684, 0.0
    %v3912 = vadd.f32 %v3910, %v3911
    %v3913 = vsel %vm904, %v2765, 0.0
    %v3914 = vadd.f32 %v3912, %v3913
    %v3915 = vsel %vm904, %v2846, 0.0
    %v3916 = vadd.f32 %v3914, %v3915
    %v3917 = vsel %vm904, %v2927, 0.0
    %v3918 = vadd.f32 %v3916, %v3917
    %v3919 = vsel %vm904, %v3008, 0.0
    %v3920 = vadd.f32 %v3918, %v3919
    %v3921 = vsel %vm904, %v3089, 0.0
    %v3922 = vadd.f32 %v3920, %v3921
    %v3923 = vsel %vm904, %v3165, 0.0
    %v3924 = vsel %vm904, %v3246, 0.0
    %v3925 = vadd.f32 %v3923, %v3924
    %v3926 = vsel %vm904, %v3327, 0.0
    %v3927 = vadd.f32 %v3925, %v3926
    %v3928 = vsel %vm904, %v3408, 0.0
    %v3929 = vadd.f32 %v3927, %v3928
    %v3930 = vsel %vm904, %v3489, 0.0
    %v3931 = vadd.f32 %v3929, %v3930
    %v3932 = vsel %vm904, %v3570, 0.0
    %v3933 = vadd.f32 %v3931, %v3932
    %v3934 = vsel %vm904, %v3651, 0.0
    %v3935 = vadd.f32 %v3933, %v3934
    %v3936 = vsel %vm904, %v3732, 0.0
    %v3937 = vadd.f32 %v3935, %v3936
    %v3938 = vsel %vm904, %v3813, 0.0
    %v3939 = vadd.f32 %v3937, %v3938
    %v3940 = vsel %vm904, %v3170, 0.0
    %v3941 = vsel %vm904, %v3251, 0.0
    %v3942 = vadd.f32 %v3940, %v3941
    %v3943 = vsel %vm904, %v3332, 0.0
    %v3944 = vadd.f32 %v3942, %v3943
    %v3945 = vsel %vm904, %v3413, 0.0
    %v3946 = vadd.f32 %v3944, %v3945
    %v3947 = vsel %vm904, %v3494, 0.0
    %v3948 = vadd.f32 %v3946, %v3947
    %v3949 = vsel %vm904, %v3575, 0.0
    %v3950 = vadd.f32 %v3948, %v3949
    %v3951 = vsel %vm904, %v3656, 0.0
    %v3952 = vadd.f32 %v3950, %v3951
    %v3953 = vsel %vm904, %v3737, 0.0
    %v3954 = vadd.f32 %v3952, %v3953
    %v3955 = vsel %vm904, %v3818, 0.0
    %v3956 = vadd.f32 %v3954, %v3955
    %v3961 = vlaneseq
    %v3962 = vshrl.u32 %v3961, 7
    %v3963 = vsub.s32 0, %v3962
    %v3964 = vrot.slane %v250, %v3963
    %v3965 = vlaneseq
    %v3966 = vshrl.u32 %v3965, 7
    %v3967 = vsub.s32 0, %v3966
    %v3968 = vrot.slane %v251, %v3967
    %v3969 = vlaneseq
    %v3970 = vshrl.u32 %v3969, 7
    %v3971 = vsub.s32 0, %v3970
    %v3972 = vrot.slane %v252, %v3971
    %v3973 = vlaneseq
    %v3974 = vshrl.u32 %v3973, 7
    %v3975 = vsub.s32 0, %v3974
    %v3976 = vrot.slane %v253, %v3975
    %3977 = vset.pattern.permute.xlu0 0
    %3978 = vperm.xlu0 %3977, %v3964
    %v3979 = vpop.permute.xlu0 %3978
    %3981 = vset.pattern.permute.xlu0 0
    %3982 = vperm.xlu0 %3981, %v3968
    %v3983 = vpop.permute.xlu0 %3982
    %3985 = vset.pattern.permute.xlu0 0
    %3986 = vperm.xlu0 %3985, %v3972
    %v3987 = vpop.permute.xlu0 %3986
    %3989 = vset.pattern.permute.xlu0 0
    %3990 = vperm.xlu0 %3989, %v3976
    %v3991 = vpop.permute.xlu0 %3990
    %v3993 = vadd.f32 %v3837, %v3979
    %v3994 = vadd.f32 %v3854, %v3979
    %v3995 = vadd.f32 %v3871, %v3983
    %v3996 = vadd.f32 %v3888, %v3983
    %v3997 = vadd.f32 %v3905, %v3987
    %v3998 = vadd.f32 %v3922, %v3987
    %v3999 = vadd.f32 %v3939, %v3991
    %v4000 = vadd.f32 %v3956, %v3991
    %v4001 = vsel %vm904, %v3993, 0.0
    %4002 = vadd.xlane.f32.xlu0 %v4001
    %v4003 = vpop.xlane.xlu0 %4002
    %v4004 = vsel %vm904, %v3994, 0.0
    %4005 = vadd.xlane.f32.xlu0 %v4004
    %v4006 = vpop.xlane.xlu0 %4005
    %v4007 = vsel %vm904, %v3995, 0.0
    %4008 = vadd.xlane.f32.xlu0 %v4007
    %v4009 = vpop.xlane.xlu0 %4008
    %v4010 = vsel %vm904, %v3996, 0.0
    %4011 = vadd.xlane.f32.xlu0 %v4010
    %v4012 = vpop.xlane.xlu0 %4011
    %v4013 = vsel %vm904, %v3997, 0.0
    %4014 = vadd.xlane.f32.xlu0 %v4013
    %v4015 = vpop.xlane.xlu0 %4014
    %v4016 = vsel %vm904, %v3998, 0.0
    %4017 = vadd.xlane.f32.xlu0 %v4016
    %v4018 = vpop.xlane.xlu0 %4017
    %v4019 = vsel %vm904, %v3999, 0.0
    %4020 = vadd.xlane.f32.xlu0 %v4019
    %v4021 = vpop.xlane.xlu0 %4020
    %v4022 = vsel %vm904, %v4000, 0.0
    %4023 = vadd.xlane.f32.xlu0 %v4022
    %v4024 = vpop.xlane.xlu0 %4023
    %v4025 = vadd.f32 %v4003, %v4006
    %v4026 = vrot.slane %v4025, 4
    %v4027 = vadd.f32 %v4025, %v4026
    %v4028 = vrot.slane %v4027, 2
    %v4029 = vadd.f32 %v4027, %v4028
    %v4030 = vrot.slane %v4029, 1
    %v4031 = vadd.f32 %v4029, %v4030
    %v4032 = vadd.f32 %v4009, %v4012
    %v4033 = vrot.slane %v4032, 4
    %v4034 = vadd.f32 %v4032, %v4033
    %v4035 = vrot.slane %v4034, 2
    %v4036 = vadd.f32 %v4034, %v4035
    %v4037 = vrot.slane %v4036, 1
    %v4038 = vadd.f32 %v4036, %v4037
    %v4039 = vadd.f32 %v4015, %v4018
    %v4040 = vrot.slane %v4039, 4
    %v4041 = vadd.f32 %v4039, %v4040
    %v4042 = vrot.slane %v4041, 2
    %v4043 = vadd.f32 %v4041, %v4042
    %v4044 = vrot.slane %v4043, 1
    %v4045 = vadd.f32 %v4043, %v4044
    %v4046 = vadd.f32 %v4021, %v4024
    %v4047 = vrot.slane %v4046, 4
    %v4048 = vadd.f32 %v4046, %v4047
    %v4049 = vrot.slane %v4048, 2
    %v4050 = vadd.f32 %v4048, %v4049
    %v4051 = vrot.slane %v4050, 1
    %v4052 = vadd.f32 %v4050, %v4051
    %v4053 = vadd.f32 %v4031, 0.0
    %v4054 = vadd.f32 %v4038, 0.0
    %v4055 = vadd.f32 %v4045, 0.0
    %v4056 = vadd.f32 %v4052, 0.0
    %v4057 = vmul.f32 %v3993, %v3993
    %v4058 = vmul.f32 %v3994, %v3994
    %v4059 = vmul.f32 %v3995, %v3995
    %v4060 = vmul.f32 %v3996, %v3996
    %v4061 = vmul.f32 %v3997, %v3997
    %v4062 = vmul.f32 %v3998, %v3998
    %v4063 = vmul.f32 %v3999, %v3999
    %v4064 = vmul.f32 %v4000, %v4000
    %v4065 = vsel %vm904, %v4057, 0.0
    %4066 = vadd.xlane.f32.xlu0 %v4065
    %v4067 = vpop.xlane.xlu0 %4066
    %v4068 = vsel %vm904, %v4058, 0.0
    %4069 = vadd.xlane.f32.xlu0 %v4068
    %v4070 = vpop.xlane.xlu0 %4069
    %v4071 = vsel %vm904, %v4059, 0.0
    %4072 = vadd.xlane.f32.xlu0 %v4071
    %v4073 = vpop.xlane.xlu0 %4072
    %v4074 = vsel %vm904, %v4060, 0.0
    %4075 = vadd.xlane.f32.xlu0 %v4074
    %v4076 = vpop.xlane.xlu0 %4075
    %v4077 = vsel %vm904, %v4061, 0.0
    %4078 = vadd.xlane.f32.xlu0 %v4077
    %v4079 = vpop.xlane.xlu0 %4078
    %v4080 = vsel %vm904, %v4062, 0.0
    %4081 = vadd.xlane.f32.xlu0 %v4080
    %v4082 = vpop.xlane.xlu0 %4081
    %v4083 = vsel %vm904, %v4063, 0.0
    %4084 = vadd.xlane.f32.xlu0 %v4083
    %v4085 = vpop.xlane.xlu0 %4084
    %v4086 = vsel %vm904, %v4064, 0.0
    %4087 = vadd.xlane.f32.xlu0 %v4086
    %v4088 = vpop.xlane.xlu0 %4087
    %v4089 = vadd.f32 %v4067, %v4070
    %v4090 = vrot.slane %v4089, 4
    %v4091 = vadd.f32 %v4089, %v4090
    %v4092 = vrot.slane %v4091, 2
    %v4093 = vadd.f32 %v4091, %v4092
    %v4094 = vrot.slane %v4093, 1
    %v4095 = vadd.f32 %v4093, %v4094
    %v4096 = vadd.f32 %v4073, %v4076
    %v4097 = vrot.slane %v4096, 4
    %v4098 = vadd.f32 %v4096, %v4097
    %v4099 = vrot.slane %v4098, 2
    %v4100 = vadd.f32 %v4098, %v4099
    %v4101 = vrot.slane %v4100, 1
    %v4102 = vadd.f32 %v4100, %v4101
    %v4103 = vadd.f32 %v4079, %v4082
    %v4104 = vrot.slane %v4103, 4
    %v4105 = vadd.f32 %v4103, %v4104
    %v4106 = vrot.slane %v4105, 2
    %v4107 = vadd.f32 %v4105, %v4106
    %v4108 = vrot.slane %v4107, 1
    %v4109 = vadd.f32 %v4107, %v4108
    %v4110 = vadd.f32 %v4085, %v4088
    %v4111 = vrot.slane %v4110, 4
    %v4112 = vadd.f32 %v4110, %v4111
    %v4113 = vrot.slane %v4112, 2
    %v4114 = vadd.f32 %v4112, %v4113
    %v4115 = vrot.slane %v4114, 1
    %v4116 = vadd.f32 %v4114, %v4115
    %v4117 = vadd.f32 %v4095, 0.0
    %v4118 = vadd.f32 %v4102, 0.0
    %v4119 = vadd.f32 %v4109, 0.0
    %v4120 = vadd.f32 %v4116, 0.0
    %s4121 = scalar_lea.vmem [#allocation7], 64
    %v4122 = vld [vmem:[%s4121] sm:$0xff]
    %v4123 = vld [vmem:[%s4121 + $0x8] sm:$0xff]
    %v4124 = vld [vmem:[%s4121 + $0x10] sm:$0xff]
    %v4125 = vld [vmem:[%s4121 + $0x18] sm:$0xff]
    %v4126 = vld [vmem:[%s4121 + $0x20] sm:$0xff]
    %v4127 = vld [vmem:[%s4121 + $0x28] sm:$0xff]
    %v4128 = vld [vmem:[%s4121 + $0x30] sm:$0xff]
    %v4129 = vld [vmem:[%s4121 + $0x38] sm:$0xff]
    %4130 = vmatprep.subr.mxu0 0.0
    %4131 = vmatpush1.msra.mxu0 %v4122
    %4132 = vmatprep.subr.mxu0 0.0
    %4133 = vmatpush1.msra.mxu0 %v4123
    %4134 = vmatprep.subr.mxu0 0.0
    %4135 = vmatpush1.msra.mxu0 %v4124
    %4136 = vmatprep.subr.mxu0 0.0
    %4137 = vmatpush1.msra.mxu0 %v4125
    %4138 = vmatprep.subr.mxu0 0.0
    %4139 = vmatpush1.msra.mxu0 %v4126
    %4140 = vmatprep.subr.mxu0 0.0
    %4141 = vmatpush1.msra.mxu0 %v4127
    %4142 = vmatprep.subr.mxu0 0.0
    %4143 = vmatpush1.msra.mxu0 %v4128
    %4144 = vmatprep.subr.mxu0 0.0
    %4145 = vmatpush1.msra.mxu0 %v4129
    %4146 = vmatprep.subr.mxu0 0.0
    %4147 = vmatpush1.msra.mxu0 0.0
    %4148 = vmatprep.subr.mxu0 0.0
    %4149 = vmatpush1.msra.mxu0 0.0
    %4150 = vmatprep.subr.mxu0 0.0
    %4151 = vmatpush1.msra.mxu0 0.0
    %4152 = vmatprep.subr.mxu0 0.0
    %4153 = vmatpush1.msra.mxu0 0.0
    %4154 = vmatprep.subr.mxu0 0.0
    %4155 = vmatpush1.msra.mxu0 0.0
    %4156 = vmatprep.subr.mxu0 0.0
    %4157 = vmatpush1.msra.mxu0 0.0
    %4158 = vmatprep.subr.mxu0 0.0
    %4159 = vmatpush1.msra.mxu0 0.0
    %4160 = vmatprep.subr.mxu0 0.0
    %4161 = vmatpush1.msra.mxu0 0.0
    %4162 = vmatprep.subr.mxu0 0.0
    %4163 = vmatpush1.msra.mxu0 0.0
    %4164 = vmatprep.subr.mxu0 0.0
    %4165 = vmatpush1.msra.mxu0 0.0
    %4166 = vmatprep.subr.mxu0 0.0
    %4167 = vmatpush1.msra.mxu0 0.0
    %4168 = vmatprep.subr.mxu0 0.0
    %4169 = vmatpush1.msra.mxu0 0.0
    %4170 = vmatprep.subr.mxu0 0.0
    %4171 = vmatpush1.msra.mxu0 0.0
    %4172 = vmatprep.subr.mxu0 0.0
    %4173 = vmatpush1.msra.mxu0 0.0
    %4174 = vmatprep.subr.mxu0 0.0
    %4175 = vmatpush1.msra.mxu0 0.0
    %4176 = vmatprep.subr.mxu0 0.0
    %4177 = vmatpush1.msra.mxu0 0.0
    %4178 = vmatprep.subr.mxu0 0.0
    %4179 = vmatpush1.msra.mxu0 0.0
    %4180 = vmatprep.subr.mxu0 0.0
    %4181 = vmatpush1.msra.mxu0 0.0
    %4182 = vmatprep.subr.mxu0 0.0
    %4183 = vmatpush1.msra.mxu0 0.0
    %4184 = vmatprep.subr.mxu0 0.0
    %4185 = vmatpush1.msra.mxu0 0.0
    %4186 = vmatprep.subr.mxu0 0.0
    %4187 = vmatpush1.msra.mxu0 0.0
    %4188 = vmatprep.subr.mxu0 0.0
    %4189 = vmatpush1.msra.mxu0 0.0
    %4190 = vmatprep.subr.mxu0 0.0
    %4191 = vmatpush1.msra.mxu0 0.0
    %4192 = vmatprep.subr.mxu0 0.0
    %4193 = vmatpush1.msra.mxu0 0.0
    %4194 = vmatprep.mubr.f32.mxu0 0.0
    %4195 = vmatmul.mubr.f32.gmra.mrb[0].mxu0 %v264
    %v4196 = vpop.f32.mrb[0].mxu0
    %v4197 = vadd.f32 0.0, %v4196
    %v4198 = vpop.f32.mrb[0].mxu0
    %4199 = vmatprep.mubr.f32.mxu0 0.0
    %4200 = vmatmul.mubr.f32.gmra.mrb[0].mxu0 %v267
    %v4201 = vpop.f32.mrb[0].mxu0
    %v4202 = vadd.f32 0.0, %v4201
    %v4203 = vpop.f32.mrb[0].mxu0
    %4204 = vmatprep.mubr.f32.mxu0 0.0
    %4205 = vmatmul.mubr.f32.gmra.mrb[0].mxu0 %v270
    %v4206 = vpop.f32.mrb[0].mxu0
    %v4207 = vadd.f32 0.0, %v4206
    %v4208 = vpop.f32.mrb[0].mxu0
    %4209 = vmatprep.mubr.f32.mxu0 0.0
    %4210 = vmatmul.mubr.f32.gmra.mrb[0].mxu0 %v273
    %v4211 = vpop.f32.mrb[0].mxu0
    %v4212 = vadd.f32 0.0, %v4211
    %v4213 = vpop.f32.mrb[0].mxu0
    %4214 = vmatprep.mubr.f32.mxu0 0.0
    %4215 = vmatmul.mubr.f32.gmra.mrb[0].mxu0 %v276
    %v4216 = vpop.f32.mrb[0].mxu0
    %v4217 = vadd.f32 0.0, %v4216
    %v4218 = vpop.f32.mrb[0].mxu0
    %4219 = vmatprep.mubr.f32.mxu0 0.0
    %4220 = vmatmul.mubr.f32.gmra.mrb[0].mxu0 %v279
    %v4221 = vpop.f32.mrb[0].mxu0
    %v4222 = vadd.f32 0.0, %v4221
    %v4223 = vpop.f32.mrb[0].mxu0
    %4224 = vmatprep.mubr.f32.mxu0 0.0
    %4225 = vmatmul.mubr.f32.gmra.mrb[0].mxu0 %v282
    %v4226 = vpop.f32.mrb[0].mxu0
    %v4227 = vadd.f32 0.0, %v4226
    %v4228 = vpop.f32.mrb[0].mxu0
    %4229 = vmatprep.mubr.f32.mxu0 0.0
    %4230 = vmatmul.mubr.f32.gmra.mrb[0].mxu0 %v285
    %v4231 = vpop.f32.mrb[0].mxu0
    %v4232 = vadd.f32 0.0, %v4231
    %v4233 = vpop.f32.mrb[0].mxu0
    %4234 = vmatprep.mubr.f32.mxu0 0.0
    %4235 = vmatmul.mubr.f32.gmra.mrb[0].mxu0 %v288
    %v4236 = vpop.f32.mrb[0].mxu0
    %v4237 = vadd.f32 0.0, %v4236
    %v4238 = vpop.f32.mrb[0].mxu0
    %4239 = vmatprep.mubr.f32.mxu0 0.0
    %4240 = vmatmul.mubr.f32.gmra.mrb[0].mxu0 %v291
    %v4241 = vpop.f32.mrb[0].mxu0
    %v4242 = vadd.f32 0.0, %v4241
    %v4243 = vpop.f32.mrb[0].mxu0
    %4244 = vmatprep.mubr.f32.mxu0 0.0
    %4245 = vmatmul.mubr.f32.gmra.mrb[0].mxu0 %v294
    %v4246 = vpop.f32.mrb[0].mxu0
    %v4247 = vadd.f32 0.0, %v4246
    %v4248 = vpop.f32.mrb[0].mxu0
    %4249 = vmatprep.mubr.f32.mxu0 0.0
    %4250 = vmatmul.mubr.f32.gmra.mrb[0].mxu0 %v297
    %v4251 = vpop.f32.mrb[0].mxu0
    %v4252 = vadd.f32 0.0, %v4251
    %v4253 = vpop.f32.mrb[0].mxu0
    %4254 = vmatprep.mubr.f32.mxu0 0.0
    %4255 = vmatmul.mubr.f32.gmra.mrb[0].mxu0 %v300
    %v4256 = vpop.f32.mrb[0].mxu0
    %v4257 = vadd.f32 0.0, %v4256
    %v4258 = vpop.f32.mrb[0].mxu0
    %4259 = vmatprep.mubr.f32.mxu0 0.0
    %4260 = vmatmul.mubr.f32.gmra.mrb[0].mxu0 %v303
    %v4261 = vpop.f32.mrb[0].mxu0
    %v4262 = vadd.f32 0.0, %v4261
    %v4263 = vpop.f32.mrb[0].mxu0
    %4264 = vmatprep.mubr.f32.mxu0 0.0
    %4265 = vmatmul.mubr.f32.gmra.mrb[0].mxu0 %v306
    %v4266 = vpop.f32.mrb[0].mxu0
    %v4267 = vadd.f32 0.0, %v4266
    %v4268 = vpop.f32.mrb[0].mxu0
    %4269 = vmatprep.mubr.f32.mxu0 0.0
    %4270 = vmatmul.mubr.f32.gmra.mrb[0].mxu0 %v309
    %v4271 = vpop.f32.mrb[0].mxu0
    %v4272 = vadd.f32 0.0, %v4271
    %v4273 = vpop.f32.mrb[0].mxu0
    %4274 = vmatprep.mubr.f32.mxu0 0.0
    %4275 = vmatmul.mubr.f32.gmra.mrb[0].mxu0 %v312
    %v4276 = vpop.f32.mrb[0].mxu0
    %v4277 = vadd.f32 0.0, %v4276
    %v4278 = vpop.f32.mrb[0].mxu0
    %4279 = vmatprep.mubr.f32.mxu0 0.0
    %4280 = vmatmul.mubr.f32.gmra.mrb[0].mxu0 %v315
    %v4281 = vpop.f32.mrb[0].mxu0
    %v4282 = vadd.f32 0.0, %v4281
    %v4283 = vpop.f32.mrb[0].mxu0
    %4284 = vmatprep.mubr.f32.mxu0 0.0
    %4285 = vmatmul.mubr.f32.gmra.mrb[0].mxu0 %v318
    %v4286 = vpop.f32.mrb[0].mxu0
    %v4287 = vadd.f32 0.0, %v4286
    %v4288 = vpop.f32.mrb[0].mxu0
    %4289 = vmatprep.mubr.f32.mxu0 0.0
    %4290 = vmatmul.mubr.f32.gmra.mrb[0].mxu0 %v321
    %v4291 = vpop.f32.mrb[0].mxu0
    %v4292 = vadd.f32 0.0, %v4291
    %v4293 = vpop.f32.mrb[0].mxu0
    %4294 = vmatprep.mubr.f32.mxu0 0.0
    %4295 = vmatmul.mubr.f32.gmra.mrb[0].mxu0 %v324
    %v4296 = vpop.f32.mrb[0].mxu0
    %v4297 = vadd.f32 0.0, %v4296
    %v4298 = vpop.f32.mrb[0].mxu0
    %4299 = vmatprep.mubr.f32.mxu0 0.0
    %4300 = vmatmul.mubr.f32.gmra.mrb[0].mxu0 %v327
    %v4301 = vpop.f32.mrb[0].mxu0
    %v4302 = vadd.f32 0.0, %v4301
    %v4303 = vpop.f32.mrb[0].mxu0
    %4304 = vmatprep.mubr.f32.mxu0 0.0
    %4305 = vmatmul.mubr.f32.gmra.mrb[0].mxu0 %v330
    %v4306 = vpop.f32.mrb[0].mxu0
    %v4307 = vadd.f32 0.0, %v4306
    %v4308 = vpop.f32.mrb[0].mxu0
    %4309 = vmatprep.mubr.f32.mxu0 0.0
    %4310 = vmatmul.mubr.f32.gmra.mrb[0].mxu0 %v333
    %v4311 = vpop.f32.mrb[0].mxu0
    %v4312 = vadd.f32 0.0, %v4311
    %v4313 = vpop.f32.mrb[0].mxu0
    %4314 = vmatprep.mubr.f32.mxu0 0.0
    %4315 = vmatmul.mubr.f32.gmra.mrb[0].mxu0 %v336
    %v4316 = vpop.f32.mrb[0].mxu0
    %v4317 = vadd.f32 0.0, %v4316
    %v4318 = vpop.f32.mrb[0].mxu0
    %4319 = vmatprep.mubr.f32.mxu0 0.0
    %4320 = vmatmul.mubr.f32.gmra.mrb[0].mxu0 %v339
    %v4321 = vpop.f32.mrb[0].mxu0
    %v4322 = vadd.f32 0.0, %v4321
    %v4323 = vpop.f32.mrb[0].mxu0
    %4324 = vmatprep.mubr.f32.mxu0 0.0
    %4325 = vmatmul.mubr.f32.gmra.mrb[0].mxu0 %v342
    %v4326 = vpop.f32.mrb[0].mxu0
    %v4327 = vadd.f32 0.0, %v4326
    %v4328 = vpop.f32.mrb[0].mxu0
    %4329 = vmatprep.mubr.f32.mxu0 0.0
    %4330 = vmatmul.mubr.f32.gmra.mrb[0].mxu0 %v345
    %v4331 = vpop.f32.mrb[0].mxu0
    %v4332 = vadd.f32 0.0, %v4331
    %v4333 = vpop.f32.mrb[0].mxu0
    %4334 = vmatprep.mubr.f32.mxu0 0.0
    %4335 = vmatmul.mubr.f32.gmra.mrb[0].mxu0 %v348
    %v4336 = vpop.f32.mrb[0].mxu0
    %v4337 = vadd.f32 0.0, %v4336
    %v4338 = vpop.f32.mrb[0].mxu0
    %4339 = vmatprep.mubr.f32.mxu0 0.0
    %4340 = vmatmul.mubr.f32.gmra.mrb[0].mxu0 %v351
    %v4341 = vpop.f32.mrb[0].mxu0
    %v4342 = vadd.f32 0.0, %v4341
    %v4343 = vpop.f32.mrb[0].mxu0
    %4344 = vmatprep.mubr.f32.mxu0 0.0
    %4345 = vmatmul.mubr.f32.gmra.mrb[0].mxu0 %v354
    %v4346 = vpop.f32.mrb[0].mxu0
    %v4347 = vadd.f32 0.0, %v4346
    %v4348 = vpop.f32.mrb[0].mxu0
    %4349 = vmatprep.mubr.f32.mxu0 0.0
    %4350 = vmatmul.mubr.f32.gmra.mrb[0].mxu0 %v357
    %v4351 = vpop.f32.mrb[0].mxu0
    %v4352 = vadd.f32 0.0, %v4351
    %v4353 = vpop.f32.mrb[0].mxu0
    %4354 = vmatprep.mubr.f32.mxu0 0.0
    %4355 = vmatmul.mubr.f32.gmra.mrb[0].mxu0 %v360
    %v4356 = vpop.f32.mrb[0].mxu0
    %v4357 = vadd.f32 0.0, %v4356
    %v4358 = vpop.f32.mrb[0].mxu0
    %4359 = vmatprep.mubr.f32.mxu0 0.0
    %4360 = vmatmul.mubr.f32.gmra.mrb[0].mxu0 %v363
    %v4361 = vpop.f32.mrb[0].mxu0
    %v4362 = vadd.f32 0.0, %v4361
    %v4363 = vpop.f32.mrb[0].mxu0
    %4364 = vmatprep.mubr.f32.mxu0 0.0
    %4365 = vmatmul.mubr.f32.gmra.mrb[0].mxu0 %v366
    %v4366 = vpop.f32.mrb[0].mxu0
    %v4367 = vadd.f32 0.0, %v4366
    %v4368 = vpop.f32.mrb[0].mxu0
    %4369 = vmatprep.mubr.f32.mxu0 0.0
    %4370 = vmatmul.mubr.f32.gmra.mrb[0].mxu0 %v369
    %v4371 = vpop.f32.mrb[0].mxu0
    %v4372 = vadd.f32 0.0, %v4371
    %v4373 = vpop.f32.mrb[0].mxu0
    %4374 = vmatprep.mubr.f32.mxu0 0.0
    %4375 = vmatmul.mubr.f32.gmra.mrb[0].mxu0 %v372
    %v4376 = vpop.f32.mrb[0].mxu0
    %v4377 = vadd.f32 0.0, %v4376
    %v4378 = vpop.f32.mrb[0].mxu0
    %4379 = vmatprep.mubr.f32.mxu0 0.0
    %4380 = vmatmul.mubr.f32.gmra.mrb[0].mxu0 %v375
    %v4381 = vpop.f32.mrb[0].mxu0
    %v4382 = vadd.f32 0.0, %v4381
    %v4383 = vpop.f32.mrb[0].mxu0
    %4384 = vmatprep.mubr.f32.mxu0 0.0
    %4385 = vmatmul.mubr.f32.gmra.mrb[0].mxu0 %v378
    %v4386 = vpop.f32.mrb[0].mxu0
    %v4387 = vadd.f32 0.0, %v4386
    %v4388 = vpop.f32.mrb[0].mxu0
    %4389 = vmatprep.mubr.f32.mxu0 0.0
    %4390 = vmatmul.mubr.f32.gmra.mrb[0].mxu0 %v381
    %v4391 = vpop.f32.mrb[0].mxu0
    %v4392 = vadd.f32 0.0, %v4391
    %v4393 = vpop.f32.mrb[0].mxu0
    %4394 = vmatprep.mubr.f32.mxu0 0.0
    %4395 = vmatmul.mubr.f32.gmra.mrb[0].mxu0 %v384
    %v4396 = vpop.f32.mrb[0].mxu0
    %v4397 = vadd.f32 0.0, %v4396
    %v4398 = vpop.f32.mrb[0].mxu0
    %4399 = vmatprep.mubr.f32.mxu0 0.0
    %4400 = vmatmul.mubr.f32.gmra.mrb[0].mxu0 %v387
    %v4401 = vpop.f32.mrb[0].mxu0
    %v4402 = vadd.f32 0.0, %v4401
    %v4403 = vpop.f32.mrb[0].mxu0
    %4404 = vmatprep.mubr.f32.mxu0 0.0
    %4405 = vmatmul.mubr.f32.gmra.mrb[0].mxu0 %v390
    %v4406 = vpop.f32.mrb[0].mxu0
    %v4407 = vadd.f32 0.0, %v4406
    %v4408 = vpop.f32.mrb[0].mxu0
    %4409 = vmatprep.mubr.f32.mxu0 0.0
    %4410 = vmatmul.mubr.f32.gmra.mrb[0].mxu0 %v393
    %v4411 = vpop.f32.mrb[0].mxu0
    %v4412 = vadd.f32 0.0, %v4411
    %v4413 = vpop.f32.mrb[0].mxu0
    %4414 = vmatprep.mubr.f32.mxu0 0.0
    %4415 = vmatmul.mubr.f32.gmra.mrb[0].mxu0 %v396
    %v4416 = vpop.f32.mrb[0].mxu0
    %v4417 = vadd.f32 0.0, %v4416
    %v4418 = vpop.f32.mrb[0].mxu0
    %4419 = vmatprep.mubr.f32.mxu0 0.0
    %4420 = vmatmul.mubr.f32.gmra.mrb[0].mxu0 %v399
    %v4421 = vpop.f32.mrb[0].mxu0
    %v4422 = vadd.f32 0.0, %v4421
    %v4423 = vpop.f32.mrb[0].mxu0
    %4424 = vmatprep.mubr.f32.mxu0 0.0
    %4425 = vmatmul.mubr.f32.gmra.mrb[0].mxu0 %v402
    %v4426 = vpop.f32.mrb[0].mxu0
    %v4427 = vadd.f32 0.0, %v4426
    %v4428 = vpop.f32.mrb[0].mxu0
    %4429 = vmatprep.mubr.f32.mxu0 0.0
    %4430 = vmatmul.mubr.f32.gmra.mrb[0].mxu0 %v405
    %v4431 = vpop.f32.mrb[0].mxu0
    %v4432 = vadd.f32 0.0, %v4431
    %v4433 = vpop.f32.mrb[0].mxu0
    %4434 = vmatprep.mubr.f32.mxu0 0.0
    %4435 = vmatmul.mubr.f32.gmra.mrb[0].mxu0 %v408
    %v4436 = vpop.f32.mrb[0].mxu0
    %v4437 = vadd.f32 0.0, %v4436
    %v4438 = vpop.f32.mrb[0].mxu0
    %4439 = vmatprep.mubr.f32.mxu0 0.0
    %4440 = vmatmul.mubr.f32.gmra.mrb[0].mxu0 %v411
    %v4441 = vpop.f32.mrb[0].mxu0
    %v4442 = vadd.f32 0.0, %v4441
    %v4443 = vpop.f32.mrb[0].mxu0
    %4444 = vmatprep.mubr.f32.mxu0 0.0
    %4445 = vmatmul.mubr.f32.gmra.mrb[0].mxu0 %v414
    %v4446 = vpop.f32.mrb[0].mxu0
    %v4447 = vadd.f32 0.0, %v4446
    %v4448 = vpop.f32.mrb[0].mxu0
    %4449 = vmatprep.mubr.f32.mxu0 0.0
    %4450 = vmatmul.mubr.f32.gmra.mrb[0].mxu0 %v417
    %v4451 = vpop.f32.mrb[0].mxu0
    %v4452 = vadd.f32 0.0, %v4451
    %v4453 = vpop.f32.mrb[0].mxu0
    %4454 = vmatprep.mubr.f32.mxu0 0.0
    %4455 = vmatmul.mubr.f32.gmra.mrb[0].mxu0 %v420
    %v4456 = vpop.f32.mrb[0].mxu0
    %v4457 = vadd.f32 0.0, %v4456
    %v4458 = vpop.f32.mrb[0].mxu0
    %4459 = vmatprep.mubr.f32.mxu0 0.0
    %4460 = vmatmul.mubr.f32.gmra.mrb[0].mxu0 %v423
    %v4461 = vpop.f32.mrb[0].mxu0
    %v4462 = vadd.f32 0.0, %v4461
    %v4463 = vpop.f32.mrb[0].mxu0
    %4464 = vmatprep.mubr.f32.mxu0 0.0
    %4465 = vmatmul.mubr.f32.gmra.mrb[0].mxu0 %v426
    %v4466 = vpop.f32.mrb[0].mxu0
    %v4467 = vadd.f32 0.0, %v4466
    %v4468 = vpop.f32.mrb[0].mxu0
    %4469 = vmatprep.mubr.f32.mxu0 0.0
    %4470 = vmatmul.mubr.f32.gmra.mrb[0].mxu0 %v429
    %v4471 = vpop.f32.mrb[0].mxu0
    %v4472 = vadd.f32 0.0, %v4471
    %v4473 = vpop.f32.mrb[0].mxu0
    %4474 = vmatprep.mubr.f32.mxu0 0.0
    %4475 = vmatmul.mubr.f32.gmra.mrb[0].mxu0 %v432
    %v4476 = vpop.f32.mrb[0].mxu0
    %v4477 = vadd.f32 0.0, %v4476
    %v4478 = vpop.f32.mrb[0].mxu0
    %4479 = vmatprep.mubr.f32.mxu0 0.0
    %4480 = vmatmul.mubr.f32.gmra.mrb[0].mxu0 %v435
    %v4481 = vpop.f32.mrb[0].mxu0
    %v4482 = vadd.f32 0.0, %v4481
    %v4483 = vpop.f32.mrb[0].mxu0
    %4484 = vmatprep.mubr.f32.mxu0 0.0
    %4485 = vmatmul.mubr.f32.gmra.mrb[0].mxu0 %v438
    %v4486 = vpop.f32.mrb[0].mxu0
    %v4487 = vadd.f32 0.0, %v4486
    %v4488 = vpop.f32.mrb[0].mxu0
    %4489 = vmatprep.mubr.f32.mxu0 0.0
    %4490 = vmatmul.mubr.f32.gmra.mrb[0].mxu0 %v441
    %v4491 = vpop.f32.mrb[0].mxu0
    %v4492 = vadd.f32 0.0, %v4491
    %v4493 = vpop.f32.mrb[0].mxu0
    %4494 = vmatprep.mubr.f32.mxu0 0.0
    %4495 = vmatmul.mubr.f32.gmra.mrb[0].mxu0 %v444
    %v4496 = vpop.f32.mrb[0].mxu0
    %v4497 = vadd.f32 0.0, %v4496
    %v4498 = vpop.f32.mrb[0].mxu0
    %4499 = vmatprep.mubr.f32.mxu0 0.0
    %4500 = vmatmul.mubr.f32.gmra.mrb[0].mxu0 %v447
    %v4501 = vpop.f32.mrb[0].mxu0
    %v4502 = vadd.f32 0.0, %v4501
    %v4503 = vpop.f32.mrb[0].mxu0
    %4504 = vmatprep.mubr.f32.mxu0 0.0
    %4505 = vmatmul.mubr.f32.gmra.mrb[0].mxu0 %v450
    %v4506 = vpop.f32.mrb[0].mxu0
    %v4507 = vadd.f32 0.0, %v4506
    %v4508 = vpop.f32.mrb[0].mxu0
    %4509 = vmatprep.mubr.f32.mxu0 0.0
    %4510 = vmatmul.mubr.f32.gmra.mrb[0].mxu0 %v453
    %v4511 = vpop.f32.mrb[0].mxu0
    %v4512 = vadd.f32 0.0, %v4511
    %v4513 = vpop.f32.mrb[0].mxu0
    %4514 = vmatprep.mubr.f32.mxu0 0.0
    %4515 = vmatmul.mubr.f32.gmra.mrb[0].mxu0 %v456
    %v4516 = vpop.f32.mrb[0].mxu0
    %v4517 = vadd.f32 0.0, %v4516
    %v4518 = vpop.f32.mrb[0].mxu0
    %4519 = vmatprep.mubr.f32.mxu0 0.0
    %4520 = vmatmul.mubr.f32.gmra.mrb[0].mxu0 %v459
    %v4521 = vpop.f32.mrb[0].mxu0
    %v4522 = vadd.f32 0.0, %v4521
    %v4523 = vpop.f32.mrb[0].mxu0
    %4524 = vmatprep.mubr.f32.mxu0 0.0
    %4525 = vmatmul.mubr.f32.gmra.mrb[0].mxu0 %v462
    %v4526 = vpop.f32.mrb[0].mxu0
    %v4527 = vadd.f32 0.0, %v4526
    %v4528 = vpop.f32.mrb[0].mxu0
    %4529 = vmatprep.mubr.f32.mxu0 0.0
    %4530 = vmatmul.mubr.f32.gmra.mrb[0].mxu0 %v465
    %v4531 = vpop.f32.mrb[0].mxu0
    %v4532 = vadd.f32 0.0, %v4531
    %v4533 = vpop.f32.mrb[0].mxu0
    %4534 = vmatprep.mubr.f32.mxu0 0.0
    %4535 = vmatmul.mubr.f32.gmra.mrb[0].mxu0 %v468
    %v4536 = vpop.f32.mrb[0].mxu0
    %v4537 = vadd.f32 0.0, %v4536
    %v4538 = vpop.f32.mrb[0].mxu0
    %4539 = vmatprep.mubr.f32.mxu0 0.0
    %4540 = vmatmul.mubr.f32.gmra.mrb[0].mxu0 %v471
    %v4541 = vpop.f32.mrb[0].mxu0
    %v4542 = vadd.f32 0.0, %v4541
    %v4543 = vpop.f32.mrb[0].mxu0
    %4544 = vmatprep.mubr.f32.mxu0 0.0
    %4545 = vmatmul.mubr.f32.gmra.mrb[0].mxu0 %v474
    %v4546 = vpop.f32.mrb[0].mxu0
    %v4547 = vadd.f32 0.0, %v4546
    %v4548 = vpop.f32.mrb[0].mxu0
    %4549 = vmatprep.mubr.f32.mxu0 0.0
    %4550 = vmatmul.mubr.f32.gmra.mrb[0].mxu0 %v477
    %v4551 = vpop.f32.mrb[0].mxu0
    %v4552 = vadd.f32 0.0, %v4551
    %v4553 = vpop.f32.mrb[0].mxu0
    %4554 = vdwg.mxu0
    %v4556 = vsel %vm904, %v4197, 0
    %v4559 = vsel %vm904, %v4202, 0
    %4561 = vmatprep.subr.mxu0 0.0
    %4562 = vmatpush1.msra.mxu0 %v178
    %4563 = vmatprep.subr.mxu0 0.0
    %4564 = vmatpush1.msra.mxu0 %v179
    %4565 = vmatprep.subr.mxu0 0.0
    %4566 = vmatpush1.msra.mxu0 0.0
    %4567 = vmatprep.subr.mxu0 0.0
    %4568 = vmatpush1.msra.mxu0 0.0
    %4569 = vmatprep.subr.mxu0 0.0
    %4570 = vmatpush1.msra.mxu0 0.0
    %4571 = vmatprep.subr.mxu0 0.0
    %4572 = vmatpush1.msra.mxu0 0.0
    %4573 = vmatprep.subr.mxu0 0.0
    %4574 = vmatpush1.msra.mxu0 0.0
    %4575 = vmatprep.subr.mxu0 0.0
    %4576 = vmatpush1.msra.mxu0 0.0
    %4577 = vmatprep.subr.mxu0 0.0
    %4578 = vmatpush1.msra.mxu0 0.0
    %4579 = vmatprep.subr.mxu0 0.0
    %4580 = vmatpush1.msra.mxu0 0.0
    %4581 = vmatprep.subr.mxu0 0.0
    %4582 = vmatpush1.msra.mxu0 0.0
    %4583 = vmatprep.subr.mxu0 0.0
    %4584 = vmatpush1.msra.mxu0 0.0
    %4585 = vmatprep.subr.mxu0 0.0
    %4586 = vmatpush1.msra.mxu0 0.0
    %4587 = vmatprep.subr.mxu0 0.0
    %4588 = vmatpush1.msra.mxu0 0.0
    %4589 = vmatprep.subr.mxu0 0.0
    %4590 = vmatpush1.msra.mxu0 0.0
    %4591 = vmatprep.subr.mxu0 0.0
    %4592 = vmatpush1.msra.mxu0 0.0
    %4593 = vmatprep.subr.mxu0 0.0
    %4594 = vmatpush1.msra.mxu0 0.0
    %4595 = vmatprep.subr.mxu0 0.0
    %4596 = vmatpush1.msra.mxu0 0.0
    %4597 = vmatprep.subr.mxu0 0.0
    %4598 = vmatpush1.msra.mxu0 0.0
    %4599 = vmatprep.subr.mxu0 0.0
    %4600 = vmatpush1.msra.mxu0 0.0
    %4601 = vmatprep.subr.mxu0 0.0
    %4602 = vmatpush1.msra.mxu0 0.0
    %4603 = vmatprep.subr.mxu0 0.0
    %4604 = vmatpush1.msra.mxu0 0.0
    %4605 = vmatprep.subr.mxu0 0.0
    %4606 = vmatpush1.msra.mxu0 0.0
    %4607 = vmatprep.subr.mxu0 0.0
    %4608 = vmatpush1.msra.mxu0 0.0
    %4609 = vmatprep.subr.mxu0 0.0
    %4610 = vmatpush1.msra.mxu0 0.0
    %4611 = vmatprep.subr.mxu0 0.0
    %4612 = vmatpush1.msra.mxu0 0.0
    %4613 = vmatprep.subr.mxu0 0.0
    %4614 = vmatpush1.msra.mxu0 0.0
    %4615 = vmatprep.subr.mxu0 0.0
    %4616 = vmatpush1.msra.mxu0 0.0
    %4617 = vmatprep.subr.mxu0 0.0
    %4618 = vmatpush1.msra.mxu0 0.0
    %4619 = vmatprep.subr.mxu0 0.0
    %4620 = vmatpush1.msra.mxu0 0.0
    %4621 = vmatprep.subr.mxu0 0.0
    %4622 = vmatpush1.msra.mxu0 0.0
    %4623 = vmatprep.subr.mxu0 0.0
    %4624 = vmatpush1.msra.mxu0 0.0
    %4625 = vmatprep.mubr.f32.mxu0 0.0
    %4626 = vmatmul.mubr.f32.gmra.mrb[0].mxu0 %v4556
    %v4627 = vpop.f32.mrb[0].mxu0
    %v4628 = vadd.f32 0.0, %v4627
    %v4629 = vpop.f32.mrb[0].mxu0
    %4630 = vmatprep.mubr.f32.mxu0 0.0
    %4631 = vmatmul.mubr.f32.gmra.mrb[0].mxu0 %v4559
    %v4632 = vpop.f32.mrb[0].mxu0
    %v4633 = vadd.f32 0.0, %v4632
    %v4634 = vpop.f32.mrb[0].mxu0
    %4635 = vdwg.mxu0
    %v4637 = vsel %vm904, %v4207, 0
    %v4640 = vsel %vm904, %v4212, 0
    %4642 = vmatprep.subr.mxu0 0.0
    %4643 = vmatpush1.msra.mxu0 %v180
    %4644 = vmatprep.subr.mxu0 0.0
    %4645 = vmatpush1.msra.mxu0 %v181
    %4646 = vmatprep.subr.mxu0 0.0
    %4647 = vmatpush1.msra.mxu0 0.0
    %4648 = vmatprep.subr.mxu0 0.0
    %4649 = vmatpush1.msra.mxu0 0.0
    %4650 = vmatprep.subr.mxu0 0.0
    %4651 = vmatpush1.msra.mxu0 0.0
    %4652 = vmatprep.subr.mxu0 0.0
    %4653 = vmatpush1.msra.mxu0 0.0
    %4654 = vmatprep.subr.mxu0 0.0
    %4655 = vmatpush1.msra.mxu0 0.0
    %4656 = vmatprep.subr.mxu0 0.0
    %4657 = vmatpush1.msra.mxu0 0.0
    %4658 = vmatprep.subr.mxu0 0.0
    %4659 = vmatpush1.msra.mxu0 0.0
    %4660 = vmatprep.subr.mxu0 0.0
    %4661 = vmatpush1.msra.mxu0 0.0
    %4662 = vmatprep.subr.mxu0 0.0
    %4663 = vmatpush1.msra.mxu0 0.0
    %4664 = vmatprep.subr.mxu0 0.0
    %4665 = vmatpush1.msra.mxu0 0.0
    %4666 = vmatprep.subr.mxu0 0.0
    %4667 = vmatpush1.msra.mxu0 0.0
    %4668 = vmatprep.subr.mxu0 0.0
    %4669 = vmatpush1.msra.mxu0 0.0
    %4670 = vmatprep.subr.mxu0 0.0
    %4671 = vmatpush1.msra.mxu0 0.0
    %4672 = vmatprep.subr.mxu0 0.0
    %4673 = vmatpush1.msra.mxu0 0.0
    %4674 = vmatprep.subr.mxu0 0.0
    %4675 = vmatpush1.msra.mxu0 0.0
    %4676 = vmatprep.subr.mxu0 0.0
    %4677 = vmatpush1.msra.mxu0 0.0
    %4678 = vmatprep.subr.mxu0 0.0
    %4679 = vmatpush1.msra.mxu0 0.0
    %4680 = vmatprep.subr.mxu0 0.0
    %4681 = vmatpush1.msra.mxu0 0.0
    %4682 = vmatprep.subr.mxu0 0.0
    %4683 = vmatpush1.msra.mxu0 0.0
    %4684 = vmatprep.subr.mxu0 0.0
    %4685 = vmatpush1.msra.mxu0 0.0
    %4686 = vmatprep.subr.mxu0 0.0
    %4687 = vmatpush1.msra.mxu0 0.0
    %4688 = vmatprep.subr.mxu0 0.0
    %4689 = vmatpush1.msra.mxu0 0.0
    %4690 = vmatprep.subr.mxu0 0.0
    %4691 = vmatpush1.msra.mxu0 0.0
    %4692 = vmatprep.subr.mxu0 0.0
    %4693 = vmatpush1.msra.mxu0 0.0
    %4694 = vmatprep.subr.mxu0 0.0
    %4695 = vmatpush1.msra.mxu0 0.0
    %4696 = vmatprep.subr.mxu0 0.0
    %4697 = vmatpush1.msra.mxu0 0.0
    %4698 = vmatprep.subr.mxu0 0.0
    %4699 = vmatpush1.msra.mxu0 0.0
    %4700 = vmatprep.subr.mxu0 0.0
    %4701 = vmatpush1.msra.mxu0 0.0
    %4702 = vmatprep.subr.mxu0 0.0
    %4703 = vmatpush1.msra.mxu0 0.0
    %4704 = vmatprep.subr.mxu0 0.0
    %4705 = vmatpush1.msra.mxu0 0.0
    %4706 = vmatprep.mubr.f32.mxu0 0.0
    %4707 = vmatmul.mubr.f32.gmra.mrb[0].mxu0 %v4637
    %v4708 = vpop.f32.mrb[0].mxu0
    %v4709 = vadd.f32 0.0, %v4708
    %v4710 = vpop.f32.mrb[0].mxu0
    %4711 = vmatprep.mubr.f32.mxu0 0.0
    %4712 = vmatmul.mubr.f32.gmra.mrb[0].mxu0 %v4640
    %v4713 = vpop.f32.mrb[0].mxu0
    %v4714 = vadd.f32 0.0, %v4713
    %v4715 = vpop.f32.mrb[0].mxu0
    %4716 = vdwg.mxu0
    %v4718 = vsel %vm904, %v4217, 0
    %v4721 = vsel %vm904, %v4222, 0
    %4723 = vmatprep.subr.mxu0 0.0
    %4724 = vmatpush1.msra.mxu0 %v182
    %4725 = vmatprep.subr.mxu0 0.0
    %4726 = vmatpush1.msra.mxu0 %v183
    %4727 = vmatprep.subr.mxu0 0.0
    %4728 = vmatpush1.msra.mxu0 0.0
    %4729 = vmatprep.subr.mxu0 0.0
    %4730 = vmatpush1.msra.mxu0 0.0
    %4731 = vmatprep.subr.mxu0 0.0
    %4732 = vmatpush1.msra.mxu0 0.0
    %4733 = vmatprep.subr.mxu0 0.0
    %4734 = vmatpush1.msra.mxu0 0.0
    %4735 = vmatprep.subr.mxu0 0.0
    %4736 = vmatpush1.msra.mxu0 0.0
    %4737 = vmatprep.subr.mxu0 0.0
    %4738 = vmatpush1.msra.mxu0 0.0
    %4739 = vmatprep.subr.mxu0 0.0
    %4740 = vmatpush1.msra.mxu0 0.0
    %4741 = vmatprep.subr.mxu0 0.0
    %4742 = vmatpush1.msra.mxu0 0.0
    %4743 = vmatprep.subr.mxu0 0.0
    %4744 = vmatpush1.msra.mxu0 0.0
    %4745 = vmatprep.subr.mxu0 0.0
    %4746 = vmatpush1.msra.mxu0 0.0
    %4747 = vmatprep.subr.mxu0 0.0
    %4748 = vmatpush1.msra.mxu0 0.0
    %4749 = vmatprep.subr.mxu0 0.0
    %4750 = vmatpush1.msra.mxu0 0.0
    %4751 = vmatprep.subr.mxu0 0.0
    %4752 = vmatpush1.msra.mxu0 0.0
    %4753 = vmatprep.subr.mxu0 0.0
    %4754 = vmatpush1.msra.mxu0 0.0
    %4755 = vmatprep.subr.mxu0 0.0
    %4756 = vmatpush1.msra.mxu0 0.0
    %4757 = vmatprep.subr.mxu0 0.0
    %4758 = vmatpush1.msra.mxu0 0.0
    %4759 = vmatprep.subr.mxu0 0.0
    %4760 = vmatpush1.msra.mxu0 0.0
    %4761 = vmatprep.subr.mxu0 0.0
    %4762 = vmatpush1.msra.mxu0 0.0
    %4763 = vmatprep.subr.mxu0 0.0
    %4764 = vmatpush1.msra.mxu0 0.0
    %4765 = vmatprep.subr.mxu0 0.0
    %4766 = vmatpush1.msra.mxu0 0.0
    %4767 = vmatprep.subr.mxu0 0.0
    %4768 = vmatpush1.msra.mxu0 0.0
    %4769 = vmatprep.subr.mxu0 0.0
    %4770 = vmatpush1.msra.mxu0 0.0
    %4771 = vmatprep.subr.mxu0 0.0
    %4772 = vmatpush1.msra.mxu0 0.0
    %4773 = vmatprep.subr.mxu0 0.0
    %4774 = vmatpush1.msra.mxu0 0.0
    %4775 = vmatprep.subr.mxu0 0.0
    %4776 = vmatpush1.msra.mxu0 0.0
    %4777 = vmatprep.subr.mxu0 0.0
    %4778 = vmatpush1.msra.mxu0 0.0
    %4779 = vmatprep.subr.mxu0 0.0
    %4780 = vmatpush1.msra.mxu0 0.0
    %4781 = vmatprep.subr.mxu0 0.0
    %4782 = vmatpush1.msra.mxu0 0.0
    %4783 = vmatprep.subr.mxu0 0.0
    %4784 = vmatpush1.msra.mxu0 0.0
    %4785 = vmatprep.subr.mxu0 0.0
    %4786 = vmatpush1.msra.mxu0 0.0
    %4787 = vmatprep.mubr.f32.mxu0 0.0
    %4788 = vmatmul.mubr.f32.gmra.mrb[0].mxu0 %v4718
    %v4789 = vpop.f32.mrb[0].mxu0
    %v4790 = vadd.f32 0.0, %v4789
    %v4791 = vpop.f32.mrb[0].mxu0
    %4792 = vmatprep.mubr.f32.mxu0 0.0
    %4793 = vmatmul.mubr.f32.gmra.mrb[0].mxu0 %v4721
    %v4794 = vpop.f32.mrb[0].mxu0
    %v4795 = vadd.f32 0.0, %v4794
    %v4796 = vpop.f32.mrb[0].mxu0
    %4797 = vdwg.mxu0
    %v4799 = vsel %vm904, %v4227, 0
    %v4802 = vsel %vm904, %v4232, 0
    %4804 = vmatprep.subr.mxu0 0.0
    %4805 = vmatpush1.msra.mxu0 %v184
    %4806 = vmatprep.subr.mxu0 0.0
    %4807 = vmatpush1.msra.mxu0 %v185
    %4808 = vmatprep.subr.mxu0 0.0
    %4809 = vmatpush1.msra.mxu0 0.0
    %4810 = vmatprep.subr.mxu0 0.0
    %4811 = vmatpush1.msra.mxu0 0.0
    %4812 = vmatprep.subr.mxu0 0.0
    %4813 = vmatpush1.msra.mxu0 0.0
    %4814 = vmatprep.subr.mxu0 0.0
    %4815 = vmatpush1.msra.mxu0 0.0
    %4816 = vmatprep.subr.mxu0 0.0
    %4817 = vmatpush1.msra.mxu0 0.0
    %4818 = vmatprep.subr.mxu0 0.0
    %4819 = vmatpush1.msra.mxu0 0.0
    %4820 = vmatprep.subr.mxu0 0.0
    %4821 = vmatpush1.msra.mxu0 0.0
    %4822 = vmatprep.subr.mxu0 0.0
    %4823 = vmatpush1.msra.mxu0 0.0
    %4824 = vmatprep.subr.mxu0 0.0
    %4825 = vmatpush1.msra.mxu0 0.0
    %4826 = vmatprep.subr.mxu0 0.0
    %4827 = vmatpush1.msra.mxu0 0.0
    %4828 = vmatprep.subr.mxu0 0.0
    %4829 = vmatpush1.msra.mxu0 0.0
    %4830 = vmatprep.subr.mxu0 0.0
    %4831 = vmatpush1.msra.mxu0 0.0
    %4832 = vmatprep.subr.mxu0 0.0
    %4833 = vmatpush1.msra.mxu0 0.0
    %4834 = vmatprep.subr.mxu0 0.0
    %4835 = vmatpush1.msra.mxu0 0.0
    %4836 = vmatprep.subr.mxu0 0.0
    %4837 = vmatpush1.msra.mxu0 0.0
    %4838 = vmatprep.subr.mxu0 0.0
    %4839 = vmatpush1.msra.mxu0 0.0
    %4840 = vmatprep.subr.mxu0 0.0
    %4841 = vmatpush1.msra.mxu0 0.0
    %4842 = vmatprep.subr.mxu0 0.0
    %4843 = vmatpush1.msra.mxu0 0.0
    %4844 = vmatprep.subr.mxu0 0.0
    %4845 = vmatpush1.msra.mxu0 0.0
    %4846 = vmatprep.subr.mxu0 0.0
    %4847 = vmatpush1.msra.mxu0 0.0
    %4848 = vmatprep.subr.mxu0 0.0
    %4849 = vmatpush1.msra.mxu0 0.0
    %4850 = vmatprep.subr.mxu0 0.0
    %4851 = vmatpush1.msra.mxu0 0.0
    %4852 = vmatprep.subr.mxu0 0.0
    %4853 = vmatpush1.msra.mxu0 0.0
    %4854 = vmatprep.subr.mxu0 0.0
    %4855 = vmatpush1.msra.mxu0 0.0
    %4856 = vmatprep.subr.mxu0 0.0
    %4857 = vmatpush1.msra.mxu0 0.0
    %4858 = vmatprep.subr.mxu0 0.0
    %4859 = vmatpush1.msra.mxu0 0.0
    %4860 = vmatprep.subr.mxu0 0.0
    %4861 = vmatpush1.msra.mxu0 0.0
    %4862 = vmatprep.subr.mxu0 0.0
    %4863 = vmatpush1.msra.mxu0 0.0
    %4864 = vmatprep.subr.mxu0 0.0
    %4865 = vmatpush1.msra.mxu0 0.0
    %4866 = vmatprep.subr.mxu0 0.0
    %4867 = vmatpush1.msra.mxu0 0.0
    %4868 = vmatprep.mubr.f32.mxu0 0.0
    %4869 = vmatmul.mubr.f32.gmra.mrb[0].mxu0 %v4799
    %v4870 = vpop.f32.mrb[0].mxu0
    %v4871 = vadd.f32 0.0, %v4870
    %v4872 = vpop.f32.mrb[0].mxu0
    %4873 = vmatprep.mubr.f32.mxu0 0.0
    %4874 = vmatmul.mubr.f32.gmra.mrb[0].mxu0 %v4802
    %v4875 = vpop.f32.mrb[0].mxu0
    %v4876 = vadd.f32 0.0, %v4875
    %v4877 = vpop.f32.mrb[0].mxu0
    %4878 = vdwg.mxu0
    %v4880 = vsel %vm904, %v4237, 0
    %v4883 = vsel %vm904, %v4242, 0
    %4885 = vmatprep.subr.mxu0 0.0
    %4886 = vmatpush1.msra.mxu0 %v186
    %4887 = vmatprep.subr.mxu0 0.0
    %4888 = vmatpush1.msra.mxu0 %v187
    %4889 = vmatprep.subr.mxu0 0.0
    %4890 = vmatpush1.msra.mxu0 0.0
    %4891 = vmatprep.subr.mxu0 0.0
    %4892 = vmatpush1.msra.mxu0 0.0
    %4893 = vmatprep.subr.mxu0 0.0
    %4894 = vmatpush1.msra.mxu0 0.0
    %4895 = vmatprep.subr.mxu0 0.0
    %4896 = vmatpush1.msra.mxu0 0.0
    %4897 = vmatprep.subr.mxu0 0.0
    %4898 = vmatpush1.msra.mxu0 0.0
    %4899 = vmatprep.subr.mxu0 0.0
    %4900 = vmatpush1.msra.mxu0 0.0
    %4901 = vmatprep.subr.mxu0 0.0
    %4902 = vmatpush1.msra.mxu0 0.0
    %4903 = vmatprep.subr.mxu0 0.0
    %4904 = vmatpush1.msra.mxu0 0.0
    %4905 = vmatprep.subr.mxu0 0.0
    %4906 = vmatpush1.msra.mxu0 0.0
    %4907 = vmatprep.subr.mxu0 0.0
    %4908 = vmatpush1.msra.mxu0 0.0
    %4909 = vmatprep.subr.mxu0 0.0
    %4910 = vmatpush1.msra.mxu0 0.0
    %4911 = vmatprep.subr.mxu0 0.0
    %4912 = vmatpush1.msra.mxu0 0.0
    %4913 = vmatprep.subr.mxu0 0.0
    %4914 = vmatpush1.msra.mxu0 0.0
    %4915 = vmatprep.subr.mxu0 0.0
    %4916 = vmatpush1.msra.mxu0 0.0
    %4917 = vmatprep.subr.mxu0 0.0
    %4918 = vmatpush1.msra.mxu0 0.0
    %4919 = vmatprep.subr.mxu0 0.0
    %4920 = vmatpush1.msra.mxu0 0.0
    %4921 = vmatprep.subr.mxu0 0.0
    %4922 = vmatpush1.msra.mxu0 0.0
    %4923 = vmatprep.subr.mxu0 0.0
    %4924 = vmatpush1.msra.mxu0 0.0
    %4925 = vmatprep.subr.mxu0 0.0
    %4926 = vmatpush1.msra.mxu0 0.0
    %4927 = vmatprep.subr.mxu0 0.0
    %4928 = vmatpush1.msra.mxu0 0.0
    %4929 = vmatprep.subr.mxu0 0.0
    %4930 = vmatpush1.msra.mxu0 0.0
    %4931 = vmatprep.subr.mxu0 0.0
    %4932 = vmatpush1.msra.mxu0 0.0
    %4933 = vmatprep.subr.mxu0 0.0
    %4934 = vmatpush1.msra.mxu0 0.0
    %4935 = vmatprep.subr.mxu0 0.0
    %4936 = vmatpush1.msra.mxu0 0.0
    %4937 = vmatprep.subr.mxu0 0.0
    %4938 = vmatpush1.msra.mxu0 0.0
    %4939 = vmatprep.subr.mxu0 0.0
    %4940 = vmatpush1.msra.mxu0 0.0
    %4941 = vmatprep.subr.mxu0 0.0
    %4942 = vmatpush1.msra.mxu0 0.0
    %4943 = vmatprep.subr.mxu0 0.0
    %4944 = vmatpush1.msra.mxu0 0.0
    %4945 = vmatprep.subr.mxu0 0.0
    %4946 = vmatpush1.msra.mxu0 0.0
    %4947 = vmatprep.subr.mxu0 0.0
    %4948 = vmatpush1.msra.mxu0 0.0
    %4949 = vmatprep.mubr.f32.mxu0 0.0
    %4950 = vmatmul.mubr.f32.gmra.mrb[0].mxu0 %v4880
    %v4951 = vpop.f32.mrb[0].mxu0
    %v4952 = vadd.f32 0.0, %v4951
    %v4953 = vpop.f32.mrb[0].mxu0
    %4954 = vmatprep.mubr.f32.mxu0 0.0
    %4955 = vmatmul.mubr.f32.gmra.mrb[0].mxu0 %v4883
    %v4956 = vpop.f32.mrb[0].mxu0
    %v4957 = vadd.f32 0.0, %v4956
    %v4958 = vpop.f32.mrb[0].mxu0
    %4959 = vdwg.mxu0
    %v4961 = vsel %vm904, %v4247, 0
    %v4964 = vsel %vm904, %v4252, 0
    %4966 = vmatprep.subr.mxu0 0.0
    %4967 = vmatpush1.msra.mxu0 %v188
    %4968 = vmatprep.subr.mxu0 0.0
    %4969 = vmatpush1.msra.mxu0 %v189
    %4970 = vmatprep.subr.mxu0 0.0
    %4971 = vmatpush1.msra.mxu0 0.0
    %4972 = vmatprep.subr.mxu0 0.0
    %4973 = vmatpush1.msra.mxu0 0.0
    %4974 = vmatprep.subr.mxu0 0.0
    %4975 = vmatpush1.msra.mxu0 0.0
    %4976 = vmatprep.subr.mxu0 0.0
    %4977 = vmatpush1.msra.mxu0 0.0
    %4978 = vmatprep.subr.mxu0 0.0
    %4979 = vmatpush1.msra.mxu0 0.0
    %4980 = vmatprep.subr.mxu0 0.0
    %4981 = vmatpush1.msra.mxu0 0.0
    %4982 = vmatprep.subr.mxu0 0.0
    %4983 = vmatpush1.msra.mxu0 0.0
    %4984 = vmatprep.subr.mxu0 0.0
    %4985 = vmatpush1.msra.mxu0 0.0
    %4986 = vmatprep.subr.mxu0 0.0
    %4987 = vmatpush1.msra.mxu0 0.0
    %4988 = vmatprep.subr.mxu0 0.0
    %4989 = vmatpush1.msra.mxu0 0.0
    %4990 = vmatprep.subr.mxu0 0.0
    %4991 = vmatpush1.msra.mxu0 0.0
    %4992 = vmatprep.subr.mxu0 0.0
    %4993 = vmatpush1.msra.mxu0 0.0
    %4994 = vmatprep.subr.mxu0 0.0
    %4995 = vmatpush1.msra.mxu0 0.0
    %4996 = vmatprep.subr.mxu0 0.0
    %4997 = vmatpush1.msra.mxu0 0.0
    %4998 = vmatprep.subr.mxu0 0.0
    %4999 = vmatpush1.msra.mxu0 0.0
    %5000 = vmatprep.subr.mxu0 0.0
    %5001 = vmatpush1.msra.mxu0 0.0
    %5002 = vmatprep.subr.mxu0 0.0
    %5003 = vmatpush1.msra.mxu0 0.0
    %5004 = vmatprep.subr.mxu0 0.0
    %5005 = vmatpush1.msra.mxu0 0.0
    %5006 = vmatprep.subr.mxu0 0.0
    %5007 = vmatpush1.msra.mxu0 0.0
    %5008 = vmatprep.subr.mxu0 0.0
    %5009 = vmatpush1.msra.mxu0 0.0
    %5010 = vmatprep.subr.mxu0 0.0
    %5011 = vmatpush1.msra.mxu0 0.0
    %5012 = vmatprep.subr.mxu0 0.0
    %5013 = vmatpush1.msra.mxu0 0.0
    %5014 = vmatprep.subr.mxu0 0.0
    %5015 = vmatpush1.msra.mxu0 0.0
    %5016 = vmatprep.subr.mxu0 0.0
    %5017 = vmatpush1.msra.mxu0 0.0
    %5018 = vmatprep.subr.mxu0 0.0
    %5019 = vmatpush1.msra.mxu0 0.0
    %5020 = vmatprep.subr.mxu0 0.0
    %5021 = vmatpush1.msra.mxu0 0.0
    %5022 = vmatprep.subr.mxu0 0.0
    %5023 = vmatpush1.msra.mxu0 0.0
    %5024 = vmatprep.subr.mxu0 0.0
    %5025 = vmatpush1.msra.mxu0 0.0
    %5026 = vmatprep.subr.mxu0 0.0
    %5027 = vmatpush1.msra.mxu0 0.0
    %5028 = vmatprep.subr.mxu0 0.0
    %5029 = vmatpush1.msra.mxu0 0.0
    %5030 = vmatprep.mubr.f32.mxu0 0.0
    %5031 = vmatmul.mubr.f32.gmra.mrb[0].mxu0 %v4961
    %v5032 = vpop.f32.mrb[0].mxu0
    %v5033 = vadd.f32 0.0, %v5032
    %v5034 = vpop.f32.mrb[0].mxu0
    %5035 = vmatprep.mubr.f32.mxu0 0.0
    %5036 = vmatmul.mubr.f32.gmra.mrb[0].mxu0 %v4964
    %v5037 = vpop.f32.mrb[0].mxu0
    %v5038 = vadd.f32 0.0, %v5037
    %v5039 = vpop.f32.mrb[0].mxu0
    %5040 = vdwg.mxu0
    %v5042 = vsel %vm904, %v4257, 0
    %v5045 = vsel %vm904, %v4262, 0
    %5047 = vmatprep.subr.mxu0 0.0
    %5048 = vmatpush1.msra.mxu0 %v190
    %5049 = vmatprep.subr.mxu0 0.0
    %5050 = vmatpush1.msra.mxu0 %v191
    %5051 = vmatprep.subr.mxu0 0.0
    %5052 = vmatpush1.msra.mxu0 0.0
    %5053 = vmatprep.subr.mxu0 0.0
    %5054 = vmatpush1.msra.mxu0 0.0
    %5055 = vmatprep.subr.mxu0 0.0
    %5056 = vmatpush1.msra.mxu0 0.0
    %5057 = vmatprep.subr.mxu0 0.0
    %5058 = vmatpush1.msra.mxu0 0.0
    %5059 = vmatprep.subr.mxu0 0.0
    %5060 = vmatpush1.msra.mxu0 0.0
    %5061 = vmatprep.subr.mxu0 0.0
    %5062 = vmatpush1.msra.mxu0 0.0
    %5063 = vmatprep.subr.mxu0 0.0
    %5064 = vmatpush1.msra.mxu0 0.0
    %5065 = vmatprep.subr.mxu0 0.0
    %5066 = vmatpush1.msra.mxu0 0.0
    %5067 = vmatprep.subr.mxu0 0.0
    %5068 = vmatpush1.msra.mxu0 0.0
    %5069 = vmatprep.subr.mxu0 0.0
    %5070 = vmatpush1.msra.mxu0 0.0
    %5071 = vmatprep.subr.mxu0 0.0
    %5072 = vmatpush1.msra.mxu0 0.0
    %5073 = vmatprep.subr.mxu0 0.0
    %5074 = vmatpush1.msra.mxu0 0.0
    %5075 = vmatprep.subr.mxu0 0.0
    %5076 = vmatpush1.msra.mxu0 0.0
    %5077 = vmatprep.subr.mxu0 0.0
    %5078 = vmatpush1.msra.mxu0 0.0
    %5079 = vmatprep.subr.mxu0 0.0
    %5080 = vmatpush1.msra.mxu0 0.0
    %5081 = vmatprep.subr.mxu0 0.0
    %5082 = vmatpush1.msra.mxu0 0.0
    %5083 = vmatprep.subr.mxu0 0.0
    %5084 = vmatpush1.msra.mxu0 0.0
    %5085 = vmatprep.subr.mxu0 0.0
    %5086 = vmatpush1.msra.mxu0 0.0
    %5087 = vmatprep.subr.mxu0 0.0
    %5088 = vmatpush1.msra.mxu0 0.0
    %5089 = vmatprep.subr.mxu0 0.0
    %5090 = vmatpush1.msra.mxu0 0.0
    %5091 = vmatprep.subr.mxu0 0.0
    %5092 = vmatpush1.msra.mxu0 0.0
    %5093 = vmatprep.subr.mxu0 0.0
    %5094 = vmatpush1.msra.mxu0 0.0
    %5095 = vmatprep.subr.mxu0 0.0
    %5096 = vmatpush1.msra.mxu0 0.0
    %5097 = vmatprep.subr.mxu0 0.0
    %5098 = vmatpush1.msra.mxu0 0.0
    %5099 = vmatprep.subr.mxu0 0.0
    %5100 = vmatpush1.msra.mxu0 0.0
    %5101 = vmatprep.subr.mxu0 0.0
    %5102 = vmatpush1.msra.mxu0 0.0
    %5103 = vmatprep.subr.mxu0 0.0
    %5104 = vmatpush1.msra.mxu0 0.0
    %5105 = vmatprep.subr.mxu0 0.0
    %5106 = vmatpush1.msra.mxu0 0.0
    %5107 = vmatprep.subr.mxu0 0.0
    %5108 = vmatpush1.msra.mxu0 0.0
    %5109 = vmatprep.subr.mxu0 0.0
    %5110 = vmatpush1.msra.mxu0 0.0
    %5111 = vmatprep.mubr.f32.mxu0 0.0
    %5112 = vmatmul.mubr.f32.gmra.mrb[0].mxu0 %v5042
    %v5113 = vpop.f32.mrb[0].mxu0
    %v5114 = vadd.f32 0.0, %v5113
    %v5115 = vpop.f32.mrb[0].mxu0
    %5116 = vmatprep.mubr.f32.mxu0 0.0
    %5117 = vmatmul.mubr.f32.gmra.mrb[0].mxu0 %v5045
    %v5118 = vpop.f32.mrb[0].mxu0
    %v5119 = vadd.f32 0.0, %v5118
    %v5120 = vpop.f32.mrb[0].mxu0
    %5121 = vdwg.mxu0
    %v5123 = vsel %vm904, %v4267, 0
    %v5126 = vsel %vm904, %v4272, 0
    %5128 = vmatprep.subr.mxu0 0.0
    %5129 = vmatpush1.msra.mxu0 %v192
    %5130 = vmatprep.subr.mxu0 0.0
    %5131 = vmatpush1.msra.mxu0 %v193
    %5132 = vmatprep.subr.mxu0 0.0
    %5133 = vmatpush1.msra.mxu0 0.0
    %5134 = vmatprep.subr.mxu0 0.0
    %5135 = vmatpush1.msra.mxu0 0.0
    %5136 = vmatprep.subr.mxu0 0.0
    %5137 = vmatpush1.msra.mxu0 0.0
    %5138 = vmatprep.subr.mxu0 0.0
    %5139 = vmatpush1.msra.mxu0 0.0
    %5140 = vmatprep.subr.mxu0 0.0
    %5141 = vmatpush1.msra.mxu0 0.0
    %5142 = vmatprep.subr.mxu0 0.0
    %5143 = vmatpush1.msra.mxu0 0.0
    %5144 = vmatprep.subr.mxu0 0.0
    %5145 = vmatpush1.msra.mxu0 0.0
    %5146 = vmatprep.subr.mxu0 0.0
    %5147 = vmatpush1.msra.mxu0 0.0
    %5148 = vmatprep.subr.mxu0 0.0
    %5149 = vmatpush1.msra.mxu0 0.0
    %5150 = vmatprep.subr.mxu0 0.0
    %5151 = vmatpush1.msra.mxu0 0.0
    %5152 = vmatprep.subr.mxu0 0.0
    %5153 = vmatpush1.msra.mxu0 0.0
    %5154 = vmatprep.subr.mxu0 0.0
    %5155 = vmatpush1.msra.mxu0 0.0
    %5156 = vmatprep.subr.mxu0 0.0
    %5157 = vmatpush1.msra.mxu0 0.0
    %5158 = vmatprep.subr.mxu0 0.0
    %5159 = vmatpush1.msra.mxu0 0.0
    %5160 = vmatprep.subr.mxu0 0.0
    %5161 = vmatpush1.msra.mxu0 0.0
    %5162 = vmatprep.subr.mxu0 0.0
    %5163 = vmatpush1.msra.mxu0 0.0
    %5164 = vmatprep.subr.mxu0 0.0
    %5165 = vmatpush1.msra.mxu0 0.0
    %5166 = vmatprep.subr.mxu0 0.0
    %5167 = vmatpush1.msra.mxu0 0.0
    %5168 = vmatprep.subr.mxu0 0.0
    %5169 = vmatpush1.msra.mxu0 0.0
    %5170 = vmatprep.subr.mxu0 0.0
    %5171 = vmatpush1.msra.mxu0 0.0
    %5172 = vmatprep.subr.mxu0 0.0
    %5173 = vmatpush1.msra.mxu0 0.0
    %5174 = vmatprep.subr.mxu0 0.0
    %5175 = vmatpush1.msra.mxu0 0.0
    %5176 = vmatprep.subr.mxu0 0.0
    %5177 = vmatpush1.msra.mxu0 0.0
    %5178 = vmatprep.subr.mxu0 0.0
    %5179 = vmatpush1.msra.mxu0 0.0
    %5180 = vmatprep.subr.mxu0 0.0
    %5181 = vmatpush1.msra.mxu0 0.0
    %5182 = vmatprep.subr.mxu0 0.0
    %5183 = vmatpush1.msra.mxu0 0.0
    %5184 = vmatprep.subr.mxu0 0.0
    %5185 = vmatpush1.msra.mxu0 0.0
    %5186 = vmatprep.subr.mxu0 0.0
    %5187 = vmatpush1.msra.mxu0 0.0
    %5188 = vmatprep.subr.mxu0 0.0
    %5189 = vmatpush1.msra.mxu0 0.0
    %5190 = vmatprep.subr.mxu0 0.0
    %5191 = vmatpush1.msra.mxu0 0.0
    %5192 = vmatprep.mubr.f32.mxu0 0.0
    %5193 = vmatmul.mubr.f32.gmra.mrb[0].mxu0 %v5123
    %v5194 = vpop.f32.mrb[0].mxu0
    %v5195 = vadd.f32 0.0, %v5194
    %v5196 = vpop.f32.mrb[0].mxu0
    %5197 = vmatprep.mubr.f32.mxu0 0.0
    %5198 = vmatmul.mubr.f32.gmra.mrb[0].mxu0 %v5126
    %v5199 = vpop.f32.mrb[0].mxu0
    %v5200 = vadd.f32 0.0, %v5199
    %v5201 = vpop.f32.mrb[0].mxu0
    %5202 = vdwg.mxu0
    %v5204 = vsel %vm904, %v4277, 0
    %v5207 = vsel %vm904, %v4282, 0
    %5209 = vmatprep.subr.mxu0 0.0
    %5210 = vmatpush1.msra.mxu0 %v194
    %5211 = vmatprep.subr.mxu0 0.0
    %5212 = vmatpush1.msra.mxu0 %v195
    %5213 = vmatprep.subr.mxu0 0.0
    %5214 = vmatpush1.msra.mxu0 0.0
    %5215 = vmatprep.subr.mxu0 0.0
    %5216 = vmatpush1.msra.mxu0 0.0
    %5217 = vmatprep.subr.mxu0 0.0
    %5218 = vmatpush1.msra.mxu0 0.0
    %5219 = vmatprep.subr.mxu0 0.0
    %5220 = vmatpush1.msra.mxu0 0.0
    %5221 = vmatprep.subr.mxu0 0.0
    %5222 = vmatpush1.msra.mxu0 0.0
    %5223 = vmatprep.subr.mxu0 0.0
    %5224 = vmatpush1.msra.mxu0 0.0
    %5225 = vmatprep.subr.mxu0 0.0
    %5226 = vmatpush1.msra.mxu0 0.0
    %5227 = vmatprep.subr.mxu0 0.0
    %5228 = vmatpush1.msra.mxu0 0.0
    %5229 = vmatprep.subr.mxu0 0.0
    %5230 = vmatpush1.msra.mxu0 0.0
    %5231 = vmatprep.subr.mxu0 0.0
    %5232 = vmatpush1.msra.mxu0 0.0
    %5233 = vmatprep.subr.mxu0 0.0
    %5234 = vmatpush1.msra.mxu0 0.0
    %5235 = vmatprep.subr.mxu0 0.0
    %5236 = vmatpush1.msra.mxu0 0.0
    %5237 = vmatprep.subr.mxu0 0.0
    %5238 = vmatpush1.msra.mxu0 0.0
    %5239 = vmatprep.subr.mxu0 0.0
    %5240 = vmatpush1.msra.mxu0 0.0
    %5241 = vmatprep.subr.mxu0 0.0
    %5242 = vmatpush1.msra.mxu0 0.0
    %5243 = vmatprep.subr.mxu0 0.0
    %5244 = vmatpush1.msra.mxu0 0.0
    %5245 = vmatprep.subr.mxu0 0.0
    %5246 = vmatpush1.msra.mxu0 0.0
    %5247 = vmatprep.subr.mxu0 0.0
    %5248 = vmatpush1.msra.mxu0 0.0
    %5249 = vmatprep.subr.mxu0 0.0
    %5250 = vmatpush1.msra.mxu0 0.0
    %5251 = vmatprep.subr.mxu0 0.0
    %5252 = vmatpush1.msra.mxu0 0.0
    %5253 = vmatprep.subr.mxu0 0.0
    %5254 = vmatpush1.msra.mxu0 0.0
    %5255 = vmatprep.subr.mxu0 0.0
    %5256 = vmatpush1.msra.mxu0 0.0
    %5257 = vmatprep.subr.mxu0 0.0
    %5258 = vmatpush1.msra.mxu0 0.0
    %5259 = vmatprep.subr.mxu0 0.0
    %5260 = vmatpush1.msra.mxu0 0.0
    %5261 = vmatprep.subr.mxu0 0.0
    %5262 = vmatpush1.msra.mxu0 0.0
    %5263 = vmatprep.subr.mxu0 0.0
    %5264 = vmatpush1.msra.mxu0 0.0
    %5265 = vmatprep.subr.mxu0 0.0
    %5266 = vmatpush1.msra.mxu0 0.0
    %5267 = vmatprep.subr.mxu0 0.0
    %5268 = vmatpush1.msra.mxu0 0.0
    %5269 = vmatprep.subr.mxu0 0.0
    %5270 = vmatpush1.msra.mxu0 0.0
    %5271 = vmatprep.subr.mxu0 0.0
    %5272 = vmatpush1.msra.mxu0 0.0
    %5273 = vmatprep.mubr.f32.mxu0 0.0
    %5274 = vmatmul.mubr.f32.gmra.mrb[0].mxu0 %v5204
    %v5275 = vpop.f32.mrb[0].mxu0
    %v5276 = vadd.f32 0.0, %v5275
    %v5277 = vpop.f32.mrb[0].mxu0
    %5278 = vmatprep.mubr.f32.mxu0 0.0
    %5279 = vmatmul.mubr.f32.gmra.mrb[0].mxu0 %v5207
    %v5280 = vpop.f32.mrb[0].mxu0
    %v5281 = vadd.f32 0.0, %v5280
    %v5282 = vpop.f32.mrb[0].mxu0
    %5283 = vdwg.mxu0
    %v5285 = vsel %vm904, %v4287, 0
    %v5288 = vsel %vm904, %v4292, 0
    %5290 = vmatprep.subr.mxu0 0.0
    %5291 = vmatpush1.msra.mxu0 %v196
    %5292 = vmatprep.subr.mxu0 0.0
    %5293 = vmatpush1.msra.mxu0 %v197
    %5294 = vmatprep.subr.mxu0 0.0
    %5295 = vmatpush1.msra.mxu0 0.0
    %5296 = vmatprep.subr.mxu0 0.0
    %5297 = vmatpush1.msra.mxu0 0.0
    %5298 = vmatprep.subr.mxu0 0.0
    %5299 = vmatpush1.msra.mxu0 0.0
    %5300 = vmatprep.subr.mxu0 0.0
    %5301 = vmatpush1.msra.mxu0 0.0
    %5302 = vmatprep.subr.mxu0 0.0
    %5303 = vmatpush1.msra.mxu0 0.0
    %5304 = vmatprep.subr.mxu0 0.0
    %5305 = vmatpush1.msra.mxu0 0.0
    %5306 = vmatprep.subr.mxu0 0.0
    %5307 = vmatpush1.msra.mxu0 0.0
    %5308 = vmatprep.subr.mxu0 0.0
    %5309 = vmatpush1.msra.mxu0 0.0
    %5310 = vmatprep.subr.mxu0 0.0
    %5311 = vmatpush1.msra.mxu0 0.0
    %5312 = vmatprep.subr.mxu0 0.0
    %5313 = vmatpush1.msra.mxu0 0.0
    %5314 = vmatprep.subr.mxu0 0.0
    %5315 = vmatpush1.msra.mxu0 0.0
    %5316 = vmatprep.subr.mxu0 0.0
    %5317 = vmatpush1.msra.mxu0 0.0
    %5318 = vmatprep.subr.mxu0 0.0
    %5319 = vmatpush1.msra.mxu0 0.0
    %5320 = vmatprep.subr.mxu0 0.0
    %5321 = vmatpush1.msra.mxu0 0.0
    %5322 = vmatprep.subr.mxu0 0.0
    %5323 = vmatpush1.msra.mxu0 0.0
    %5324 = vmatprep.subr.mxu0 0.0
    %5325 = vmatpush1.msra.mxu0 0.0
    %5326 = vmatprep.subr.mxu0 0.0
    %5327 = vmatpush1.msra.mxu0 0.0
    %5328 = vmatprep.subr.mxu0 0.0
    %5329 = vmatpush1.msra.mxu0 0.0
    %5330 = vmatprep.subr.mxu0 0.0
    %5331 = vmatpush1.msra.mxu0 0.0
    %5332 = vmatprep.subr.mxu0 0.0
    %5333 = vmatpush1.msra.mxu0 0.0
    %5334 = vmatprep.subr.mxu0 0.0
    %5335 = vmatpush1.msra.mxu0 0.0
    %5336 = vmatprep.subr.mxu0 0.0
    %5337 = vmatpush1.msra.mxu0 0.0
    %5338 = vmatprep.subr.mxu0 0.0
    %5339 = vmatpush1.msra.mxu0 0.0
    %5340 = vmatprep.subr.mxu0 0.0
    %5341 = vmatpush1.msra.mxu0 0.0
    %5342 = vmatprep.subr.mxu0 0.0
    %5343 = vmatpush1.msra.mxu0 0.0
    %5344 = vmatprep.subr.mxu0 0.0
    %5345 = vmatpush1.msra.mxu0 0.0
    %5346 = vmatprep.subr.mxu0 0.0
    %5347 = vmatpush1.msra.mxu0 0.0
    %5348 = vmatprep.subr.mxu0 0.0
    %5349 = vmatpush1.msra.mxu0 0.0
    %5350 = vmatprep.subr.mxu0 0.0
    %5351 = vmatpush1.msra.mxu0 0.0
    %5352 = vmatprep.subr.mxu0 0.0
    %5353 = vmatpush1.msra.mxu0 0.0
    %5354 = vmatprep.mubr.f32.mxu0 0.0
    %5355 = vmatmul.mubr.f32.gmra.mrb[0].mxu0 %v5285
    %v5356 = vpop.f32.mrb[0].mxu0
    %v5357 = vadd.f32 0.0, %v5356
    %v5358 = vpop.f32.mrb[0].mxu0
    %5359 = vmatprep.mubr.f32.mxu0 0.0
    %5360 = vmatmul.mubr.f32.gmra.mrb[0].mxu0 %v5288
    %v5361 = vpop.f32.mrb[0].mxu0
    %v5362 = vadd.f32 0.0, %v5361
    %v5363 = vpop.f32.mrb[0].mxu0
    %5364 = vdwg.mxu0
    %v5366 = vsel %vm904, %v4297, 0
    %v5369 = vsel %vm904, %v4302, 0
    %5371 = vmatprep.subr.mxu0 0.0
    %5372 = vmatpush1.msra.mxu0 %v198
    %5373 = vmatprep.subr.mxu0 0.0
    %5374 = vmatpush1.msra.mxu0 %v199
    %5375 = vmatprep.subr.mxu0 0.0
    %5376 = vmatpush1.msra.mxu0 0.0
    %5377 = vmatprep.subr.mxu0 0.0
    %5378 = vmatpush1.msra.mxu0 0.0
    %5379 = vmatprep.subr.mxu0 0.0
    %5380 = vmatpush1.msra.mxu0 0.0
    %5381 = vmatprep.subr.mxu0 0.0
    %5382 = vmatpush1.msra.mxu0 0.0
    %5383 = vmatprep.subr.mxu0 0.0
    %5384 = vmatpush1.msra.mxu0 0.0
    %5385 = vmatprep.subr.mxu0 0.0
    %5386 = vmatpush1.msra.mxu0 0.0
    %5387 = vmatprep.subr.mxu0 0.0
    %5388 = vmatpush1.msra.mxu0 0.0
    %5389 = vmatprep.subr.mxu0 0.0
    %5390 = vmatpush1.msra.mxu0 0.0
    %5391 = vmatprep.subr.mxu0 0.0
    %5392 = vmatpush1.msra.mxu0 0.0
    %5393 = vmatprep.subr.mxu0 0.0
    %5394 = vmatpush1.msra.mxu0 0.0
    %5395 = vmatprep.subr.mxu0 0.0
    %5396 = vmatpush1.msra.mxu0 0.0
    %5397 = vmatprep.subr.mxu0 0.0
    %5398 = vmatpush1.msra.mxu0 0.0
    %5399 = vmatprep.subr.mxu0 0.0
    %5400 = vmatpush1.msra.mxu0 0.0
    %5401 = vmatprep.subr.mxu0 0.0
    %5402 = vmatpush1.msra.mxu0 0.0
    %5403 = vmatprep.subr.mxu0 0.0
    %5404 = vmatpush1.msra.mxu0 0.0
    %5405 = vmatprep.subr.mxu0 0.0
    %5406 = vmatpush1.msra.mxu0 0.0
    %5407 = vmatprep.subr.mxu0 0.0
    %5408 = vmatpush1.msra.mxu0 0.0
    %5409 = vmatprep.subr.mxu0 0.0
    %5410 = vmatpush1.msra.mxu0 0.0
    %5411 = vmatprep.subr.mxu0 0.0
    %5412 = vmatpush1.msra.mxu0 0.0
    %5413 = vmatprep.subr.mxu0 0.0
    %5414 = vmatpush1.msra.mxu0 0.0
    %5415 = vmatprep.subr.mxu0 0.0
    %5416 = vmatpush1.msra.mxu0 0.0
    %5417 = vmatprep.subr.mxu0 0.0
    %5418 = vmatpush1.msra.mxu0 0.0
    %5419 = vmatprep.subr.mxu0 0.0
    %5420 = vmatpush1.msra.mxu0 0.0
    %5421 = vmatprep.subr.mxu0 0.0
    %5422 = vmatpush1.msra.mxu0 0.0
    %5423 = vmatprep.subr.mxu0 0.0
    %5424 = vmatpush1.msra.mxu0 0.0
    %5425 = vmatprep.subr.mxu0 0.0
    %5426 = vmatpush1.msra.mxu0 0.0
    %5427 = vmatprep.subr.mxu0 0.0
    %5428 = vmatpush1.msra.mxu0 0.0
    %5429 = vmatprep.subr.mxu0 0.0
    %5430 = vmatpush1.msra.mxu0 0.0
    %5431 = vmatprep.subr.mxu0 0.0
    %5432 = vmatpush1.msra.mxu0 0.0
    %5433 = vmatprep.subr.mxu0 0.0
    %5434 = vmatpush1.msra.mxu0 0.0
    %5435 = vmatprep.mubr.f32.mxu0 0.0
    %5436 = vmatmul.mubr.f32.gmra.mrb[0].mxu0 %v5366
    %v5437 = vpop.f32.mrb[0].mxu0
    %v5438 = vadd.f32 0.0, %v5437
    %v5439 = vpop.f32.mrb[0].mxu0
    %5440 = vmatprep.mubr.f32.mxu0 0.0
    %5441 = vmatmul.mubr.f32.gmra.mrb[0].mxu0 %v5369
    %v5442 = vpop.f32.mrb[0].mxu0
    %v5443 = vadd.f32 0.0, %v5442
    %v5444 = vpop.f32.mrb[0].mxu0
    %5445 = vdwg.mxu0
    %v5447 = vsel %vm904, %v4307, 0
    %v5450 = vsel %vm904, %v4312, 0
    %5452 = vmatprep.subr.mxu0 0.0
    %5453 = vmatpush1.msra.mxu0 %v200
    %5454 = vmatprep.subr.mxu0 0.0
    %5455 = vmatpush1.msra.mxu0 %v201
    %5456 = vmatprep.subr.mxu0 0.0
    %5457 = vmatpush1.msra.mxu0 0.0
    %5458 = vmatprep.subr.mxu0 0.0
    %5459 = vmatpush1.msra.mxu0 0.0
    %5460 = vmatprep.subr.mxu0 0.0
    %5461 = vmatpush1.msra.mxu0 0.0
    %5462 = vmatprep.subr.mxu0 0.0
    %5463 = vmatpush1.msra.mxu0 0.0
    %5464 = vmatprep.subr.mxu0 0.0
    %5465 = vmatpush1.msra.mxu0 0.0
    %5466 = vmatprep.subr.mxu0 0.0
    %5467 = vmatpush1.msra.mxu0 0.0
    %5468 = vmatprep.subr.mxu0 0.0
    %5469 = vmatpush1.msra.mxu0 0.0
    %5470 = vmatprep.subr.mxu0 0.0
    %5471 = vmatpush1.msra.mxu0 0.0
    %5472 = vmatprep.subr.mxu0 0.0
    %5473 = vmatpush1.msra.mxu0 0.0
    %5474 = vmatprep.subr.mxu0 0.0
    %5475 = vmatpush1.msra.mxu0 0.0
    %5476 = vmatprep.subr.mxu0 0.0
    %5477 = vmatpush1.msra.mxu0 0.0
    %5478 = vmatprep.subr.mxu0 0.0
    %5479 = vmatpush1.msra.mxu0 0.0
    %5480 = vmatprep.subr.mxu0 0.0
    %5481 = vmatpush1.msra.mxu0 0.0
    %5482 = vmatprep.subr.mxu0 0.0
    %5483 = vmatpush1.msra.mxu0 0.0
    %5484 = vmatprep.subr.mxu0 0.0
    %5485 = vmatpush1.msra.mxu0 0.0
    %5486 = vmatprep.subr.mxu0 0.0
    %5487 = vmatpush1.msra.mxu0 0.0
    %5488 = vmatprep.subr.mxu0 0.0
    %5489 = vmatpush1.msra.mxu0 0.0
    %5490 = vmatprep.subr.mxu0 0.0
    %5491 = vmatpush1.msra.mxu0 0.0
    %5492 = vmatprep.subr.mxu0 0.0
    %5493 = vmatpush1.msra.mxu0 0.0
    %5494 = vmatprep.subr.mxu0 0.0
    %5495 = vmatpush1.msra.mxu0 0.0
    %5496 = vmatprep.subr.mxu0 0.0
    %5497 = vmatpush1.msra.mxu0 0.0
    %5498 = vmatprep.subr.mxu0 0.0
    %5499 = vmatpush1.msra.mxu0 0.0
    %5500 = vmatprep.subr.mxu0 0.0
    %5501 = vmatpush1.msra.mxu0 0.0
    %5502 = vmatprep.subr.mxu0 0.0
    %5503 = vmatpush1.msra.mxu0 0.0
    %5504 = vmatprep.subr.mxu0 0.0
    %5505 = vmatpush1.msra.mxu0 0.0
    %5506 = vmatprep.subr.mxu0 0.0
    %5507 = vmatpush1.msra.mxu0 0.0
    %5508 = vmatprep.subr.mxu0 0.0
    %5509 = vmatpush1.msra.mxu0 0.0
    %5510 = vmatprep.subr.mxu0 0.0
    %5511 = vmatpush1.msra.mxu0 0.0
    %5512 = vmatprep.subr.mxu0 0.0
    %5513 = vmatpush1.msra.mxu0 0.0
    %5514 = vmatprep.subr.mxu0 0.0
    %5515 = vmatpush1.msra.mxu0 0.0
    %5516 = vmatprep.mubr.f32.mxu0 0.0
    %5517 = vmatmul.mubr.f32.gmra.mrb[0].mxu0 %v5447
    %v5518 = vpop.f32.mrb[0].mxu0
    %v5519 = vadd.f32 0.0, %v5518
    %v5520 = vpop.f32.mrb[0].mxu0
    %5521 = vmatprep.mubr.f32.mxu0 0.0
    %5522 = vmatmul.mubr.f32.gmra.mrb[0].mxu0 %v5450
    %v5523 = vpop.f32.mrb[0].mxu0
    %v5524 = vadd.f32 0.0, %v5523
    %v5525 = vpop.f32.mrb[0].mxu0
    %5526 = vdwg.mxu0
    %v5528 = vsel %vm904, %v4317, 0
    %v5531 = vsel %vm904, %v4322, 0
    %5533 = vmatprep.subr.mxu0 0.0
    %5534 = vmatpush1.msra.mxu0 %v202
    %5535 = vmatprep.subr.mxu0 0.0
    %5536 = vmatpush1.msra.mxu0 %v203
    %5537 = vmatprep.subr.mxu0 0.0
    %5538 = vmatpush1.msra.mxu0 0.0
    %5539 = vmatprep.subr.mxu0 0.0
    %5540 = vmatpush1.msra.mxu0 0.0
    %5541 = vmatprep.subr.mxu0 0.0
    %5542 = vmatpush1.msra.mxu0 0.0
    %5543 = vmatprep.subr.mxu0 0.0
    %5544 = vmatpush1.msra.mxu0 0.0
    %5545 = vmatprep.subr.mxu0 0.0
    %5546 = vmatpush1.msra.mxu0 0.0
    %5547 = vmatprep.subr.mxu0 0.0
    %5548 = vmatpush1.msra.mxu0 0.0
    %5549 = vmatprep.subr.mxu0 0.0
    %5550 = vmatpush1.msra.mxu0 0.0
    %5551 = vmatprep.subr.mxu0 0.0
    %5552 = vmatpush1.msra.mxu0 0.0
    %5553 = vmatprep.subr.mxu0 0.0
    %5554 = vmatpush1.msra.mxu0 0.0
    %5555 = vmatprep.subr.mxu0 0.0
    %5556 = vmatpush1.msra.mxu0 0.0
    %5557 = vmatprep.subr.mxu0 0.0
    %5558 = vmatpush1.msra.mxu0 0.0
    %5559 = vmatprep.subr.mxu0 0.0
    %5560 = vmatpush1.msra.mxu0 0.0
    %5561 = vmatprep.subr.mxu0 0.0
    %5562 = vmatpush1.msra.mxu0 0.0
    %5563 = vmatprep.subr.mxu0 0.0
    %5564 = vmatpush1.msra.mxu0 0.0
    %5565 = vmatprep.subr.mxu0 0.0
    %5566 = vmatpush1.msra.mxu0 0.0
    %5567 = vmatprep.subr.mxu0 0.0
    %5568 = vmatpush1.msra.mxu0 0.0
    %5569 = vmatprep.subr.mxu0 0.0
    %5570 = vmatpush1.msra.mxu0 0.0
    %5571 = vmatprep.subr.mxu0 0.0
    %5572 = vmatpush1.msra.mxu0 0.0
    %5573 = vmatprep.subr.mxu0 0.0
    %5574 = vmatpush1.msra.mxu0 0.0
    %5575 = vmatprep.subr.mxu0 0.0
    %5576 = vmatpush1.msra.mxu0 0.0
    %5577 = vmatprep.subr.mxu0 0.0
    %5578 = vmatpush1.msra.mxu0 0.0
    %5579 = vmatprep.subr.mxu0 0.0
    %5580 = vmatpush1.msra.mxu0 0.0
    %5581 = vmatprep.subr.mxu0 0.0
    %5582 = vmatpush1.msra.mxu0 0.0
    %5583 = vmatprep.subr.mxu0 0.0
    %5584 = vmatpush1.msra.mxu0 0.0
    %5585 = vmatprep.subr.mxu0 0.0
    %5586 = vmatpush1.msra.mxu0 0.0
    %5587 = vmatprep.subr.mxu0 0.0
    %5588 = vmatpush1.msra.mxu0 0.0
    %5589 = vmatprep.subr.mxu0 0.0
    %5590 = vmatpush1.msra.mxu0 0.0
    %5591 = vmatprep.subr.mxu0 0.0
    %5592 = vmatpush1.msra.mxu0 0.0
    %5593 = vmatprep.subr.mxu0 0.0
    %5594 = vmatpush1.msra.mxu0 0.0
    %5595 = vmatprep.subr.mxu0 0.0
    %5596 = vmatpush1.msra.mxu0 0.0
    %5597 = vmatprep.mubr.f32.mxu0 0.0
    %5598 = vmatmul.mubr.f32.gmra.mrb[0].mxu0 %v5528
    %v5599 = vpop.f32.mrb[0].mxu0
    %v5600 = vadd.f32 0.0, %v5599
    %v5601 = vpop.f32.mrb[0].mxu0
    %5602 = vmatprep.mubr.f32.mxu0 0.0
    %5603 = vmatmul.mubr.f32.gmra.mrb[0].mxu0 %v5531
    %v5604 = vpop.f32.mrb[0].mxu0
    %v5605 = vadd.f32 0.0, %v5604
    %v5606 = vpop.f32.mrb[0].mxu0
    %5607 = vdwg.mxu0
    %v5609 = vsel %vm904, %v4327, 0
    %v5612 = vsel %vm904, %v4332, 0
    %5614 = vmatprep.subr.mxu0 0.0
    %5615 = vmatpush1.msra.mxu0 %v204
    %5616 = vmatprep.subr.mxu0 0.0
    %5617 = vmatpush1.msra.mxu0 %v205
    %5618 = vmatprep.subr.mxu0 0.0
    %5619 = vmatpush1.msra.mxu0 0.0
    %5620 = vmatprep.subr.mxu0 0.0
    %5621 = vmatpush1.msra.mxu0 0.0
    %5622 = vmatprep.subr.mxu0 0.0
    %5623 = vmatpush1.msra.mxu0 0.0
    %5624 = vmatprep.subr.mxu0 0.0
    %5625 = vmatpush1.msra.mxu0 0.0
    %5626 = vmatprep.subr.mxu0 0.0
    %5627 = vmatpush1.msra.mxu0 0.0
    %5628 = vmatprep.subr.mxu0 0.0
    %5629 = vmatpush1.msra.mxu0 0.0
    %5630 = vmatprep.subr.mxu0 0.0
    %5631 = vmatpush1.msra.mxu0 0.0
    %5632 = vmatprep.subr.mxu0 0.0
    %5633 = vmatpush1.msra.mxu0 0.0
    %5634 = vmatprep.subr.mxu0 0.0
    %5635 = vmatpush1.msra.mxu0 0.0
    %5636 = vmatprep.subr.mxu0 0.0
    %5637 = vmatpush1.msra.mxu0 0.0
    %5638 = vmatprep.subr.mxu0 0.0
    %5639 = vmatpush1.msra.mxu0 0.0
    %5640 = vmatprep.subr.mxu0 0.0
    %5641 = vmatpush1.msra.mxu0 0.0
    %5642 = vmatprep.subr.mxu0 0.0
    %5643 = vmatpush1.msra.mxu0 0.0
    %5644 = vmatprep.subr.mxu0 0.0
    %5645 = vmatpush1.msra.mxu0 0.0
    %5646 = vmatprep.subr.mxu0 0.0
    %5647 = vmatpush1.msra.mxu0 0.0
    %5648 = vmatprep.subr.mxu0 0.0
    %5649 = vmatpush1.msra.mxu0 0.0
    %5650 = vmatprep.subr.mxu0 0.0
    %5651 = vmatpush1.msra.mxu0 0.0
    %5652 = vmatprep.subr.mxu0 0.0
    %5653 = vmatpush1.msra.mxu0 0.0
    %5654 = vmatprep.subr.mxu0 0.0
    %5655 = vmatpush1.msra.mxu0 0.0
    %5656 = vmatprep.subr.mxu0 0.0
    %5657 = vmatpush1.msra.mxu0 0.0
    %5658 = vmatprep.subr.mxu0 0.0
    %5659 = vmatpush1.msra.mxu0 0.0
    %5660 = vmatprep.subr.mxu0 0.0
    %5661 = vmatpush1.msra.mxu0 0.0
    %5662 = vmatprep.subr.mxu0 0.0
    %5663 = vmatpush1.msra.mxu0 0.0
    %5664 = vmatprep.subr.mxu0 0.0
    %5665 = vmatpush1.msra.mxu0 0.0
    %5666 = vmatprep.subr.mxu0 0.0
    %5667 = vmatpush1.msra.mxu0 0.0
    %5668 = vmatprep.subr.mxu0 0.0
    %5669 = vmatpush1.msra.mxu0 0.0
    %5670 = vmatprep.subr.mxu0 0.0
    %5671 = vmatpush1.msra.mxu0 0.0
    %5672 = vmatprep.subr.mxu0 0.0
    %5673 = vmatpush1.msra.mxu0 0.0
    %5674 = vmatprep.subr.mxu0 0.0
    %5675 = vmatpush1.msra.mxu0 0.0
    %5676 = vmatprep.subr.mxu0 0.0
    %5677 = vmatpush1.msra.mxu0 0.0
    %5678 = vmatprep.mubr.f32.mxu0 0.0
    %5679 = vmatmul.mubr.f32.gmra.mrb[0].mxu0 %v5609
    %v5680 = vpop.f32.mrb[0].mxu0
    %v5681 = vadd.f32 0.0, %v5680
    %v5682 = vpop.f32.mrb[0].mxu0
    %5683 = vmatprep.mubr.f32.mxu0 0.0
    %5684 = vmatmul.mubr.f32.gmra.mrb[0].mxu0 %v5612
    %v5685 = vpop.f32.mrb[0].mxu0
    %v5686 = vadd.f32 0.0, %v5685
    %v5687 = vpop.f32.mrb[0].mxu0
    %5688 = vdwg.mxu0
    %v5690 = vsel %vm904, %v4337, 0
    %v5693 = vsel %vm904, %v4342, 0
    %5695 = vmatprep.subr.mxu0 0.0
    %5696 = vmatpush1.msra.mxu0 %v206
    %5697 = vmatprep.subr.mxu0 0.0
    %5698 = vmatpush1.msra.mxu0 %v207
    %5699 = vmatprep.subr.mxu0 0.0
    %5700 = vmatpush1.msra.mxu0 0.0
    %5701 = vmatprep.subr.mxu0 0.0
    %5702 = vmatpush1.msra.mxu0 0.0
    %5703 = vmatprep.subr.mxu0 0.0
    %5704 = vmatpush1.msra.mxu0 0.0
    %5705 = vmatprep.subr.mxu0 0.0
    %5706 = vmatpush1.msra.mxu0 0.0
    %5707 = vmatprep.subr.mxu0 0.0
    %5708 = vmatpush1.msra.mxu0 0.0
    %5709 = vmatprep.subr.mxu0 0.0
    %5710 = vmatpush1.msra.mxu0 0.0
    %5711 = vmatprep.subr.mxu0 0.0
    %5712 = vmatpush1.msra.mxu0 0.0
    %5713 = vmatprep.subr.mxu0 0.0
    %5714 = vmatpush1.msra.mxu0 0.0
    %5715 = vmatprep.subr.mxu0 0.0
    %5716 = vmatpush1.msra.mxu0 0.0
    %5717 = vmatprep.subr.mxu0 0.0
    %5718 = vmatpush1.msra.mxu0 0.0
    %5719 = vmatprep.subr.mxu0 0.0
    %5720 = vmatpush1.msra.mxu0 0.0
    %5721 = vmatprep.subr.mxu0 0.0
    %5722 = vmatpush1.msra.mxu0 0.0
    %5723 = vmatprep.subr.mxu0 0.0
    %5724 = vmatpush1.msra.mxu0 0.0
    %5725 = vmatprep.subr.mxu0 0.0
    %5726 = vmatpush1.msra.mxu0 0.0
    %5727 = vmatprep.subr.mxu0 0.0
    %5728 = vmatpush1.msra.mxu0 0.0
    %5729 = vmatprep.subr.mxu0 0.0
    %5730 = vmatpush1.msra.mxu0 0.0
    %5731 = vmatprep.subr.mxu0 0.0
    %5732 = vmatpush1.msra.mxu0 0.0
    %5733 = vmatprep.subr.mxu0 0.0
    %5734 = vmatpush1.msra.mxu0 0.0
    %5735 = vmatprep.subr.mxu0 0.0
    %5736 = vmatpush1.msra.mxu0 0.0
    %5737 = vmatprep.subr.mxu0 0.0
    %5738 = vmatpush1.msra.mxu0 0.0
    %5739 = vmatprep.subr.mxu0 0.0
    %5740 = vmatpush1.msra.mxu0 0.0
    %5741 = vmatprep.subr.mxu0 0.0
    %5742 = vmatpush1.msra.mxu0 0.0
    %5743 = vmatprep.subr.mxu0 0.0
    %5744 = vmatpush1.msra.mxu0 0.0
    %5745 = vmatprep.subr.mxu0 0.0
    %5746 = vmatpush1.msra.mxu0 0.0
    %5747 = vmatprep.subr.mxu0 0.0
    %5748 = vmatpush1.msra.mxu0 0.0
    %5749 = vmatprep.subr.mxu0 0.0
    %5750 = vmatpush1.msra.mxu0 0.0
    %5751 = vmatprep.subr.mxu0 0.0
    %5752 = vmatpush1.msra.mxu0 0.0
    %5753 = vmatprep.subr.mxu0 0.0
    %5754 = vmatpush1.msra.mxu0 0.0
    %5755 = vmatprep.subr.mxu0 0.0
    %5756 = vmatpush1.msra.mxu0 0.0
    %5757 = vmatprep.subr.mxu0 0.0
    %5758 = vmatpush1.msra.mxu0 0.0
    %5759 = vmatprep.mubr.f32.mxu0 0.0
    %5760 = vmatmul.mubr.f32.gmra.mrb[0].mxu0 %v5690
    %v5761 = vpop.f32.mrb[0].mxu0
    %v5762 = vadd.f32 0.0, %v5761
    %v5763 = vpop.f32.mrb[0].mxu0
    %5764 = vmatprep.mubr.f32.mxu0 0.0
    %5765 = vmatmul.mubr.f32.gmra.mrb[0].mxu0 %v5693
    %v5766 = vpop.f32.mrb[0].mxu0
    %v5767 = vadd.f32 0.0, %v5766
    %v5768 = vpop.f32.mrb[0].mxu0
    %5769 = vdwg.mxu0
    %v5771 = vsel %vm904, %v4347, 0
    %v5774 = vsel %vm904, %v4352, 0
    %5776 = vmatprep.subr.mxu0 0.0
    %5777 = vmatpush1.msra.mxu0 %v208
    %5778 = vmatprep.subr.mxu0 0.0
    %5779 = vmatpush1.msra.mxu0 %v209
    %5780 = vmatprep.subr.mxu0 0.0
    %5781 = vmatpush1.msra.mxu0 0.0
    %5782 = vmatprep.subr.mxu0 0.0
    %5783 = vmatpush1.msra.mxu0 0.0
    %5784 = vmatprep.subr.mxu0 0.0
    %5785 = vmatpush1.msra.mxu0 0.0
    %5786 = vmatprep.subr.mxu0 0.0
    %5787 = vmatpush1.msra.mxu0 0.0
    %5788 = vmatprep.subr.mxu0 0.0
    %5789 = vmatpush1.msra.mxu0 0.0
    %5790 = vmatprep.subr.mxu0 0.0
    %5791 = vmatpush1.msra.mxu0 0.0
    %5792 = vmatprep.subr.mxu0 0.0
    %5793 = vmatpush1.msra.mxu0 0.0
    %5794 = vmatprep.subr.mxu0 0.0
    %5795 = vmatpush1.msra.mxu0 0.0
    %5796 = vmatprep.subr.mxu0 0.0
    %5797 = vmatpush1.msra.mxu0 0.0
    %5798 = vmatprep.subr.mxu0 0.0
    %5799 = vmatpush1.msra.mxu0 0.0
    %5800 = vmatprep.subr.mxu0 0.0
    %5801 = vmatpush1.msra.mxu0 0.0
    %5802 = vmatprep.subr.mxu0 0.0
    %5803 = vmatpush1.msra.mxu0 0.0
    %5804 = vmatprep.subr.mxu0 0.0
    %5805 = vmatpush1.msra.mxu0 0.0
    %5806 = vmatprep.subr.mxu0 0.0
    %5807 = vmatpush1.msra.mxu0 0.0
    %5808 = vmatprep.subr.mxu0 0.0
    %5809 = vmatpush1.msra.mxu0 0.0
    %5810 = vmatprep.subr.mxu0 0.0
    %5811 = vmatpush1.msra.mxu0 0.0
    %5812 = vmatprep.subr.mxu0 0.0
    %5813 = vmatpush1.msra.mxu0 0.0
    %5814 = vmatprep.subr.mxu0 0.0
    %5815 = vmatpush1.msra.mxu0 0.0
    %5816 = vmatprep.subr.mxu0 0.0
    %5817 = vmatpush1.msra.mxu0 0.0
    %5818 = vmatprep.subr.mxu0 0.0
    %5819 = vmatpush1.msra.mxu0 0.0
    %5820 = vmatprep.subr.mxu0 0.0
    %5821 = vmatpush1.msra.mxu0 0.0
    %5822 = vmatprep.subr.mxu0 0.0
    %5823 = vmatpush1.msra.mxu0 0.0
    %5824 = vmatprep.subr.mxu0 0.0
    %5825 = vmatpush1.msra.mxu0 0.0
    %5826 = vmatprep.subr.mxu0 0.0
    %5827 = vmatpush1.msra.mxu0 0.0
    %5828 = vmatprep.subr.mxu0 0.0
    %5829 = vmatpush1.msra.mxu0 0.0
    %5830 = vmatprep.subr.mxu0 0.0
    %5831 = vmatpush1.msra.mxu0 0.0
    %5832 = vmatprep.subr.mxu0 0.0
    %5833 = vmatpush1.msra.mxu0 0.0
    %5834 = vmatprep.subr.mxu0 0.0
    %5835 = vmatpush1.msra.mxu0 0.0
    %5836 = vmatprep.subr.mxu0 0.0
    %5837 = vmatpush1.msra.mxu0 0.0
    %5838 = vmatprep.subr.mxu0 0.0
    %5839 = vmatpush1.msra.mxu0 0.0
    %5840 = vmatprep.mubr.f32.mxu0 0.0
    %5841 = vmatmul.mubr.f32.gmra.mrb[0].mxu0 %v5771
    %v5842 = vpop.f32.mrb[0].mxu0
    %v5843 = vadd.f32 0.0, %v5842
    %v5844 = vpop.f32.mrb[0].mxu0
    %5845 = vmatprep.mubr.f32.mxu0 0.0
    %5846 = vmatmul.mubr.f32.gmra.mrb[0].mxu0 %v5774
    %v5847 = vpop.f32.mrb[0].mxu0
    %v5848 = vadd.f32 0.0, %v5847
    %v5849 = vpop.f32.mrb[0].mxu0
    %5850 = vdwg.mxu0
    %v5852 = vsel %vm904, %v4357, 0
    %v5855 = vsel %vm904, %v4362, 0
    %5857 = vmatprep.subr.mxu0 0.0
    %5858 = vmatpush1.msra.mxu0 %v210
    %5859 = vmatprep.subr.mxu0 0.0
    %5860 = vmatpush1.msra.mxu0 %v211
    %5861 = vmatprep.subr.mxu0 0.0
    %5862 = vmatpush1.msra.mxu0 0.0
    %5863 = vmatprep.subr.mxu0 0.0
    %5864 = vmatpush1.msra.mxu0 0.0
    %5865 = vmatprep.subr.mxu0 0.0
    %5866 = vmatpush1.msra.mxu0 0.0
    %5867 = vmatprep.subr.mxu0 0.0
    %5868 = vmatpush1.msra.mxu0 0.0
    %5869 = vmatprep.subr.mxu0 0.0
    %5870 = vmatpush1.msra.mxu0 0.0
    %5871 = vmatprep.subr.mxu0 0.0
    %5872 = vmatpush1.msra.mxu0 0.0
    %5873 = vmatprep.subr.mxu0 0.0
    %5874 = vmatpush1.msra.mxu0 0.0
    %5875 = vmatprep.subr.mxu0 0.0
    %5876 = vmatpush1.msra.mxu0 0.0
    %5877 = vmatprep.subr.mxu0 0.0
    %5878 = vmatpush1.msra.mxu0 0.0
    %5879 = vmatprep.subr.mxu0 0.0
    %5880 = vmatpush1.msra.mxu0 0.0
    %5881 = vmatprep.subr.mxu0 0.0
    %5882 = vmatpush1.msra.mxu0 0.0
    %5883 = vmatprep.subr.mxu0 0.0
    %5884 = vmatpush1.msra.mxu0 0.0
    %5885 = vmatprep.subr.mxu0 0.0
    %5886 = vmatpush1.msra.mxu0 0.0
    %5887 = vmatprep.subr.mxu0 0.0
    %5888 = vmatpush1.msra.mxu0 0.0
    %5889 = vmatprep.subr.mxu0 0.0
    %5890 = vmatpush1.msra.mxu0 0.0
    %5891 = vmatprep.subr.mxu0 0.0
    %5892 = vmatpush1.msra.mxu0 0.0
    %5893 = vmatprep.subr.mxu0 0.0
    %5894 = vmatpush1.msra.mxu0 0.0
    %5895 = vmatprep.subr.mxu0 0.0
    %5896 = vmatpush1.msra.mxu0 0.0
    %5897 = vmatprep.subr.mxu0 0.0
    %5898 = vmatpush1.msra.mxu0 0.0
    %5899 = vmatprep.subr.mxu0 0.0
    %5900 = vmatpush1.msra.mxu0 0.0
    %5901 = vmatprep.subr.mxu0 0.0
    %5902 = vmatpush1.msra.mxu0 0.0
    %5903 = vmatprep.subr.mxu0 0.0
    %5904 = vmatpush1.msra.mxu0 0.0
    %5905 = vmatprep.subr.mxu0 0.0
    %5906 = vmatpush1.msra.mxu0 0.0
    %5907 = vmatprep.subr.mxu0 0.0
    %5908 = vmatpush1.msra.mxu0 0.0
    %5909 = vmatprep.subr.mxu0 0.0
    %5910 = vmatpush1.msra.mxu0 0.0
    %5911 = vmatprep.subr.mxu0 0.0
    %5912 = vmatpush1.msra.mxu0 0.0
    %5913 = vmatprep.subr.mxu0 0.0
    %5914 = vmatpush1.msra.mxu0 0.0
    %5915 = vmatprep.subr.mxu0 0.0
    %5916 = vmatpush1.msra.mxu0 0.0
    %5917 = vmatprep.subr.mxu0 0.0
    %5918 = vmatpush1.msra.mxu0 0.0
    %5919 = vmatprep.subr.mxu0 0.0
    %5920 = vmatpush1.msra.mxu0 0.0
    %5921 = vmatprep.mubr.f32.mxu0 0.0
    %5922 = vmatmul.mubr.f32.gmra.mrb[0].mxu0 %v5852
    %v5923 = vpop.f32.mrb[0].mxu0
    %v5924 = vadd.f32 0.0, %v5923
    %v5925 = vpop.f32.mrb[0].mxu0
    %5926 = vmatprep.mubr.f32.mxu0 0.0
    %5927 = vmatmul.mubr.f32.gmra.mrb[0].mxu0 %v5855
    %v5928 = vpop.f32.mrb[0].mxu0
    %v5929 = vadd.f32 0.0, %v5928
    %v5930 = vpop.f32.mrb[0].mxu0
    %5931 = vdwg.mxu0
    %v5933 = vsel %vm904, %v4367, 0
    %v5936 = vsel %vm904, %v4372, 0
    %5938 = vmatprep.subr.mxu0 0.0
    %5939 = vmatpush1.msra.mxu0 %v212
    %5940 = vmatprep.subr.mxu0 0.0
    %5941 = vmatpush1.msra.mxu0 %v213
    %5942 = vmatprep.subr.mxu0 0.0
    %5943 = vmatpush1.msra.mxu0 0.0
    %5944 = vmatprep.subr.mxu0 0.0
    %5945 = vmatpush1.msra.mxu0 0.0
    %5946 = vmatprep.subr.mxu0 0.0
    %5947 = vmatpush1.msra.mxu0 0.0
    %5948 = vmatprep.subr.mxu0 0.0
    %5949 = vmatpush1.msra.mxu0 0.0
    %5950 = vmatprep.subr.mxu0 0.0
    %5951 = vmatpush1.msra.mxu0 0.0
    %5952 = vmatprep.subr.mxu0 0.0
    %5953 = vmatpush1.msra.mxu0 0.0
    %5954 = vmatprep.subr.mxu0 0.0
    %5955 = vmatpush1.msra.mxu0 0.0
    %5956 = vmatprep.subr.mxu0 0.0
    %5957 = vmatpush1.msra.mxu0 0.0
    %5958 = vmatprep.subr.mxu0 0.0
    %5959 = vmatpush1.msra.mxu0 0.0
    %5960 = vmatprep.subr.mxu0 0.0
    %5961 = vmatpush1.msra.mxu0 0.0
    %5962 = vmatprep.subr.mxu0 0.0
    %5963 = vmatpush1.msra.mxu0 0.0
    %5964 = vmatprep.subr.mxu0 0.0
    %5965 = vmatpush1.msra.mxu0 0.0
    %5966 = vmatprep.subr.mxu0 0.0
    %5967 = vmatpush1.msra.mxu0 0.0
    %5968 = vmatprep.subr.mxu0 0.0
    %5969 = vmatpush1.msra.mxu0 0.0
    %5970 = vmatprep.subr.mxu0 0.0
    %5971 = vmatpush1.msra.mxu0 0.0
    %5972 = vmatprep.subr.mxu0 0.0
    %5973 = vmatpush1.msra.mxu0 0.0
    %5974 = vmatprep.subr.mxu0 0.0
    %5975 = vmatpush1.msra.mxu0 0.0
    %5976 = vmatprep.subr.mxu0 0.0
    %5977 = vmatpush1.msra.mxu0 0.0
    %5978 = vmatprep.subr.mxu0 0.0
    %5979 = vmatpush1.msra.mxu0 0.0
    %5980 = vmatprep.subr.mxu0 0.0
    %5981 = vmatpush1.msra.mxu0 0.0
    %5982 = vmatprep.subr.mxu0 0.0
    %5983 = vmatpush1.msra.mxu0 0.0
    %5984 = vmatprep.subr.mxu0 0.0
    %5985 = vmatpush1.msra.mxu0 0.0
    %5986 = vmatprep.subr.mxu0 0.0
    %5987 = vmatpush1.msra.mxu0 0.0
    %5988 = vmatprep.subr.mxu0 0.0
    %5989 = vmatpush1.msra.mxu0 0.0
    %5990 = vmatprep.subr.mxu0 0.0
    %5991 = vmatpush1.msra.mxu0 0.0
    %5992 = vmatprep.subr.mxu0 0.0
    %5993 = vmatpush1.msra.mxu0 0.0
    %5994 = vmatprep.subr.mxu0 0.0
    %5995 = vmatpush1.msra.mxu0 0.0
    %5996 = vmatprep.subr.mxu0 0.0
    %5997 = vmatpush1.msra.mxu0 0.0
    %5998 = vmatprep.subr.mxu0 0.0
    %5999 = vmatpush1.msra.mxu0 0.0
    %6000 = vmatprep.subr.mxu0 0.0
    %6001 = vmatpush1.msra.mxu0 0.0
    %6002 = vmatprep.mubr.f32.mxu0 0.0
    %6003 = vmatmul.mubr.f32.gmra.mrb[0].mxu0 %v5933
    %v6004 = vpop.f32.mrb[0].mxu0
    %v6005 = vadd.f32 0.0, %v6004
    %v6006 = vpop.f32.mrb[0].mxu0
    %6007 = vmatprep.mubr.f32.mxu0 0.0
    %6008 = vmatmul.mubr.f32.gmra.mrb[0].mxu0 %v5936
    %v6009 = vpop.f32.mrb[0].mxu0
    %v6010 = vadd.f32 0.0, %v6009
    %v6011 = vpop.f32.mrb[0].mxu0
    %6012 = vdwg.mxu0
    %v6014 = vsel %vm904, %v4377, 0
    %v6017 = vsel %vm904, %v4382, 0
    %6019 = vmatprep.subr.mxu0 0.0
    %6020 = vmatpush1.msra.mxu0 %v214
    %6021 = vmatprep.subr.mxu0 0.0
    %6022 = vmatpush1.msra.mxu0 %v215
    %6023 = vmatprep.subr.mxu0 0.0
    %6024 = vmatpush1.msra.mxu0 0.0
    %6025 = vmatprep.subr.mxu0 0.0
    %6026 = vmatpush1.msra.mxu0 0.0
    %6027 = vmatprep.subr.mxu0 0.0
    %6028 = vmatpush1.msra.mxu0 0.0
    %6029 = vmatprep.subr.mxu0 0.0
    %6030 = vmatpush1.msra.mxu0 0.0
    %6031 = vmatprep.subr.mxu0 0.0
    %6032 = vmatpush1.msra.mxu0 0.0
    %6033 = vmatprep.subr.mxu0 0.0
    %6034 = vmatpush1.msra.mxu0 0.0
    %6035 = vmatprep.subr.mxu0 0.0
    %6036 = vmatpush1.msra.mxu0 0.0
    %6037 = vmatprep.subr.mxu0 0.0
    %6038 = vmatpush1.msra.mxu0 0.0
    %6039 = vmatprep.subr.mxu0 0.0
    %6040 = vmatpush1.msra.mxu0 0.0
    %6041 = vmatprep.subr.mxu0 0.0
    %6042 = vmatpush1.msra.mxu0 0.0
    %6043 = vmatprep.subr.mxu0 0.0
    %6044 = vmatpush1.msra.mxu0 0.0
    %6045 = vmatprep.subr.mxu0 0.0
    %6046 = vmatpush1.msra.mxu0 0.0
    %6047 = vmatprep.subr.mxu0 0.0
    %6048 = vmatpush1.msra.mxu0 0.0
    %6049 = vmatprep.subr.mxu0 0.0
    %6050 = vmatpush1.msra.mxu0 0.0
    %6051 = vmatprep.subr.mxu0 0.0
    %6052 = vmatpush1.msra.mxu0 0.0
    %6053 = vmatprep.subr.mxu0 0.0
    %6054 = vmatpush1.msra.mxu0 0.0
    %6055 = vmatprep.subr.mxu0 0.0
    %6056 = vmatpush1.msra.mxu0 0.0
    %6057 = vmatprep.subr.mxu0 0.0
    %6058 = vmatpush1.msra.mxu0 0.0
    %6059 = vmatprep.subr.mxu0 0.0
    %6060 = vmatpush1.msra.mxu0 0.0
    %6061 = vmatprep.subr.mxu0 0.0
    %6062 = vmatpush1.msra.mxu0 0.0
    %6063 = vmatprep.subr.mxu0 0.0
    %6064 = vmatpush1.msra.mxu0 0.0
    %6065 = vmatprep.subr.mxu0 0.0
    %6066 = vmatpush1.msra.mxu0 0.0
    %6067 = vmatprep.subr.mxu0 0.0
    %6068 = vmatpush1.msra.mxu0 0.0
    %6069 = vmatprep.subr.mxu0 0.0
    %6070 = vmatpush1.msra.mxu0 0.0
    %6071 = vmatprep.subr.mxu0 0.0
    %6072 = vmatpush1.msra.mxu0 0.0
    %6073 = vmatprep.subr.mxu0 0.0
    %6074 = vmatpush1.msra.mxu0 0.0
    %6075 = vmatprep.subr.mxu0 0.0
    %6076 = vmatpush1.msra.mxu0 0.0
    %6077 = vmatprep.subr.mxu0 0.0
    %6078 = vmatpush1.msra.mxu0 0.0
    %6079 = vmatprep.subr.mxu0 0.0
    %6080 = vmatpush1.msra.mxu0 0.0
    %6081 = vmatprep.subr.mxu0 0.0
    %6082 = vmatpush1.msra.mxu0 0.0
    %6083 = vmatprep.mubr.f32.mxu0 0.0
    %6084 = vmatmul.mubr.f32.gmra.mrb[0].mxu0 %v6014
    %v6085 = vpop.f32.mrb[0].mxu0
    %v6086 = vadd.f32 0.0, %v6085
    %v6087 = vpop.f32.mrb[0].mxu0
    %6088 = vmatprep.mubr.f32.mxu0 0.0
    %6089 = vmatmul.mubr.f32.gmra.mrb[0].mxu0 %v6017
    %v6090 = vpop.f32.mrb[0].mxu0
    %v6091 = vadd.f32 0.0, %v6090
    %v6092 = vpop.f32.mrb[0].mxu0
    %6093 = vdwg.mxu0
    %v6095 = vsel %vm904, %v4387, 0
    %v6098 = vsel %vm904, %v4392, 0
    %6100 = vmatprep.subr.mxu0 0.0
    %6101 = vmatpush1.msra.mxu0 %v216
    %6102 = vmatprep.subr.mxu0 0.0
    %6103 = vmatpush1.msra.mxu0 %v217
    %6104 = vmatprep.subr.mxu0 0.0
    %6105 = vmatpush1.msra.mxu0 0.0
    %6106 = vmatprep.subr.mxu0 0.0
    %6107 = vmatpush1.msra.mxu0 0.0
    %6108 = vmatprep.subr.mxu0 0.0
    %6109 = vmatpush1.msra.mxu0 0.0
    %6110 = vmatprep.subr.mxu0 0.0
    %6111 = vmatpush1.msra.mxu0 0.0
    %6112 = vmatprep.subr.mxu0 0.0
    %6113 = vmatpush1.msra.mxu0 0.0
    %6114 = vmatprep.subr.mxu0 0.0
    %6115 = vmatpush1.msra.mxu0 0.0
    %6116 = vmatprep.subr.mxu0 0.0
    %6117 = vmatpush1.msra.mxu0 0.0
    %6118 = vmatprep.subr.mxu0 0.0
    %6119 = vmatpush1.msra.mxu0 0.0
    %6120 = vmatprep.subr.mxu0 0.0
    %6121 = vmatpush1.msra.mxu0 0.0
    %6122 = vmatprep.subr.mxu0 0.0
    %6123 = vmatpush1.msra.mxu0 0.0
    %6124 = vmatprep.subr.mxu0 0.0
    %6125 = vmatpush1.msra.mxu0 0.0
    %6126 = vmatprep.subr.mxu0 0.0
    %6127 = vmatpush1.msra.mxu0 0.0
    %6128 = vmatprep.subr.mxu0 0.0
    %6129 = vmatpush1.msra.mxu0 0.0
    %6130 = vmatprep.subr.mxu0 0.0
    %6131 = vmatpush1.msra.mxu0 0.0
    %6132 = vmatprep.subr.mxu0 0.0
    %6133 = vmatpush1.msra.mxu0 0.0
    %6134 = vmatprep.subr.mxu0 0.0
    %6135 = vmatpush1.msra.mxu0 0.0
    %6136 = vmatprep.subr.mxu0 0.0
    %6137 = vmatpush1.msra.mxu0 0.0
    %6138 = vmatprep.subr.mxu0 0.0
    %6139 = vmatpush1.msra.mxu0 0.0
    %6140 = vmatprep.subr.mxu0 0.0
    %6141 = vmatpush1.msra.mxu0 0.0
    %6142 = vmatprep.subr.mxu0 0.0
    %6143 = vmatpush1.msra.mxu0 0.0
    %6144 = vmatprep.subr.mxu0 0.0
    %6145 = vmatpush1.msra.mxu0 0.0
    %6146 = vmatprep.subr.mxu0 0.0
    %6147 = vmatpush1.msra.mxu0 0.0
    %6148 = vmatprep.subr.mxu0 0.0
    %6149 = vmatpush1.msra.mxu0 0.0
    %6150 = vmatprep.subr.mxu0 0.0
    %6151 = vmatpush1.msra.mxu0 0.0
    %6152 = vmatprep.subr.mxu0 0.0
    %6153 = vmatpush1.msra.mxu0 0.0
    %6154 = vmatprep.subr.mxu0 0.0
    %6155 = vmatpush1.msra.mxu0 0.0
    %6156 = vmatprep.subr.mxu0 0.0
    %6157 = vmatpush1.msra.mxu0 0.0
    %6158 = vmatprep.subr.mxu0 0.0
    %6159 = vmatpush1.msra.mxu0 0.0
    %6160 = vmatprep.subr.mxu0 0.0
    %6161 = vmatpush1.msra.mxu0 0.0
    %6162 = vmatprep.subr.mxu0 0.0
    %6163 = vmatpush1.msra.mxu0 0.0
    %6164 = vmatprep.mubr.f32.mxu0 0.0
    %6165 = vmatmul.mubr.f32.gmra.mrb[0].mxu0 %v6095
    %v6166 = vpop.f32.mrb[0].mxu0
    %v6167 = vadd.f32 0.0, %v6166
    %v6168 = vpop.f32.mrb[0].mxu0
    %6169 = vmatprep.mubr.f32.mxu0 0.0
    %6170 = vmatmul.mubr.f32.gmra.mrb[0].mxu0 %v6098
    %v6171 = vpop.f32.mrb[0].mxu0
    %v6172 = vadd.f32 0.0, %v6171
    %v6173 = vpop.f32.mrb[0].mxu0
    %6174 = vdwg.mxu0
    %v6176 = vsel %vm904, %v4397, 0
    %v6179 = vsel %vm904, %v4402, 0
    %6181 = vmatprep.subr.mxu0 0.0
    %6182 = vmatpush1.msra.mxu0 %v218
    %6183 = vmatprep.subr.mxu0 0.0
    %6184 = vmatpush1.msra.mxu0 %v219
    %6185 = vmatprep.subr.mxu0 0.0
    %6186 = vmatpush1.msra.mxu0 0.0
    %6187 = vmatprep.subr.mxu0 0.0
    %6188 = vmatpush1.msra.mxu0 0.0
    %6189 = vmatprep.subr.mxu0 0.0
    %6190 = vmatpush1.msra.mxu0 0.0
    %6191 = vmatprep.subr.mxu0 0.0
    %6192 = vmatpush1.msra.mxu0 0.0
    %6193 = vmatprep.subr.mxu0 0.0
    %6194 = vmatpush1.msra.mxu0 0.0
    %6195 = vmatprep.subr.mxu0 0.0
    %6196 = vmatpush1.msra.mxu0 0.0
    %6197 = vmatprep.subr.mxu0 0.0
    %6198 = vmatpush1.msra.mxu0 0.0
    %6199 = vmatprep.subr.mxu0 0.0
    %6200 = vmatpush1.msra.mxu0 0.0
    %6201 = vmatprep.subr.mxu0 0.0
    %6202 = vmatpush1.msra.mxu0 0.0
    %6203 = vmatprep.subr.mxu0 0.0
    %6204 = vmatpush1.msra.mxu0 0.0
    %6205 = vmatprep.subr.mxu0 0.0
    %6206 = vmatpush1.msra.mxu0 0.0
    %6207 = vmatprep.subr.mxu0 0.0
    %6208 = vmatpush1.msra.mxu0 0.0
    %6209 = vmatprep.subr.mxu0 0.0
    %6210 = vmatpush1.msra.mxu0 0.0
    %6211 = vmatprep.subr.mxu0 0.0
    %6212 = vmatpush1.msra.mxu0 0.0
    %6213 = vmatprep.subr.mxu0 0.0
    %6214 = vmatpush1.msra.mxu0 0.0
    %6215 = vmatprep.subr.mxu0 0.0
    %6216 = vmatpush1.msra.mxu0 0.0
    %6217 = vmatprep.subr.mxu0 0.0
    %6218 = vmatpush1.msra.mxu0 0.0
    %6219 = vmatprep.subr.mxu0 0.0
    %6220 = vmatpush1.msra.mxu0 0.0
    %6221 = vmatprep.subr.mxu0 0.0
    %6222 = vmatpush1.msra.mxu0 0.0
    %6223 = vmatprep.subr.mxu0 0.0
    %6224 = vmatpush1.msra.mxu0 0.0
    %6225 = vmatprep.subr.mxu0 0.0
    %6226 = vmatpush1.msra.mxu0 0.0
    %6227 = vmatprep.subr.mxu0 0.0
    %6228 = vmatpush1.msra.mxu0 0.0
    %6229 = vmatprep.subr.mxu0 0.0
    %6230 = vmatpush1.msra.mxu0 0.0
    %6231 = vmatprep.subr.mxu0 0.0
    %6232 = vmatpush1.msra.mxu0 0.0
    %6233 = vmatprep.subr.mxu0 0.0
    %6234 = vmatpush1.msra.mxu0 0.0
    %6235 = vmatprep.subr.mxu0 0.0
    %6236 = vmatpush1.msra.mxu0 0.0
    %6237 = vmatprep.subr.mxu0 0.0
    %6238 = vmatpush1.msra.mxu0 0.0
    %6239 = vmatprep.subr.mxu0 0.0
    %6240 = vmatpush1.msra.mxu0 0.0
    %6241 = vmatprep.subr.mxu0 0.0
    %6242 = vmatpush1.msra.mxu0 0.0
    %6243 = vmatprep.subr.mxu0 0.0
    %6244 = vmatpush1.msra.mxu0 0.0
    %6245 = vmatprep.mubr.f32.mxu0 0.0
    %6246 = vmatmul.mubr.f32.gmra.mrb[0].mxu0 %v6176
    %v6247 = vpop.f32.mrb[0].mxu0
    %v6248 = vadd.f32 0.0, %v6247
    %v6249 = vpop.f32.mrb[0].mxu0
    %6250 = vmatprep.mubr.f32.mxu0 0.0
    %6251 = vmatmul.mubr.f32.gmra.mrb[0].mxu0 %v6179
    %v6252 = vpop.f32.mrb[0].mxu0
    %v6253 = vadd.f32 0.0, %v6252
    %v6254 = vpop.f32.mrb[0].mxu0
    %6255 = vdwg.mxu0
    %v6257 = vsel %vm904, %v4407, 0
    %v6260 = vsel %vm904, %v4412, 0
    %6262 = vmatprep.subr.mxu0 0.0
    %6263 = vmatpush1.msra.mxu0 %v220
    %6264 = vmatprep.subr.mxu0 0.0
    %6265 = vmatpush1.msra.mxu0 %v221
    %6266 = vmatprep.subr.mxu0 0.0
    %6267 = vmatpush1.msra.mxu0 0.0
    %6268 = vmatprep.subr.mxu0 0.0
    %6269 = vmatpush1.msra.mxu0 0.0
    %6270 = vmatprep.subr.mxu0 0.0
    %6271 = vmatpush1.msra.mxu0 0.0
    %6272 = vmatprep.subr.mxu0 0.0
    %6273 = vmatpush1.msra.mxu0 0.0
    %6274 = vmatprep.subr.mxu0 0.0
    %6275 = vmatpush1.msra.mxu0 0.0
    %6276 = vmatprep.subr.mxu0 0.0
    %6277 = vmatpush1.msra.mxu0 0.0
    %6278 = vmatprep.subr.mxu0 0.0
    %6279 = vmatpush1.msra.mxu0 0.0
    %6280 = vmatprep.subr.mxu0 0.0
    %6281 = vmatpush1.msra.mxu0 0.0
    %6282 = vmatprep.subr.mxu0 0.0
    %6283 = vmatpush1.msra.mxu0 0.0
    %6284 = vmatprep.subr.mxu0 0.0
    %6285 = vmatpush1.msra.mxu0 0.0
    %6286 = vmatprep.subr.mxu0 0.0
    %6287 = vmatpush1.msra.mxu0 0.0
    %6288 = vmatprep.subr.mxu0 0.0
    %6289 = vmatpush1.msra.mxu0 0.0
    %6290 = vmatprep.subr.mxu0 0.0
    %6291 = vmatpush1.msra.mxu0 0.0
    %6292 = vmatprep.subr.mxu0 0.0
    %6293 = vmatpush1.msra.mxu0 0.0
    %6294 = vmatprep.subr.mxu0 0.0
    %6295 = vmatpush1.msra.mxu0 0.0
    %6296 = vmatprep.subr.mxu0 0.0
    %6297 = vmatpush1.msra.mxu0 0.0
    %6298 = vmatprep.subr.mxu0 0.0
    %6299 = vmatpush1.msra.mxu0 0.0
    %6300 = vmatprep.subr.mxu0 0.0
    %6301 = vmatpush1.msra.mxu0 0.0
    %6302 = vmatprep.subr.mxu0 0.0
    %6303 = vmatpush1.msra.mxu0 0.0
    %6304 = vmatprep.subr.mxu0 0.0
    %6305 = vmatpush1.msra.mxu0 0.0
    %6306 = vmatprep.subr.mxu0 0.0
    %6307 = vmatpush1.msra.mxu0 0.0
    %6308 = vmatprep.subr.mxu0 0.0
    %6309 = vmatpush1.msra.mxu0 0.0
    %6310 = vmatprep.subr.mxu0 0.0
    %6311 = vmatpush1.msra.mxu0 0.0
    %6312 = vmatprep.subr.mxu0 0.0
    %6313 = vmatpush1.msra.mxu0 0.0
    %6314 = vmatprep.subr.mxu0 0.0
    %6315 = vmatpush1.msra.mxu0 0.0
    %6316 = vmatprep.subr.mxu0 0.0
    %6317 = vmatpush1.msra.mxu0 0.0
    %6318 = vmatprep.subr.mxu0 0.0
    %6319 = vmatpush1.msra.mxu0 0.0
    %6320 = vmatprep.subr.mxu0 0.0
    %6321 = vmatpush1.msra.mxu0 0.0
    %6322 = vmatprep.subr.mxu0 0.0
    %6323 = vmatpush1.msra.mxu0 0.0
    %6324 = vmatprep.subr.mxu0 0.0
    %6325 = vmatpush1.msra.mxu0 0.0
    %6326 = vmatprep.mubr.f32.mxu0 0.0
    %6327 = vmatmul.mubr.f32.gmra.mrb[0].mxu0 %v6257
    %v6328 = vpop.f32.mrb[0].mxu0
    %v6329 = vadd.f32 0.0, %v6328
    %v6330 = vpop.f32.mrb[0].mxu0
    %6331 = vmatprep.mubr.f32.mxu0 0.0
    %6332 = vmatmul.mubr.f32.gmra.mrb[0].mxu0 %v6260
    %v6333 = vpop.f32.mrb[0].mxu0
    %v6334 = vadd.f32 0.0, %v6333
    %v6335 = vpop.f32.mrb[0].mxu0
    %6336 = vdwg.mxu0
    %v6338 = vsel %vm904, %v4417, 0
    %v6341 = vsel %vm904, %v4422, 0
    %6343 = vmatprep.subr.mxu0 0.0
    %6344 = vmatpush1.msra.mxu0 %v222
    %6345 = vmatprep.subr.mxu0 0.0
    %6346 = vmatpush1.msra.mxu0 %v223
    %6347 = vmatprep.subr.mxu0 0.0
    %6348 = vmatpush1.msra.mxu0 0.0
    %6349 = vmatprep.subr.mxu0 0.0
    %6350 = vmatpush1.msra.mxu0 0.0
    %6351 = vmatprep.subr.mxu0 0.0
    %6352 = vmatpush1.msra.mxu0 0.0
    %6353 = vmatprep.subr.mxu0 0.0
    %6354 = vmatpush1.msra.mxu0 0.0
    %6355 = vmatprep.subr.mxu0 0.0
    %6356 = vmatpush1.msra.mxu0 0.0
    %6357 = vmatprep.subr.mxu0 0.0
    %6358 = vmatpush1.msra.mxu0 0.0
    %6359 = vmatprep.subr.mxu0 0.0
    %6360 = vmatpush1.msra.mxu0 0.0
    %6361 = vmatprep.subr.mxu0 0.0
    %6362 = vmatpush1.msra.mxu0 0.0
    %6363 = vmatprep.subr.mxu0 0.0
    %6364 = vmatpush1.msra.mxu0 0.0
    %6365 = vmatprep.subr.mxu0 0.0
    %6366 = vmatpush1.msra.mxu0 0.0
    %6367 = vmatprep.subr.mxu0 0.0
    %6368 = vmatpush1.msra.mxu0 0.0
    %6369 = vmatprep.subr.mxu0 0.0
    %6370 = vmatpush1.msra.mxu0 0.0
    %6371 = vmatprep.subr.mxu0 0.0
    %6372 = vmatpush1.msra.mxu0 0.0
    %6373 = vmatprep.subr.mxu0 0.0
    %6374 = vmatpush1.msra.mxu0 0.0
    %6375 = vmatprep.subr.mxu0 0.0
    %6376 = vmatpush1.msra.mxu0 0.0
    %6377 = vmatprep.subr.mxu0 0.0
    %6378 = vmatpush1.msra.mxu0 0.0
    %6379 = vmatprep.subr.mxu0 0.0
    %6380 = vmatpush1.msra.mxu0 0.0
    %6381 = vmatprep.subr.mxu0 0.0
    %6382 = vmatpush1.msra.mxu0 0.0
    %6383 = vmatprep.subr.mxu0 0.0
    %6384 = vmatpush1.msra.mxu0 0.0
    %6385 = vmatprep.subr.mxu0 0.0
    %6386 = vmatpush1.msra.mxu0 0.0
    %6387 = vmatprep.subr.mxu0 0.0
    %6388 = vmatpush1.msra.mxu0 0.0
    %6389 = vmatprep.subr.mxu0 0.0
    %6390 = vmatpush1.msra.mxu0 0.0
    %6391 = vmatprep.subr.mxu0 0.0
    %6392 = vmatpush1.msra.mxu0 0.0
    %6393 = vmatprep.subr.mxu0 0.0
    %6394 = vmatpush1.msra.mxu0 0.0
    %6395 = vmatprep.subr.mxu0 0.0
    %6396 = vmatpush1.msra.mxu0 0.0
    %6397 = vmatprep.subr.mxu0 0.0
    %6398 = vmatpush1.msra.mxu0 0.0
    %6399 = vmatprep.subr.mxu0 0.0
    %6400 = vmatpush1.msra.mxu0 0.0
    %6401 = vmatprep.subr.mxu0 0.0
    %6402 = vmatpush1.msra.mxu0 0.0
    %6403 = vmatprep.subr.mxu0 0.0
    %6404 = vmatpush1.msra.mxu0 0.0
    %6405 = vmatprep.subr.mxu0 0.0
    %6406 = vmatpush1.msra.mxu0 0.0
    %6407 = vmatprep.mubr.f32.mxu0 0.0
    %6408 = vmatmul.mubr.f32.gmra.mrb[0].mxu0 %v6338
    %v6409 = vpop.f32.mrb[0].mxu0
    %v6410 = vadd.f32 0.0, %v6409
    %v6411 = vpop.f32.mrb[0].mxu0
    %6412 = vmatprep.mubr.f32.mxu0 0.0
    %6413 = vmatmul.mubr.f32.gmra.mrb[0].mxu0 %v6341
    %v6414 = vpop.f32.mrb[0].mxu0
    %v6415 = vadd.f32 0.0, %v6414
    %v6416 = vpop.f32.mrb[0].mxu0
    %6417 = vdwg.mxu0
    %v6419 = vsel %vm904, %v4427, 0
    %v6422 = vsel %vm904, %v4432, 0
    %6424 = vmatprep.subr.mxu0 0.0
    %6425 = vmatpush1.msra.mxu0 %v224
    %6426 = vmatprep.subr.mxu0 0.0
    %6427 = vmatpush1.msra.mxu0 %v225
    %6428 = vmatprep.subr.mxu0 0.0
    %6429 = vmatpush1.msra.mxu0 0.0
    %6430 = vmatprep.subr.mxu0 0.0
    %6431 = vmatpush1.msra.mxu0 0.0
    %6432 = vmatprep.subr.mxu0 0.0
    %6433 = vmatpush1.msra.mxu0 0.0
    %6434 = vmatprep.subr.mxu0 0.0
    %6435 = vmatpush1.msra.mxu0 0.0
    %6436 = vmatprep.subr.mxu0 0.0
    %6437 = vmatpush1.msra.mxu0 0.0
    %6438 = vmatprep.subr.mxu0 0.0
    %6439 = vmatpush1.msra.mxu0 0.0
    %6440 = vmatprep.subr.mxu0 0.0
    %6441 = vmatpush1.msra.mxu0 0.0
    %6442 = vmatprep.subr.mxu0 0.0
    %6443 = vmatpush1.msra.mxu0 0.0
    %6444 = vmatprep.subr.mxu0 0.0
    %6445 = vmatpush1.msra.mxu0 0.0
    %6446 = vmatprep.subr.mxu0 0.0
    %6447 = vmatpush1.msra.mxu0 0.0
    %6448 = vmatprep.subr.mxu0 0.0
    %6449 = vmatpush1.msra.mxu0 0.0
    %6450 = vmatprep.subr.mxu0 0.0
    %6451 = vmatpush1.msra.mxu0 0.0
    %6452 = vmatprep.subr.mxu0 0.0
    %6453 = vmatpush1.msra.mxu0 0.0
    %6454 = vmatprep.subr.mxu0 0.0
    %6455 = vmatpush1.msra.mxu0 0.0
    %6456 = vmatprep.subr.mxu0 0.0
    %6457 = vmatpush1.msra.mxu0 0.0
    %6458 = vmatprep.subr.mxu0 0.0
    %6459 = vmatpush1.msra.mxu0 0.0
    %6460 = vmatprep.subr.mxu0 0.0
    %6461 = vmatpush1.msra.mxu0 0.0
    %6462 = vmatprep.subr.mxu0 0.0
    %6463 = vmatpush1.msra.mxu0 0.0
    %6464 = vmatprep.subr.mxu0 0.0
    %6465 = vmatpush1.msra.mxu0 0.0
    %6466 = vmatprep.subr.mxu0 0.0
    %6467 = vmatpush1.msra.mxu0 0.0
    %6468 = vmatprep.subr.mxu0 0.0
    %6469 = vmatpush1.msra.mxu0 0.0
    %6470 = vmatprep.subr.mxu0 0.0
    %6471 = vmatpush1.msra.mxu0 0.0
    %6472 = vmatprep.subr.mxu0 0.0
    %6473 = vmatpush1.msra.mxu0 0.0
    %6474 = vmatprep.subr.mxu0 0.0
    %6475 = vmatpush1.msra.mxu0 0.0
    %6476 = vmatprep.subr.mxu0 0.0
    %6477 = vmatpush1.msra.mxu0 0.0
    %6478 = vmatprep.subr.mxu0 0.0
    %6479 = vmatpush1.msra.mxu0 0.0
    %6480 = vmatprep.subr.mxu0 0.0
    %6481 = vmatpush1.msra.mxu0 0.0
    %6482 = vmatprep.subr.mxu0 0.0
    %6483 = vmatpush1.msra.mxu0 0.0
    %6484 = vmatprep.subr.mxu0 0.0
    %6485 = vmatpush1.msra.mxu0 0.0
    %6486 = vmatprep.subr.mxu0 0.0
    %6487 = vmatpush1.msra.mxu0 0.0
    %6488 = vmatprep.mubr.f32.mxu0 0.0
    %6489 = vmatmul.mubr.f32.gmra.mrb[0].mxu0 %v6419
    %v6490 = vpop.f32.mrb[0].mxu0
    %v6491 = vadd.f32 0.0, %v6490
    %v6492 = vpop.f32.mrb[0].mxu0
    %6493 = vmatprep.mubr.f32.mxu0 0.0
    %6494 = vmatmul.mubr.f32.gmra.mrb[0].mxu0 %v6422
    %v6495 = vpop.f32.mrb[0].mxu0
    %v6496 = vadd.f32 0.0, %v6495
    %v6497 = vpop.f32.mrb[0].mxu0
    %6498 = vdwg.mxu0
    %v6500 = vsel %vm904, %v4437, 0
    %v6503 = vsel %vm904, %v4442, 0
    %6505 = vmatprep.subr.mxu0 0.0
    %6506 = vmatpush1.msra.mxu0 %v226
    %6507 = vmatprep.subr.mxu0 0.0
    %6508 = vmatpush1.msra.mxu0 %v227
    %6509 = vmatprep.subr.mxu0 0.0
    %6510 = vmatpush1.msra.mxu0 0.0
    %6511 = vmatprep.subr.mxu0 0.0
    %6512 = vmatpush1.msra.mxu0 0.0
    %6513 = vmatprep.subr.mxu0 0.0
    %6514 = vmatpush1.msra.mxu0 0.0
    %6515 = vmatprep.subr.mxu0 0.0
    %6516 = vmatpush1.msra.mxu0 0.0
    %6517 = vmatprep.subr.mxu0 0.0
    %6518 = vmatpush1.msra.mxu0 0.0
    %6519 = vmatprep.subr.mxu0 0.0
    %6520 = vmatpush1.msra.mxu0 0.0
    %6521 = vmatprep.subr.mxu0 0.0
    %6522 = vmatpush1.msra.mxu0 0.0
    %6523 = vmatprep.subr.mxu0 0.0
    %6524 = vmatpush1.msra.mxu0 0.0
    %6525 = vmatprep.subr.mxu0 0.0
    %6526 = vmatpush1.msra.mxu0 0.0
    %6527 = vmatprep.subr.mxu0 0.0
    %6528 = vmatpush1.msra.mxu0 0.0
    %6529 = vmatprep.subr.mxu0 0.0
    %6530 = vmatpush1.msra.mxu0 0.0
    %6531 = vmatprep.subr.mxu0 0.0
    %6532 = vmatpush1.msra.mxu0 0.0
    %6533 = vmatprep.subr.mxu0 0.0
    %6534 = vmatpush1.msra.mxu0 0.0
    %6535 = vmatprep.subr.mxu0 0.0
    %6536 = vmatpush1.msra.mxu0 0.0
    %6537 = vmatprep.subr.mxu0 0.0
    %6538 = vmatpush1.msra.mxu0 0.0
    %6539 = vmatprep.subr.mxu0 0.0
    %6540 = vmatpush1.msra.mxu0 0.0
    %6541 = vmatprep.subr.mxu0 0.0
    %6542 = vmatpush1.msra.mxu0 0.0
    %6543 = vmatprep.subr.mxu0 0.0
    %6544 = vmatpush1.msra.mxu0 0.0
    %6545 = vmatprep.subr.mxu0 0.0
    %6546 = vmatpush1.msra.mxu0 0.0
    %6547 = vmatprep.subr.mxu0 0.0
    %6548 = vmatpush1.msra.mxu0 0.0
    %6549 = vmatprep.subr.mxu0 0.0
    %6550 = vmatpush1.msra.mxu0 0.0
    %6551 = vmatprep.subr.mxu0 0.0
    %6552 = vmatpush1.msra.mxu0 0.0
    %6553 = vmatprep.subr.mxu0 0.0
    %6554 = vmatpush1.msra.mxu0 0.0
    %6555 = vmatprep.subr.mxu0 0.0
    %6556 = vmatpush1.msra.mxu0 0.0
    %6557 = vmatprep.subr.mxu0 0.0
    %6558 = vmatpush1.msra.mxu0 0.0
    %6559 = vmatprep.subr.mxu0 0.0
    %6560 = vmatpush1.msra.mxu0 0.0
    %6561 = vmatprep.subr.mxu0 0.0
    %6562 = vmatpush1.msra.mxu0 0.0
    %6563 = vmatprep.subr.mxu0 0.0
    %6564 = vmatpush1.msra.mxu0 0.0
    %6565 = vmatprep.subr.mxu0 0.0
    %6566 = vmatpush1.msra.mxu0 0.0
    %6567 = vmatprep.subr.mxu0 0.0
    %6568 = vmatpush1.msra.mxu0 0.0
    %6569 = vmatprep.mubr.f32.mxu0 0.0
    %6570 = vmatmul.mubr.f32.gmra.mrb[0].mxu0 %v6500
    %v6571 = vpop.f32.mrb[0].mxu0
    %v6572 = vadd.f32 0.0, %v6571
    %v6573 = vpop.f32.mrb[0].mxu0
    %6574 = vmatprep.mubr.f32.mxu0 0.0
    %6575 = vmatmul.mubr.f32.gmra.mrb[0].mxu0 %v6503
    %v6576 = vpop.f32.mrb[0].mxu0
    %v6577 = vadd.f32 0.0, %v6576
    %v6578 = vpop.f32.mrb[0].mxu0
    %6579 = vdwg.mxu0
    %v6581 = vsel %vm904, %v4447, 0
    %v6584 = vsel %vm904, %v4452, 0
    %6586 = vmatprep.subr.mxu0 0.0
    %6587 = vmatpush1.msra.mxu0 %v228
    %6588 = vmatprep.subr.mxu0 0.0
    %6589 = vmatpush1.msra.mxu0 %v229
    %6590 = vmatprep.subr.mxu0 0.0
    %6591 = vmatpush1.msra.mxu0 0.0
    %6592 = vmatprep.subr.mxu0 0.0
    %6593 = vmatpush1.msra.mxu0 0.0
    %6594 = vmatprep.subr.mxu0 0.0
    %6595 = vmatpush1.msra.mxu0 0.0
    %6596 = vmatprep.subr.mxu0 0.0
    %6597 = vmatpush1.msra.mxu0 0.0
    %6598 = vmatprep.subr.mxu0 0.0
    %6599 = vmatpush1.msra.mxu0 0.0
    %6600 = vmatprep.subr.mxu0 0.0
    %6601 = vmatpush1.msra.mxu0 0.0
    %6602 = vmatprep.subr.mxu0 0.0
    %6603 = vmatpush1.msra.mxu0 0.0
    %6604 = vmatprep.subr.mxu0 0.0
    %6605 = vmatpush1.msra.mxu0 0.0
    %6606 = vmatprep.subr.mxu0 0.0
    %6607 = vmatpush1.msra.mxu0 0.0
    %6608 = vmatprep.subr.mxu0 0.0
    %6609 = vmatpush1.msra.mxu0 0.0
    %6610 = vmatprep.subr.mxu0 0.0
    %6611 = vmatpush1.msra.mxu0 0.0
    %6612 = vmatprep.subr.mxu0 0.0
    %6613 = vmatpush1.msra.mxu0 0.0
    %6614 = vmatprep.subr.mxu0 0.0
    %6615 = vmatpush1.msra.mxu0 0.0
    %6616 = vmatprep.subr.mxu0 0.0
    %6617 = vmatpush1.msra.mxu0 0.0
    %6618 = vmatprep.subr.mxu0 0.0
    %6619 = vmatpush1.msra.mxu0 0.0
    %6620 = vmatprep.subr.mxu0 0.0
    %6621 = vmatpush1.msra.mxu0 0.0
    %6622 = vmatprep.subr.mxu0 0.0
    %6623 = vmatpush1.msra.mxu0 0.0
    %6624 = vmatprep.subr.mxu0 0.0
    %6625 = vmatpush1.msra.mxu0 0.0
    %6626 = vmatprep.subr.mxu0 0.0
    %6627 = vmatpush1.msra.mxu0 0.0
    %6628 = vmatprep.subr.mxu0 0.0
    %6629 = vmatpush1.msra.mxu0 0.0
    %6630 = vmatprep.subr.mxu0 0.0
    %6631 = vmatpush1.msra.mxu0 0.0
    %6632 = vmatprep.subr.mxu0 0.0
    %6633 = vmatpush1.msra.mxu0 0.0
    %6634 = vmatprep.subr.mxu0 0.0
    %6635 = vmatpush1.msra.mxu0 0.0
    %6636 = vmatprep.subr.mxu0 0.0
    %6637 = vmatpush1.msra.mxu0 0.0
    %6638 = vmatprep.subr.mxu0 0.0
    %6639 = vmatpush1.msra.mxu0 0.0
    %6640 = vmatprep.subr.mxu0 0.0
    %6641 = vmatpush1.msra.mxu0 0.0
    %6642 = vmatprep.subr.mxu0 0.0
    %6643 = vmatpush1.msra.mxu0 0.0
    %6644 = vmatprep.subr.mxu0 0.0
    %6645 = vmatpush1.msra.mxu0 0.0
    %6646 = vmatprep.subr.mxu0 0.0
    %6647 = vmatpush1.msra.mxu0 0.0
    %6648 = vmatprep.subr.mxu0 0.0
    %6649 = vmatpush1.msra.mxu0 0.0
    %6650 = vmatprep.mubr.f32.mxu0 0.0
    %6651 = vmatmul.mubr.f32.gmra.mrb[0].mxu0 %v6581
    %v6652 = vpop.f32.mrb[0].mxu0
    %v6653 = vadd.f32 0.0, %v6652
    %v6654 = vpop.f32.mrb[0].mxu0
    %6655 = vmatprep.mubr.f32.mxu0 0.0
    %6656 = vmatmul.mubr.f32.gmra.mrb[0].mxu0 %v6584
    %v6657 = vpop.f32.mrb[0].mxu0
    %v6658 = vadd.f32 0.0, %v6657
    %v6659 = vpop.f32.mrb[0].mxu0
    %6660 = vdwg.mxu0
    %v6662 = vsel %vm904, %v4457, 0
    %v6665 = vsel %vm904, %v4462, 0
    %6667 = vmatprep.subr.mxu0 0.0
    %6668 = vmatpush1.msra.mxu0 %v230
    %6669 = vmatprep.subr.mxu0 0.0
    %6670 = vmatpush1.msra.mxu0 %v231
    %6671 = vmatprep.subr.mxu0 0.0
    %6672 = vmatpush1.msra.mxu0 0.0
    %6673 = vmatprep.subr.mxu0 0.0
    %6674 = vmatpush1.msra.mxu0 0.0
    %6675 = vmatprep.subr.mxu0 0.0
    %6676 = vmatpush1.msra.mxu0 0.0
    %6677 = vmatprep.subr.mxu0 0.0
    %6678 = vmatpush1.msra.mxu0 0.0
    %6679 = vmatprep.subr.mxu0 0.0
    %6680 = vmatpush1.msra.mxu0 0.0
    %6681 = vmatprep.subr.mxu0 0.0
    %6682 = vmatpush1.msra.mxu0 0.0
    %6683 = vmatprep.subr.mxu0 0.0
    %6684 = vmatpush1.msra.mxu0 0.0
    %6685 = vmatprep.subr.mxu0 0.0
    %6686 = vmatpush1.msra.mxu0 0.0
    %6687 = vmatprep.subr.mxu0 0.0
    %6688 = vmatpush1.msra.mxu0 0.0
    %6689 = vmatprep.subr.mxu0 0.0
    %6690 = vmatpush1.msra.mxu0 0.0
    %6691 = vmatprep.subr.mxu0 0.0
    %6692 = vmatpush1.msra.mxu0 0.0
    %6693 = vmatprep.subr.mxu0 0.0
    %6694 = vmatpush1.msra.mxu0 0.0
    %6695 = vmatprep.subr.mxu0 0.0
    %6696 = vmatpush1.msra.mxu0 0.0
    %6697 = vmatprep.subr.mxu0 0.0
    %6698 = vmatpush1.msra.mxu0 0.0
    %6699 = vmatprep.subr.mxu0 0.0
    %6700 = vmatpush1.msra.mxu0 0.0
    %6701 = vmatprep.subr.mxu0 0.0
    %6702 = vmatpush1.msra.mxu0 0.0
    %6703 = vmatprep.subr.mxu0 0.0
    %6704 = vmatpush1.msra.mxu0 0.0
    %6705 = vmatprep.subr.mxu0 0.0
    %6706 = vmatpush1.msra.mxu0 0.0
    %6707 = vmatprep.subr.mxu0 0.0
    %6708 = vmatpush1.msra.mxu0 0.0
    %6709 = vmatprep.subr.mxu0 0.0
    %6710 = vmatpush1.msra.mxu0 0.0
    %6711 = vmatprep.subr.mxu0 0.0
    %6712 = vmatpush1.msra.mxu0 0.0
    %6713 = vmatprep.subr.mxu0 0.0
    %6714 = vmatpush1.msra.mxu0 0.0
    %6715 = vmatprep.subr.mxu0 0.0
    %6716 = vmatpush1.msra.mxu0 0.0
    %6717 = vmatprep.subr.mxu0 0.0
    %6718 = vmatpush1.msra.mxu0 0.0
    %6719 = vmatprep.subr.mxu0 0.0
    %6720 = vmatpush1.msra.mxu0 0.0
    %6721 = vmatprep.subr.mxu0 0.0
    %6722 = vmatpush1.msra.mxu0 0.0
    %6723 = vmatprep.subr.mxu0 0.0
    %6724 = vmatpush1.msra.mxu0 0.0
    %6725 = vmatprep.subr.mxu0 0.0
    %6726 = vmatpush1.msra.mxu0 0.0
    %6727 = vmatprep.subr.mxu0 0.0
    %6728 = vmatpush1.msra.mxu0 0.0
    %6729 = vmatprep.subr.mxu0 0.0
    %6730 = vmatpush1.msra.mxu0 0.0
    %6731 = vmatprep.mubr.f32.mxu0 0.0
    %6732 = vmatmul.mubr.f32.gmra.mrb[0].mxu0 %v6662
    %v6733 = vpop.f32.mrb[0].mxu0
    %v6734 = vadd.f32 0.0, %v6733
    %v6735 = vpop.f32.mrb[0].mxu0
    %6736 = vmatprep.mubr.f32.mxu0 0.0
    %6737 = vmatmul.mubr.f32.gmra.mrb[0].mxu0 %v6665
    %v6738 = vpop.f32.mrb[0].mxu0
    %v6739 = vadd.f32 0.0, %v6738
    %v6740 = vpop.f32.mrb[0].mxu0
    %6741 = vdwg.mxu0
    %v6743 = vsel %vm904, %v4467, 0
    %v6746 = vsel %vm904, %v4472, 0
    %6748 = vmatprep.subr.mxu0 0.0
    %6749 = vmatpush1.msra.mxu0 %v232
    %6750 = vmatprep.subr.mxu0 0.0
    %6751 = vmatpush1.msra.mxu0 %v233
    %6752 = vmatprep.subr.mxu0 0.0
    %6753 = vmatpush1.msra.mxu0 0.0
    %6754 = vmatprep.subr.mxu0 0.0
    %6755 = vmatpush1.msra.mxu0 0.0
    %6756 = vmatprep.subr.mxu0 0.0
    %6757 = vmatpush1.msra.mxu0 0.0
    %6758 = vmatprep.subr.mxu0 0.0
    %6759 = vmatpush1.msra.mxu0 0.0
    %6760 = vmatprep.subr.mxu0 0.0
    %6761 = vmatpush1.msra.mxu0 0.0
    %6762 = vmatprep.subr.mxu0 0.0
    %6763 = vmatpush1.msra.mxu0 0.0
    %6764 = vmatprep.subr.mxu0 0.0
    %6765 = vmatpush1.msra.mxu0 0.0
    %6766 = vmatprep.subr.mxu0 0.0
    %6767 = vmatpush1.msra.mxu0 0.0
    %6768 = vmatprep.subr.mxu0 0.0
    %6769 = vmatpush1.msra.mxu0 0.0
    %6770 = vmatprep.subr.mxu0 0.0
    %6771 = vmatpush1.msra.mxu0 0.0
    %6772 = vmatprep.subr.mxu0 0.0
    %6773 = vmatpush1.msra.mxu0 0.0
    %6774 = vmatprep.subr.mxu0 0.0
    %6775 = vmatpush1.msra.mxu0 0.0
    %6776 = vmatprep.subr.mxu0 0.0
    %6777 = vmatpush1.msra.mxu0 0.0
    %6778 = vmatprep.subr.mxu0 0.0
    %6779 = vmatpush1.msra.mxu0 0.0
    %6780 = vmatprep.subr.mxu0 0.0
    %6781 = vmatpush1.msra.mxu0 0.0
    %6782 = vmatprep.subr.mxu0 0.0
    %6783 = vmatpush1.msra.mxu0 0.0
    %6784 = vmatprep.subr.mxu0 0.0
    %6785 = vmatpush1.msra.mxu0 0.0
    %6786 = vmatprep.subr.mxu0 0.0
    %6787 = vmatpush1.msra.mxu0 0.0
    %6788 = vmatprep.subr.mxu0 0.0
    %6789 = vmatpush1.msra.mxu0 0.0
    %6790 = vmatprep.subr.mxu0 0.0
    %6791 = vmatpush1.msra.mxu0 0.0
    %6792 = vmatprep.subr.mxu0 0.0
    %6793 = vmatpush1.msra.mxu0 0.0
    %6794 = vmatprep.subr.mxu0 0.0
    %6795 = vmatpush1.msra.mxu0 0.0
    %6796 = vmatprep.subr.mxu0 0.0
    %6797 = vmatpush1.msra.mxu0 0.0
    %6798 = vmatprep.subr.mxu0 0.0
    %6799 = vmatpush1.msra.mxu0 0.0
    %6800 = vmatprep.subr.mxu0 0.0
    %6801 = vmatpush1.msra.mxu0 0.0
    %6802 = vmatprep.subr.mxu0 0.0
    %6803 = vmatpush1.msra.mxu0 0.0
    %6804 = vmatprep.subr.mxu0 0.0
    %6805 = vmatpush1.msra.mxu0 0.0
    %6806 = vmatprep.subr.mxu0 0.0
    %6807 = vmatpush1.msra.mxu0 0.0
    %6808 = vmatprep.subr.mxu0 0.0
    %6809 = vmatpush1.msra.mxu0 0.0
    %6810 = vmatprep.subr.mxu0 0.0
    %6811 = vmatpush1.msra.mxu0 0.0
    %6812 = vmatprep.mubr.f32.mxu0 0.0
    %6813 = vmatmul.mubr.f32.gmra.mrb[0].mxu0 %v6743
    %v6814 = vpop.f32.mrb[0].mxu0
    %v6815 = vadd.f32 0.0, %v6814
    %v6816 = vpop.f32.mrb[0].mxu0
    %6817 = vmatprep.mubr.f32.mxu0 0.0
    %6818 = vmatmul.mubr.f32.gmra.mrb[0].mxu0 %v6746
    %v6819 = vpop.f32.mrb[0].mxu0
    %v6820 = vadd.f32 0.0, %v6819
    %v6821 = vpop.f32.mrb[0].mxu0
    %6822 = vdwg.mxu0
    %v6824 = vsel %vm904, %v4477, 0
    %v6827 = vsel %vm904, %v4482, 0
    %6829 = vmatprep.subr.mxu0 0.0
    %6830 = vmatpush1.msra.mxu0 %v234
    %6831 = vmatprep.subr.mxu0 0.0
    %6832 = vmatpush1.msra.mxu0 %v235
    %6833 = vmatprep.subr.mxu0 0.0
    %6834 = vmatpush1.msra.mxu0 0.0
    %6835 = vmatprep.subr.mxu0 0.0
    %6836 = vmatpush1.msra.mxu0 0.0
    %6837 = vmatprep.subr.mxu0 0.0
    %6838 = vmatpush1.msra.mxu0 0.0
    %6839 = vmatprep.subr.mxu0 0.0
    %6840 = vmatpush1.msra.mxu0 0.0
    %6841 = vmatprep.subr.mxu0 0.0
    %6842 = vmatpush1.msra.mxu0 0.0
    %6843 = vmatprep.subr.mxu0 0.0
    %6844 = vmatpush1.msra.mxu0 0.0
    %6845 = vmatprep.subr.mxu0 0.0
    %6846 = vmatpush1.msra.mxu0 0.0
    %6847 = vmatprep.subr.mxu0 0.0
    %6848 = vmatpush1.msra.mxu0 0.0
    %6849 = vmatprep.subr.mxu0 0.0
    %6850 = vmatpush1.msra.mxu0 0.0
    %6851 = vmatprep.subr.mxu0 0.0
    %6852 = vmatpush1.msra.mxu0 0.0
    %6853 = vmatprep.subr.mxu0 0.0
    %6854 = vmatpush1.msra.mxu0 0.0
    %6855 = vmatprep.subr.mxu0 0.0
    %6856 = vmatpush1.msra.mxu0 0.0
    %6857 = vmatprep.subr.mxu0 0.0
    %6858 = vmatpush1.msra.mxu0 0.0
    %6859 = vmatprep.subr.mxu0 0.0
    %6860 = vmatpush1.msra.mxu0 0.0
    %6861 = vmatprep.subr.mxu0 0.0
    %6862 = vmatpush1.msra.mxu0 0.0
    %6863 = vmatprep.subr.mxu0 0.0
    %6864 = vmatpush1.msra.mxu0 0.0
    %6865 = vmatprep.subr.mxu0 0.0
    %6866 = vmatpush1.msra.mxu0 0.0
    %6867 = vmatprep.subr.mxu0 0.0
    %6868 = vmatpush1.msra.mxu0 0.0
    %6869 = vmatprep.subr.mxu0 0.0
    %6870 = vmatpush1.msra.mxu0 0.0
    %6871 = vmatprep.subr.mxu0 0.0
    %6872 = vmatpush1.msra.mxu0 0.0
    %6873 = vmatprep.subr.mxu0 0.0
    %6874 = vmatpush1.msra.mxu0 0.0
    %6875 = vmatprep.subr.mxu0 0.0
    %6876 = vmatpush1.msra.mxu0 0.0
    %6877 = vmatprep.subr.mxu0 0.0
    %6878 = vmatpush1.msra.mxu0 0.0
    %6879 = vmatprep.subr.mxu0 0.0
    %6880 = vmatpush1.msra.mxu0 0.0
    %6881 = vmatprep.subr.mxu0 0.0
    %6882 = vmatpush1.msra.mxu0 0.0
    %6883 = vmatprep.subr.mxu0 0.0
    %6884 = vmatpush1.msra.mxu0 0.0
    %6885 = vmatprep.subr.mxu0 0.0
    %6886 = vmatpush1.msra.mxu0 0.0
    %6887 = vmatprep.subr.mxu0 0.0
    %6888 = vmatpush1.msra.mxu0 0.0
    %6889 = vmatprep.subr.mxu0 0.0
    %6890 = vmatpush1.msra.mxu0 0.0
    %6891 = vmatprep.subr.mxu0 0.0
    %6892 = vmatpush1.msra.mxu0 0.0
    %6893 = vmatprep.mubr.f32.mxu0 0.0
    %6894 = vmatmul.mubr.f32.gmra.mrb[0].mxu0 %v6824
    %v6895 = vpop.f32.mrb[0].mxu0
    %v6896 = vadd.f32 0.0, %v6895
    %v6897 = vpop.f32.mrb[0].mxu0
    %6898 = vmatprep.mubr.f32.mxu0 0.0
    %6899 = vmatmul.mubr.f32.gmra.mrb[0].mxu0 %v6827
    %v6900 = vpop.f32.mrb[0].mxu0
    %v6901 = vadd.f32 0.0, %v6900
    %v6902 = vpop.f32.mrb[0].mxu0
    %6903 = vdwg.mxu0
    %v6905 = vsel %vm904, %v4487, 0
    %v6908 = vsel %vm904, %v4492, 0
    %6910 = vmatprep.subr.mxu0 0.0
    %6911 = vmatpush1.msra.mxu0 %v236
    %6912 = vmatprep.subr.mxu0 0.0
    %6913 = vmatpush1.msra.mxu0 %v237
    %6914 = vmatprep.subr.mxu0 0.0
    %6915 = vmatpush1.msra.mxu0 0.0
    %6916 = vmatprep.subr.mxu0 0.0
    %6917 = vmatpush1.msra.mxu0 0.0
    %6918 = vmatprep.subr.mxu0 0.0
    %6919 = vmatpush1.msra.mxu0 0.0
    %6920 = vmatprep.subr.mxu0 0.0
    %6921 = vmatpush1.msra.mxu0 0.0
    %6922 = vmatprep.subr.mxu0 0.0
    %6923 = vmatpush1.msra.mxu0 0.0
    %6924 = vmatprep.subr.mxu0 0.0
    %6925 = vmatpush1.msra.mxu0 0.0
    %6926 = vmatprep.subr.mxu0 0.0
    %6927 = vmatpush1.msra.mxu0 0.0
    %6928 = vmatprep.subr.mxu0 0.0
    %6929 = vmatpush1.msra.mxu0 0.0
    %6930 = vmatprep.subr.mxu0 0.0
    %6931 = vmatpush1.msra.mxu0 0.0
    %6932 = vmatprep.subr.mxu0 0.0
    %6933 = vmatpush1.msra.mxu0 0.0
    %6934 = vmatprep.subr.mxu0 0.0
    %6935 = vmatpush1.msra.mxu0 0.0
    %6936 = vmatprep.subr.mxu0 0.0
    %6937 = vmatpush1.msra.mxu0 0.0
    %6938 = vmatprep.subr.mxu0 0.0
    %6939 = vmatpush1.msra.mxu0 0.0
    %6940 = vmatprep.subr.mxu0 0.0
    %6941 = vmatpush1.msra.mxu0 0.0
    %6942 = vmatprep.subr.mxu0 0.0
    %6943 = vmatpush1.msra.mxu0 0.0
    %6944 = vmatprep.subr.mxu0 0.0
    %6945 = vmatpush1.msra.mxu0 0.0
    %6946 = vmatprep.subr.mxu0 0.0
    %6947 = vmatpush1.msra.mxu0 0.0
    %6948 = vmatprep.subr.mxu0 0.0
    %6949 = vmatpush1.msra.mxu0 0.0
    %6950 = vmatprep.subr.mxu0 0.0
    %6951 = vmatpush1.msra.mxu0 0.0
    %6952 = vmatprep.subr.mxu0 0.0
    %6953 = vmatpush1.msra.mxu0 0.0
    %6954 = vmatprep.subr.mxu0 0.0
    %6955 = vmatpush1.msra.mxu0 0.0
    %6956 = vmatprep.subr.mxu0 0.0
    %6957 = vmatpush1.msra.mxu0 0.0
    %6958 = vmatprep.subr.mxu0 0.0
    %6959 = vmatpush1.msra.mxu0 0.0
    %6960 = vmatprep.subr.mxu0 0.0
    %6961 = vmatpush1.msra.mxu0 0.0
    %6962 = vmatprep.subr.mxu0 0.0
    %6963 = vmatpush1.msra.mxu0 0.0
    %6964 = vmatprep.subr.mxu0 0.0
    %6965 = vmatpush1.msra.mxu0 0.0
    %6966 = vmatprep.subr.mxu0 0.0
    %6967 = vmatpush1.msra.mxu0 0.0
    %6968 = vmatprep.subr.mxu0 0.0
    %6969 = vmatpush1.msra.mxu0 0.0
    %6970 = vmatprep.subr.mxu0 0.0
    %6971 = vmatpush1.msra.mxu0 0.0
    %6972 = vmatprep.subr.mxu0 0.0
    %6973 = vmatpush1.msra.mxu0 0.0
    %6974 = vmatprep.mubr.f32.mxu0 0.0
    %6975 = vmatmul.mubr.f32.gmra.mrb[0].mxu0 %v6905
    %v6976 = vpop.f32.mrb[0].mxu0
    %v6977 = vadd.f32 0.0, %v6976
    %v6978 = vpop.f32.mrb[0].mxu0
    %6979 = vmatprep.mubr.f32.mxu0 0.0
    %6980 = vmatmul.mubr.f32.gmra.mrb[0].mxu0 %v6908
    %v6981 = vpop.f32.mrb[0].mxu0
    %v6982 = vadd.f32 0.0, %v6981
    %v6983 = vpop.f32.mrb[0].mxu0
    %6984 = vdwg.mxu0
    %v6986 = vsel %vm904, %v4497, 0
    %v6989 = vsel %vm904, %v4502, 0
    %6991 = vmatprep.subr.mxu0 0.0
    %6992 = vmatpush1.msra.mxu0 %v238
    %6993 = vmatprep.subr.mxu0 0.0
    %6994 = vmatpush1.msra.mxu0 %v239
    %6995 = vmatprep.subr.mxu0 0.0
    %6996 = vmatpush1.msra.mxu0 0.0
    %6997 = vmatprep.subr.mxu0 0.0
    %6998 = vmatpush1.msra.mxu0 0.0
    %6999 = vmatprep.subr.mxu0 0.0
    %7000 = vmatpush1.msra.mxu0 0.0
    %7001 = vmatprep.subr.mxu0 0.0
    %7002 = vmatpush1.msra.mxu0 0.0
    %7003 = vmatprep.subr.mxu0 0.0
    %7004 = vmatpush1.msra.mxu0 0.0
    %7005 = vmatprep.subr.mxu0 0.0
    %7006 = vmatpush1.msra.mxu0 0.0
    %7007 = vmatprep.subr.mxu0 0.0
    %7008 = vmatpush1.msra.mxu0 0.0
    %7009 = vmatprep.subr.mxu0 0.0
    %7010 = vmatpush1.msra.mxu0 0.0
    %7011 = vmatprep.subr.mxu0 0.0
    %7012 = vmatpush1.msra.mxu0 0.0
    %7013 = vmatprep.subr.mxu0 0.0
    %7014 = vmatpush1.msra.mxu0 0.0
    %7015 = vmatprep.subr.mxu0 0.0
    %7016 = vmatpush1.msra.mxu0 0.0
    %7017 = vmatprep.subr.mxu0 0.0
    %7018 = vmatpush1.msra.mxu0 0.0
    %7019 = vmatprep.subr.mxu0 0.0
    %7020 = vmatpush1.msra.mxu0 0.0
    %7021 = vmatprep.subr.mxu0 0.0
    %7022 = vmatpush1.msra.mxu0 0.0
    %7023 = vmatprep.subr.mxu0 0.0
    %7024 = vmatpush1.msra.mxu0 0.0
    %7025 = vmatprep.subr.mxu0 0.0
    %7026 = vmatpush1.msra.mxu0 0.0
    %7027 = vmatprep.subr.mxu0 0.0
    %7028 = vmatpush1.msra.mxu0 0.0
    %7029 = vmatprep.subr.mxu0 0.0
    %7030 = vmatpush1.msra.mxu0 0.0
    %7031 = vmatprep.subr.mxu0 0.0
    %7032 = vmatpush1.msra.mxu0 0.0
    %7033 = vmatprep.subr.mxu0 0.0
    %7034 = vmatpush1.msra.mxu0 0.0
    %7035 = vmatprep.subr.mxu0 0.0
    %7036 = vmatpush1.msra.mxu0 0.0
    %7037 = vmatprep.subr.mxu0 0.0
    %7038 = vmatpush1.msra.mxu0 0.0
    %7039 = vmatprep.subr.mxu0 0.0
    %7040 = vmatpush1.msra.mxu0 0.0
    %7041 = vmatprep.subr.mxu0 0.0
    %7042 = vmatpush1.msra.mxu0 0.0
    %7043 = vmatprep.subr.mxu0 0.0
    %7044 = vmatpush1.msra.mxu0 0.0
    %7045 = vmatprep.subr.mxu0 0.0
    %7046 = vmatpush1.msra.mxu0 0.0
    %7047 = vmatprep.subr.mxu0 0.0
    %7048 = vmatpush1.msra.mxu0 0.0
    %7049 = vmatprep.subr.mxu0 0.0
    %7050 = vmatpush1.msra.mxu0 0.0
    %7051 = vmatprep.subr.mxu0 0.0
    %7052 = vmatpush1.msra.mxu0 0.0
    %7053 = vmatprep.subr.mxu0 0.0
    %7054 = vmatpush1.msra.mxu0 0.0
    %7055 = vmatprep.mubr.f32.mxu0 0.0
    %7056 = vmatmul.mubr.f32.gmra.mrb[0].mxu0 %v6986
    %v7057 = vpop.f32.mrb[0].mxu0
    %v7058 = vadd.f32 0.0, %v7057
    %v7059 = vpop.f32.mrb[0].mxu0
    %7060 = vmatprep.mubr.f32.mxu0 0.0
    %7061 = vmatmul.mubr.f32.gmra.mrb[0].mxu0 %v6989
    %v7062 = vpop.f32.mrb[0].mxu0
    %v7063 = vadd.f32 0.0, %v7062
    %v7064 = vpop.f32.mrb[0].mxu0
    %7065 = vdwg.mxu0
    %v7067 = vsel %vm904, %v4507, 0
    %v7070 = vsel %vm904, %v4512, 0
    %7072 = vmatprep.subr.mxu0 0.0
    %7073 = vmatpush1.msra.mxu0 %v240
    %7074 = vmatprep.subr.mxu0 0.0
    %7075 = vmatpush1.msra.mxu0 %v241
    %7076 = vmatprep.subr.mxu0 0.0
    %7077 = vmatpush1.msra.mxu0 0.0
    %7078 = vmatprep.subr.mxu0 0.0
    %7079 = vmatpush1.msra.mxu0 0.0
    %7080 = vmatprep.subr.mxu0 0.0
    %7081 = vmatpush1.msra.mxu0 0.0
    %7082 = vmatprep.subr.mxu0 0.0
    %7083 = vmatpush1.msra.mxu0 0.0
    %7084 = vmatprep.subr.mxu0 0.0
    %7085 = vmatpush1.msra.mxu0 0.0
    %7086 = vmatprep.subr.mxu0 0.0
    %7087 = vmatpush1.msra.mxu0 0.0
    %7088 = vmatprep.subr.mxu0 0.0
    %7089 = vmatpush1.msra.mxu0 0.0
    %7090 = vmatprep.subr.mxu0 0.0
    %7091 = vmatpush1.msra.mxu0 0.0
    %7092 = vmatprep.subr.mxu0 0.0
    %7093 = vmatpush1.msra.mxu0 0.0
    %7094 = vmatprep.subr.mxu0 0.0
    %7095 = vmatpush1.msra.mxu0 0.0
    %7096 = vmatprep.subr.mxu0 0.0
    %7097 = vmatpush1.msra.mxu0 0.0
    %7098 = vmatprep.subr.mxu0 0.0
    %7099 = vmatpush1.msra.mxu0 0.0
    %7100 = vmatprep.subr.mxu0 0.0
    %7101 = vmatpush1.msra.mxu0 0.0
    %7102 = vmatprep.subr.mxu0 0.0
    %7103 = vmatpush1.msra.mxu0 0.0
    %7104 = vmatprep.subr.mxu0 0.0
    %7105 = vmatpush1.msra.mxu0 0.0
    %7106 = vmatprep.subr.mxu0 0.0
    %7107 = vmatpush1.msra.mxu0 0.0
    %7108 = vmatprep.subr.mxu0 0.0
    %7109 = vmatpush1.msra.mxu0 0.0
    %7110 = vmatprep.subr.mxu0 0.0
    %7111 = vmatpush1.msra.mxu0 0.0
    %7112 = vmatprep.subr.mxu0 0.0
    %7113 = vmatpush1.msra.mxu0 0.0
    %7114 = vmatprep.subr.mxu0 0.0
    %7115 = vmatpush1.msra.mxu0 0.0
    %7116 = vmatprep.subr.mxu0 0.0
    %7117 = vmatpush1.msra.mxu0 0.0
    %7118 = vmatprep.subr.mxu0 0.0
    %7119 = vmatpush1.msra.mxu0 0.0
    %7120 = vmatprep.subr.mxu0 0.0
    %7121 = vmatpush1.msra.mxu0 0.0
    %7122 = vmatprep.subr.mxu0 0.0
    %7123 = vmatpush1.msra.mxu0 0.0
    %7124 = vmatprep.subr.mxu0 0.0
    %7125 = vmatpush1.msra.mxu0 0.0
    %7126 = vmatprep.subr.mxu0 0.0
    %7127 = vmatpush1.msra.mxu0 0.0
    %7128 = vmatprep.subr.mxu0 0.0
    %7129 = vmatpush1.msra.mxu0 0.0
    %7130 = vmatprep.subr.mxu0 0.0
    %7131 = vmatpush1.msra.mxu0 0.0
    %7132 = vmatprep.subr.mxu0 0.0
    %7133 = vmatpush1.msra.mxu0 0.0
    %7134 = vmatprep.subr.mxu0 0.0
    %7135 = vmatpush1.msra.mxu0 0.0
    %7136 = vmatprep.mubr.f32.mxu0 0.0
    %7137 = vmatmul.mubr.f32.gmra.mrb[0].mxu0 %v7067
    %v7138 = vpop.f32.mrb[0].mxu0
    %v7139 = vadd.f32 0.0, %v7138
    %v7140 = vpop.f32.mrb[0].mxu0
    %7141 = vmatprep.mubr.f32.mxu0 0.0
    %7142 = vmatmul.mubr.f32.gmra.mrb[0].mxu0 %v7070
    %v7143 = vpop.f32.mrb[0].mxu0
    %v7144 = vadd.f32 0.0, %v7143
    %v7145 = vpop.f32.mrb[0].mxu0
    %7146 = vdwg.mxu0
    %v7148 = vsel %vm904, %v4517, 0
    %v7151 = vsel %vm904, %v4522, 0
    %7153 = vmatprep.subr.mxu0 0.0
    %7154 = vmatpush1.msra.mxu0 %v242
    %7155 = vmatprep.subr.mxu0 0.0
    %7156 = vmatpush1.msra.mxu0 %v243
    %7157 = vmatprep.subr.mxu0 0.0
    %7158 = vmatpush1.msra.mxu0 0.0
    %7159 = vmatprep.subr.mxu0 0.0
    %7160 = vmatpush1.msra.mxu0 0.0
    %7161 = vmatprep.subr.mxu0 0.0
    %7162 = vmatpush1.msra.mxu0 0.0
    %7163 = vmatprep.subr.mxu0 0.0
    %7164 = vmatpush1.msra.mxu0 0.0
    %7165 = vmatprep.subr.mxu0 0.0
    %7166 = vmatpush1.msra.mxu0 0.0
    %7167 = vmatprep.subr.mxu0 0.0
    %7168 = vmatpush1.msra.mxu0 0.0
    %7169 = vmatprep.subr.mxu0 0.0
    %7170 = vmatpush1.msra.mxu0 0.0
    %7171 = vmatprep.subr.mxu0 0.0
    %7172 = vmatpush1.msra.mxu0 0.0
    %7173 = vmatprep.subr.mxu0 0.0
    %7174 = vmatpush1.msra.mxu0 0.0
    %7175 = vmatprep.subr.mxu0 0.0
    %7176 = vmatpush1.msra.mxu0 0.0
    %7177 = vmatprep.subr.mxu0 0.0
    %7178 = vmatpush1.msra.mxu0 0.0
    %7179 = vmatprep.subr.mxu0 0.0
    %7180 = vmatpush1.msra.mxu0 0.0
    %7181 = vmatprep.subr.mxu0 0.0
    %7182 = vmatpush1.msra.mxu0 0.0
    %7183 = vmatprep.subr.mxu0 0.0
    %7184 = vmatpush1.msra.mxu0 0.0
    %7185 = vmatprep.subr.mxu0 0.0
    %7186 = vmatpush1.msra.mxu0 0.0
    %7187 = vmatprep.subr.mxu0 0.0
    %7188 = vmatpush1.msra.mxu0 0.0
    %7189 = vmatprep.subr.mxu0 0.0
    %7190 = vmatpush1.msra.mxu0 0.0
    %7191 = vmatprep.subr.mxu0 0.0
    %7192 = vmatpush1.msra.mxu0 0.0
    %7193 = vmatprep.subr.mxu0 0.0
    %7194 = vmatpush1.msra.mxu0 0.0
    %7195 = vmatprep.subr.mxu0 0.0
    %7196 = vmatpush1.msra.mxu0 0.0
    %7197 = vmatprep.subr.mxu0 0.0
    %7198 = vmatpush1.msra.mxu0 0.0
    %7199 = vmatprep.subr.mxu0 0.0
    %7200 = vmatpush1.msra.mxu0 0.0
    %7201 = vmatprep.subr.mxu0 0.0
    %7202 = vmatpush1.msra.mxu0 0.0
    %7203 = vmatprep.subr.mxu0 0.0
    %7204 = vmatpush1.msra.mxu0 0.0
    %7205 = vmatprep.subr.mxu0 0.0
    %7206 = vmatpush1.msra.mxu0 0.0
    %7207 = vmatprep.subr.mxu0 0.0
    %7208 = vmatpush1.msra.mxu0 0.0
    %7209 = vmatprep.subr.mxu0 0.0
    %7210 = vmatpush1.msra.mxu0 0.0
    %7211 = vmatprep.subr.mxu0 0.0
    %7212 = vmatpush1.msra.mxu0 0.0
    %7213 = vmatprep.subr.mxu0 0.0
    %7214 = vmatpush1.msra.mxu0 0.0
    %7215 = vmatprep.subr.mxu0 0.0
    %7216 = vmatpush1.msra.mxu0 0.0
    %7217 = vmatprep.mubr.f32.mxu0 0.0
    %7218 = vmatmul.mubr.f32.gmra.mrb[0].mxu0 %v7148
    %v7219 = vpop.f32.mrb[0].mxu0
    %v7220 = vadd.f32 0.0, %v7219
    %v7221 = vpop.f32.mrb[0].mxu0
    %7222 = vmatprep.mubr.f32.mxu0 0.0
    %7223 = vmatmul.mubr.f32.gmra.mrb[0].mxu0 %v7151
    %v7224 = vpop.f32.mrb[0].mxu0
    %v7225 = vadd.f32 0.0, %v7224
    %v7226 = vpop.f32.mrb[0].mxu0
    %7227 = vdwg.mxu0
    %v7229 = vsel %vm904, %v4527, 0
    %v7232 = vsel %vm904, %v4532, 0
    %7234 = vmatprep.subr.mxu0 0.0
    %7235 = vmatpush1.msra.mxu0 %v244
    %7236 = vmatprep.subr.mxu0 0.0
    %7237 = vmatpush1.msra.mxu0 %v245
    %7238 = vmatprep.subr.mxu0 0.0
    %7239 = vmatpush1.msra.mxu0 0.0
    %7240 = vmatprep.subr.mxu0 0.0
    %7241 = vmatpush1.msra.mxu0 0.0
    %7242 = vmatprep.subr.mxu0 0.0
    %7243 = vmatpush1.msra.mxu0 0.0
    %7244 = vmatprep.subr.mxu0 0.0
    %7245 = vmatpush1.msra.mxu0 0.0
    %7246 = vmatprep.subr.mxu0 0.0
    %7247 = vmatpush1.msra.mxu0 0.0
    %7248 = vmatprep.subr.mxu0 0.0
    %7249 = vmatpush1.msra.mxu0 0.0
    %7250 = vmatprep.subr.mxu0 0.0
    %7251 = vmatpush1.msra.mxu0 0.0
    %7252 = vmatprep.subr.mxu0 0.0
    %7253 = vmatpush1.msra.mxu0 0.0
    %7254 = vmatprep.subr.mxu0 0.0
    %7255 = vmatpush1.msra.mxu0 0.0
    %7256 = vmatprep.subr.mxu0 0.0
    %7257 = vmatpush1.msra.mxu0 0.0
    %7258 = vmatprep.subr.mxu0 0.0
    %7259 = vmatpush1.msra.mxu0 0.0
    %7260 = vmatprep.subr.mxu0 0.0
    %7261 = vmatpush1.msra.mxu0 0.0
    %7262 = vmatprep.subr.mxu0 0.0
    %7263 = vmatpush1.msra.mxu0 0.0
    %7264 = vmatprep.subr.mxu0 0.0
    %7265 = vmatpush1.msra.mxu0 0.0
    %7266 = vmatprep.subr.mxu0 0.0
    %7267 = vmatpush1.msra.mxu0 0.0
    %7268 = vmatprep.subr.mxu0 0.0
    %7269 = vmatpush1.msra.mxu0 0.0
    %7270 = vmatprep.subr.mxu0 0.0
    %7271 = vmatpush1.msra.mxu0 0.0
    %7272 = vmatprep.subr.mxu0 0.0
    %7273 = vmatpush1.msra.mxu0 0.0
    %7274 = vmatprep.subr.mxu0 0.0
    %7275 = vmatpush1.msra.mxu0 0.0
    %7276 = vmatprep.subr.mxu0 0.0
    %7277 = vmatpush1.msra.mxu0 0.0
    %7278 = vmatprep.subr.mxu0 0.0
    %7279 = vmatpush1.msra.mxu0 0.0
    %7280 = vmatprep.subr.mxu0 0.0
    %7281 = vmatpush1.msra.mxu0 0.0
    %7282 = vmatprep.subr.mxu0 0.0
    %7283 = vmatpush1.msra.mxu0 0.0
    %7284 = vmatprep.subr.mxu0 0.0
    %7285 = vmatpush1.msra.mxu0 0.0
    %7286 = vmatprep.subr.mxu0 0.0
    %7287 = vmatpush1.msra.mxu0 0.0
    %7288 = vmatprep.subr.mxu0 0.0
    %7289 = vmatpush1.msra.mxu0 0.0
    %7290 = vmatprep.subr.mxu0 0.0
    %7291 = vmatpush1.msra.mxu0 0.0
    %7292 = vmatprep.subr.mxu0 0.0
    %7293 = vmatpush1.msra.mxu0 0.0
    %7294 = vmatprep.subr.mxu0 0.0
    %7295 = vmatpush1.msra.mxu0 0.0
    %7296 = vmatprep.subr.mxu0 0.0
    %7297 = vmatpush1.msra.mxu0 0.0
    %7298 = vmatprep.mubr.f32.mxu0 0.0
    %7299 = vmatmul.mubr.f32.gmra.mrb[0].mxu0 %v7229
    %v7300 = vpop.f32.mrb[0].mxu0
    %v7301 = vadd.f32 0.0, %v7300
    %v7302 = vpop.f32.mrb[0].mxu0
    %7303 = vmatprep.mubr.f32.mxu0 0.0
    %7304 = vmatmul.mubr.f32.gmra.mrb[0].mxu0 %v7232
    %v7305 = vpop.f32.mrb[0].mxu0
    %v7306 = vadd.f32 0.0, %v7305
    %v7307 = vpop.f32.mrb[0].mxu0
    %7308 = vdwg.mxu0
    %v7310 = vsel %vm904, %v4537, 0
    %v7313 = vsel %vm904, %v4542, 0
    %7315 = vmatprep.subr.mxu0 0.0
    %7316 = vmatpush1.msra.mxu0 %v246
    %7317 = vmatprep.subr.mxu0 0.0
    %7318 = vmatpush1.msra.mxu0 %v247
    %7319 = vmatprep.subr.mxu0 0.0
    %7320 = vmatpush1.msra.mxu0 0.0
    %7321 = vmatprep.subr.mxu0 0.0
    %7322 = vmatpush1.msra.mxu0 0.0
    %7323 = vmatprep.subr.mxu0 0.0
    %7324 = vmatpush1.msra.mxu0 0.0
    %7325 = vmatprep.subr.mxu0 0.0
    %7326 = vmatpush1.msra.mxu0 0.0
    %7327 = vmatprep.subr.mxu0 0.0
    %7328 = vmatpush1.msra.mxu0 0.0
    %7329 = vmatprep.subr.mxu0 0.0
    %7330 = vmatpush1.msra.mxu0 0.0
    %7331 = vmatprep.subr.mxu0 0.0
    %7332 = vmatpush1.msra.mxu0 0.0
    %7333 = vmatprep.subr.mxu0 0.0
    %7334 = vmatpush1.msra.mxu0 0.0
    %7335 = vmatprep.subr.mxu0 0.0
    %7336 = vmatpush1.msra.mxu0 0.0
    %7337 = vmatprep.subr.mxu0 0.0
    %7338 = vmatpush1.msra.mxu0 0.0
    %7339 = vmatprep.subr.mxu0 0.0
    %7340 = vmatpush1.msra.mxu0 0.0
    %7341 = vmatprep.subr.mxu0 0.0
    %7342 = vmatpush1.msra.mxu0 0.0
    %7343 = vmatprep.subr.mxu0 0.0
    %7344 = vmatpush1.msra.mxu0 0.0
    %7345 = vmatprep.subr.mxu0 0.0
    %7346 = vmatpush1.msra.mxu0 0.0
    %7347 = vmatprep.subr.mxu0 0.0
    %7348 = vmatpush1.msra.mxu0 0.0
    %7349 = vmatprep.subr.mxu0 0.0
    %7350 = vmatpush1.msra.mxu0 0.0
    %7351 = vmatprep.subr.mxu0 0.0
    %7352 = vmatpush1.msra.mxu0 0.0
    %7353 = vmatprep.subr.mxu0 0.0
    %7354 = vmatpush1.msra.mxu0 0.0
    %7355 = vmatprep.subr.mxu0 0.0
    %7356 = vmatpush1.msra.mxu0 0.0
    %7357 = vmatprep.subr.mxu0 0.0
    %7358 = vmatpush1.msra.mxu0 0.0
    %7359 = vmatprep.subr.mxu0 0.0
    %7360 = vmatpush1.msra.mxu0 0.0
    %7361 = vmatprep.subr.mxu0 0.0
    %7362 = vmatpush1.msra.mxu0 0.0
    %7363 = vmatprep.subr.mxu0 0.0
    %7364 = vmatpush1.msra.mxu0 0.0
    %7365 = vmatprep.subr.mxu0 0.0
    %7366 = vmatpush1.msra.mxu0 0.0
    %7367 = vmatprep.subr.mxu0 0.0
    %7368 = vmatpush1.msra.mxu0 0.0
    %7369 = vmatprep.subr.mxu0 0.0
    %7370 = vmatpush1.msra.mxu0 0.0
    %7371 = vmatprep.subr.mxu0 0.0
    %7372 = vmatpush1.msra.mxu0 0.0
    %7373 = vmatprep.subr.mxu0 0.0
    %7374 = vmatpush1.msra.mxu0 0.0
    %7375 = vmatprep.subr.mxu0 0.0
    %7376 = vmatpush1.msra.mxu0 0.0
    %7377 = vmatprep.subr.mxu0 0.0
    %7378 = vmatpush1.msra.mxu0 0.0
    %7379 = vmatprep.mubr.f32.mxu0 0.0
    %7380 = vmatmul.mubr.f32.gmra.mrb[0].mxu0 %v7310
    %v7381 = vpop.f32.mrb[0].mxu0
    %v7382 = vadd.f32 0.0, %v7381
    %v7383 = vpop.f32.mrb[0].mxu0
    %7384 = vmatprep.mubr.f32.mxu0 0.0
    %7385 = vmatmul.mubr.f32.gmra.mrb[0].mxu0 %v7313
    %v7386 = vpop.f32.mrb[0].mxu0
    %v7387 = vadd.f32 0.0, %v7386
    %v7388 = vpop.f32.mrb[0].mxu0
    %7389 = vdwg.mxu0
    %v7391 = vsel %vm904, %v4547, 0
    %v7394 = vsel %vm904, %v4552, 0
    %7396 = vmatprep.subr.mxu0 0.0
    %7397 = vmatpush1.msra.mxu0 %v248
    %7398 = vmatprep.subr.mxu0 0.0
    %7399 = vmatpush1.msra.mxu0 %v249
    %7400 = vmatprep.subr.mxu0 0.0
    %7401 = vmatpush1.msra.mxu0 0.0
    %7402 = vmatprep.subr.mxu0 0.0
    %7403 = vmatpush1.msra.mxu0 0.0
    %7404 = vmatprep.subr.mxu0 0.0
    %7405 = vmatpush1.msra.mxu0 0.0
    %7406 = vmatprep.subr.mxu0 0.0
    %7407 = vmatpush1.msra.mxu0 0.0
    %7408 = vmatprep.subr.mxu0 0.0
    %7409 = vmatpush1.msra.mxu0 0.0
    %7410 = vmatprep.subr.mxu0 0.0
    %7411 = vmatpush1.msra.mxu0 0.0
    %7412 = vmatprep.subr.mxu0 0.0
    %7413 = vmatpush1.msra.mxu0 0.0
    %7414 = vmatprep.subr.mxu0 0.0
    %7415 = vmatpush1.msra.mxu0 0.0
    %7416 = vmatprep.subr.mxu0 0.0
    %7417 = vmatpush1.msra.mxu0 0.0
    %7418 = vmatprep.subr.mxu0 0.0
    %7419 = vmatpush1.msra.mxu0 0.0
    %7420 = vmatprep.subr.mxu0 0.0
    %7421 = vmatpush1.msra.mxu0 0.0
    %7422 = vmatprep.subr.mxu0 0.0
    %7423 = vmatpush1.msra.mxu0 0.0
    %7424 = vmatprep.subr.mxu0 0.0
    %7425 = vmatpush1.msra.mxu0 0.0
    %7426 = vmatprep.subr.mxu0 0.0
    %7427 = vmatpush1.msra.mxu0 0.0
    %7428 = vmatprep.subr.mxu0 0.0
    %7429 = vmatpush1.msra.mxu0 0.0
    %7430 = vmatprep.subr.mxu0 0.0
    %7431 = vmatpush1.msra.mxu0 0.0
    %7432 = vmatprep.subr.mxu0 0.0
    %7433 = vmatpush1.msra.mxu0 0.0
    %7434 = vmatprep.subr.mxu0 0.0
    %7435 = vmatpush1.msra.mxu0 0.0
    %7436 = vmatprep.subr.mxu0 0.0
    %7437 = vmatpush1.msra.mxu0 0.0
    %7438 = vmatprep.subr.mxu0 0.0
    %7439 = vmatpush1.msra.mxu0 0.0
    %7440 = vmatprep.subr.mxu0 0.0
    %7441 = vmatpush1.msra.mxu0 0.0
    %7442 = vmatprep.subr.mxu0 0.0
    %7443 = vmatpush1.msra.mxu0 0.0
    %7444 = vmatprep.subr.mxu0 0.0
    %7445 = vmatpush1.msra.mxu0 0.0
    %7446 = vmatprep.subr.mxu0 0.0
    %7447 = vmatpush1.msra.mxu0 0.0
    %7448 = vmatprep.subr.mxu0 0.0
    %7449 = vmatpush1.msra.mxu0 0.0
    %7450 = vmatprep.subr.mxu0 0.0
    %7451 = vmatpush1.msra.mxu0 0.0
    %7452 = vmatprep.subr.mxu0 0.0
    %7453 = vmatpush1.msra.mxu0 0.0
    %7454 = vmatprep.subr.mxu0 0.0
    %7455 = vmatpush1.msra.mxu0 0.0
    %7456 = vmatprep.subr.mxu0 0.0
    %7457 = vmatpush1.msra.mxu0 0.0
    %7458 = vmatprep.subr.mxu0 0.0
    %7459 = vmatpush1.msra.mxu0 0.0
    %7460 = vmatprep.mubr.f32.mxu0 0.0
    %7461 = vmatmul.mubr.f32.gmra.mrb[0].mxu0 %v7391
    %v7462 = vpop.f32.mrb[0].mxu0
    %v7463 = vadd.f32 0.0, %v7462
    %v7464 = vpop.f32.mrb[0].mxu0
    %7465 = vmatprep.mubr.f32.mxu0 0.0
    %7466 = vmatmul.mubr.f32.gmra.mrb[0].mxu0 %v7394
    %v7467 = vpop.f32.mrb[0].mxu0
    %v7468 = vadd.f32 0.0, %v7467
    %v7469 = vpop.f32.mrb[0].mxu0
    %7470 = vdwg.mxu0
    %v7471 = vsel %vm904, %v4628, 0.0
    %v7472 = vsel %vm904, %v4709, 0.0
    %v7473 = vadd.f32 %v7471, %v7472
    %v7474 = vsel %vm904, %v4790, 0.0
    %v7475 = vadd.f32 %v7473, %v7474
    %v7476 = vsel %vm904, %v4871, 0.0
    %v7477 = vadd.f32 %v7475, %v7476
    %v7478 = vsel %vm904, %v4952, 0.0
    %v7479 = vadd.f32 %v7477, %v7478
    %v7480 = vsel %vm904, %v5033, 0.0
    %v7481 = vadd.f32 %v7479, %v7480
    %v7482 = vsel %vm904, %v5114, 0.0
    %v7483 = vadd.f32 %v7481, %v7482
    %v7484 = vsel %vm904, %v5195, 0.0
    %v7485 = vadd.f32 %v7483, %v7484
    %v7486 = vsel %vm904, %v5276, 0.0
    %v7487 = vadd.f32 %v7485, %v7486
    %v7488 = vsel %vm904, %v4633, 0.0
    %v7489 = vsel %vm904, %v4714, 0.0
    %v7490 = vadd.f32 %v7488, %v7489
    %v7491 = vsel %vm904, %v4795, 0.0
    %v7492 = vadd.f32 %v7490, %v7491
    %v7493 = vsel %vm904, %v4876, 0.0
    %v7494 = vadd.f32 %v7492, %v7493
    %v7495 = vsel %vm904, %v4957, 0.0
    %v7496 = vadd.f32 %v7494, %v7495
    %v7497 = vsel %vm904, %v5038, 0.0
    %v7498 = vadd.f32 %v7496, %v7497
    %v7499 = vsel %vm904, %v5119, 0.0
    %v7500 = vadd.f32 %v7498, %v7499
    %v7501 = vsel %vm904, %v5200, 0.0
    %v7502 = vadd.f32 %v7500, %v7501
    %v7503 = vsel %vm904, %v5281, 0.0
    %v7504 = vadd.f32 %v7502, %v7503
    %v7505 = vsel %vm904, %v5357, 0.0
    %v7506 = vsel %vm904, %v5438, 0.0
    %v7507 = vadd.f32 %v7505, %v7506
    %v7508 = vsel %vm904, %v5519, 0.0
    %v7509 = vadd.f32 %v7507, %v7508
    %v7510 = vsel %vm904, %v5600, 0.0
    %v7511 = vadd.f32 %v7509, %v7510
    %v7512 = vsel %vm904, %v5681, 0.0
    %v7513 = vadd.f32 %v7511, %v7512
    %v7514 = vsel %vm904, %v5762, 0.0
    %v7515 = vadd.f32 %v7513, %v7514
    %v7516 = vsel %vm904, %v5843, 0.0
    %v7517 = vadd.f32 %v7515, %v7516
    %v7518 = vsel %vm904, %v5924, 0.0
    %v7519 = vadd.f32 %v7517, %v7518
    %v7520 = vsel %vm904, %v6005, 0.0
    %v7521 = vadd.f32 %v7519, %v7520
    %v7522 = vsel %vm904, %v5362, 0.0
    %v7523 = vsel %vm904, %v5443, 0.0
    %v7524 = vadd.f32 %v7522, %v7523
    %v7525 = vsel %vm904, %v5524, 0.0
    %v7526 = vadd.f32 %v7524, %v7525
    %v7527 = vsel %vm904, %v5605, 0.0
    %v7528 = vadd.f32 %v7526, %v7527
    %v7529 = vsel %vm904, %v5686, 0.0
    %v7530 = vadd.f32 %v7528, %v7529
    %v7531 = vsel %vm904, %v5767, 0.0
    %v7532 = vadd.f32 %v7530, %v7531
    %v7533 = vsel %vm904, %v5848, 0.0
    %v7534 = vadd.f32 %v7532, %v7533
    %v7535 = vsel %vm904, %v5929, 0.0
    %v7536 = vadd.f32 %v7534, %v7535
    %v7537 = vsel %vm904, %v6010, 0.0
    %v7538 = vadd.f32 %v7536, %v7537
    %v7539 = vsel %vm904, %v6086, 0.0
    %v7540 = vsel %vm904, %v6167, 0.0
    %v7541 = vadd.f32 %v7539, %v7540
    %v7542 = vsel %vm904, %v6248, 0.0
    %v7543 = vadd.f32 %v7541, %v7542
    %v7544 = vsel %vm904, %v6329, 0.0
    %v7545 = vadd.f32 %v7543, %v7544
    %v7546 = vsel %vm904, %v6410, 0.0
    %v7547 = vadd.f32 %v7545, %v7546
    %v7548 = vsel %vm904, %v6491, 0.0
    %v7549 = vadd.f32 %v7547, %v7548
    %v7550 = vsel %vm904, %v6572, 0.0
    %v7551 = vadd.f32 %v7549, %v7550
    %v7552 = vsel %vm904, %v6653, 0.0
    %v7553 = vadd.f32 %v7551, %v7552
    %v7554 = vsel %vm904, %v6734, 0.0
    %v7555 = vadd.f32 %v7553, %v7554
    %v7556 = vsel %vm904, %v6091, 0.0
    %v7557 = vsel %vm904, %v6172, 0.0
    %v7558 = vadd.f32 %v7556, %v7557
    %v7559 = vsel %vm904, %v6253, 0.0
    %v7560 = vadd.f32 %v7558, %v7559
    %v7561 = vsel %vm904, %v6334, 0.0
    %v7562 = vadd.f32 %v7560, %v7561
    %v7563 = vsel %vm904, %v6415, 0.0
    %v7564 = vadd.f32 %v7562, %v7563
    %v7565 = vsel %vm904, %v6496, 0.0
    %v7566 = vadd.f32 %v7564, %v7565
    %v7567 = vsel %vm904, %v6577, 0.0
    %v7568 = vadd.f32 %v7566, %v7567
    %v7569 = vsel %vm904, %v6658, 0.0
    %v7570 = vadd.f32 %v7568, %v7569
    %v7571 = vsel %vm904, %v6739, 0.0
    %v7572 = vadd.f32 %v7570, %v7571
    %v7573 = vsel %vm904, %v6815, 0.0
    %v7574 = vsel %vm904, %v6896, 0.0
    %v7575 = vadd.f32 %v7573, %v7574
    %v7576 = vsel %vm904, %v6977, 0.0
    %v7577 = vadd.f32 %v7575, %v7576
    %v7578 = vsel %vm904, %v7058, 0.0
    %v7579 = vadd.f32 %v7577, %v7578
    %v7580 = vsel %vm904, %v7139, 0.0
    %v7581 = vadd.f32 %v7579, %v7580
    %v7582 = vsel %vm904, %v7220, 0.0
    %v7583 = vadd.f32 %v7581, %v7582
    %v7584 = vsel %vm904, %v7301, 0.0
    %v7585 = vadd.f32 %v7583, %v7584
    %v7586 = vsel %vm904, %v7382, 0.0
    %v7587 = vadd.f32 %v7585, %v7586
    %v7588 = vsel %vm904, %v7463, 0.0
    %v7589 = vadd.f32 %v7587, %v7588
    %v7590 = vsel %vm904, %v6820, 0.0
    %v7591 = vsel %vm904, %v6901, 0.0
    %v7592 = vadd.f32 %v7590, %v7591
    %v7593 = vsel %vm904, %v6982, 0.0
    %v7594 = vadd.f32 %v7592, %v7593
    %v7595 = vsel %vm904, %v7063, 0.0
    %v7596 = vadd.f32 %v7594, %v7595
    %v7597 = vsel %vm904, %v7144, 0.0
    %v7598 = vadd.f32 %v7596, %v7597
    %v7599 = vsel %vm904, %v7225, 0.0
    %v7600 = vadd.f32 %v7598, %v7599
    %v7601 = vsel %vm904, %v7306, 0.0
    %v7602 = vadd.f32 %v7600, %v7601
    %v7603 = vsel %vm904, %v7387, 0.0
    %v7604 = vadd.f32 %v7602, %v7603
    %v7605 = vsel %vm904, %v7468, 0.0
    %v7606 = vadd.f32 %v7604, %v7605
    %v7607 = vadd.f32 %v7487, %v3979
    %v7608 = vadd.f32 %v7504, %v3979
    %v7609 = vadd.f32 %v7521, %v3983
    %v7610 = vadd.f32 %v7538, %v3983
    %v7611 = vadd.f32 %v7555, %v3987
    %v7612 = vadd.f32 %v7572, %v3987
    %v7613 = vadd.f32 %v7589, %v3991
    %v7614 = vadd.f32 %v7606, %v3991
    %v7615 = vsel %vm904, %v7607, 0.0
    %7616 = vadd.xlane.f32.xlu0 %v7615
    %v7617 = vpop.xlane.xlu0 %7616
    %v7618 = vsel %vm904, %v7608, 0.0
    %7619 = vadd.xlane.f32.xlu0 %v7618
    %v7620 = vpop.xlane.xlu0 %7619
    %v7621 = vsel %vm904, %v7609, 0.0
    %7622 = vadd.xlane.f32.xlu0 %v7621
    %v7623 = vpop.xlane.xlu0 %7622
    %v7624 = vsel %vm904, %v7610, 0.0
    %7625 = vadd.xlane.f32.xlu0 %v7624
    %v7626 = vpop.xlane.xlu0 %7625
    %v7627 = vsel %vm904, %v7611, 0.0
    %7628 = vadd.xlane.f32.xlu0 %v7627
    %v7629 = vpop.xlane.xlu0 %7628
    %v7630 = vsel %vm904, %v7612, 0.0
    %7631 = vadd.xlane.f32.xlu0 %v7630
    %v7632 = vpop.xlane.xlu0 %7631
    %v7633 = vsel %vm904, %v7613, 0.0
    %7634 = vadd.xlane.f32.xlu0 %v7633
    %v7635 = vpop.xlane.xlu0 %7634
    %v7636 = vsel %vm904, %v7614, 0.0
    %7637 = vadd.xlane.f32.xlu0 %v7636
    %v7638 = vpop.xlane.xlu0 %7637
    %v7639 = vadd.f32 %v7617, %v7620
    %v7640 = vrot.slane %v7639, 4
    %v7641 = vadd.f32 %v7639, %v7640
    %v7642 = vrot.slane %v7641, 2
    %v7643 = vadd.f32 %v7641, %v7642
    %v7644 = vrot.slane %v7643, 1
    %v7645 = vadd.f32 %v7643, %v7644
    %v7646 = vadd.f32 %v7623, %v7626
    %v7647 = vrot.slane %v7646, 4
    %v7648 = vadd.f32 %v7646, %v7647
    %v7649 = vrot.slane %v7648, 2
    %v7650 = vadd.f32 %v7648, %v7649
    %v7651 = vrot.slane %v7650, 1
    %v7652 = vadd.f32 %v7650, %v7651
    %v7653 = vadd.f32 %v7629, %v7632
    %v7654 = vrot.slane %v7653, 4
    %v7655 = vadd.f32 %v7653, %v7654
    %v7656 = vrot.slane %v7655, 2
    %v7657 = vadd.f32 %v7655, %v7656
    %v7658 = vrot.slane %v7657, 1
    %v7659 = vadd.f32 %v7657, %v7658
    %v7660 = vadd.f32 %v7635, %v7638
    %v7661 = vrot.slane %v7660, 4
    %v7662 = vadd.f32 %v7660, %v7661
    %v7663 = vrot.slane %v7662, 2
    %v7664 = vadd.f32 %v7662, %v7663
    %v7665 = vrot.slane %v7664, 1
    %v7666 = vadd.f32 %v7664, %v7665
    %v7667 = vadd.f32 %v4053, %v7645
    %v7668 = vadd.f32 %v4054, %v7652
    %v7669 = vadd.f32 %v4055, %v7659
    %v7670 = vadd.f32 %v4056, %v7666
    %v7671 = vmul.f32 %v7607, %v7607
    %v7672 = vmul.f32 %v7608, %v7608
    %v7673 = vmul.f32 %v7609, %v7609
    %v7674 = vmul.f32 %v7610, %v7610
    %v7675 = vmul.f32 %v7611, %v7611
    %v7676 = vmul.f32 %v7612, %v7612
    %v7677 = vmul.f32 %v7613, %v7613
    %v7678 = vmul.f32 %v7614, %v7614
    %v7679 = vsel %vm904, %v7671, 0.0
    %7680 = vadd.xlane.f32.xlu0 %v7679
    %v7681 = vpop.xlane.xlu0 %7680
    %v7682 = vsel %vm904, %v7672, 0.0
    %7683 = vadd.xlane.f32.xlu0 %v7682
    %v7684 = vpop.xlane.xlu0 %7683
    %v7685 = vsel %vm904, %v7673, 0.0
    %7686 = vadd.xlane.f32.xlu0 %v7685
    %v7687 = vpop.xlane.xlu0 %7686
    %v7688 = vsel %vm904, %v7674, 0.0
    %7689 = vadd.xlane.f32.xlu0 %v7688
    %v7690 = vpop.xlane.xlu0 %7689
    %v7691 = vsel %vm904, %v7675, 0.0
    %7692 = vadd.xlane.f32.xlu0 %v7691
    %v7693 = vpop.xlane.xlu0 %7692
    %v7694 = vsel %vm904, %v7676, 0.0
    %7695 = vadd.xlane.f32.xlu0 %v7694
    %v7696 = vpop.xlane.xlu0 %7695
    %v7697 = vsel %vm904, %v7677, 0.0
    %7698 = vadd.xlane.f32.xlu0 %v7697
    %v7699 = vpop.xlane.xlu0 %7698
    %v7700 = vsel %vm904, %v7678, 0.0
    %7701 = vadd.xlane.f32.xlu0 %v7700
    %v7702 = vpop.xlane.xlu0 %7701
    %v7703 = vadd.f32 %v7681, %v7684
    %v7704 = vrot.slane %v7703, 4
    %v7705 = vadd.f32 %v7703, %v7704
    %v7706 = vrot.slane %v7705, 2
    %v7707 = vadd.f32 %v7705, %v7706
    %v7708 = vrot.slane %v7707, 1
    %v7709 = vadd.f32 %v7707, %v7708
    %v7710 = vadd.f32 %v7687, %v7690
    %v7711 = vrot.slane %v7710, 4
    %v7712 = vadd.f32 %v7710, %v7711
    %v7713 = vrot.slane %v7712, 2
    %v7714 = vadd.f32 %v7712, %v7713
    %v7715 = vrot.slane %v7714, 1
    %v7716 = vadd.f32 %v7714, %v7715
    %v7717 = vadd.f32 %v7693, %v7696
    %v7718 = vrot.slane %v7717, 4
    %v7719 = vadd.f32 %v7717, %v7718
    %v7720 = vrot.slane %v7719, 2
    %v7721 = vadd.f32 %v7719, %v7720
    %v7722 = vrot.slane %v7721, 1
    %v7723 = vadd.f32 %v7721, %v7722
    %v7724 = vadd.f32 %v7699, %v7702
    %v7725 = vrot.slane %v7724, 4
    %v7726 = vadd.f32 %v7724, %v7725
    %v7727 = vrot.slane %v7726, 2
    %v7728 = vadd.f32 %v7726, %v7727
    %v7729 = vrot.slane %v7728, 1
    %v7730 = vadd.f32 %v7728, %v7729
    %v7731 = vadd.f32 %v4117, %v7709
    %v7732 = vadd.f32 %v4118, %v7716
    %v7733 = vadd.f32 %v4119, %v7723
    %v7734 = vadd.f32 %v4120, %v7730
    %v7735 = vmul.f32 %v7667, 0.001953125
    %v7736 = vmul.f32 %v7668, 0.001953125
    %v7737 = vmul.f32 %v7669, 0.001953125
    %v7738 = vmul.f32 %v7670, 0.001953125
    %v7739 = vmul.f32 %v7731, 0.001953125
    %v7740 = vmul.f32 %v7732, 0.001953125
    %v7741 = vmul.f32 %v7733, 0.001953125
    %v7742 = vmul.f32 %v7734, 0.001953125
    %v7743 = vmul.f32 %v7735, %v7735
    %v7744 = vmul.f32 %v7736, %v7736
    %v7745 = vmul.f32 %v7737, %v7737
    %v7746 = vmul.f32 %v7738, %v7738
    %v7747 = vsub.f32 %v7739, %v7743
    %v7748 = vsub.f32 %v7740, %v7744
    %v7749 = vsub.f32 %v7741, %v7745
    %v7750 = vsub.f32 %v7742, %v7746
    %v7751 = vmax.f32 %v7747, 0.0
    %v7752 = vmax.f32 %v7748, 0.0
    %v7753 = vmax.f32 %v7749, 0.0
    %v7754 = vmax.f32 %v7750, 0.0
    %v7755 = vld [vmem:[#allocation10] sm:$0x1]
    %v7756 = vld [vmem:[#allocation10 + $0x1] sm:$0x1]
    %v7757 = vld [vmem:[#allocation10 + $0x2] sm:$0x1]
    %v7758 = vld [vmem:[#allocation10 + $0x3] sm:$0x1]
    %v7759 = vadd.f32 %v7751, 1e-05
    %v7760 = vadd.f32 %v7752, 1e-05
    %v7761 = vadd.f32 %v7753, 1e-05
    %v7762 = vadd.f32 %v7754, 1e-05
    %v7763 = vrsqrt.pop %v7759
    %v7764 = vrsqrt.pop %v7760
    %v7765 = vrsqrt.pop %v7761
    %v7766 = vrsqrt.pop %v7762
    %v7767 = vmul.f32 %v7755, %v7763
    %v7768 = vmul.f32 %v7756, %v7764
    %v7769 = vmul.f32 %v7757, %v7765
    %v7770 = vmul.f32 %v7758, %v7766
    %v7771 = vld [vmem:[#allocation11] sm:$0x1]
    %v7772 = vld [vmem:[#allocation11 + $0x1] sm:$0x1]
    %v7773 = vld [vmem:[#allocation11 + $0x2] sm:$0x1]
    %v7774 = vld [vmem:[#allocation11 + $0x3] sm:$0x1]
    %v7775 = vmul.f32 %v7735, %v7767
    %v7776 = vmul.f32 %v7736, %v7768
    %v7777 = vmul.f32 %v7737, %v7769
    %v7778 = vmul.f32 %v7738, %v7770
    %v7779 = vsub.f32 %v7771, %v7775
    %v7780 = vsub.f32 %v7772, %v7776
    %v7781 = vsub.f32 %v7773, %v7777
    %v7782 = vsub.f32 %v7774, %v7778
    %v7787 = vlaneseq
    %v7788 = vshrl.u32 %v7787, 7
    %v7789 = vsub.s32 0, %v7788
    %v7790 = vrot.slane %v7767, %v7789
    %v7791 = vlaneseq
    %v7792 = vshrl.u32 %v7791, 7
    %v7793 = vsub.s32 0, %v7792
    %v7794 = vrot.slane %v7768, %v7793
    %v7795 = vlaneseq
    %v7796 = vshrl.u32 %v7795, 7
    %v7797 = vsub.s32 0, %v7796
    %v7798 = vrot.slane %v7769, %v7797
    %v7799 = vlaneseq
    %v7800 = vshrl.u32 %v7799, 7
    %v7801 = vsub.s32 0, %v7800
    %v7802 = vrot.slane %v7770, %v7801
    %7803 = vset.pattern.permute.xlu0 0
    %7804 = vperm.xlu0 %7803, %v7790
    %v7805 = vpop.permute.xlu0 %7804
    %7807 = vset.pattern.permute.xlu0 0
    %7808 = vperm.xlu0 %7807, %v7794
    %v7809 = vpop.permute.xlu0 %7808
    %7811 = vset.pattern.permute.xlu0 0
    %7812 = vperm.xlu0 %7811, %v7798
    %v7813 = vpop.permute.xlu0 %7812
    %7815 = vset.pattern.permute.xlu0 0
    %7816 = vperm.xlu0 %7815, %v7802
    %v7817 = vpop.permute.xlu0 %7816
    %v7819 = vmul.f32 %v3993, %v7805
    %v7820 = vmul.f32 %v3994, %v7805
    %v7821 = vmul.f32 %v3995, %v7809
    %v7822 = vmul.f32 %v3996, %v7809
    %v7823 = vmul.f32 %v3997, %v7813
    %v7824 = vmul.f32 %v3998, %v7813
    %v7825 = vmul.f32 %v3999, %v7817
    %v7826 = vmul.f32 %v4000, %v7817
    %v7831 = vlaneseq
    %v7832 = vshrl.u32 %v7831, 7
    %v7833 = vsub.s32 0, %v7832
    %v7834 = vrot.slane %v7779, %v7833
    %v7835 = vlaneseq
    %v7836 = vshrl.u32 %v7835, 7
    %v7837 = vsub.s32 0, %v7836
    %v7838 = vrot.slane %v7780, %v7837
    %v7839 = vlaneseq
    %v7840 = vshrl.u32 %v7839, 7
    %v7841 = vsub.s32 0, %v7840
    %v7842 = vrot.slane %v7781, %v7841
    %v7843 = vlaneseq
    %v7844 = vshrl.u32 %v7843, 7
    %v7845 = vsub.s32 0, %v7844
    %v7846 = vrot.slane %v7782, %v7845
    %7847 = vset.pattern.permute.xlu0 0
    %7848 = vperm.xlu0 %7847, %v7834
    %v7849 = vpop.permute.xlu0 %7848
    %7851 = vset.pattern.permute.xlu0 0
    %7852 = vperm.xlu0 %7851, %v7838
    %v7853 = vpop.permute.xlu0 %7852
    %7855 = vset.pattern.permute.xlu0 0
    %7856 = vperm.xlu0 %7855, %v7842
    %v7857 = vpop.permute.xlu0 %7856
    %7859 = vset.pattern.permute.xlu0 0
    %7860 = vperm.xlu0 %7859, %v7846
    %v7861 = vpop.permute.xlu0 %7860
    %v7863 = vadd.f32 %v7819, %v7849
    %v7864 = vadd.f32 %v7820, %v7849
    %v7865 = vadd.f32 %v7821, %v7853
    %v7866 = vadd.f32 %v7822, %v7853
    %v7867 = vadd.f32 %v7823, %v7857
    %v7868 = vadd.f32 %v7824, %v7857
    %v7869 = vadd.f32 %v7825, %v7861
    %v7870 = vadd.f32 %v7826, %v7861
    %v7871 = vmax.f32 %v7863, 0.0
    %v7872 = vmax.f32 %v7864, 0.0
    %v7873 = vmax.f32 %v7865, 0.0
    %v7874 = vmax.f32 %v7866, 0.0
    %v7875 = vmax.f32 %v7867, 0.0
    %v7876 = vmax.f32 %v7868, 0.0
    %v7877 = vmax.f32 %v7869, 0.0
    %v7878 = vmax.f32 %v7870, 0.0
    %7879 = vst.msk [vmem:[#allocation13] sm:$0xff] %vm904, %v7871
    %7880 = vst.msk [vmem:[#allocation13 + $0x8] sm:$0xff] %vm904, %v7872
    %7881 = vst.msk [vmem:[#allocation13 + $0x10] sm:$0xff] %vm904, %v7873
    %7882 = vst.msk [vmem:[#allocation13 + $0x18] sm:$0xff] %vm904, %v7874
    %7883 = vst.msk [vmem:[#allocation13 + $0x20] sm:$0xff] %vm904, %v7875
    %7884 = vst.msk [vmem:[#allocation13 + $0x28] sm:$0xff] %vm904, %v7876
    %7885 = vst.msk [vmem:[#allocation13 + $0x30] sm:$0xff] %vm904, %v7877
    %7886 = vst.msk [vmem:[#allocation13 + $0x38] sm:$0xff] %vm904, %v7878
    %v7887 = vmul.f32 %v7607, %v7805
    %v7888 = vmul.f32 %v7608, %v7805
    %v7889 = vmul.f32 %v7609, %v7809
    %v7890 = vmul.f32 %v7610, %v7809
    %v7891 = vmul.f32 %v7611, %v7813
    %v7892 = vmul.f32 %v7612, %v7813
    %v7893 = vmul.f32 %v7613, %v7817
    %v7894 = vmul.f32 %v7614, %v7817
    %v7895 = vadd.f32 %v7887, %v7849
    %v7896 = vadd.f32 %v7888, %v7849
    %v7897 = vadd.f32 %v7889, %v7853
    %v7898 = vadd.f32 %v7890, %v7853
    %v7899 = vadd.f32 %v7891, %v7857
    %v7900 = vadd.f32 %v7892, %v7857
    %v7901 = vadd.f32 %v7893, %v7861
    %v7902 = vadd.f32 %v7894, %v7861
    %v7903 = vmax.f32 %v7895, 0.0
    %v7904 = vmax.f32 %v7896, 0.0
    %v7905 = vmax.f32 %v7897, 0.0
    %v7906 = vmax.f32 %v7898, 0.0
    %v7907 = vmax.f32 %v7899, 0.0
    %v7908 = vmax.f32 %v7900, 0.0
    %v7909 = vmax.f32 %v7901, 0.0
    %v7910 = vmax.f32 %v7902, 0.0
    %s7911 = scalar_lea.vmem [#allocation13], 64
    %7912 = vst.msk [vmem:[%s7911] sm:$0xff] %vm904, %v7903
    %7913 = vst.msk [vmem:[%s7911 + $0x8] sm:$0xff] %vm904, %v7904
    %7914 = vst.msk [vmem:[%s7911 + $0x10] sm:$0xff] %vm904, %v7905
    %7915 = vst.msk [vmem:[%s7911 + $0x18] sm:$0xff] %vm904, %v7906
    %7916 = vst.msk [vmem:[%s7911 + $0x20] sm:$0xff] %vm904, %v7907
    %7917 = vst.msk [vmem:[%s7911 + $0x28] sm:$0xff] %vm904, %v7908
    %7918 = vst.msk [vmem:[%s7911 + $0x30] sm:$0xff] %vm904, %v7909
    %7919 = vst.msk [vmem:[%s7911 + $0x38] sm:$0xff] %vm904, %v7910
    // Predicated region
    $region50: #{tpu_custom_call.1} parent=1 // pred_check
      _
    $region51: #{tpu_custom_call.1} parent=1 // pred_check_branch
      %7921 = sbr.rel (0) target = $region53
    $region52: #{tpu_custom_call.1} parent=1 // pred_region
      %s7923 = ssub.s32 2048, 2048
      %7924 = vsyncadd [#allocation4], %s7923
      %s7925 = sshll.u32 [#allocation13], 4
      %s7926 = int_to_ptr.vmem [resolvable:$true] %s7925
      %7931 = dma.vmem_to_hbm [thread:$0]  %s7926, 2048, %s6, [#allocation4], 128, 128, 8
    $region53: #{tpu_custom_call.1} parent=1 // pred_fallthru
      _
    // Predicated region
    $region54: #{tpu_custom_call.1} parent=1 // pred_check
      _
    $region55: #{tpu_custom_call.1} parent=1 // pred_check_branch
      %7933 = sbr.rel (0) target = $region57
    $region56: #{tpu_custom_call.1} parent=1 // pred_region
      %7934 = dma.done [#allocation4], 2048
    $region57: #{tpu_custom_call.1} parent=1 // pred_fallthru
      _
    %7935 = vsyncpa [#allocation3], 1
    %7936 = vsyncpa [#allocation6], 1
    %7937 = vsyncpa [#allocation9], 1
    %7938 = vsyncpa [#allocation12], 1
    %7939 = vsyncpa [#allocation4], 1

</llo_original>
